<compile_context>
chip_gen: v7x
topology: tpu7x:2x2x1
jax: 0.10.0
libtpu: 0.0.40
codegen_flags: <defaults>
</compile_context>

<pallas_src>
import numpy as np
import jax
import jax.numpy as jnp
from jax import lax
from jax.experimental import pallas as pl
from jax.experimental.pallas import tpu as pltpu

BN_EPS = 1e-5

CONV_CFG = [
    # (in_c, out_c, kernel, stride, pad)
    (3, 16, 4, 2, 0),
    (16, 32, 4, 2, 1),
    (32, 64, 4, 2, 1),
]

_TAPS = 16  # 4x4 kernel taps (conv2 / conv3)

# Whole-array-in-VMEM spec (no grid, no blocking): weights + activations resident.
_VMEM = pl.BlockSpec(memory_space=pltpu.MemorySpace.VMEM)


# ------------------------------- fused kernel --------------------------------

def _actor_fused_kernel(p1_ref, w1_ref, s1_ref, g2_ref, w2_ref, s2_ref,
                        g3_ref, w3_ref, s3_ref,
                        wf1_ref, bf1_ref, wf2_ref, bf2_ref, wf3_ref, bf3_ref,
                        o_ref, p2_scr, p3_scr, fc_scr):
    f32 = jnp.float32
    bf16 = jnp.bfloat16

    pos1 = g2_ref.shape[1]            # conv1 output positions  (15*15 = 225)
    pos2 = g2_ref.shape[0] // _TAPS   # conv2 output positions  (7*7   = 49)
    pos3 = g3_ref.shape[0] // _TAPS   # conv3 output positions  (3*3   = 9)
    n = p1_ref.shape[0] // pos1       # batch
    c1 = w1_ref.shape[1]              # 16
    c2 = w2_ref.shape[1]              # 32
    c3 = w3_ref.shape[1]              # 64

    # ---- conv1 + folded BN + ReLU: one MXU matmul over all samples/positions.
    h1 = jnp.dot(p1_ref[...], w1_ref[...], preferred_element_type=f32) + s1_ref[...]
    h1 = jnp.maximum(h1, 0.0).astype(bf16)                       # (n*225, 16)

    # ---- in-kernel im2col for conv2: gather-by-matmul (rows are one-hot bf16,
    # so the gathered values are exact; all-zero rows reproduce the zero pad).
    g2 = g2_ref[...]                                             # hoisted once
    for i in range(n):
        gath = jnp.dot(g2, h1[i * pos1:(i + 1) * pos1, :],
                       preferred_element_type=f32)               # (16*49, 16)
        for t in range(_TAPS):
            p2_scr[i * pos2:(i + 1) * pos2, t * c1:(t + 1) * c1] = (
                gath[t * pos2:(t + 1) * pos2, :])

    # ---- conv2 + folded BN + ReLU (single matmul on the VMEM patch matrix).
    h2 = jnp.dot(p2_scr[...].astype(bf16), w2_ref[...],
                 preferred_element_type=f32) + s2_ref[...]
    h2 = jnp.maximum(h2, 0.0).astype(bf16)                       # (n*49, 32)

    # ---- in-kernel im2col for conv3.
    g3 = g3_ref[...]
    for i in range(n):
        gath = jnp.dot(g3, h2[i * pos2:(i + 1) * pos2, :],
                       preferred_element_type=f32)               # (16*9, 32)
        for t in range(_TAPS):
            p3_scr[i * pos3:(i + 1) * pos3, t * c2:(t + 1) * c2] = (
                gath[t * pos3:(t + 1) * pos3, :])

    # ---- conv3 + folded BN + ReLU: ONE (n*9, 512) @ (512, 64) matmul
    # (replaces the previous 9-way unrolled K-split).
    h3 = jnp.dot(p3_scr[...].astype(bf16), w3_ref[...],
                 preferred_element_type=f32) + s3_ref[...]
    h3 = jnp.maximum(h3, 0.0)                                    # (n*9, 64) f32

    # ---- repack (n*P3, C3) -> (n, P3*C3) in VMEM; fc1 weight rows were
    # pre-permuted on the host to (position, channel) order, so this exactly
    # reproduces PyTorch's NCHW view(N, -1) flatten.
    for i in range(n):
        for p in range(pos3):
            fc_scr[i:i + 1, p * c3:(p + 1) * c3] = (
                h3[i * pos3 + p:i * pos3 + p + 1, :])

    # ---- fc1 / fc2 (+ReLU) and fc3 (+Tanh); hidden dims padded to 896 / 512.
    f1 = jnp.dot(fc_scr[...].astype(bf16), wf1_ref[...],
                 preferred_element_type=f32) + bf1_ref[...]
    f1 = jnp.maximum(f1, 0.0).astype(bf16)
    f2 = jnp.dot(f1, wf2_ref[...], preferred_element_type=f32) + bf2_ref[...]
    f2 = jnp.maximum(f2, 0.0).astype(bf16)
    out = jnp.dot(f2, wf3_ref[...], preferred_element_type=f32) + bf3_ref[...]
    o_ref[...] = jnp.tanh(out)


# ------------------------------ host-side glue --------------------------------

def im2col_nhwc(x, k, stride, pad):
    """x: (N, H, W, C) -> patches (N*OH*OW, k*k*C); column order (ki, kj, C)."""
    n, h, w, c = x.shape
    xp = jnp.pad(x, ((0, 0), (pad, pad), (pad, pad), (0, 0)))
    oh = (h + 2 * pad - k) // stride + 1
    ow = (w + 2 * pad - k) // stride + 1
    cols = []
    for i in range(k):
        for j in range(k):
            cols.append(xp[:, i:i + stride * oh:stride, j:j + stride * ow:stride, :])
    p = jnp.stack(cols, axis=3)                       # (N, OH, OW, k*k, C)
    return p.reshape(n * oh * ow, k * k * c), oh, ow


def _conv_out_sizes(obs_shape):
    _, h, w = obs_shape
    sizes = []
    for (_, _, k, s, p) in CONV_CFG:
        h = (h + 2 * p - k) // s + 1
        w = (w + 2 * p - k) // s + 1
        sizes.append((h, w))
    return sizes


def _gather_matrix(ih, iw, k, stride, pad, oh, ow):
    """One-hot matrix (k*k*OH*OW, IH*IW) that performs im2col as a matmul.

    Row (t, oy, ox) selects input position (stride*oy + ki - pad,
    stride*ox + kj - pad); out-of-range rows are all-zero (= zero padding).
    """
    g = np.zeros((k * k * oh * ow, ih * iw), np.float32)
    for ki in range(k):
        for kj in range(k):
            t = ki * k + kj
            for oy in range(oh):
                for ox in range(ow):
                    r = stride * oy + ki - pad
                    c = stride * ox + kj - pad
                    if 0 <= r < ih and 0 <= c < iw:
                        g[t * oh * ow + oy * ow + ox, r * iw + c] = 1.0
    return jnp.asarray(g, jnp.bfloat16)


def _pad2d(w, rows, cols):
    out = jnp.zeros((rows, cols), w.dtype)
    return out.at[:w.shape[0], :w.shape[1]].set(w)


def _pad_bias(b, cols):
    out = jnp.zeros((1, cols), jnp.float32)
    return out.at[0, :b.shape[0]].set(b.astype(jnp.float32))


def _pad128(d):
    return ((d + 127) // 128) * 128


# ------------------------------- parameters -----------------------------------

def _uniform(key, shape, bound):
    return jax.random.uniform(key, shape, jnp.float32, -bound, bound)


def init_raw_params(key, obs_shape, act_size):
    """PyTorch-layout f32 parameters (conv OIHW + BN running stats, fc (in,out))."""
    raw = {"conv": [], "fc": []}
    for (ci, co, k, s, p) in CONV_CFG:
        key, kw_, kb_, kg_, kbt_, km_, kv_ = jax.random.split(key, 7)
        bound = 1.0 / np.sqrt(ci * k * k)
        raw["conv"].append(dict(
            w=_uniform(kw_, (co, ci, k, k), bound),
            b=_uniform(kb_, (co,), bound),
            gamma=1.0 + 0.1 * jax.random.normal(kg_, (co,), jnp.float32),
            beta=0.1 * jax.random.normal(kbt_, (co,), jnp.float32),
            mean=0.1 * jax.random.normal(km_, (co,), jnp.float32),
            var=1.0 + 0.1 * jnp.abs(jax.random.normal(kv_, (co,), jnp.float32))))
    oh, ow = _conv_out_sizes(obs_shape)[-1]
    dims = [CONV_CFG[-1][1] * oh * ow, 800, 500, act_size]
    for i in range(3):
        key, kw_, kb_ = jax.random.split(key, 3)
        bound = 1.0 / np.sqrt(dims[i])
        raw["fc"].append(dict(w=_uniform(kw_, (dims[i], dims[i + 1]), bound),
                              b=_uniform(kb_, (dims[i + 1],), bound)))
    return raw


def prepare_params(raw, obs_shape):
    """Fold eval BN into conv weights, build in-kernel im2col gather matrices,
    permute + lane-pad the fc weights, pre-cast everything to bf16."""
    p = {"conv": []}
    for layer in raw["conv"]:
        s = layer["gamma"] / jnp.sqrt(layer["var"] + BN_EPS)
        w_oihw = (layer["w"] * s[:, None, None, None]).astype(jnp.bfloat16)
        shift = ((layer["b"] - layer["mean"]) * s
                 + layer["beta"]).reshape(1, -1).astype(jnp.float32)
        oc, ci, kh, kw = layer["w"].shape
        # rows ordered (ki, kj, c_in) to match the im2col column order
        w_mat = jnp.transpose(w_oihw, (2, 3, 1, 0)).reshape(kh * kw * ci, oc)
        p["conv"].append(dict(w_oihw=w_oihw, w_mat=w_mat, shift=shift))

    (oh1, ow1), (oh2, ow2), (oh3, ow3) = _conv_out_sizes(obs_shape)
    p["g2"] = _gather_matrix(oh1, ow1, CONV_CFG[1][2], CONV_CFG[1][3],
                             CONV_CFG[1][4], oh2, ow2)
    p["g3"] = _gather_matrix(oh2, ow2, CONV_CFG[2][2], CONV_CFG[2][3],
                             CONV_CFG[2][4], oh3, ow3)

    oc3 = CONV_CFG[-1][1]
    fc = raw["fc"]
    d0, d1 = fc[0]["w"].shape            # 576, 800
    d2 = fc[1]["w"].shape[1]             # 500
    act = fc[2]["w"].shape[1]
    d1p, d2p = _pad128(d1), _pad128(d2)  # 896, 512

    w1 = fc[0]["w"].astype(jnp.bfloat16)
    w2 = fc[1]["w"].astype(jnp.bfloat16)
    w3 = fc[2]["w"].astype(jnp.bfloat16)

    # fc1 rows permuted from PyTorch (channel, position) to (position, channel)
    # so the kernel's (n, P*C) repack needs no activation reordering.
    w1_perm = w1.reshape(oc3, oh3 * ow3, d1).transpose(1, 0, 2).reshape(d0, d1)

    p["fc1_w"] = _pad2d(w1_perm, d0, d1p)
    p["fc1_b"] = _pad_bias(fc[0]["b"], d1p)
    p["fc2_w"] = _pad2d(w2, d1p, d2p)
    p["fc2_b"] = _pad_bias(fc[1]["b"], d2p)
    p["fc3_w"] = _pad2d(w3, d2p, act)
    p["fc3_b"] = _pad_bias(fc[2]["b"], act)

    # unpermuted / unpadded copies for the pure-JAX cross-check
    p["fc_ref"] = [(w1, fc[0]["b"].reshape(1, -1)),
                   (w2, fc[1]["b"].reshape(1, -1)),
                   (w3, fc[2]["b"].reshape(1, -1))]
    return p


# ------------------------------- forward pass ----------------------------------

@jax.jit
def actor_forward(state, params):
    """state: (N, 3, H, W) float32 -> (N, act_size) tanh actions (Pallas path)."""
    # TODO(synk): BatchNorm is eval-mode only (running stats); `action_lim` is
    # stored by the PyTorch module but unused in forward(), so it is omitted.
    n = state.shape[0]
    x = jnp.transpose(state, (0, 2, 3, 1))            # NCHW -> NHWC, once
    _, _, k, s, pad = CONV_CFG[0]
    p1, _, _ = im2col_nhwc(x, k, s, pad)              # conv1 patches (host side)
    p1 = p1.astype(jnp.bfloat16)

    c = params["conv"]
    g2, g3 = params["g2"], params["g3"]
    c1 = c[0]["w_mat"].shape[1]
    c2 = c[1]["w_mat"].shape[1]
    c3 = c[2]["w_mat"].shape[1]
    pos2 = g2.shape[0] // _TAPS
    pos3 = g3.shape[0] // _TAPS
    act = params["fc3_b"].shape[1]

    # TODO(synk): for large batches, add a batch-tiled grid with
    # dimension_semantics=("parallel",) so v7x's two TensorCores split rows;
    # at batch=2 a single grid=() VMEM-resident call is fastest.
    return pl.pallas_call(
        _actor_fused_kernel,
        out_shape=jax.ShapeDtypeStruct((n, act), jnp.float32),
        in_specs=[_VMEM] * 15,
        out_specs=_VMEM,
        scratch_shapes=[
            pltpu.VMEM((n * pos2, _TAPS * c1), jnp.float32),   # conv2 patches
            pltpu.VMEM((n * pos3, _TAPS * c2), jnp.float32),   # conv3 patches
            pltpu.VMEM((n, pos3 * c3), jnp.float32),           # fc1 input
        ],
    )(p1, c[0]["w_mat"], c[0]["shift"],
      g2, c[1]["w_mat"], c[1]["shift"],
      g3, c[2]["w_mat"], c[2]["shift"],
      params["fc1_w"], params["fc1_b"], params["fc2_w"], params["fc2_b"],
      params["fc3_w"], params["fc3_b"])


# pure-JAX reference: same folded bf16 weights, but NCHW layout + lax.conv +
# PyTorch-style view(N,-1) flatten with the UNpermuted, UNpadded fc weights,
# which cross-checks the in-kernel im2col, the fc1 row permutation and the
# zero padding of the fc dims.
def actor_forward_ref(state, params):
    x = state
    for cfg, layer in zip(CONV_CFG, params["conv"]):
        _, _, _, s, p = cfg
        y = lax.conv_general_dilated(
            x.astype(jnp.bfloat16), layer["w_oihw"], (s, s), [(p, p), (p, p)],
            dimension_numbers=("NCHW", "OIHW", "NCHW"),
            preferred_element_type=jnp.float32)
        x = jnp.maximum(y + layer["shift"].reshape(1, -1, 1, 1), 0.0)
    x = x.reshape(x.shape[0], -1)                     # PyTorch NCHW flatten

    def dense(h, w, b):
        return jnp.dot(h.astype(jnp.bfloat16), w,
                       preferred_element_type=jnp.float32) + b

    (w1, b1), (w2, b2), (w3, b3) = params["fc_ref"]
    h = jnp.maximum(dense(x, w1, b1), 0.0)
    h = jnp.maximum(dense(h, w2, b2), 0.0)
    return jnp.tanh(dense(h, w3, b3))


# ----------------------------------- main ---------------------------------------

if __name__ == "__main__":
    key = jax.random.PRNGKey(0)
    obs_shape = (3, 32, 32)          # (C, H, W), as the PyTorch module expects
    act_size = 4
    action_lim = 1.0                 # stored by the module but unused in forward
    batch = 2

    key, kp, kx = jax.random.split(key, 3)
    raw = init_raw_params(kp, obs_shape, act_size)
    params = prepare_params(raw, obs_shape)
    state = jax.random.normal(kx, (batch,) + obs_shape, jnp.float32)

    out = jax.block_until_ready(actor_forward(state, params))
    ref = jax.block_until_ready(actor_forward_ref(state, params))

    assert out.shape == (batch, act_size)
    max_err = float(np.max(np.abs(np.asarray(out) - np.asarray(ref))))
    assert np.allclose(np.asarray(out), np.asarray(ref), atol=2e-3, rtol=2e-2), max_err

    print("KERNEL_OK")
</pallas_src>

<mosaic_0001>
module attributes {stable_mosaic.version = 11 : i64} {
  func.func @_actor_fused_kernel(%arg0: memref<450x48xbf16, #tpu.memory_space<vmem>>, %arg1: memref<48x16xbf16, #tpu.memory_space<vmem>>, %arg2: memref<1x16xf32, #tpu.memory_space<vmem>>, %arg3: memref<784x225xbf16, #tpu.memory_space<vmem>>, %arg4: memref<256x32xbf16, #tpu.memory_space<vmem>>, %arg5: memref<1x32xf32, #tpu.memory_space<vmem>>, %arg6: memref<144x49xbf16, #tpu.memory_space<vmem>>, %arg7: memref<512x64xbf16, #tpu.memory_space<vmem>>, %arg8: memref<1x64xf32, #tpu.memory_space<vmem>>, %arg9: memref<576x896xbf16, #tpu.memory_space<vmem>>, %arg10: memref<1x896xf32, #tpu.memory_space<vmem>>, %arg11: memref<896x512xbf16, #tpu.memory_space<vmem>>, %arg12: memref<1x512xf32, #tpu.memory_space<vmem>>, %arg13: memref<512x4xbf16, #tpu.memory_space<vmem>>, %arg14: memref<1x4xf32, #tpu.memory_space<vmem>>, %arg15: memref<2x4xf32, #tpu.memory_space<vmem>>, %arg16: memref<98x256xf32, #tpu.memory_space<vmem>>, %arg17: memref<18x512xf32, #tpu.memory_space<vmem>>, %arg18: memref<2x576xf32, #tpu.memory_space<vmem>>) attributes {dimension_semantics = [], scalar_prefetch = 0 : i64, scratch_operands = 3 : i64, tpu.core_type = #tpu.core_type<tc>} {
    %c0 = arith.constant 0 : index
    %c0_0 = arith.constant 0 : index
    %0 = vector.load %arg0[%c0, %c0_0] : memref<450x48xbf16, #tpu.memory_space<vmem>>, vector<450x48xbf16>
    %c0_1 = arith.constant 0 : index
    %c0_2 = arith.constant 0 : index
    %1 = vector.load %arg1[%c0_1, %c0_2] : memref<48x16xbf16, #tpu.memory_space<vmem>>, vector<48x16xbf16>
    %cst = arith.constant dense<0.000000e+00> : vector<450x16xf32>
    %2 = tpu.matmul %0, %1, %cst {dimension_numbers = #tpu.dot_dimension_numbers<[1], [0], [0], [1], [0, 0, 1, 1], [], []>} : vector<450x48xbf16>, vector<48x16xbf16>, vector<450x16xf32> -> vector<450x16xf32>
    %c0_3 = arith.constant 0 : index
    %c0_4 = arith.constant 0 : index
    %3 = vector.load %arg2[%c0_3, %c0_4] : memref<1x16xf32, #tpu.memory_space<vmem>>, vector<1x16xf32>
    %4 = vector.broadcast %3 : vector<1x16xf32> to vector<450x16xf32>
    %5 = arith.addf %2, %4 : vector<450x16xf32>
    %cst_5 = arith.constant 0.000000e+00 : f32
    %6 = vector.broadcast %cst_5 : f32 to vector<450x16xf32>
    %7 = arith.maximumf %5, %6 : vector<450x16xf32>
    %8 = arith.truncf %7 : vector<450x16xf32> to vector<450x16xbf16>
    %c0_6 = arith.constant 0 : index
    %c0_7 = arith.constant 0 : index
    %9 = vector.load %arg3[%c0_6, %c0_7] : memref<784x225xbf16, #tpu.memory_space<vmem>>, vector<784x225xbf16>
    %10 = vector.extract_strided_slice %8 {offsets = [0, 0], sizes = [225, 16], strides = [1, 1]} : vector<450x16xbf16> to vector<225x16xbf16>
    %cst_8 = arith.constant dense<0.000000e+00> : vector<784x16xf32>
    %11 = tpu.matmul %9, %10, %cst_8 {dimension_numbers = #tpu.dot_dimension_numbers<[1], [0], [0], [1], [0, 0, 1, 1], [], []>} : vector<784x225xbf16>, vector<225x16xbf16>, vector<784x16xf32> -> vector<784x16xf32>
    %12 = vector.extract_strided_slice %11 {offsets = [0, 0], sizes = [49, 16], strides = [1, 1]} : vector<784x16xf32> to vector<49x16xf32>
    %c0_9 = arith.constant 0 : index
    %c0_10 = arith.constant 0 : index
    %13 = vector.load %arg16[%c0_9, %c0_10] : memref<98x256xf32, #tpu.memory_space<vmem>>, vector<49x16xf32>
    tpu.vector_store %arg16[%c0_9, %c0_10], %12 {strides = array<i32>} : memref<98x256xf32, #tpu.memory_space<vmem>>, vector<49x16xf32>,
    %14 = vector.extract_strided_slice %11 {offsets = [49, 0], sizes = [49, 16], strides = [1, 1]} : vector<784x16xf32> to vector<49x16xf32>
    %c0_11 = arith.constant 0 : index
    %c16 = arith.constant 16 : index
    %15 = vector.load %arg16[%c0_11, %c16] : memref<98x256xf32, #tpu.memory_space<vmem>>, vector<49x16xf32>
    tpu.vector_store %arg16[%c0_11, %c16], %14 {strides = array<i32>} : memref<98x256xf32, #tpu.memory_space<vmem>>, vector<49x16xf32>,
    %16 = vector.extract_strided_slice %11 {offsets = [98, 0], sizes = [49, 16], strides = [1, 1]} : vector<784x16xf32> to vector<49x16xf32>
    %c0_12 = arith.constant 0 : index
    %c32 = arith.constant 32 : index
    %17 = vector.load %arg16[%c0_12, %c32] : memref<98x256xf32, #tpu.memory_space<vmem>>, vector<49x16xf32>
    tpu.vector_store %arg16[%c0_12, %c32], %16 {strides = array<i32>} : memref<98x256xf32, #tpu.memory_space<vmem>>, vector<49x16xf32>,
    %18 = vector.extract_strided_slice %11 {offsets = [147, 0], sizes = [49, 16], strides = [1, 1]} : vector<784x16xf32> to vector<49x16xf32>
    %c0_13 = arith.constant 0 : index
    %c48 = arith.constant 48 : index
    %19 = vector.load %arg16[%c0_13, %c48] : memref<98x256xf32, #tpu.memory_space<vmem>>, vector<49x16xf32>
    tpu.vector_store %arg16[%c0_13, %c48], %18 {strides = array<i32>} : memref<98x256xf32, #tpu.memory_space<vmem>>, vector<49x16xf32>,
    %20 = vector.extract_strided_slice %11 {offsets = [196, 0], sizes = [49, 16], strides = [1, 1]} : vector<784x16xf32> to vector<49x16xf32>
    %c0_14 = arith.constant 0 : index
    %c64 = arith.constant 64 : index
    %21 = vector.load %arg16[%c0_14, %c64] : memref<98x256xf32, #tpu.memory_space<vmem>>, vector<49x16xf32>
    tpu.vector_store %arg16[%c0_14, %c64], %20 {strides = array<i32>} : memref<98x256xf32, #tpu.memory_space<vmem>>, vector<49x16xf32>,
    %22 = vector.extract_strided_slice %11 {offsets = [245, 0], sizes = [49, 16], strides = [1, 1]} : vector<784x16xf32> to vector<49x16xf32>
    %c0_15 = arith.constant 0 : index
    %c80 = arith.constant 80 : index
    %23 = vector.load %arg16[%c0_15, %c80] : memref<98x256xf32, #tpu.memory_space<vmem>>, vector<49x16xf32>
    tpu.vector_store %arg16[%c0_15, %c80], %22 {strides = array<i32>} : memref<98x256xf32, #tpu.memory_space<vmem>>, vector<49x16xf32>,
    %24 = vector.extract_strided_slice %11 {offsets = [294, 0], sizes = [49, 16], strides = [1, 1]} : vector<784x16xf32> to vector<49x16xf32>
    %c0_16 = arith.constant 0 : index
    %c96 = arith.constant 96 : index
    %25 = vector.load %arg16[%c0_16, %c96] : memref<98x256xf32, #tpu.memory_space<vmem>>, vector<49x16xf32>
    tpu.vector_store %arg16[%c0_16, %c96], %24 {strides = array<i32>} : memref<98x256xf32, #tpu.memory_space<vmem>>, vector<49x16xf32>,
    %26 = vector.extract_strided_slice %11 {offsets = [343, 0], sizes = [49, 16], strides = [1, 1]} : vector<784x16xf32> to vector<49x16xf32>
    %c0_17 = arith.constant 0 : index
    %c112 = arith.constant 112 : index
    %27 = vector.load %arg16[%c0_17, %c112] : memref<98x256xf32, #tpu.memory_space<vmem>>, vector<49x16xf32>
    tpu.vector_store %arg16[%c0_17, %c112], %26 {strides = array<i32>} : memref<98x256xf32, #tpu.memory_space<vmem>>, vector<49x16xf32>,
    %28 = vector.extract_strided_slice %11 {offsets = [392, 0], sizes = [49, 16], strides = [1, 1]} : vector<784x16xf32> to vector<49x16xf32>
    %c0_18 = arith.constant 0 : index
    %c128 = arith.constant 128 : index
    %29 = vector.load %arg16[%c0_18, %c128] : memref<98x256xf32, #tpu.memory_space<vmem>>, vector<49x16xf32>
    tpu.vector_store %arg16[%c0_18, %c128], %28 {strides = array<i32>} : memref<98x256xf32, #tpu.memory_space<vmem>>, vector<49x16xf32>,
    %30 = vector.extract_strided_slice %11 {offsets = [441, 0], sizes = [49, 16], strides = [1, 1]} : vector<784x16xf32> to vector<49x16xf32>
    %c0_19 = arith.constant 0 : index
    %c144 = arith.constant 144 : index
    %31 = vector.load %arg16[%c0_19, %c144] : memref<98x256xf32, #tpu.memory_space<vmem>>, vector<49x16xf32>
    tpu.vector_store %arg16[%c0_19, %c144], %30 {strides = array<i32>} : memref<98x256xf32, #tpu.memory_space<vmem>>, vector<49x16xf32>,
    %32 = vector.extract_strided_slice %11 {offsets = [490, 0], sizes = [49, 16], strides = [1, 1]} : vector<784x16xf32> to vector<49x16xf32>
    %c0_20 = arith.constant 0 : index
    %c160 = arith.constant 160 : index
    %33 = vector.load %arg16[%c0_20, %c160] : memref<98x256xf32, #tpu.memory_space<vmem>>, vector<49x16xf32>
    tpu.vector_store %arg16[%c0_20, %c160], %32 {strides = array<i32>} : memref<98x256xf32, #tpu.memory_space<vmem>>, vector<49x16xf32>,
    %34 = vector.extract_strided_slice %11 {offsets = [539, 0], sizes = [49, 16], strides = [1, 1]} : vector<784x16xf32> to vector<49x16xf32>
    %c0_21 = arith.constant 0 : index
    %c176 = arith.constant 176 : index
    %35 = vector.load %arg16[%c0_21, %c176] : memref<98x256xf32, #tpu.memory_space<vmem>>, vector<49x16xf32>
    tpu.vector_store %arg16[%c0_21, %c176], %34 {strides = array<i32>} : memref<98x256xf32, #tpu.memory_space<vmem>>, vector<49x16xf32>,
    %36 = vector.extract_strided_slice %11 {offsets = [588, 0], sizes = [49, 16], strides = [1, 1]} : vector<784x16xf32> to vector<49x16xf32>
    %c0_22 = arith.constant 0 : index
    %c192 = arith.constant 192 : index
    %37 = vector.load %arg16[%c0_22, %c192] : memref<98x256xf32, #tpu.memory_space<vmem>>, vector<49x16xf32>
    tpu.vector_store %arg16[%c0_22, %c192], %36 {strides = array<i32>} : memref<98x256xf32, #tpu.memory_space<vmem>>, vector<49x16xf32>,
    %38 = vector.extract_strided_slice %11 {offsets = [637, 0], sizes = [49, 16], strides = [1, 1]} : vector<784x16xf32> to vector<49x16xf32>
    %c0_23 = arith.constant 0 : index
    %c208 = arith.constant 208 : index
    %39 = vector.load %arg16[%c0_23, %c208] : memref<98x256xf32, #tpu.memory_space<vmem>>, vector<49x16xf32>
    tpu.vector_store %arg16[%c0_23, %c208], %38 {strides = array<i32>} : memref<98x256xf32, #tpu.memory_space<vmem>>, vector<49x16xf32>,
    %40 = vector.extract_strided_slice %11 {offsets = [686, 0], sizes = [49, 16], strides = [1, 1]} : vector<784x16xf32> to vector<49x16xf32>
    %c0_24 = arith.constant 0 : index
    %c224 = arith.constant 224 : index
    %41 = vector.load %arg16[%c0_24, %c224] : memref<98x256xf32, #tpu.memory_space<vmem>>, vector<49x16xf32>
    tpu.vector_store %arg16[%c0_24, %c224], %40 {strides = array<i32>} : memref<98x256xf32, #tpu.memory_space<vmem>>, vector<49x16xf32>,
    %42 = vector.extract_strided_slice %11 {offsets = [735, 0], sizes = [49, 16], strides = [1, 1]} : vector<784x16xf32> to vector<49x16xf32>
    %c0_25 = arith.constant 0 : index
    %c240 = arith.constant 240 : index
    %43 = vector.load %arg16[%c0_25, %c240] : memref<98x256xf32, #tpu.memory_space<vmem>>, vector<49x16xf32>
    tpu.vector_store %arg16[%c0_25, %c240], %42 {strides = array<i32>} : memref<98x256xf32, #tpu.memory_space<vmem>>, vector<49x16xf32>,
    %44 = vector.extract_strided_slice %8 {offsets = [225, 0], sizes = [225, 16], strides = [1, 1]} : vector<450x16xbf16> to vector<225x16xbf16>
    %cst_26 = arith.constant dense<0.000000e+00> : vector<784x16xf32>
    %45 = tpu.matmul %9, %44, %cst_26 {dimension_numbers = #tpu.dot_dimension_numbers<[1], [0], [0], [1], [0, 0, 1, 1], [], []>} : vector<784x225xbf16>, vector<225x16xbf16>, vector<784x16xf32> -> vector<784x16xf32>
    %46 = vector.extract_strided_slice %45 {offsets = [0, 0], sizes = [49, 16], strides = [1, 1]} : vector<784x16xf32> to vector<49x16xf32>
    %c49 = arith.constant 49 : index
    %c0_27 = arith.constant 0 : index
    %47 = vector.load %arg16[%c49, %c0_27] : memref<98x256xf32, #tpu.memory_space<vmem>>, vector<49x16xf32>
    tpu.vector_store %arg16[%c49, %c0_27], %46 {strides = array<i32>} : memref<98x256xf32, #tpu.memory_space<vmem>>, vector<49x16xf32>,
    %48 = vector.extract_strided_slice %45 {offsets = [49, 0], sizes = [49, 16], strides = [1, 1]} : vector<784x16xf32> to vector<49x16xf32>
    %c49_28 = arith.constant 49 : index
    %c16_29 = arith.constant 16 : index
    %49 = vector.load %arg16[%c49_28, %c16_29] : memref<98x256xf32, #tpu.memory_space<vmem>>, vector<49x16xf32>
    tpu.vector_store %arg16[%c49_28, %c16_29], %48 {strides = array<i32>} : memref<98x256xf32, #tpu.memory_space<vmem>>, vector<49x16xf32>,
    %50 = vector.extract_strided_slice %45 {offsets = [98, 0], sizes = [49, 16], strides = [1, 1]} : vector<784x16xf32> to vector<49x16xf32>
    %c49_30 = arith.constant 49 : index
    %c32_31 = arith.constant 32 : index
    %51 = vector.load %arg16[%c49_30, %c32_31] : memref<98x256xf32, #tpu.memory_space<vmem>>, vector<49x16xf32>
    tpu.vector_store %arg16[%c49_30, %c32_31], %50 {strides = array<i32>} : memref<98x256xf32, #tpu.memory_space<vmem>>, vector<49x16xf32>,
    %52 = vector.extract_strided_slice %45 {offsets = [147, 0], sizes = [49, 16], strides = [1, 1]} : vector<784x16xf32> to vector<49x16xf32>
    %c49_32 = arith.constant 49 : index
    %c48_33 = arith.constant 48 : index
    %53 = vector.load %arg16[%c49_32, %c48_33] : memref<98x256xf32, #tpu.memory_space<vmem>>, vector<49x16xf32>
    tpu.vector_store %arg16[%c49_32, %c48_33], %52 {strides = array<i32>} : memref<98x256xf32, #tpu.memory_space<vmem>>, vector<49x16xf32>,
    %54 = vector.extract_strided_slice %45 {offsets = [196, 0], sizes = [49, 16], strides = [1, 1]} : vector<784x16xf32> to vector<49x16xf32>
    %c49_34 = arith.constant 49 : index
    %c64_35 = arith.constant 64 : index
    %55 = vector.load %arg16[%c49_34, %c64_35] : memref<98x256xf32, #tpu.memory_space<vmem>>, vector<49x16xf32>
    tpu.vector_store %arg16[%c49_34, %c64_35], %54 {strides = array<i32>} : memref<98x256xf32, #tpu.memory_space<vmem>>, vector<49x16xf32>,
    %56 = vector.extract_strided_slice %45 {offsets = [245, 0], sizes = [49, 16], strides = [1, 1]} : vector<784x16xf32> to vector<49x16xf32>
    %c49_36 = arith.constant 49 : index
    %c80_37 = arith.constant 80 : index
    %57 = vector.load %arg16[%c49_36, %c80_37] : memref<98x256xf32, #tpu.memory_space<vmem>>, vector<49x16xf32>
    tpu.vector_store %arg16[%c49_36, %c80_37], %56 {strides = array<i32>} : memref<98x256xf32, #tpu.memory_space<vmem>>, vector<49x16xf32>,
    %58 = vector.extract_strided_slice %45 {offsets = [294, 0], sizes = [49, 16], strides = [1, 1]} : vector<784x16xf32> to vector<49x16xf32>
    %c49_38 = arith.constant 49 : index
    %c96_39 = arith.constant 96 : index
    %59 = vector.load %arg16[%c49_38, %c96_39] : memref<98x256xf32, #tpu.memory_space<vmem>>, vector<49x16xf32>
    tpu.vector_store %arg16[%c49_38, %c96_39], %58 {strides = array<i32>} : memref<98x256xf32, #tpu.memory_space<vmem>>, vector<49x16xf32>,
    %60 = vector.extract_strided_slice %45 {offsets = [343, 0], sizes = [49, 16], strides = [1, 1]} : vector<784x16xf32> to vector<49x16xf32>
    %c49_40 = arith.constant 49 : index
    %c112_41 = arith.constant 112 : index
    %61 = vector.load %arg16[%c49_40, %c112_41] : memref<98x256xf32, #tpu.memory_space<vmem>>, vector<49x16xf32>
    tpu.vector_store %arg16[%c49_40, %c112_41], %60 {strides = array<i32>} : memref<98x256xf32, #tpu.memory_space<vmem>>, vector<49x16xf32>,
    %62 = vector.extract_strided_slice %45 {offsets = [392, 0], sizes = [49, 16], strides = [1, 1]} : vector<784x16xf32> to vector<49x16xf32>
    %c49_42 = arith.constant 49 : index
    %c128_43 = arith.constant 128 : index
    %63 = vector.load %arg16[%c49_42, %c128_43] : memref<98x256xf32, #tpu.memory_space<vmem>>, vector<49x16xf32>
    tpu.vector_store %arg16[%c49_42, %c128_43], %62 {strides = array<i32>} : memref<98x256xf32, #tpu.memory_space<vmem>>, vector<49x16xf32>,
    %64 = vector.extract_strided_slice %45 {offsets = [441, 0], sizes = [49, 16], strides = [1, 1]} : vector<784x16xf32> to vector<49x16xf32>
    %c49_44 = arith.constant 49 : index
    %c144_45 = arith.constant 144 : index
    %65 = vector.load %arg16[%c49_44, %c144_45] : memref<98x256xf32, #tpu.memory_space<vmem>>, vector<49x16xf32>
    tpu.vector_store %arg16[%c49_44, %c144_45], %64 {strides = array<i32>} : memref<98x256xf32, #tpu.memory_space<vmem>>, vector<49x16xf32>,
    %66 = vector.extract_strided_slice %45 {offsets = [490, 0], sizes = [49, 16], strides = [1, 1]} : vector<784x16xf32> to vector<49x16xf32>
    %c49_46 = arith.constant 49 : index
    %c160_47 = arith.constant 160 : index
    %67 = vector.load %arg16[%c49_46, %c160_47] : memref<98x256xf32, #tpu.memory_space<vmem>>, vector<49x16xf32>
    tpu.vector_store %arg16[%c49_46, %c160_47], %66 {strides = array<i32>} : memref<98x256xf32, #tpu.memory_space<vmem>>, vector<49x16xf32>,
    %68 = vector.extract_strided_slice %45 {offsets = [539, 0], sizes = [49, 16], strides = [1, 1]} : vector<784x16xf32> to vector<49x16xf32>
    %c49_48 = arith.constant 49 : index
    %c176_49 = arith.constant 176 : index
    %69 = vector.load %arg16[%c49_48, %c176_49] : memref<98x256xf32, #tpu.memory_space<vmem>>, vector<49x16xf32>
    tpu.vector_store %arg16[%c49_48, %c176_49], %68 {strides = array<i32>} : memref<98x256xf32, #tpu.memory_space<vmem>>, vector<49x16xf32>,
    %70 = vector.extract_strided_slice %45 {offsets = [588, 0], sizes = [49, 16], strides = [1, 1]} : vector<784x16xf32> to vector<49x16xf32>
    %c49_50 = arith.constant 49 : index
    %c192_51 = arith.constant 192 : index
    %71 = vector.load %arg16[%c49_50, %c192_51] : memref<98x256xf32, #tpu.memory_space<vmem>>, vector<49x16xf32>
    tpu.vector_store %arg16[%c49_50, %c192_51], %70 {strides = array<i32>} : memref<98x256xf32, #tpu.memory_space<vmem>>, vector<49x16xf32>,
    %72 = vector.extract_strided_slice %45 {offsets = [637, 0], sizes = [49, 16], strides = [1, 1]} : vector<784x16xf32> to vector<49x16xf32>
    %c49_52 = arith.constant 49 : index
    %c208_53 = arith.constant 208 : index
    %73 = vector.load %arg16[%c49_52, %c208_53] : memref<98x256xf32, #tpu.memory_space<vmem>>, vector<49x16xf32>
    tpu.vector_store %arg16[%c49_52, %c208_53], %72 {strides = array<i32>} : memref<98x256xf32, #tpu.memory_space<vmem>>, vector<49x16xf32>,
    %74 = vector.extract_strided_slice %45 {offsets = [686, 0], sizes = [49, 16], strides = [1, 1]} : vector<784x16xf32> to vector<49x16xf32>
    %c49_54 = arith.constant 49 : index
    %c224_55 = arith.constant 224 : index
    %75 = vector.load %arg16[%c49_54, %c224_55] : memref<98x256xf32, #tpu.memory_space<vmem>>, vector<49x16xf32>
    tpu.vector_store %arg16[%c49_54, %c224_55], %74 {strides = array<i32>} : memref<98x256xf32, #tpu.memory_space<vmem>>, vector<49x16xf32>,
    %76 = vector.extract_strided_slice %45 {offsets = [735, 0], sizes = [49, 16], strides = [1, 1]} : vector<784x16xf32> to vector<49x16xf32>
    %c49_56 = arith.constant 49 : index
    %c240_57 = arith.constant 240 : index
    %77 = vector.load %arg16[%c49_56, %c240_57] : memref<98x256xf32, #tpu.memory_space<vmem>>, vector<49x16xf32>
    tpu.vector_store %arg16[%c49_56, %c240_57], %76 {strides = array<i32>} : memref<98x256xf32, #tpu.memory_space<vmem>>, vector<49x16xf32>,
    %c0_58 = arith.constant 0 : index
    %c0_59 = arith.constant 0 : index
    %78 = vector.load %arg16[%c0_58, %c0_59] : memref<98x256xf32, #tpu.memory_space<vmem>>, vector<98x256xf32>
    %79 = arith.truncf %78 : vector<98x256xf32> to vector<98x256xbf16>
    %c0_60 = arith.constant 0 : index
    %c0_61 = arith.constant 0 : index
    %80 = vector.load %arg4[%c0_60, %c0_61] : memref<256x32xbf16, #tpu.memory_space<vmem>>, vector<256x32xbf16>
    %cst_62 = arith.constant dense<0.000000e+00> : vector<98x32xf32>
    %81 = tpu.matmul %79, %80, %cst_62 {dimension_numbers = #tpu.dot_dimension_numbers<[1], [0], [0], [1], [0, 0, 1, 1], [], []>} : vector<98x256xbf16>, vector<256x32xbf16>, vector<98x32xf32> -> vector<98x32xf32>
    %c0_63 = arith.constant 0 : index
    %c0_64 = arith.constant 0 : index
    %82 = vector.load %arg5[%c0_63, %c0_64] : memref<1x32xf32, #tpu.memory_space<vmem>>, vector<1x32xf32>
    %83 = vector.broadcast %82 : vector<1x32xf32> to vector<98x32xf32>
    %84 = arith.addf %81, %83 : vector<98x32xf32>
    %cst_65 = arith.constant 0.000000e+00 : f32
    %85 = vector.broadcast %cst_65 : f32 to vector<98x32xf32>
    %86 = arith.maximumf %84, %85 : vector<98x32xf32>
    %87 = arith.truncf %86 : vector<98x32xf32> to vector<98x32xbf16>
    %c0_66 = arith.constant 0 : index
    %c0_67 = arith.constant 0 : index
    %88 = vector.load %arg6[%c0_66, %c0_67] : memref<144x49xbf16, #tpu.memory_space<vmem>>, vector<144x49xbf16>
    %89 = vector.extract_strided_slice %87 {offsets = [0, 0], sizes = [49, 32], strides = [1, 1]} : vector<98x32xbf16> to vector<49x32xbf16>
    %cst_68 = arith.constant dense<0.000000e+00> : vector<144x32xf32>
    %90 = tpu.matmul %88, %89, %cst_68 {dimension_numbers = #tpu.dot_dimension_numbers<[1], [0], [0], [1], [0, 0, 1, 1], [], []>} : vector<144x49xbf16>, vector<49x32xbf16>, vector<144x32xf32> -> vector<144x32xf32>
    %91 = vector.extract_strided_slice %90 {offsets = [0, 0], sizes = [9, 32], strides = [1, 1]} : vector<144x32xf32> to vector<9x32xf32>
    %c0_69 = arith.constant 0 : index
    %c0_70 = arith.constant 0 : index
    %92 = vector.load %arg17[%c0_69, %c0_70] : memref<18x512xf32, #tpu.memory_space<vmem>>, vector<9x32xf32>
    tpu.vector_store %arg17[%c0_69, %c0_70], %91 {strides = array<i32>} : memref<18x512xf32, #tpu.memory_space<vmem>>, vector<9x32xf32>,
    %93 = vector.extract_strided_slice %90 {offsets = [9, 0], sizes = [9, 32], strides = [1, 1]} : vector<144x32xf32> to vector<9x32xf32>
    %c0_71 = arith.constant 0 : index
    %c32_72 = arith.constant 32 : index
    %94 = vector.load %arg17[%c0_71, %c32_72] : memref<18x512xf32, #tpu.memory_space<vmem>>, vector<9x32xf32>
    tpu.vector_store %arg17[%c0_71, %c32_72], %93 {strides = array<i32>} : memref<18x512xf32, #tpu.memory_space<vmem>>, vector<9x32xf32>,
    %95 = vector.extract_strided_slice %90 {offsets = [18, 0], sizes = [9, 32], strides = [1, 1]} : vector<144x32xf32> to vector<9x32xf32>
    %c0_73 = arith.constant 0 : index
    %c64_74 = arith.constant 64 : index
    %96 = vector.load %arg17[%c0_73, %c64_74] : memref<18x512xf32, #tpu.memory_space<vmem>>, vector<9x32xf32>
    tpu.vector_store %arg17[%c0_73, %c64_74], %95 {strides = array<i32>} : memref<18x512xf32, #tpu.memory_space<vmem>>, vector<9x32xf32>,
    %97 = vector.extract_strided_slice %90 {offsets = [27, 0], sizes = [9, 32], strides = [1, 1]} : vector<144x32xf32> to vector<9x32xf32>
    %c0_75 = arith.constant 0 : index
    %c96_76 = arith.constant 96 : index
    %98 = vector.load %arg17[%c0_75, %c96_76] : memref<18x512xf32, #tpu.memory_space<vmem>>, vector<9x32xf32>
    tpu.vector_store %arg17[%c0_75, %c96_76], %97 {strides = array<i32>} : memref<18x512xf32, #tpu.memory_space<vmem>>, vector<9x32xf32>,
    %99 = vector.extract_strided_slice %90 {offsets = [36, 0], sizes = [9, 32], strides = [1, 1]} : vector<144x32xf32> to vector<9x32xf32>
    %c0_77 = arith.constant 0 : index
    %c128_78 = arith.constant 128 : index
    %100 = vector.load %arg17[%c0_77, %c128_78] : memref<18x512xf32, #tpu.memory_space<vmem>>, vector<9x32xf32>
    tpu.vector_store %arg17[%c0_77, %c128_78], %99 {strides = array<i32>} : memref<18x512xf32, #tpu.memory_space<vmem>>, vector<9x32xf32>,
    %101 = vector.extract_strided_slice %90 {offsets = [45, 0], sizes = [9, 32], strides = [1, 1]} : vector<144x32xf32> to vector<9x32xf32>
    %c0_79 = arith.constant 0 : index
    %c160_80 = arith.constant 160 : index
    %102 = vector.load %arg17[%c0_79, %c160_80] : memref<18x512xf32, #tpu.memory_space<vmem>>, vector<9x32xf32>
    tpu.vector_store %arg17[%c0_79, %c160_80], %101 {strides = array<i32>} : memref<18x512xf32, #tpu.memory_space<vmem>>, vector<9x32xf32>,
    %103 = vector.extract_strided_slice %90 {offsets = [54, 0], sizes = [9, 32], strides = [1, 1]} : vector<144x32xf32> to vector<9x32xf32>
    %c0_81 = arith.constant 0 : index
    %c192_82 = arith.constant 192 : index
    %104 = vector.load %arg17[%c0_81, %c192_82] : memref<18x512xf32, #tpu.memory_space<vmem>>, vector<9x32xf32>
    tpu.vector_store %arg17[%c0_81, %c192_82], %103 {strides = array<i32>} : memref<18x512xf32, #tpu.memory_space<vmem>>, vector<9x32xf32>,
    %105 = vector.extract_strided_slice %90 {offsets = [63, 0], sizes = [9, 32], strides = [1, 1]} : vector<144x32xf32> to vector<9x32xf32>
    %c0_83 = arith.constant 0 : index
    %c224_84 = arith.constant 224 : index
    %106 = vector.load %arg17[%c0_83, %c224_84] : memref<18x512xf32, #tpu.memory_space<vmem>>, vector<9x32xf32>
    tpu.vector_store %arg17[%c0_83, %c224_84], %105 {strides = array<i32>} : memref<18x512xf32, #tpu.memory_space<vmem>>, vector<9x32xf32>,
    %107 = vector.extract_strided_slice %90 {offsets = [72, 0], sizes = [9, 32], strides = [1, 1]} : vector<144x32xf32> to vector<9x32xf32>
    %c0_85 = arith.constant 0 : index
    %c256 = arith.constant 256 : index
    %108 = vector.load %arg17[%c0_85, %c256] : memref<18x512xf32, #tpu.memory_space<vmem>>, vector<9x32xf32>
    tpu.vector_store %arg17[%c0_85, %c256], %107 {strides = array<i32>} : memref<18x512xf32, #tpu.memory_space<vmem>>, vector<9x32xf32>,
    %109 = vector.extract_strided_slice %90 {offsets = [81, 0], sizes = [9, 32], strides = [1, 1]} : vector<144x32xf32> to vector<9x32xf32>
    %c0_86 = arith.constant 0 : index
    %c288 = arith.constant 288 : index
    %110 = vector.load %arg17[%c0_86, %c288] : memref<18x512xf32, #tpu.memory_space<vmem>>, vector<9x32xf32>
    tpu.vector_store %arg17[%c0_86, %c288], %109 {strides = array<i32>} : memref<18x512xf32, #tpu.memory_space<vmem>>, vector<9x32xf32>,
    %111 = vector.extract_strided_slice %90 {offsets = [90, 0], sizes = [9, 32], strides = [1, 1]} : vector<144x32xf32> to vector<9x32xf32>
    %c0_87 = arith.constant 0 : index
    %c320 = arith.constant 320 : index
    %112 = vector.load %arg17[%c0_87, %c320] : memref<18x512xf32, #tpu.memory_space<vmem>>, vector<9x32xf32>
    tpu.vector_store %arg17[%c0_87, %c320], %111 {strides = array<i32>} : memref<18x512xf32, #tpu.memory_space<vmem>>, vector<9x32xf32>,
    %113 = vector.extract_strided_slice %90 {offsets = [99, 0], sizes = [9, 32], strides = [1, 1]} : vector<144x32xf32> to vector<9x32xf32>
    %c0_88 = arith.constant 0 : index
    %c352 = arith.constant 352 : index
    %114 = vector.load %arg17[%c0_88, %c352] : memref<18x512xf32, #tpu.memory_space<vmem>>, vector<9x32xf32>
    tpu.vector_store %arg17[%c0_88, %c352], %113 {strides = array<i32>} : memref<18x512xf32, #tpu.memory_space<vmem>>, vector<9x32xf32>,
    %115 = vector.extract_strided_slice %90 {offsets = [108, 0], sizes = [9, 32], strides = [1, 1]} : vector<144x32xf32> to vector<9x32xf32>
    %c0_89 = arith.constant 0 : index
    %c384 = arith.constant 384 : index
    %116 = vector.load %arg17[%c0_89, %c384] : memref<18x512xf32, #tpu.memory_space<vmem>>, vector<9x32xf32>
    tpu.vector_store %arg17[%c0_89, %c384], %115 {strides = array<i32>} : memref<18x512xf32, #tpu.memory_space<vmem>>, vector<9x32xf32>,
    %117 = vector.extract_strided_slice %90 {offsets = [117, 0], sizes = [9, 32], strides = [1, 1]} : vector<144x32xf32> to vector<9x32xf32>
    %c0_90 = arith.constant 0 : index
    %c416 = arith.constant 416 : index
    %118 = vector.load %arg17[%c0_90, %c416] : memref<18x512xf32, #tpu.memory_space<vmem>>, vector<9x32xf32>
    tpu.vector_store %arg17[%c0_90, %c416], %117 {strides = array<i32>} : memref<18x512xf32, #tpu.memory_space<vmem>>, vector<9x32xf32>,
    %119 = vector.extract_strided_slice %90 {offsets = [126, 0], sizes = [9, 32], strides = [1, 1]} : vector<144x32xf32> to vector<9x32xf32>
    %c0_91 = arith.constant 0 : index
    %c448 = arith.constant 448 : index
    %120 = vector.load %arg17[%c0_91, %c448] : memref<18x512xf32, #tpu.memory_space<vmem>>, vector<9x32xf32>
    tpu.vector_store %arg17[%c0_91, %c448], %119 {strides = array<i32>} : memref<18x512xf32, #tpu.memory_space<vmem>>, vector<9x32xf32>,
    %121 = vector.extract_strided_slice %90 {offsets = [135, 0], sizes = [9, 32], strides = [1, 1]} : vector<144x32xf32> to vector<9x32xf32>
    %c0_92 = arith.constant 0 : index
    %c480 = arith.constant 480 : index
    %122 = vector.load %arg17[%c0_92, %c480] : memref<18x512xf32, #tpu.memory_space<vmem>>, vector<9x32xf32>
    tpu.vector_store %arg17[%c0_92, %c480], %121 {strides = array<i32>} : memref<18x512xf32, #tpu.memory_space<vmem>>, vector<9x32xf32>,
    %123 = vector.extract_strided_slice %87 {offsets = [49, 0], sizes = [49, 32], strides = [1, 1]} : vector<98x32xbf16> to vector<49x32xbf16>
    %cst_93 = arith.constant dense<0.000000e+00> : vector<144x32xf32>
    %124 = tpu.matmul %88, %123, %cst_93 {dimension_numbers = #tpu.dot_dimension_numbers<[1], [0], [0], [1], [0, 0, 1, 1], [], []>} : vector<144x49xbf16>, vector<49x32xbf16>, vector<144x32xf32> -> vector<144x32xf32>
    %125 = vector.extract_strided_slice %124 {offsets = [0, 0], sizes = [9, 32], strides = [1, 1]} : vector<144x32xf32> to vector<9x32xf32>
    %c9 = arith.constant 9 : index
    %c0_94 = arith.constant 0 : index
    %126 = vector.load %arg17[%c9, %c0_94] : memref<18x512xf32, #tpu.memory_space<vmem>>, vector<9x32xf32>
    tpu.vector_store %arg17[%c9, %c0_94], %125 {strides = array<i32>} : memref<18x512xf32, #tpu.memory_space<vmem>>, vector<9x32xf32>,
    %127 = vector.extract_strided_slice %124 {offsets = [9, 0], sizes = [9, 32], strides = [1, 1]} : vector<144x32xf32> to vector<9x32xf32>
    %c9_95 = arith.constant 9 : index
    %c32_96 = arith.constant 32 : index
    %128 = vector.load %arg17[%c9_95, %c32_96] : memref<18x512xf32, #tpu.memory_space<vmem>>, vector<9x32xf32>
    tpu.vector_store %arg17[%c9_95, %c32_96], %127 {strides = array<i32>} : memref<18x512xf32, #tpu.memory_space<vmem>>, vector<9x32xf32>,
    %129 = vector.extract_strided_slice %124 {offsets = [18, 0], sizes = [9, 32], strides = [1, 1]} : vector<144x32xf32> to vector<9x32xf32>
    %c9_97 = arith.constant 9 : index
    %c64_98 = arith.constant 64 : index
    %130 = vector.load %arg17[%c9_97, %c64_98] : memref<18x512xf32, #tpu.memory_space<vmem>>, vector<9x32xf32>
    tpu.vector_store %arg17[%c9_97, %c64_98], %129 {strides = array<i32>} : memref<18x512xf32, #tpu.memory_space<vmem>>, vector<9x32xf32>,
    %131 = vector.extract_strided_slice %124 {offsets = [27, 0], sizes = [9, 32], strides = [1, 1]} : vector<144x32xf32> to vector<9x32xf32>
    %c9_99 = arith.constant 9 : index
    %c96_100 = arith.constant 96 : index
    %132 = vector.load %arg17[%c9_99, %c96_100] : memref<18x512xf32, #tpu.memory_space<vmem>>, vector<9x32xf32>
    tpu.vector_store %arg17[%c9_99, %c96_100], %131 {strides = array<i32>} : memref<18x512xf32, #tpu.memory_space<vmem>>, vector<9x32xf32>,
    %133 = vector.extract_strided_slice %124 {offsets = [36, 0], sizes = [9, 32], strides = [1, 1]} : vector<144x32xf32> to vector<9x32xf32>
    %c9_101 = arith.constant 9 : index
    %c128_102 = arith.constant 128 : index
    %134 = vector.load %arg17[%c9_101, %c128_102] : memref<18x512xf32, #tpu.memory_space<vmem>>, vector<9x32xf32>
    tpu.vector_store %arg17[%c9_101, %c128_102], %133 {strides = array<i32>} : memref<18x512xf32, #tpu.memory_space<vmem>>, vector<9x32xf32>,
    %135 = vector.extract_strided_slice %124 {offsets = [45, 0], sizes = [9, 32], strides = [1, 1]} : vector<144x32xf32> to vector<9x32xf32>
    %c9_103 = arith.constant 9 : index
    %c160_104 = arith.constant 160 : index
    %136 = vector.load %arg17[%c9_103, %c160_104] : memref<18x512xf32, #tpu.memory_space<vmem>>, vector<9x32xf32>
    tpu.vector_store %arg17[%c9_103, %c160_104], %135 {strides = array<i32>} : memref<18x512xf32, #tpu.memory_space<vmem>>, vector<9x32xf32>,
    %137 = vector.extract_strided_slice %124 {offsets = [54, 0], sizes = [9, 32], strides = [1, 1]} : vector<144x32xf32> to vector<9x32xf32>
    %c9_105 = arith.constant 9 : index
    %c192_106 = arith.constant 192 : index
    %138 = vector.load %arg17[%c9_105, %c192_106] : memref<18x512xf32, #tpu.memory_space<vmem>>, vector<9x32xf32>
    tpu.vector_store %arg17[%c9_105, %c192_106], %137 {strides = array<i32>} : memref<18x512xf32, #tpu.memory_space<vmem>>, vector<9x32xf32>,
    %139 = vector.extract_strided_slice %124 {offsets = [63, 0], sizes = [9, 32], strides = [1, 1]} : vector<144x32xf32> to vector<9x32xf32>
    %c9_107 = arith.constant 9 : index
    %c224_108 = arith.constant 224 : index
    %140 = vector.load %arg17[%c9_107, %c224_108] : memref<18x512xf32, #tpu.memory_space<vmem>>, vector<9x32xf32>
    tpu.vector_store %arg17[%c9_107, %c224_108], %139 {strides = array<i32>} : memref<18x512xf32, #tpu.memory_space<vmem>>, vector<9x32xf32>,
    %141 = vector.extract_strided_slice %124 {offsets = [72, 0], sizes = [9, 32], strides = [1, 1]} : vector<144x32xf32> to vector<9x32xf32>
    %c9_109 = arith.constant 9 : index
    %c256_110 = arith.constant 256 : index
    %142 = vector.load %arg17[%c9_109, %c256_110] : memref<18x512xf32, #tpu.memory_space<vmem>>, vector<9x32xf32>
    tpu.vector_store %arg17[%c9_109, %c256_110], %141 {strides = array<i32>} : memref<18x512xf32, #tpu.memory_space<vmem>>, vector<9x32xf32>,
    %143 = vector.extract_strided_slice %124 {offsets = [81, 0], sizes = [9, 32], strides = [1, 1]} : vector<144x32xf32> to vector<9x32xf32>
    %c9_111 = arith.constant 9 : index
    %c288_112 = arith.constant 288 : index
    %144 = vector.load %arg17[%c9_111, %c288_112] : memref<18x512xf32, #tpu.memory_space<vmem>>, vector<9x32xf32>
    tpu.vector_store %arg17[%c9_111, %c288_112], %143 {strides = array<i32>} : memref<18x512xf32, #tpu.memory_space<vmem>>, vector<9x32xf32>,
    %145 = vector.extract_strided_slice %124 {offsets = [90, 0], sizes = [9, 32], strides = [1, 1]} : vector<144x32xf32> to vector<9x32xf32>
    %c9_113 = arith.constant 9 : index
    %c320_114 = arith.constant 320 : index
    %146 = vector.load %arg17[%c9_113, %c320_114] : memref<18x512xf32, #tpu.memory_space<vmem>>, vector<9x32xf32>
    tpu.vector_store %arg17[%c9_113, %c320_114], %145 {strides = array<i32>} : memref<18x512xf32, #tpu.memory_space<vmem>>, vector<9x32xf32>,
    %147 = vector.extract_strided_slice %124 {offsets = [99, 0], sizes = [9, 32], strides = [1, 1]} : vector<144x32xf32> to vector<9x32xf32>
    %c9_115 = arith.constant 9 : index
    %c352_116 = arith.constant 352 : index
    %148 = vector.load %arg17[%c9_115, %c352_116] : memref<18x512xf32, #tpu.memory_space<vmem>>, vector<9x32xf32>
    tpu.vector_store %arg17[%c9_115, %c352_116], %147 {strides = array<i32>} : memref<18x512xf32, #tpu.memory_space<vmem>>, vector<9x32xf32>,
    %149 = vector.extract_strided_slice %124 {offsets = [108, 0], sizes = [9, 32], strides = [1, 1]} : vector<144x32xf32> to vector<9x32xf32>
    %c9_117 = arith.constant 9 : index
    %c384_118 = arith.constant 384 : index
    %150 = vector.load %arg17[%c9_117, %c384_118] : memref<18x512xf32, #tpu.memory_space<vmem>>, vector<9x32xf32>
    tpu.vector_store %arg17[%c9_117, %c384_118], %149 {strides = array<i32>} : memref<18x512xf32, #tpu.memory_space<vmem>>, vector<9x32xf32>,
    %151 = vector.extract_strided_slice %124 {offsets = [117, 0], sizes = [9, 32], strides = [1, 1]} : vector<144x32xf32> to vector<9x32xf32>
    %c9_119 = arith.constant 9 : index
    %c416_120 = arith.constant 416 : index
    %152 = vector.load %arg17[%c9_119, %c416_120] : memref<18x512xf32, #tpu.memory_space<vmem>>, vector<9x32xf32>
    tpu.vector_store %arg17[%c9_119, %c416_120], %151 {strides = array<i32>} : memref<18x512xf32, #tpu.memory_space<vmem>>, vector<9x32xf32>,
    %153 = vector.extract_strided_slice %124 {offsets = [126, 0], sizes = [9, 32], strides = [1, 1]} : vector<144x32xf32> to vector<9x32xf32>
    %c9_121 = arith.constant 9 : index
    %c448_122 = arith.constant 448 : index
    %154 = vector.load %arg17[%c9_121, %c448_122] : memref<18x512xf32, #tpu.memory_space<vmem>>, vector<9x32xf32>
    tpu.vector_store %arg17[%c9_121, %c448_122], %153 {strides = array<i32>} : memref<18x512xf32, #tpu.memory_space<vmem>>, vector<9x32xf32>,
    %155 = vector.extract_strided_slice %124 {offsets = [135, 0], sizes = [9, 32], strides = [1, 1]} : vector<144x32xf32> to vector<9x32xf32>
    %c9_123 = arith.constant 9 : index
    %c480_124 = arith.constant 480 : index
    %156 = vector.load %arg17[%c9_123, %c480_124] : memref<18x512xf32, #tpu.memory_space<vmem>>, vector<9x32xf32>
    tpu.vector_store %arg17[%c9_123, %c480_124], %155 {strides = array<i32>} : memref<18x512xf32, #tpu.memory_space<vmem>>, vector<9x32xf32>,
    %c0_125 = arith.constant 0 : index
    %c0_126 = arith.constant 0 : index
    %157 = vector.load %arg17[%c0_125, %c0_126] : memref<18x512xf32, #tpu.memory_space<vmem>>, vector<18x512xf32>
    %158 = arith.truncf %157 : vector<18x512xf32> to vector<18x512xbf16>
    %c0_127 = arith.constant 0 : index
    %c0_128 = arith.constant 0 : index
    %159 = vector.load %arg7[%c0_127, %c0_128] : memref<512x64xbf16, #tpu.memory_space<vmem>>, vector<512x64xbf16>
    %cst_129 = arith.constant dense<0.000000e+00> : vector<18x64xf32>
    %160 = tpu.matmul %158, %159, %cst_129 {dimension_numbers = #tpu.dot_dimension_numbers<[1], [0], [0], [1], [0, 0, 1, 1], [], []>} : vector<18x512xbf16>, vector<512x64xbf16>, vector<18x64xf32> -> vector<18x64xf32>
    %c0_130 = arith.constant 0 : index
    %c0_131 = arith.constant 0 : index
    %161 = vector.load %arg8[%c0_130, %c0_131] : memref<1x64xf32, #tpu.memory_space<vmem>>, vector<1x64xf32>
    %162 = vector.broadcast %161 : vector<1x64xf32> to vector<18x64xf32>
    %163 = arith.addf %160, %162 : vector<18x64xf32>
    %cst_132 = arith.constant 0.000000e+00 : f32
    %164 = vector.broadcast %cst_132 : f32 to vector<18x64xf32>
    %165 = arith.maximumf %163, %164 : vector<18x64xf32>
    %166 = vector.extract_strided_slice %165 {offsets = [0, 0], sizes = [1, 64], strides = [1, 1]} : vector<18x64xf32> to vector<1x64xf32>
    %c0_133 = arith.constant 0 : index
    %c0_134 = arith.constant 0 : index
    %167 = vector.load %arg18[%c0_133, %c0_134] : memref<2x576xf32, #tpu.memory_space<vmem>>, vector<1x64xf32>
    tpu.vector_store %arg18[%c0_133, %c0_134], %166 {strides = array<i32>} : memref<2x576xf32, #tpu.memory_space<vmem>>, vector<1x64xf32>,
    %168 = vector.extract_strided_slice %165 {offsets = [1, 0], sizes = [1, 64], strides = [1, 1]} : vector<18x64xf32> to vector<1x64xf32>
    %c0_135 = arith.constant 0 : index
    %c64_136 = arith.constant 64 : index
    %169 = vector.load %arg18[%c0_135, %c64_136] : memref<2x576xf32, #tpu.memory_space<vmem>>, vector<1x64xf32>
    tpu.vector_store %arg18[%c0_135, %c64_136], %168 {strides = array<i32>} : memref<2x576xf32, #tpu.memory_space<vmem>>, vector<1x64xf32>,
    %170 = vector.extract_strided_slice %165 {offsets = [2, 0], sizes = [1, 64], strides = [1, 1]} : vector<18x64xf32> to vector<1x64xf32>
    %c0_137 = arith.constant 0 : index
    %c128_138 = arith.constant 128 : index
    %171 = vector.load %arg18[%c0_137, %c128_138] : memref<2x576xf32, #tpu.memory_space<vmem>>, vector<1x64xf32>
    tpu.vector_store %arg18[%c0_137, %c128_138], %170 {strides = array<i32>} : memref<2x576xf32, #tpu.memory_space<vmem>>, vector<1x64xf32>,
    %172 = vector.extract_strided_slice %165 {offsets = [3, 0], sizes = [1, 64], strides = [1, 1]} : vector<18x64xf32> to vector<1x64xf32>
    %c0_139 = arith.constant 0 : index
    %c192_140 = arith.constant 192 : index
    %173 = vector.load %arg18[%c0_139, %c192_140] : memref<2x576xf32, #tpu.memory_space<vmem>>, vector<1x64xf32>
    tpu.vector_store %arg18[%c0_139, %c192_140], %172 {strides = array<i32>} : memref<2x576xf32, #tpu.memory_space<vmem>>, vector<1x64xf32>,
    %174 = vector.extract_strided_slice %165 {offsets = [4, 0], sizes = [1, 64], strides = [1, 1]} : vector<18x64xf32> to vector<1x64xf32>
    %c0_141 = arith.constant 0 : index
    %c256_142 = arith.constant 256 : index
    %175 = vector.load %arg18[%c0_141, %c256_142] : memref<2x576xf32, #tpu.memory_space<vmem>>, vector<1x64xf32>
    tpu.vector_store %arg18[%c0_141, %c256_142], %174 {strides = array<i32>} : memref<2x576xf32, #tpu.memory_space<vmem>>, vector<1x64xf32>,
    %176 = vector.extract_strided_slice %165 {offsets = [5, 0], sizes = [1, 64], strides = [1, 1]} : vector<18x64xf32> to vector<1x64xf32>
    %c0_143 = arith.constant 0 : index
    %c320_144 = arith.constant 320 : index
    %177 = vector.load %arg18[%c0_143, %c320_144] : memref<2x576xf32, #tpu.memory_space<vmem>>, vector<1x64xf32>
    tpu.vector_store %arg18[%c0_143, %c320_144], %176 {strides = array<i32>} : memref<2x576xf32, #tpu.memory_space<vmem>>, vector<1x64xf32>,
    %178 = vector.extract_strided_slice %165 {offsets = [6, 0], sizes = [1, 64], strides = [1, 1]} : vector<18x64xf32> to vector<1x64xf32>
    %c0_145 = arith.constant 0 : index
    %c384_146 = arith.constant 384 : index
    %179 = vector.load %arg18[%c0_145, %c384_146] : memref<2x576xf32, #tpu.memory_space<vmem>>, vector<1x64xf32>
    tpu.vector_store %arg18[%c0_145, %c384_146], %178 {strides = array<i32>} : memref<2x576xf32, #tpu.memory_space<vmem>>, vector<1x64xf32>,
    %180 = vector.extract_strided_slice %165 {offsets = [7, 0], sizes = [1, 64], strides = [1, 1]} : vector<18x64xf32> to vector<1x64xf32>
    %c0_147 = arith.constant 0 : index
    %c448_148 = arith.constant 448 : index
    %181 = vector.load %arg18[%c0_147, %c448_148] : memref<2x576xf32, #tpu.memory_space<vmem>>, vector<1x64xf32>
    tpu.vector_store %arg18[%c0_147, %c448_148], %180 {strides = array<i32>} : memref<2x576xf32, #tpu.memory_space<vmem>>, vector<1x64xf32>,
    %182 = vector.extract_strided_slice %165 {offsets = [8, 0], sizes = [1, 64], strides = [1, 1]} : vector<18x64xf32> to vector<1x64xf32>
    %c0_149 = arith.constant 0 : index
    %c512 = arith.constant 512 : index
    %183 = vector.load %arg18[%c0_149, %c512] : memref<2x576xf32, #tpu.memory_space<vmem>>, vector<1x64xf32>
    tpu.vector_store %arg18[%c0_149, %c512], %182 {strides = array<i32>} : memref<2x576xf32, #tpu.memory_space<vmem>>, vector<1x64xf32>,
    %184 = vector.extract_strided_slice %165 {offsets = [9, 0], sizes = [1, 64], strides = [1, 1]} : vector<18x64xf32> to vector<1x64xf32>
    %c1 = arith.constant 1 : index
    %c0_150 = arith.constant 0 : index
    %185 = vector.load %arg18[%c1, %c0_150] : memref<2x576xf32, #tpu.memory_space<vmem>>, vector<1x64xf32>
    tpu.vector_store %arg18[%c1, %c0_150], %184 {strides = array<i32>} : memref<2x576xf32, #tpu.memory_space<vmem>>, vector<1x64xf32>,
    %186 = vector.extract_strided_slice %165 {offsets = [10, 0], sizes = [1, 64], strides = [1, 1]} : vector<18x64xf32> to vector<1x64xf32>
    %c1_151 = arith.constant 1 : index
    %c64_152 = arith.constant 64 : index
    %187 = vector.load %arg18[%c1_151, %c64_152] : memref<2x576xf32, #tpu.memory_space<vmem>>, vector<1x64xf32>
    tpu.vector_store %arg18[%c1_151, %c64_152], %186 {strides = array<i32>} : memref<2x576xf32, #tpu.memory_space<vmem>>, vector<1x64xf32>,
    %188 = vector.extract_strided_slice %165 {offsets = [11, 0], sizes = [1, 64], strides = [1, 1]} : vector<18x64xf32> to vector<1x64xf32>
    %c1_153 = arith.constant 1 : index
    %c128_154 = arith.constant 128 : index
    %189 = vector.load %arg18[%c1_153, %c128_154] : memref<2x576xf32, #tpu.memory_space<vmem>>, vector<1x64xf32>
    tpu.vector_store %arg18[%c1_153, %c128_154], %188 {strides = array<i32>} : memref<2x576xf32, #tpu.memory_space<vmem>>, vector<1x64xf32>,
    %190 = vector.extract_strided_slice %165 {offsets = [12, 0], sizes = [1, 64], strides = [1, 1]} : vector<18x64xf32> to vector<1x64xf32>
    %c1_155 = arith.constant 1 : index
    %c192_156 = arith.constant 192 : index
    %191 = vector.load %arg18[%c1_155, %c192_156] : memref<2x576xf32, #tpu.memory_space<vmem>>, vector<1x64xf32>
    tpu.vector_store %arg18[%c1_155, %c192_156], %190 {strides = array<i32>} : memref<2x576xf32, #tpu.memory_space<vmem>>, vector<1x64xf32>,
    %192 = vector.extract_strided_slice %165 {offsets = [13, 0], sizes = [1, 64], strides = [1, 1]} : vector<18x64xf32> to vector<1x64xf32>
    %c1_157 = arith.constant 1 : index
    %c256_158 = arith.constant 256 : index
    %193 = vector.load %arg18[%c1_157, %c256_158] : memref<2x576xf32, #tpu.memory_space<vmem>>, vector<1x64xf32>
    tpu.vector_store %arg18[%c1_157, %c256_158], %192 {strides = array<i32>} : memref<2x576xf32, #tpu.memory_space<vmem>>, vector<1x64xf32>,
    %194 = vector.extract_strided_slice %165 {offsets = [14, 0], sizes = [1, 64], strides = [1, 1]} : vector<18x64xf32> to vector<1x64xf32>
    %c1_159 = arith.constant 1 : index
    %c320_160 = arith.constant 320 : index
    %195 = vector.load %arg18[%c1_159, %c320_160] : memref<2x576xf32, #tpu.memory_space<vmem>>, vector<1x64xf32>
    tpu.vector_store %arg18[%c1_159, %c320_160], %194 {strides = array<i32>} : memref<2x576xf32, #tpu.memory_space<vmem>>, vector<1x64xf32>,
    %196 = vector.extract_strided_slice %165 {offsets = [15, 0], sizes = [1, 64], strides = [1, 1]} : vector<18x64xf32> to vector<1x64xf32>
    %c1_161 = arith.constant 1 : index
    %c384_162 = arith.constant 384 : index
    %197 = vector.load %arg18[%c1_161, %c384_162] : memref<2x576xf32, #tpu.memory_space<vmem>>, vector<1x64xf32>
    tpu.vector_store %arg18[%c1_161, %c384_162], %196 {strides = array<i32>} : memref<2x576xf32, #tpu.memory_space<vmem>>, vector<1x64xf32>,
    %198 = vector.extract_strided_slice %165 {offsets = [16, 0], sizes = [1, 64], strides = [1, 1]} : vector<18x64xf32> to vector<1x64xf32>
    %c1_163 = arith.constant 1 : index
    %c448_164 = arith.constant 448 : index
    %199 = vector.load %arg18[%c1_163, %c448_164] : memref<2x576xf32, #tpu.memory_space<vmem>>, vector<1x64xf32>
    tpu.vector_store %arg18[%c1_163, %c448_164], %198 {strides = array<i32>} : memref<2x576xf32, #tpu.memory_space<vmem>>, vector<1x64xf32>,
    %200 = vector.extract_strided_slice %165 {offsets = [17, 0], sizes = [1, 64], strides = [1, 1]} : vector<18x64xf32> to vector<1x64xf32>
    %c1_165 = arith.constant 1 : index
    %c512_166 = arith.constant 512 : index
    %201 = vector.load %arg18[%c1_165, %c512_166] : memref<2x576xf32, #tpu.memory_space<vmem>>, vector<1x64xf32>
    tpu.vector_store %arg18[%c1_165, %c512_166], %200 {strides = array<i32>} : memref<2x576xf32, #tpu.memory_space<vmem>>, vector<1x64xf32>,
    %c0_167 = arith.constant 0 : index
    %c0_168 = arith.constant 0 : index
    %202 = vector.load %arg18[%c0_167, %c0_168] : memref<2x576xf32, #tpu.memory_space<vmem>>, vector<2x576xf32>
    %203 = arith.truncf %202 : vector<2x576xf32> to vector<2x576xbf16>
    %c0_169 = arith.constant 0 : index
    %c0_170 = arith.constant 0 : index
    %204 = vector.load %arg9[%c0_169, %c0_170] : memref<576x896xbf16, #tpu.memory_space<vmem>>, vector<576x896xbf16>
    %cst_171 = arith.constant dense<0.000000e+00> : vector<2x896xf32>
    %205 = tpu.matmul %203, %204, %cst_171 {dimension_numbers = #tpu.dot_dimension_numbers<[1], [0], [0], [1], [0, 0, 1, 1], [], []>} : vector<2x576xbf16>, vector<576x896xbf16>, vector<2x896xf32> -> vector<2x896xf32>
    %c0_172 = arith.constant 0 : index
    %c0_173 = arith.constant 0 : index
    %206 = vector.load %arg10[%c0_172, %c0_173] : memref<1x896xf32, #tpu.memory_space<vmem>>, vector<1x896xf32>
    %207 = vector.broadcast %206 : vector<1x896xf32> to vector<2x896xf32>
    %208 = arith.addf %205, %207 : vector<2x896xf32>
    %cst_174 = arith.constant 0.000000e+00 : f32
    %209 = vector.broadcast %cst_174 : f32 to vector<2x896xf32>
    %210 = arith.maximumf %208, %209 : vector<2x896xf32>
    %211 = arith.truncf %210 : vector<2x896xf32> to vector<2x896xbf16>
    %c0_175 = arith.constant 0 : index
    %c0_176 = arith.constant 0 : index
    %212 = vector.load %arg11[%c0_175, %c0_176] : memref<896x512xbf16, #tpu.memory_space<vmem>>, vector<896x512xbf16>
    %cst_177 = arith.constant dense<0.000000e+00> : vector<2x512xf32>
    %213 = tpu.matmul %211, %212, %cst_177 {dimension_numbers = #tpu.dot_dimension_numbers<[1], [0], [0], [1], [0, 0, 1, 1], [], []>} : vector<2x896xbf16>, vector<896x512xbf16>, vector<2x512xf32> -> vector<2x512xf32>
    %c0_178 = arith.constant 0 : index
    %c0_179 = arith.constant 0 : index
    %214 = vector.load %arg12[%c0_178, %c0_179] : memref<1x512xf32, #tpu.memory_space<vmem>>, vector<1x512xf32>
    %215 = vector.broadcast %214 : vector<1x512xf32> to vector<2x512xf32>
    %216 = arith.addf %213, %215 : vector<2x512xf32>
    %cst_180 = arith.constant 0.000000e+00 : f32
    %217 = vector.broadcast %cst_180 : f32 to vector<2x512xf32>
    %218 = arith.maximumf %216, %217 : vector<2x512xf32>
    %219 = arith.truncf %218 : vector<2x512xf32> to vector<2x512xbf16>
    %c0_181 = arith.constant 0 : index
    %c0_182 = arith.constant 0 : index
    %220 = vector.load %arg13[%c0_181, %c0_182] : memref<512x4xbf16, #tpu.memory_space<vmem>>, vector<512x4xbf16>
    %cst_183 = arith.constant dense<0.000000e+00> : vector<2x4xf32>
    %221 = tpu.matmul %219, %220, %cst_183 {dimension_numbers = #tpu.dot_dimension_numbers<[1], [0], [0], [1], [0, 0, 1, 1], [], []>} : vector<2x512xbf16>, vector<512x4xbf16>, vector<2x4xf32> -> vector<2x4xf32>
    %c0_184 = arith.constant 0 : index
    %c0_185 = arith.constant 0 : index
    %222 = vector.load %arg14[%c0_184, %c0_185] : memref<1x4xf32, #tpu.memory_space<vmem>>, vector<1x4xf32>
    %223 = vector.broadcast %222 : vector<1x4xf32> to vector<2x4xf32>
    %224 = arith.addf %221, %223 : vector<2x4xf32>
    %225 = math.tanh %224 : vector<2x4xf32>
    %c0_186 = arith.constant 0 : index
    %c0_187 = arith.constant 0 : index
    %226 = vector.load %arg15[%c0_186, %c0_187] : memref<2x4xf32, #tpu.memory_space<vmem>>, vector<2x4xf32>
    tpu.vector_store %arg15[%c0_186, %c0_187], %225 {strides = array<i32>} : memref<2x4xf32, #tpu.memory_space<vmem>>, vector<2x4xf32>,
    return
  }
}

</mosaic_0001>

<llo_original>
// kernel: actor_forward.1
$region0: #{actor_forward.1}
  #allocation0 [shape = 'u32[]', space=smem, size = 0x4, offset = 0x4, fixed_abs, tag = 'smem constant byte address 0x4 - core index']
  #allocation1 [shape = 'u32[144,128]{1,0:T(1,128)}', space=vmem, size = 0x12000, scoped, tag = 'internal scratch']
  #allocation2 [shape = 'f32[98,256]{1,0:T(8,128)}', space=vmem, size = 0x1a000, scoped, tag = 'scratch operand']
  #allocation3 [shape = 'f32[18,512]{1,0:T(8,128)}', space=vmem, size = 0xc000, scoped, tag = 'scratch operand']
  #allocation4 [shape = 'f32[2,576]{1,0:T(2,128)}', space=vmem, size = 0x1400, scoped, tag = 'scratch operand']
  %s0 = inlined_call_operand.vmem [shape: bf16[450,48], index: 0, kind: input, shape index: {}]
  %s1 = inlined_call_operand.vmem [shape: bf16[48,16], index: 1, kind: input, shape index: {}]
  %s2 = inlined_call_operand.vmem [shape: f32[1,16], index: 2, kind: input, shape index: {}]
  %s3 = inlined_call_operand.vmem [shape: bf16[784,225], index: 3, kind: input, shape index: {}]
  %s4 = inlined_call_operand.vmem [shape: bf16[256,32], index: 4, kind: input, shape index: {}]
  %s5 = inlined_call_operand.vmem [shape: f32[1,32], index: 5, kind: input, shape index: {}]
  %s6 = inlined_call_operand.vmem [shape: bf16[144,49], index: 6, kind: input, shape index: {}]
  %s7 = inlined_call_operand.vmem [shape: bf16[512,64], index: 7, kind: input, shape index: {}]
  %s8 = inlined_call_operand.vmem [shape: f32[1,64], index: 8, kind: input, shape index: {}]
  %s9 = inlined_call_operand.vmem [shape: bf16[576,896], index: 9, kind: input, shape index: {}]
  %s10 = inlined_call_operand.vmem [shape: f32[1,896], index: 10, kind: input, shape index: {}]
  %s11 = inlined_call_operand.vmem [shape: bf16[896,512], index: 11, kind: input, shape index: {}]
  %s12 = inlined_call_operand.vmem [shape: f32[1,512], index: 12, kind: input, shape index: {}]
  %s13 = inlined_call_operand.vmem [shape: bf16[512,4], index: 13, kind: input, shape index: {}]
  %s14 = inlined_call_operand.vmem [shape: f32[1,4], index: 14, kind: input, shape index: {}]
  %s15 = inlined_call_operand.hbm [shape: f32[2,4], index: 15, kind: output, shape index: {}]
  %s16 = sld [smem:[#allocation0]]
  $region70: #{actor_forward.1} parent=0
    _
  %s18 = ssub.s32 1, %s16
  %s19 = scalar_select 0, %s18, %s16
  $region1: #{actor_forward.1} parent=0
    #allocation5 [shape = 'u8[1024]{0}', space=vmem, size = 0x400, scoped, tag = 'output window, operand 0, single buffered']
    #allocation6 [shape = 's32[1]{0}', space=sflag, size = 0x4, scoped, tag = 'scoped memory for actor_forward.1']
    %20 = vsyncpa [#allocation6], 0
    // Predicated region
    $region2: #{actor_forward.1} parent=1 // pred_check
      _
    $region3: #{actor_forward.1} parent=1 // pred_check_branch
      %22 = sbr.rel (0) target = $region5
    $region4: #{actor_forward.1} parent=1 // pred_region
      _
    $region5: #{actor_forward.1} parent=1 // pred_fallthru
      _
    // Predicated region
    $region6: #{actor_forward.1} parent=1 // pred_check
      _
    $region7: #{actor_forward.1} parent=1 // pred_check_branch
      %24 = sbr.rel (0) target = $region9
    $region8: #{actor_forward.1} parent=1 // pred_region
      _
    $region9: #{actor_forward.1} parent=1 // pred_fallthru
      _
    // Predicated region
    $region10: #{actor_forward.1} parent=1 // pred_check
      _
    $region11: #{actor_forward.1} parent=1 // pred_check_branch
      %26 = sbr.rel (0) target = $region13
    $region12: #{actor_forward.1} parent=1 // pred_region
      _
    $region13: #{actor_forward.1} parent=1 // pred_fallthru
      _
    // Predicated region
    $region14: #{actor_forward.1} parent=1 // pred_check
      _
    $region15: #{actor_forward.1} parent=1 // pred_check_branch
      %28 = sbr.rel (0) target = $region17
    $region16: #{actor_forward.1} parent=1 // pred_region
      _
    $region17: #{actor_forward.1} parent=1 // pred_fallthru
      _
    // Predicated region
    $region18: #{actor_forward.1} parent=1 // pred_check
      _
    $region19: #{actor_forward.1} parent=1 // pred_check_branch
      %30 = sbr.rel (0) target = $region21
    $region20: #{actor_forward.1} parent=1 // pred_region
      _
    $region21: #{actor_forward.1} parent=1 // pred_fallthru
      _
    // Predicated region
    $region22: #{actor_forward.1} parent=1 // pred_check
      _
    $region23: #{actor_forward.1} parent=1 // pred_check_branch
      %32 = sbr.rel (0) target = $region25
    $region24: #{actor_forward.1} parent=1 // pred_region
      _
    $region25: #{actor_forward.1} parent=1 // pred_fallthru
      _
    // Predicated region
    $region26: #{actor_forward.1} parent=1 // pred_check
      _
    $region27: #{actor_forward.1} parent=1 // pred_check_branch
      %34 = sbr.rel (0) target = $region29
    $region28: #{actor_forward.1} parent=1 // pred_region
      _
    $region29: #{actor_forward.1} parent=1 // pred_fallthru
      _
    // Predicated region
    $region30: #{actor_forward.1} parent=1 // pred_check
      _
    $region31: #{actor_forward.1} parent=1 // pred_check_branch
      %36 = sbr.rel (0) target = $region33
    $region32: #{actor_forward.1} parent=1 // pred_region
      _
    $region33: #{actor_forward.1} parent=1 // pred_fallthru
      _
    // Predicated region
    $region34: #{actor_forward.1} parent=1 // pred_check
      _
    $region35: #{actor_forward.1} parent=1 // pred_check_branch
      %38 = sbr.rel (0) target = $region37
    $region36: #{actor_forward.1} parent=1 // pred_region
      _
    $region37: #{actor_forward.1} parent=1 // pred_fallthru
      _
    // Predicated region
    $region38: #{actor_forward.1} parent=1 // pred_check
      _
    $region39: #{actor_forward.1} parent=1 // pred_check_branch
      %40 = sbr.rel (0) target = $region41
    $region40: #{actor_forward.1} parent=1 // pred_region
      _
    $region41: #{actor_forward.1} parent=1 // pred_fallthru
      _
    // Predicated region
    $region42: #{actor_forward.1} parent=1 // pred_check
      _
    $region43: #{actor_forward.1} parent=1 // pred_check_branch
      %42 = sbr.rel (0) target = $region45
    $region44: #{actor_forward.1} parent=1 // pred_region
      _
    $region45: #{actor_forward.1} parent=1 // pred_fallthru
      _
    // Predicated region
    $region46: #{actor_forward.1} parent=1 // pred_check
      _
    $region47: #{actor_forward.1} parent=1 // pred_check_branch
      %44 = sbr.rel (0) target = $region49
    $region48: #{actor_forward.1} parent=1 // pred_region
      _
    $region49: #{actor_forward.1} parent=1 // pred_fallthru
      _
    // Predicated region
    $region50: #{actor_forward.1} parent=1 // pred_check
      _
    $region51: #{actor_forward.1} parent=1 // pred_check_branch
      %46 = sbr.rel (0) target = $region53
    $region52: #{actor_forward.1} parent=1 // pred_region
      _
    $region53: #{actor_forward.1} parent=1 // pred_fallthru
      _
    // Predicated region
    $region54: #{actor_forward.1} parent=1 // pred_check
      _
    $region55: #{actor_forward.1} parent=1 // pred_check_branch
      %48 = sbr.rel (0) target = $region57
    $region56: #{actor_forward.1} parent=1 // pred_region
      _
    $region57: #{actor_forward.1} parent=1 // pred_fallthru
      _
    // Predicated region
    $region58: #{actor_forward.1} parent=1 // pred_check
      _
    $region59: #{actor_forward.1} parent=1 // pred_check_branch
      %50 = sbr.rel (0) target = $region61
    $region60: #{actor_forward.1} parent=1 // pred_region
      _
    $region61: #{actor_forward.1} parent=1 // pred_fallthru
      _
    %v52 = vld [vmem:[%s0] sm:$0xf]
    %v53 = vld [vmem:[%s0 + $0x4] sm:$0xf]
    %v54 = vld [vmem:[%s0 + $0x8] sm:$0xf]
    %v55 = vld [vmem:[%s0 + $0xc] sm:$0xf]
    %v56 = vld [vmem:[%s0 + $0x10] sm:$0xf]
    %v57 = vld [vmem:[%s0 + $0x14] sm:$0xf]
    %v58 = vld [vmem:[%s0 + $0x18] sm:$0xf]
    %v59 = vld [vmem:[%s0 + $0x1c] sm:$0xf]
    %v60 = vld [vmem:[%s0 + $0x20] sm:$0xf]
    %v61 = vld [vmem:[%s0 + $0x24] sm:$0xf]
    %v62 = vld [vmem:[%s0 + $0x28] sm:$0xf]
    %v63 = vld [vmem:[%s0 + $0x2c] sm:$0xf]
    %v64 = vld [vmem:[%s0 + $0x30] sm:$0xf]
    %v65 = vld [vmem:[%s0 + $0x34] sm:$0xf]
    %v66 = vld [vmem:[%s0 + $0x38] sm:$0xf]
    %v67 = vld [vmem:[%s0 + $0x3c] sm:$0xf]
    %v68 = vld [vmem:[%s0 + $0x40] sm:$0xf]
    %v69 = vld [vmem:[%s0 + $0x44] sm:$0xf]
    %v70 = vld [vmem:[%s0 + $0x48] sm:$0xf]
    %v71 = vld [vmem:[%s0 + $0x4c] sm:$0xf]
    %v72 = vld [vmem:[%s0 + $0x50] sm:$0xf]
    %v73 = vld [vmem:[%s0 + $0x54] sm:$0xf]
    %v74 = vld [vmem:[%s0 + $0x58] sm:$0xf]
    %v75 = vld [vmem:[%s0 + $0x5c] sm:$0xf]
    %v76 = vld [vmem:[%s0 + $0x60] sm:$0xf]
    %v77 = vld [vmem:[%s0 + $0x64] sm:$0xf]
    %v78 = vld [vmem:[%s0 + $0x68] sm:$0xf]
    %v79 = vld [vmem:[%s0 + $0x6c] sm:$0xf]
    %v80 = vld [vmem:[%s0 + $0x70] sm:$0xf]
    %v81 = vld [vmem:[%s0 + $0x74] sm:$0xf]
    %v82 = vld [vmem:[%s0 + $0x78] sm:$0xf]
    %v83 = vld [vmem:[%s0 + $0x7c] sm:$0xf]
    %v84 = vld [vmem:[%s0 + $0x80] sm:$0xf]
    %v85 = vld [vmem:[%s0 + $0x84] sm:$0xf]
    %v86 = vld [vmem:[%s0 + $0x88] sm:$0xf]
    %v87 = vld [vmem:[%s0 + $0x8c] sm:$0xf]
    %v88 = vld [vmem:[%s0 + $0x90] sm:$0xf]
    %v89 = vld [vmem:[%s0 + $0x94] sm:$0xf]
    %v90 = vld [vmem:[%s0 + $0x98] sm:$0xf]
    %v91 = vld [vmem:[%s0 + $0x9c] sm:$0xf]
    %v92 = vld [vmem:[%s0 + $0xa0] sm:$0xf]
    %v93 = vld [vmem:[%s0 + $0xa4] sm:$0xf]
    %v94 = vld [vmem:[%s0 + $0xa8] sm:$0xf]
    %v95 = vld [vmem:[%s0 + $0xac] sm:$0xf]
    %v96 = vld [vmem:[%s0 + $0xb0] sm:$0xf]
    %v97 = vld [vmem:[%s0 + $0xb4] sm:$0xf]
    %v98 = vld [vmem:[%s0 + $0xb8] sm:$0xf]
    %v99 = vld [vmem:[%s0 + $0xbc] sm:$0xf]
    %v100 = vld [vmem:[%s0 + $0xc0] sm:$0xf]
    %v101 = vld [vmem:[%s0 + $0xc4] sm:$0xf]
    %v102 = vld [vmem:[%s0 + $0xc8] sm:$0xf]
    %v103 = vld [vmem:[%s0 + $0xcc] sm:$0xf]
    %v104 = vld [vmem:[%s0 + $0xd0] sm:$0xf]
    %v105 = vld [vmem:[%s0 + $0xd4] sm:$0xf]
    %v106 = vld [vmem:[%s0 + $0xd8] sm:$0xf]
    %v107 = vld [vmem:[%s0 + $0xdc] sm:$0xf]
    %v108 = vld [vmem:[%s0 + $0xe0] sm:$0x1]
    %v109 = vld [vmem:[%s1] sm:$0xf]
    %v110 = vld [vmem:[%s1 + $0x4] sm:$0xf]
    %v111 = vld [vmem:[%s1 + $0x8] sm:$0xf]
    %v112 = vld [vmem:[%s1 + $0xc] sm:$0xf]
    %v113 = vld [vmem:[%s1 + $0x10] sm:$0xf]
    %v114 = vld [vmem:[%s1 + $0x14] sm:$0xf]
    %v115 = vld [vmem:[%s2] sm:$0x1]
    %v117 = vlaneseq
    %v118 = vshrl.u32 %v117, 7
    %v119 = vsub.s32 0, %v118
    %v120 = vrot.slane %v115, %v119
    %v179 = vunpack.c.l.b16 %v52
    %v180 = vunpack.c.l.b16 %v53
    %v181 = vunpack.c.l.b16 %v54
    %v182 = vunpack.c.l.b16 %v55
    %v183 = vunpack.c.l.b16 %v56
    %v184 = vunpack.c.l.b16 %v57
    %v185 = vunpack.c.l.b16 %v58
    %v186 = vunpack.c.l.b16 %v59
    %v187 = vunpack.c.l.b16 %v60
    %v188 = vunpack.c.l.b16 %v61
    %v189 = vunpack.c.l.b16 %v62
    %v190 = vunpack.c.l.b16 %v63
    %v191 = vunpack.c.l.b16 %v64
    %v192 = vunpack.c.l.b16 %v65
    %v193 = vunpack.c.l.b16 %v66
    %v194 = vunpack.c.l.b16 %v67
    %v195 = vunpack.c.l.b16 %v68
    %v196 = vunpack.c.l.b16 %v69
    %v197 = vunpack.c.l.b16 %v70
    %v198 = vunpack.c.l.b16 %v71
    %v199 = vunpack.c.l.b16 %v72
    %v200 = vunpack.c.l.b16 %v73
    %v201 = vunpack.c.l.b16 %v74
    %v202 = vunpack.c.l.b16 %v75
    %v203 = vunpack.c.l.b16 %v76
    %v204 = vunpack.c.l.b16 %v77
    %v205 = vunpack.c.l.b16 %v78
    %v206 = vunpack.c.l.b16 %v79
    %v207 = vunpack.c.l.b16 %v80
    %v208 = vunpack.c.l.b16 %v81
    %v209 = vunpack.c.l.b16 %v82
    %v210 = vunpack.c.l.b16 %v83
    %v211 = vunpack.c.l.b16 %v84
    %v212 = vunpack.c.l.b16 %v85
    %v213 = vunpack.c.l.b16 %v86
    %v214 = vunpack.c.l.b16 %v87
    %v215 = vunpack.c.l.b16 %v88
    %v216 = vunpack.c.l.b16 %v89
    %v217 = vunpack.c.l.b16 %v90
    %v218 = vunpack.c.l.b16 %v91
    %v219 = vunpack.c.l.b16 %v92
    %v220 = vunpack.c.l.b16 %v93
    %v221 = vunpack.c.l.b16 %v94
    %v222 = vunpack.c.l.b16 %v95
    %v223 = vunpack.c.l.b16 %v96
    %v224 = vunpack.c.l.b16 %v97
    %v225 = vunpack.c.l.b16 %v98
    %v226 = vunpack.c.l.b16 %v99
    %v227 = vunpack.c.l.b16 %v100
    %v228 = vunpack.c.l.b16 %v101
    %v229 = vunpack.c.l.b16 %v102
    %v230 = vunpack.c.l.b16 %v103
    %v231 = vunpack.c.l.b16 %v104
    %v232 = vunpack.c.l.b16 %v105
    %v233 = vunpack.c.l.b16 %v106
    %v234 = vunpack.c.l.b16 %v107
    %v235 = vunpack.c.l.b16 %v108
    %v236 = vpack.c.b16 %v180, %v179
    %v237 = vpack.c.b16 %v182, %v181
    %v238 = vpack.c.b16 %v184, %v183
    %v239 = vpack.c.b16 %v186, %v185
    %v240 = vpack.c.b16 %v188, %v187
    %v241 = vpack.c.b16 %v190, %v189
    %v242 = vpack.c.b16 %v192, %v191
    %v243 = vpack.c.b16 %v194, %v193
    %v244 = vpack.c.b16 %v196, %v195
    %v245 = vpack.c.b16 %v198, %v197
    %v246 = vpack.c.b16 %v200, %v199
    %v247 = vpack.c.b16 %v202, %v201
    %v248 = vpack.c.b16 %v204, %v203
    %v249 = vpack.c.b16 %v206, %v205
    %v250 = vpack.c.b16 %v208, %v207
    %v251 = vpack.c.b16 %v210, %v209
    %v252 = vpack.c.b16 %v212, %v211
    %v253 = vpack.c.b16 %v214, %v213
    %v254 = vpack.c.b16 %v216, %v215
    %v255 = vpack.c.b16 %v218, %v217
    %v256 = vpack.c.b16 %v220, %v219
    %v257 = vpack.c.b16 %v222, %v221
    %v258 = vpack.c.b16 %v224, %v223
    %v259 = vpack.c.b16 %v226, %v225
    %v260 = vpack.c.b16 %v228, %v227
    %v261 = vpack.c.b16 %v230, %v229
    %v262 = vpack.c.b16 %v232, %v231
    %v263 = vpack.c.b16 %v234, %v233
    %v264 = vpack.c.b16 %v235, %v235
    %v271 = vunpack.c.l.b16 %v109
    %v272 = vunpack.c.l.b16 %v110
    %v273 = vunpack.c.l.b16 %v111
    %v274 = vunpack.c.l.b16 %v112
    %v275 = vunpack.c.l.b16 %v113
    %v276 = vunpack.c.l.b16 %v114
    %v277 = vpack.c.b16 %v272, %v271
    %v278 = vpack.c.b16 %v274, %v273
    %v279 = vpack.c.b16 %v276, %v275
    %vm283 = vcmask 392192
    %v285 = vsel %vm283, %v236, 0
    %v288 = vsel %vm283, %v237, 0
    %v291 = vsel %vm283, %v238, 0
    %v294 = vsel %vm283, %v239, 0
    %v297 = vsel %vm283, %v240, 0
    %v300 = vsel %vm283, %v241, 0
    %v303 = vsel %vm283, %v242, 0
    %v306 = vsel %vm283, %v243, 0
    %v309 = vsel %vm283, %v244, 0
    %v312 = vsel %vm283, %v245, 0
    %v315 = vsel %vm283, %v246, 0
    %v318 = vsel %vm283, %v247, 0
    %v321 = vsel %vm283, %v248, 0
    %v324 = vsel %vm283, %v249, 0
    %v327 = vsel %vm283, %v250, 0
    %v330 = vsel %vm283, %v251, 0
    %v333 = vsel %vm283, %v252, 0
    %v336 = vsel %vm283, %v253, 0
    %v339 = vsel %vm283, %v254, 0
    %v342 = vsel %vm283, %v255, 0
    %v345 = vsel %vm283, %v256, 0
    %v348 = vsel %vm283, %v257, 0
    %v351 = vsel %vm283, %v258, 0
    %v354 = vsel %vm283, %v259, 0
    %v357 = vsel %vm283, %v260, 0
    %v360 = vsel %vm283, %v261, 0
    %v363 = vsel %vm283, %v262, 0
    %v366 = vsel %vm283, %v263, 0
    %v369 = vsel %vm283, %v264, 0
    %371 = vmatprep.subr.bf16.mxu0 0
    %372 = vmatpush1.bf16.msra.mxu0 %v277
    %373 = vmatprep.subr.bf16.mxu0 0
    %374 = vmatpush1.bf16.msra.mxu0 %v278
    %375 = vmatprep.subr.bf16.mxu0 0
    %376 = vmatpush1.bf16.msra.mxu0 %v279
    %377 = vmatprep.subr.bf16.mxu0 0
    %378 = vmatpush1.bf16.msra.mxu0 0
    %379 = vmatprep.subr.bf16.mxu0 0
    %380 = vmatpush1.bf16.msra.mxu0 0
    %381 = vmatprep.subr.bf16.mxu0 0
    %382 = vmatpush1.bf16.msra.mxu0 0
    %383 = vmatprep.subr.bf16.mxu0 0
    %384 = vmatpush1.bf16.msra.mxu0 0
    %385 = vmatprep.subr.bf16.mxu0 0
    %386 = vmatpush1.bf16.msra.mxu0 0
    %387 = vmatprep.subr.bf16.mxu0 0
    %388 = vmatpush1.bf16.msra.mxu0 0
    %389 = vmatprep.subr.bf16.mxu0 0
    %390 = vmatpush1.bf16.msra.mxu0 0
    %391 = vmatprep.subr.bf16.mxu0 0
    %392 = vmatpush1.bf16.msra.mxu0 0
    %393 = vmatprep.subr.bf16.mxu0 0
    %394 = vmatpush1.bf16.msra.mxu0 0
    %395 = vmatprep.subr.bf16.mxu0 0
    %396 = vmatpush1.bf16.msra.mxu0 0
    %397 = vmatprep.subr.bf16.mxu0 0
    %398 = vmatpush1.bf16.msra.mxu0 0
    %399 = vmatprep.subr.bf16.mxu0 0
    %400 = vmatpush1.bf16.msra.mxu0 0
    %401 = vmatprep.subr.bf16.mxu0 0
    %402 = vmatpush1.bf16.msra.mxu0 0
    %403 = vmatprep.mubr.bf16.mxu0 0
    %404 = vmatmul.mubr.bf16.gmra.mrb[0].mxu0 %v285
    %v405 = vpop.f32.mrb[0].mxu0
    %v406 = vadd.f32 %v120, %v405
    %v407 = vpop.f32.mrb[0].mxu0
    %v408 = vpop.f32.mrb[0].mxu0
    %v409 = vadd.f32 %v120, %v408
    %v410 = vpop.f32.mrb[0].mxu0
    %411 = vmatprep.mubr.bf16.mxu0 0
    %412 = vmatmul.mubr.bf16.gmra.mrb[0].mxu0 %v288
    %v413 = vpop.f32.mrb[0].mxu0
    %v414 = vadd.f32 %v120, %v413
    %v415 = vpop.f32.mrb[0].mxu0
    %v416 = vpop.f32.mrb[0].mxu0
    %v417 = vadd.f32 %v120, %v416
    %v418 = vpop.f32.mrb[0].mxu0
    %419 = vmatprep.mubr.bf16.mxu0 0
    %420 = vmatmul.mubr.bf16.gmra.mrb[0].mxu0 %v291
    %v421 = vpop.f32.mrb[0].mxu0
    %v422 = vadd.f32 %v120, %v421
    %v423 = vpop.f32.mrb[0].mxu0
    %v424 = vpop.f32.mrb[0].mxu0
    %v425 = vadd.f32 %v120, %v424
    %v426 = vpop.f32.mrb[0].mxu0
    %427 = vmatprep.mubr.bf16.mxu0 0
    %428 = vmatmul.mubr.bf16.gmra.mrb[0].mxu0 %v294
    %v429 = vpop.f32.mrb[0].mxu0
    %v430 = vadd.f32 %v120, %v429
    %v431 = vpop.f32.mrb[0].mxu0
    %v432 = vpop.f32.mrb[0].mxu0
    %v433 = vadd.f32 %v120, %v432
    %v434 = vpop.f32.mrb[0].mxu0
    %435 = vmatprep.mubr.bf16.mxu0 0
    %436 = vmatmul.mubr.bf16.gmra.mrb[0].mxu0 %v297
    %v437 = vpop.f32.mrb[0].mxu0
    %v438 = vadd.f32 %v120, %v437
    %v439 = vpop.f32.mrb[0].mxu0
    %v440 = vpop.f32.mrb[0].mxu0
    %v441 = vadd.f32 %v120, %v440
    %v442 = vpop.f32.mrb[0].mxu0
    %443 = vmatprep.mubr.bf16.mxu0 0
    %444 = vmatmul.mubr.bf16.gmra.mrb[0].mxu0 %v300
    %v445 = vpop.f32.mrb[0].mxu0
    %v446 = vadd.f32 %v120, %v445
    %v447 = vpop.f32.mrb[0].mxu0
    %v448 = vpop.f32.mrb[0].mxu0
    %v449 = vadd.f32 %v120, %v448
    %v450 = vpop.f32.mrb[0].mxu0
    %451 = vmatprep.mubr.bf16.mxu0 0
    %452 = vmatmul.mubr.bf16.gmra.mrb[0].mxu0 %v303
    %v453 = vpop.f32.mrb[0].mxu0
    %v454 = vadd.f32 %v120, %v453
    %v455 = vpop.f32.mrb[0].mxu0
    %v456 = vpop.f32.mrb[0].mxu0
    %v457 = vadd.f32 %v120, %v456
    %v458 = vpop.f32.mrb[0].mxu0
    %459 = vmatprep.mubr.bf16.mxu0 0
    %460 = vmatmul.mubr.bf16.gmra.mrb[0].mxu0 %v306
    %v461 = vpop.f32.mrb[0].mxu0
    %v462 = vadd.f32 %v120, %v461
    %v463 = vpop.f32.mrb[0].mxu0
    %v464 = vpop.f32.mrb[0].mxu0
    %v465 = vadd.f32 %v120, %v464
    %v466 = vpop.f32.mrb[0].mxu0
    %467 = vmatprep.mubr.bf16.mxu0 0
    %468 = vmatmul.mubr.bf16.gmra.mrb[0].mxu0 %v309
    %v469 = vpop.f32.mrb[0].mxu0
    %v470 = vadd.f32 %v120, %v469
    %v471 = vpop.f32.mrb[0].mxu0
    %v472 = vpop.f32.mrb[0].mxu0
    %v473 = vadd.f32 %v120, %v472
    %v474 = vpop.f32.mrb[0].mxu0
    %475 = vmatprep.mubr.bf16.mxu0 0
    %476 = vmatmul.mubr.bf16.gmra.mrb[0].mxu0 %v312
    %v477 = vpop.f32.mrb[0].mxu0
    %v478 = vadd.f32 %v120, %v477
    %v479 = vpop.f32.mrb[0].mxu0
    %v480 = vpop.f32.mrb[0].mxu0
    %v481 = vadd.f32 %v120, %v480
    %v482 = vpop.f32.mrb[0].mxu0
    %483 = vmatprep.mubr.bf16.mxu0 0
    %484 = vmatmul.mubr.bf16.gmra.mrb[0].mxu0 %v315
    %v485 = vpop.f32.mrb[0].mxu0
    %v486 = vadd.f32 %v120, %v485
    %v487 = vpop.f32.mrb[0].mxu0
    %v488 = vpop.f32.mrb[0].mxu0
    %v489 = vadd.f32 %v120, %v488
    %v490 = vpop.f32.mrb[0].mxu0
    %491 = vmatprep.mubr.bf16.mxu0 0
    %492 = vmatmul.mubr.bf16.gmra.mrb[0].mxu0 %v318
    %v493 = vpop.f32.mrb[0].mxu0
    %v494 = vadd.f32 %v120, %v493
    %v495 = vpop.f32.mrb[0].mxu0
    %v496 = vpop.f32.mrb[0].mxu0
    %v497 = vadd.f32 %v120, %v496
    %v498 = vpop.f32.mrb[0].mxu0
    %499 = vmatprep.mubr.bf16.mxu0 0
    %500 = vmatmul.mubr.bf16.gmra.mrb[0].mxu0 %v321
    %v501 = vpop.f32.mrb[0].mxu0
    %v502 = vadd.f32 %v120, %v501
    %v503 = vpop.f32.mrb[0].mxu0
    %v504 = vpop.f32.mrb[0].mxu0
    %v505 = vadd.f32 %v120, %v504
    %v506 = vpop.f32.mrb[0].mxu0
    %507 = vmatprep.mubr.bf16.mxu0 0
    %508 = vmatmul.mubr.bf16.gmra.mrb[0].mxu0 %v324
    %v509 = vpop.f32.mrb[0].mxu0
    %v510 = vadd.f32 %v120, %v509
    %v511 = vpop.f32.mrb[0].mxu0
    %v512 = vpop.f32.mrb[0].mxu0
    %v513 = vadd.f32 %v120, %v512
    %v514 = vpop.f32.mrb[0].mxu0
    %515 = vmatprep.mubr.bf16.mxu0 0
    %516 = vmatmul.mubr.bf16.gmra.mrb[0].mxu0 %v327
    %v517 = vpop.f32.mrb[0].mxu0
    %v518 = vadd.f32 %v120, %v517
    %v519 = vpop.f32.mrb[0].mxu0
    %v520 = vpop.f32.mrb[0].mxu0
    %v521 = vadd.f32 %v120, %v520
    %v522 = vpop.f32.mrb[0].mxu0
    %523 = vmatprep.mubr.bf16.mxu0 0
    %524 = vmatmul.mubr.bf16.gmra.mrb[0].mxu0 %v330
    %v525 = vpop.f32.mrb[0].mxu0
    %v526 = vadd.f32 %v120, %v525
    %v527 = vpop.f32.mrb[0].mxu0
    %v528 = vpop.f32.mrb[0].mxu0
    %v529 = vadd.f32 %v120, %v528
    %v530 = vpop.f32.mrb[0].mxu0
    %531 = vmatprep.mubr.bf16.mxu0 0
    %532 = vmatmul.mubr.bf16.gmra.mrb[0].mxu0 %v333
    %v533 = vpop.f32.mrb[0].mxu0
    %v534 = vadd.f32 %v120, %v533
    %v535 = vpop.f32.mrb[0].mxu0
    %v536 = vpop.f32.mrb[0].mxu0
    %v537 = vadd.f32 %v120, %v536
    %v538 = vpop.f32.mrb[0].mxu0
    %539 = vmatprep.mubr.bf16.mxu0 0
    %540 = vmatmul.mubr.bf16.gmra.mrb[0].mxu0 %v336
    %v541 = vpop.f32.mrb[0].mxu0
    %v542 = vadd.f32 %v120, %v541
    %v543 = vpop.f32.mrb[0].mxu0
    %v544 = vpop.f32.mrb[0].mxu0
    %v545 = vadd.f32 %v120, %v544
    %v546 = vpop.f32.mrb[0].mxu0
    %547 = vmatprep.mubr.bf16.mxu0 0
    %548 = vmatmul.mubr.bf16.gmra.mrb[0].mxu0 %v339
    %v549 = vpop.f32.mrb[0].mxu0
    %v550 = vadd.f32 %v120, %v549
    %v551 = vpop.f32.mrb[0].mxu0
    %v552 = vpop.f32.mrb[0].mxu0
    %v553 = vadd.f32 %v120, %v552
    %v554 = vpop.f32.mrb[0].mxu0
    %555 = vmatprep.mubr.bf16.mxu0 0
    %556 = vmatmul.mubr.bf16.gmra.mrb[0].mxu0 %v342
    %v557 = vpop.f32.mrb[0].mxu0
    %v558 = vadd.f32 %v120, %v557
    %v559 = vpop.f32.mrb[0].mxu0
    %v560 = vpop.f32.mrb[0].mxu0
    %v561 = vadd.f32 %v120, %v560
    %v562 = vpop.f32.mrb[0].mxu0
    %563 = vmatprep.mubr.bf16.mxu0 0
    %564 = vmatmul.mubr.bf16.gmra.mrb[0].mxu0 %v345
    %v565 = vpop.f32.mrb[0].mxu0
    %v566 = vadd.f32 %v120, %v565
    %v567 = vpop.f32.mrb[0].mxu0
    %v568 = vpop.f32.mrb[0].mxu0
    %v569 = vadd.f32 %v120, %v568
    %v570 = vpop.f32.mrb[0].mxu0
    %571 = vmatprep.mubr.bf16.mxu0 0
    %572 = vmatmul.mubr.bf16.gmra.mrb[0].mxu0 %v348
    %v573 = vpop.f32.mrb[0].mxu0
    %v574 = vadd.f32 %v120, %v573
    %v575 = vpop.f32.mrb[0].mxu0
    %v576 = vpop.f32.mrb[0].mxu0
    %v577 = vadd.f32 %v120, %v576
    %v578 = vpop.f32.mrb[0].mxu0
    %579 = vmatprep.mubr.bf16.mxu0 0
    %580 = vmatmul.mubr.bf16.gmra.mrb[0].mxu0 %v351
    %v581 = vpop.f32.mrb[0].mxu0
    %v582 = vadd.f32 %v120, %v581
    %v583 = vpop.f32.mrb[0].mxu0
    %v584 = vpop.f32.mrb[0].mxu0
    %v585 = vadd.f32 %v120, %v584
    %v586 = vpop.f32.mrb[0].mxu0
    %587 = vmatprep.mubr.bf16.mxu0 0
    %588 = vmatmul.mubr.bf16.gmra.mrb[0].mxu0 %v354
    %v589 = vpop.f32.mrb[0].mxu0
    %v590 = vadd.f32 %v120, %v589
    %v591 = vpop.f32.mrb[0].mxu0
    %v592 = vpop.f32.mrb[0].mxu0
    %v593 = vadd.f32 %v120, %v592
    %v594 = vpop.f32.mrb[0].mxu0
    %595 = vmatprep.mubr.bf16.mxu0 0
    %596 = vmatmul.mubr.bf16.gmra.mrb[0].mxu0 %v357
    %v597 = vpop.f32.mrb[0].mxu0
    %v598 = vadd.f32 %v120, %v597
    %v599 = vpop.f32.mrb[0].mxu0
    %v600 = vpop.f32.mrb[0].mxu0
    %v601 = vadd.f32 %v120, %v600
    %v602 = vpop.f32.mrb[0].mxu0
    %603 = vmatprep.mubr.bf16.mxu0 0
    %604 = vmatmul.mubr.bf16.gmra.mrb[0].mxu0 %v360
    %v605 = vpop.f32.mrb[0].mxu0
    %v606 = vadd.f32 %v120, %v605
    %v607 = vpop.f32.mrb[0].mxu0
    %v608 = vpop.f32.mrb[0].mxu0
    %v609 = vadd.f32 %v120, %v608
    %v610 = vpop.f32.mrb[0].mxu0
    %611 = vmatprep.mubr.bf16.mxu0 0
    %612 = vmatmul.mubr.bf16.gmra.mrb[0].mxu0 %v363
    %v613 = vpop.f32.mrb[0].mxu0
    %v614 = vadd.f32 %v120, %v613
    %v615 = vpop.f32.mrb[0].mxu0
    %v616 = vpop.f32.mrb[0].mxu0
    %v617 = vadd.f32 %v120, %v616
    %v618 = vpop.f32.mrb[0].mxu0
    %619 = vmatprep.mubr.bf16.mxu0 0
    %620 = vmatmul.mubr.bf16.gmra.mrb[0].mxu0 %v366
    %v621 = vpop.f32.mrb[0].mxu0
    %v622 = vadd.f32 %v120, %v621
    %v623 = vpop.f32.mrb[0].mxu0
    %v624 = vpop.f32.mrb[0].mxu0
    %v625 = vadd.f32 %v120, %v624
    %v626 = vpop.f32.mrb[0].mxu0
    %627 = vmatprep.mubr.bf16.mxu0 0
    %628 = vmatmul.mubr.bf16.gmra.mrb[0].mxu0 %v369
    %v629 = vpop.f32.mrb[0].mxu0
    %v630 = vadd.f32 %v120, %v629
    %v631 = vpop.f32.mrb[0].mxu0
    %v632 = vpop.f32.mrb[0].mxu0
    %v633 = vpop.f32.mrb[0].mxu0
    %634 = vdwg.mxu0
    %v635 = vmax.f32 %v406, 0.0
    %v636 = vmax.f32 %v409, 0.0
    %v637 = vmax.f32 %v414, 0.0
    %v638 = vmax.f32 %v417, 0.0
    %v639 = vmax.f32 %v422, 0.0
    %v640 = vmax.f32 %v425, 0.0
    %v641 = vmax.f32 %v430, 0.0
    %v642 = vmax.f32 %v433, 0.0
    %v643 = vmax.f32 %v438, 0.0
    %v644 = vmax.f32 %v441, 0.0
    %v645 = vmax.f32 %v446, 0.0
    %v646 = vmax.f32 %v449, 0.0
    %v647 = vmax.f32 %v454, 0.0
    %v648 = vmax.f32 %v457, 0.0
    %v649 = vmax.f32 %v462, 0.0
    %v650 = vmax.f32 %v465, 0.0
    %v651 = vmax.f32 %v470, 0.0
    %v652 = vmax.f32 %v473, 0.0
    %v653 = vmax.f32 %v478, 0.0
    %v654 = vmax.f32 %v481, 0.0
    %v655 = vmax.f32 %v486, 0.0
    %v656 = vmax.f32 %v489, 0.0
    %v657 = vmax.f32 %v494, 0.0
    %v658 = vmax.f32 %v497, 0.0
    %v659 = vmax.f32 %v502, 0.0
    %v660 = vmax.f32 %v505, 0.0
    %v661 = vmax.f32 %v510, 0.0
    %v662 = vmax.f32 %v513, 0.0
    %v663 = vmax.f32 %v518, 0.0
    %v664 = vmax.f32 %v521, 0.0
    %v665 = vmax.f32 %v526, 0.0
    %v666 = vmax.f32 %v529, 0.0
    %v667 = vmax.f32 %v534, 0.0
    %v668 = vmax.f32 %v537, 0.0
    %v669 = vmax.f32 %v542, 0.0
    %v670 = vmax.f32 %v545, 0.0
    %v671 = vmax.f32 %v550, 0.0
    %v672 = vmax.f32 %v553, 0.0
    %v673 = vmax.f32 %v558, 0.0
    %v674 = vmax.f32 %v561, 0.0
    %v675 = vmax.f32 %v566, 0.0
    %v676 = vmax.f32 %v569, 0.0
    %v677 = vmax.f32 %v574, 0.0
    %v678 = vmax.f32 %v577, 0.0
    %v679 = vmax.f32 %v582, 0.0
    %v680 = vmax.f32 %v585, 0.0
    %v681 = vmax.f32 %v590, 0.0
    %v682 = vmax.f32 %v593, 0.0
    %v683 = vmax.f32 %v598, 0.0
    %v684 = vmax.f32 %v601, 0.0
    %v685 = vmax.f32 %v606, 0.0
    %v686 = vmax.f32 %v609, 0.0
    %v687 = vmax.f32 %v614, 0.0
    %v688 = vmax.f32 %v617, 0.0
    %v689 = vmax.f32 %v622, 0.0
    %v690 = vmax.f32 %v625, 0.0
    %v691 = vmax.f32 %v630, 0.0
    %v692 = vpack.c.bf16 %v636, %v635
    %v693 = vpack.c.bf16 %v638, %v637
    %v694 = vpack.c.bf16 %v640, %v639
    %v695 = vpack.c.bf16 %v642, %v641
    %v696 = vpack.c.bf16 %v644, %v643
    %v697 = vpack.c.bf16 %v646, %v645
    %v698 = vpack.c.bf16 %v648, %v647
    %v699 = vpack.c.bf16 %v650, %v649
    %v700 = vpack.c.bf16 %v652, %v651
    %v701 = vpack.c.bf16 %v654, %v653
    %v702 = vpack.c.bf16 %v656, %v655
    %v703 = vpack.c.bf16 %v658, %v657
    %v704 = vpack.c.bf16 %v660, %v659
    %v705 = vpack.c.bf16 %v662, %v661
    %v706 = vpack.c.bf16 %v664, %v663
    %v707 = vpack.c.bf16 %v666, %v665
    %v708 = vpack.c.bf16 %v668, %v667
    %v709 = vpack.c.bf16 %v670, %v669
    %v710 = vpack.c.bf16 %v672, %v671
    %v711 = vpack.c.bf16 %v674, %v673
    %v712 = vpack.c.bf16 %v676, %v675
    %v713 = vpack.c.bf16 %v678, %v677
    %v714 = vpack.c.bf16 %v680, %v679
    %v715 = vpack.c.bf16 %v682, %v681
    %v716 = vpack.c.bf16 %v684, %v683
    %v717 = vpack.c.bf16 %v686, %v685
    %v718 = vpack.c.bf16 %v688, %v687
    %v719 = vpack.c.bf16 %v690, %v689
    %v720 = vpack.c.bf16 %v691, %v691
    %v721 = vld [vmem:[%s3] sm:$0xff]
    %v722 = vld [vmem:[%s3 + $0x8] sm:$0xff]
    %v723 = vld [vmem:[%s3 + $0x10] sm:$0xff]
    %v724 = vld [vmem:[%s3 + $0x18] sm:$0xff]
    %v725 = vld [vmem:[%s3 + $0x20] sm:$0xff]
    %v726 = vld [vmem:[%s3 + $0x28] sm:$0xff]
    %v727 = vld [vmem:[%s3 + $0x30] sm:$0xff]
    %v728 = vld [vmem:[%s3 + $0x38] sm:$0xff]
    %v729 = vld [vmem:[%s3 + $0x40] sm:$0xff]
    %v730 = vld [vmem:[%s3 + $0x48] sm:$0xff]
    %v731 = vld [vmem:[%s3 + $0x50] sm:$0xff]
    %v732 = vld [vmem:[%s3 + $0x58] sm:$0xff]
    %v733 = vld [vmem:[%s3 + $0x60] sm:$0xff]
    %v734 = vld [vmem:[%s3 + $0x68] sm:$0xff]
    %v735 = vld [vmem:[%s3 + $0x70] sm:$0xff]
    %v736 = vld [vmem:[%s3 + $0x78] sm:$0xff]
    %v737 = vld [vmem:[%s3 + $0x80] sm:$0xff]
    %v738 = vld [vmem:[%s3 + $0x88] sm:$0xff]
    %v739 = vld [vmem:[%s3 + $0x90] sm:$0xff]
    %v740 = vld [vmem:[%s3 + $0x98] sm:$0xff]
    %v741 = vld [vmem:[%s3 + $0xa0] sm:$0xff]
    %v742 = vld [vmem:[%s3 + $0xa8] sm:$0xff]
    %v743 = vld [vmem:[%s3 + $0xb0] sm:$0xff]
    %v744 = vld [vmem:[%s3 + $0xb8] sm:$0xff]
    %v745 = vld [vmem:[%s3 + $0xc0] sm:$0xff]
    %v746 = vld [vmem:[%s3 + $0xc8] sm:$0xff]
    %v747 = vld [vmem:[%s3 + $0xd0] sm:$0xff]
    %v748 = vld [vmem:[%s3 + $0xd8] sm:$0xff]
    %v749 = vld [vmem:[%s3 + $0xe0] sm:$0xff]
    %v750 = vld [vmem:[%s3 + $0xe8] sm:$0xff]
    %v751 = vld [vmem:[%s3 + $0xf0] sm:$0xff]
    %v752 = vld [vmem:[%s3 + $0xf8] sm:$0xff]
    %v753 = vld [vmem:[%s3 + $0x100] sm:$0xff]
    %v754 = vld [vmem:[%s3 + $0x108] sm:$0xff]
    %v755 = vld [vmem:[%s3 + $0x110] sm:$0xff]
    %v756 = vld [vmem:[%s3 + $0x118] sm:$0xff]
    %v757 = vld [vmem:[%s3 + $0x120] sm:$0xff]
    %v758 = vld [vmem:[%s3 + $0x128] sm:$0xff]
    %v759 = vld [vmem:[%s3 + $0x130] sm:$0xff]
    %v760 = vld [vmem:[%s3 + $0x138] sm:$0xff]
    %v761 = vld [vmem:[%s3 + $0x140] sm:$0xff]
    %v762 = vld [vmem:[%s3 + $0x148] sm:$0xff]
    %v763 = vld [vmem:[%s3 + $0x150] sm:$0xff]
    %v764 = vld [vmem:[%s3 + $0x158] sm:$0xff]
    %v765 = vld [vmem:[%s3 + $0x160] sm:$0xff]
    %v766 = vld [vmem:[%s3 + $0x168] sm:$0xff]
    %v767 = vld [vmem:[%s3 + $0x170] sm:$0xff]
    %v768 = vld [vmem:[%s3 + $0x178] sm:$0xff]
    %v769 = vld [vmem:[%s3 + $0x180] sm:$0xff]
    %v770 = vld [vmem:[%s3 + $0x188] sm:$0xff]
    %v771 = vld [vmem:[%s3 + $0x190] sm:$0xff]
    %v772 = vld [vmem:[%s3 + $0x198] sm:$0xff]
    %v773 = vld [vmem:[%s3 + $0x1a0] sm:$0xff]
    %v774 = vld [vmem:[%s3 + $0x1a8] sm:$0xff]
    %v775 = vld [vmem:[%s3 + $0x1b0] sm:$0xff]
    %v776 = vld [vmem:[%s3 + $0x1b8] sm:$0xff]
    %v777 = vld [vmem:[%s3 + $0x1c0] sm:$0xff]
    %v778 = vld [vmem:[%s3 + $0x1c8] sm:$0xff]
    %v779 = vld [vmem:[%s3 + $0x1d0] sm:$0xff]
    %v780 = vld [vmem:[%s3 + $0x1d8] sm:$0xff]
    %v781 = vld [vmem:[%s3 + $0x1e0] sm:$0xff]
    %v782 = vld [vmem:[%s3 + $0x1e8] sm:$0xff]
    %v783 = vld [vmem:[%s3 + $0x1f0] sm:$0xff]
    %v784 = vld [vmem:[%s3 + $0x1f8] sm:$0xff]
    %v785 = vld [vmem:[%s3 + $0x200] sm:$0xff]
    %v786 = vld [vmem:[%s3 + $0x208] sm:$0xff]
    %v787 = vld [vmem:[%s3 + $0x210] sm:$0xff]
    %v788 = vld [vmem:[%s3 + $0x218] sm:$0xff]
    %v789 = vld [vmem:[%s3 + $0x220] sm:$0xff]
    %v790 = vld [vmem:[%s3 + $0x228] sm:$0xff]
    %v791 = vld [vmem:[%s3 + $0x230] sm:$0xff]
    %v792 = vld [vmem:[%s3 + $0x238] sm:$0xff]
    %v793 = vld [vmem:[%s3 + $0x240] sm:$0xff]
    %v794 = vld [vmem:[%s3 + $0x248] sm:$0xff]
    %v795 = vld [vmem:[%s3 + $0x250] sm:$0xff]
    %v796 = vld [vmem:[%s3 + $0x258] sm:$0xff]
    %v797 = vld [vmem:[%s3 + $0x260] sm:$0xff]
    %v798 = vld [vmem:[%s3 + $0x268] sm:$0xff]
    %v799 = vld [vmem:[%s3 + $0x270] sm:$0xff]
    %v800 = vld [vmem:[%s3 + $0x278] sm:$0xff]
    %v801 = vld [vmem:[%s3 + $0x280] sm:$0xff]
    %v802 = vld [vmem:[%s3 + $0x288] sm:$0xff]
    %v803 = vld [vmem:[%s3 + $0x290] sm:$0xff]
    %v804 = vld [vmem:[%s3 + $0x298] sm:$0xff]
    %v805 = vld [vmem:[%s3 + $0x2a0] sm:$0xff]
    %v806 = vld [vmem:[%s3 + $0x2a8] sm:$0xff]
    %v807 = vld [vmem:[%s3 + $0x2b0] sm:$0xff]
    %v808 = vld [vmem:[%s3 + $0x2b8] sm:$0xff]
    %v809 = vld [vmem:[%s3 + $0x2c0] sm:$0xff]
    %v810 = vld [vmem:[%s3 + $0x2c8] sm:$0xff]
    %v811 = vld [vmem:[%s3 + $0x2d0] sm:$0xff]
    %v812 = vld [vmem:[%s3 + $0x2d8] sm:$0xff]
    %v813 = vld [vmem:[%s3 + $0x2e0] sm:$0xff]
    %v814 = vld [vmem:[%s3 + $0x2e8] sm:$0xff]
    %v815 = vld [vmem:[%s3 + $0x2f0] sm:$0xff]
    %v816 = vld [vmem:[%s3 + $0x2f8] sm:$0xff]
    %v817 = vld [vmem:[%s3 + $0x300] sm:$0xff]
    %v818 = vld [vmem:[%s3 + $0x308] sm:$0xff]
    %v917 = vunpack.c.l.b16 %v721
    %v918 = vunpack.c.h.b16 %v721
    %v919 = vunpack.c.l.b16 %v722
    %v920 = vunpack.c.h.b16 %v722
    %v921 = vunpack.c.l.b16 %v723
    %v922 = vunpack.c.h.b16 %v723
    %v923 = vunpack.c.l.b16 %v724
    %v924 = vunpack.c.h.b16 %v724
    %v925 = vunpack.c.l.b16 %v725
    %v926 = vunpack.c.h.b16 %v725
    %v927 = vunpack.c.l.b16 %v726
    %v928 = vunpack.c.h.b16 %v726
    %v929 = vunpack.c.l.b16 %v727
    %v930 = vunpack.c.h.b16 %v727
    %v931 = vunpack.c.l.b16 %v728
    %v932 = vunpack.c.h.b16 %v728
    %v933 = vunpack.c.l.b16 %v729
    %v934 = vunpack.c.h.b16 %v729
    %v935 = vunpack.c.l.b16 %v730
    %v936 = vunpack.c.h.b16 %v730
    %v937 = vunpack.c.l.b16 %v731
    %v938 = vunpack.c.h.b16 %v731
    %v939 = vunpack.c.l.b16 %v732
    %v940 = vunpack.c.h.b16 %v732
    %v941 = vunpack.c.l.b16 %v733
    %v942 = vunpack.c.h.b16 %v733
    %v943 = vunpack.c.l.b16 %v734
    %v944 = vunpack.c.h.b16 %v734
    %v945 = vunpack.c.l.b16 %v735
    %v946 = vunpack.c.h.b16 %v735
    %v947 = vunpack.c.l.b16 %v736
    %v948 = vunpack.c.h.b16 %v736
    %v949 = vunpack.c.l.b16 %v737
    %v950 = vunpack.c.h.b16 %v737
    %v951 = vunpack.c.l.b16 %v738
    %v952 = vunpack.c.h.b16 %v738
    %v953 = vunpack.c.l.b16 %v739
    %v954 = vunpack.c.h.b16 %v739
    %v955 = vunpack.c.l.b16 %v740
    %v956 = vunpack.c.h.b16 %v740
    %v957 = vunpack.c.l.b16 %v741
    %v958 = vunpack.c.h.b16 %v741
    %v959 = vunpack.c.l.b16 %v742
    %v960 = vunpack.c.h.b16 %v742
    %v961 = vunpack.c.l.b16 %v743
    %v962 = vunpack.c.h.b16 %v743
    %v963 = vunpack.c.l.b16 %v744
    %v964 = vunpack.c.h.b16 %v744
    %v965 = vunpack.c.l.b16 %v745
    %v966 = vunpack.c.h.b16 %v745
    %v967 = vunpack.c.l.b16 %v746
    %v968 = vunpack.c.h.b16 %v746
    %v969 = vunpack.c.l.b16 %v747
    %v970 = vunpack.c.h.b16 %v747
    %v971 = vunpack.c.l.b16 %v748
    %v972 = vunpack.c.h.b16 %v748
    %v973 = vunpack.c.l.b16 %v749
    %v974 = vunpack.c.h.b16 %v749
    %v975 = vunpack.c.l.b16 %v750
    %v976 = vunpack.c.h.b16 %v750
    %v977 = vunpack.c.l.b16 %v751
    %v978 = vunpack.c.h.b16 %v751
    %v979 = vunpack.c.l.b16 %v752
    %v980 = vunpack.c.h.b16 %v752
    %v981 = vunpack.c.l.b16 %v753
    %v982 = vunpack.c.h.b16 %v753
    %v983 = vunpack.c.l.b16 %v754
    %v984 = vunpack.c.h.b16 %v754
    %v985 = vunpack.c.l.b16 %v755
    %v986 = vunpack.c.h.b16 %v755
    %v987 = vunpack.c.l.b16 %v756
    %v988 = vunpack.c.h.b16 %v756
    %v989 = vunpack.c.l.b16 %v757
    %v990 = vunpack.c.h.b16 %v757
    %v991 = vunpack.c.l.b16 %v758
    %v992 = vunpack.c.h.b16 %v758
    %v993 = vunpack.c.l.b16 %v759
    %v994 = vunpack.c.h.b16 %v759
    %v995 = vunpack.c.l.b16 %v760
    %v996 = vunpack.c.h.b16 %v760
    %v997 = vunpack.c.l.b16 %v761
    %v998 = vunpack.c.h.b16 %v761
    %v999 = vunpack.c.l.b16 %v762
    %v1000 = vunpack.c.h.b16 %v762
    %v1001 = vunpack.c.l.b16 %v763
    %v1002 = vunpack.c.h.b16 %v763
    %v1003 = vunpack.c.l.b16 %v764
    %v1004 = vunpack.c.h.b16 %v764
    %v1005 = vunpack.c.l.b16 %v765
    %v1006 = vunpack.c.h.b16 %v765
    %v1007 = vunpack.c.l.b16 %v766
    %v1008 = vunpack.c.h.b16 %v766
    %v1009 = vunpack.c.l.b16 %v767
    %v1010 = vunpack.c.h.b16 %v767
    %v1011 = vunpack.c.l.b16 %v768
    %v1012 = vunpack.c.h.b16 %v768
    %v1013 = vunpack.c.l.b16 %v769
    %v1014 = vunpack.c.h.b16 %v769
    %v1015 = vunpack.c.l.b16 %v770
    %v1016 = vunpack.c.h.b16 %v770
    %v1017 = vunpack.c.l.b16 %v771
    %v1018 = vunpack.c.h.b16 %v771
    %v1019 = vunpack.c.l.b16 %v772
    %v1020 = vunpack.c.h.b16 %v772
    %v1021 = vunpack.c.l.b16 %v773
    %v1022 = vunpack.c.h.b16 %v773
    %v1023 = vunpack.c.l.b16 %v774
    %v1024 = vunpack.c.h.b16 %v774
    %v1025 = vunpack.c.l.b16 %v775
    %v1026 = vunpack.c.h.b16 %v775
    %v1027 = vunpack.c.l.b16 %v776
    %v1028 = vunpack.c.h.b16 %v776
    %v1029 = vunpack.c.l.b16 %v777
    %v1030 = vunpack.c.h.b16 %v777
    %v1031 = vunpack.c.l.b16 %v778
    %v1032 = vunpack.c.h.b16 %v778
    %v1033 = vunpack.c.l.b16 %v779
    %v1034 = vunpack.c.h.b16 %v779
    %v1035 = vunpack.c.l.b16 %v780
    %v1036 = vunpack.c.h.b16 %v780
    %v1037 = vunpack.c.l.b16 %v781
    %v1038 = vunpack.c.h.b16 %v781
    %v1039 = vunpack.c.l.b16 %v782
    %v1040 = vunpack.c.h.b16 %v782
    %v1041 = vunpack.c.l.b16 %v783
    %v1042 = vunpack.c.h.b16 %v783
    %v1043 = vunpack.c.l.b16 %v784
    %v1044 = vunpack.c.h.b16 %v784
    %v1045 = vunpack.c.l.b16 %v785
    %v1046 = vunpack.c.h.b16 %v785
    %v1047 = vunpack.c.l.b16 %v786
    %v1048 = vunpack.c.h.b16 %v786
    %v1049 = vunpack.c.l.b16 %v787
    %v1050 = vunpack.c.h.b16 %v787
    %v1051 = vunpack.c.l.b16 %v788
    %v1052 = vunpack.c.h.b16 %v788
    %v1053 = vunpack.c.l.b16 %v789
    %v1054 = vunpack.c.h.b16 %v789
    %v1055 = vunpack.c.l.b16 %v790
    %v1056 = vunpack.c.h.b16 %v790
    %v1057 = vunpack.c.l.b16 %v791
    %v1058 = vunpack.c.h.b16 %v791
    %v1059 = vunpack.c.l.b16 %v792
    %v1060 = vunpack.c.h.b16 %v792
    %v1061 = vunpack.c.l.b16 %v793
    %v1062 = vunpack.c.h.b16 %v793
    %v1063 = vunpack.c.l.b16 %v794
    %v1064 = vunpack.c.h.b16 %v794
    %v1065 = vunpack.c.l.b16 %v795
    %v1066 = vunpack.c.h.b16 %v795
    %v1067 = vunpack.c.l.b16 %v796
    %v1068 = vunpack.c.h.b16 %v796
    %v1069 = vunpack.c.l.b16 %v797
    %v1070 = vunpack.c.h.b16 %v797
    %v1071 = vunpack.c.l.b16 %v798
    %v1072 = vunpack.c.h.b16 %v798
    %v1073 = vunpack.c.l.b16 %v799
    %v1074 = vunpack.c.h.b16 %v799
    %v1075 = vunpack.c.l.b16 %v800
    %v1076 = vunpack.c.h.b16 %v800
    %v1077 = vunpack.c.l.b16 %v801
    %v1078 = vunpack.c.h.b16 %v801
    %v1079 = vunpack.c.l.b16 %v802
    %v1080 = vunpack.c.h.b16 %v802
    %v1081 = vunpack.c.l.b16 %v803
    %v1082 = vunpack.c.h.b16 %v803
    %v1083 = vunpack.c.l.b16 %v804
    %v1084 = vunpack.c.h.b16 %v804
    %v1085 = vunpack.c.l.b16 %v805
    %v1086 = vunpack.c.h.b16 %v805
    %v1087 = vunpack.c.l.b16 %v806
    %v1088 = vunpack.c.h.b16 %v806
    %v1089 = vunpack.c.l.b16 %v807
    %v1090 = vunpack.c.h.b16 %v807
    %v1091 = vunpack.c.l.b16 %v808
    %v1092 = vunpack.c.h.b16 %v808
    %v1093 = vunpack.c.l.b16 %v809
    %v1094 = vunpack.c.h.b16 %v809
    %v1095 = vunpack.c.l.b16 %v810
    %v1096 = vunpack.c.h.b16 %v810
    %v1097 = vunpack.c.l.b16 %v811
    %v1098 = vunpack.c.h.b16 %v811
    %v1099 = vunpack.c.l.b16 %v812
    %v1100 = vunpack.c.h.b16 %v812
    %v1101 = vunpack.c.l.b16 %v813
    %v1102 = vunpack.c.h.b16 %v813
    %v1103 = vunpack.c.l.b16 %v814
    %v1104 = vunpack.c.h.b16 %v814
    %v1105 = vunpack.c.l.b16 %v815
    %v1106 = vunpack.c.h.b16 %v815
    %v1107 = vunpack.c.l.b16 %v816
    %v1108 = vunpack.c.h.b16 %v816
    %v1109 = vunpack.c.l.b16 %v817
    %v1110 = vunpack.c.h.b16 %v817
    %v1111 = vunpack.c.l.b16 %v818
    %v1112 = vunpack.c.h.b16 %v818
    %v1113 = vpack.c.b16 %v919, %v917
    %v1114 = vpack.c.b16 %v920, %v918
    %v1115 = vpack.c.b16 %v923, %v921
    %v1116 = vpack.c.b16 %v924, %v922
    %v1117 = vpack.c.b16 %v927, %v925
    %v1118 = vpack.c.b16 %v928, %v926
    %v1119 = vpack.c.b16 %v931, %v929
    %v1120 = vpack.c.b16 %v932, %v930
    %v1121 = vpack.c.b16 %v935, %v933
    %v1122 = vpack.c.b16 %v936, %v934
    %v1123 = vpack.c.b16 %v939, %v937
    %v1124 = vpack.c.b16 %v940, %v938
    %v1125 = vpack.c.b16 %v943, %v941
    %v1126 = vpack.c.b16 %v944, %v942
    %v1127 = vpack.c.b16 %v947, %v945
    %v1128 = vpack.c.b16 %v948, %v946
    %v1129 = vpack.c.b16 %v951, %v949
    %v1130 = vpack.c.b16 %v952, %v950
    %v1131 = vpack.c.b16 %v955, %v953
    %v1132 = vpack.c.b16 %v956, %v954
    %v1133 = vpack.c.b16 %v959, %v957
    %v1134 = vpack.c.b16 %v960, %v958
    %v1135 = vpack.c.b16 %v963, %v961
    %v1136 = vpack.c.b16 %v964, %v962
    %v1137 = vpack.c.b16 %v967, %v965
    %v1138 = vpack.c.b16 %v968, %v966
    %v1139 = vpack.c.b16 %v971, %v969
    %v1140 = vpack.c.b16 %v972, %v970
    %v1141 = vpack.c.b16 %v975, %v973
    %v1142 = vpack.c.b16 %v976, %v974
    %v1143 = vpack.c.b16 %v979, %v977
    %v1144 = vpack.c.b16 %v980, %v978
    %v1145 = vpack.c.b16 %v983, %v981
    %v1146 = vpack.c.b16 %v984, %v982
    %v1147 = vpack.c.b16 %v987, %v985
    %v1148 = vpack.c.b16 %v988, %v986
    %v1149 = vpack.c.b16 %v991, %v989
    %v1150 = vpack.c.b16 %v992, %v990
    %v1151 = vpack.c.b16 %v995, %v993
    %v1152 = vpack.c.b16 %v996, %v994
    %v1153 = vpack.c.b16 %v999, %v997
    %v1154 = vpack.c.b16 %v1000, %v998
    %v1155 = vpack.c.b16 %v1003, %v1001
    %v1156 = vpack.c.b16 %v1004, %v1002
    %v1157 = vpack.c.b16 %v1007, %v1005
    %v1158 = vpack.c.b16 %v1008, %v1006
    %v1159 = vpack.c.b16 %v1011, %v1009
    %v1160 = vpack.c.b16 %v1012, %v1010
    %v1161 = vpack.c.b16 %v1015, %v1013
    %v1162 = vpack.c.b16 %v1016, %v1014
    %v1163 = vpack.c.b16 %v1019, %v1017
    %v1164 = vpack.c.b16 %v1020, %v1018
    %v1165 = vpack.c.b16 %v1023, %v1021
    %v1166 = vpack.c.b16 %v1024, %v1022
    %v1167 = vpack.c.b16 %v1027, %v1025
    %v1168 = vpack.c.b16 %v1028, %v1026
    %v1169 = vpack.c.b16 %v1031, %v1029
    %v1170 = vpack.c.b16 %v1032, %v1030
    %v1171 = vpack.c.b16 %v1035, %v1033
    %v1172 = vpack.c.b16 %v1036, %v1034
    %v1173 = vpack.c.b16 %v1039, %v1037
    %v1174 = vpack.c.b16 %v1040, %v1038
    %v1175 = vpack.c.b16 %v1043, %v1041
    %v1176 = vpack.c.b16 %v1044, %v1042
    %v1177 = vpack.c.b16 %v1047, %v1045
    %v1178 = vpack.c.b16 %v1048, %v1046
    %v1179 = vpack.c.b16 %v1051, %v1049
    %v1180 = vpack.c.b16 %v1052, %v1050
    %v1181 = vpack.c.b16 %v1055, %v1053
    %v1182 = vpack.c.b16 %v1056, %v1054
    %v1183 = vpack.c.b16 %v1059, %v1057
    %v1184 = vpack.c.b16 %v1060, %v1058
    %v1185 = vpack.c.b16 %v1063, %v1061
    %v1186 = vpack.c.b16 %v1064, %v1062
    %v1187 = vpack.c.b16 %v1067, %v1065
    %v1188 = vpack.c.b16 %v1068, %v1066
    %v1189 = vpack.c.b16 %v1071, %v1069
    %v1190 = vpack.c.b16 %v1072, %v1070
    %v1191 = vpack.c.b16 %v1075, %v1073
    %v1192 = vpack.c.b16 %v1076, %v1074
    %v1193 = vpack.c.b16 %v1079, %v1077
    %v1194 = vpack.c.b16 %v1080, %v1078
    %v1195 = vpack.c.b16 %v1083, %v1081
    %v1196 = vpack.c.b16 %v1084, %v1082
    %v1197 = vpack.c.b16 %v1087, %v1085
    %v1198 = vpack.c.b16 %v1088, %v1086
    %v1199 = vpack.c.b16 %v1091, %v1089
    %v1200 = vpack.c.b16 %v1092, %v1090
    %v1201 = vpack.c.b16 %v1095, %v1093
    %v1202 = vpack.c.b16 %v1096, %v1094
    %v1203 = vpack.c.b16 %v1099, %v1097
    %v1204 = vpack.c.b16 %v1100, %v1098
    %v1205 = vpack.c.b16 %v1103, %v1101
    %v1206 = vpack.c.b16 %v1104, %v1102
    %v1207 = vpack.c.b16 %v1107, %v1105
    %v1208 = vpack.c.b16 %v1108, %v1106
    %v1209 = vpack.c.b16 %v1111, %v1109
    %v1210 = vpack.c.b16 %v1112, %v1110
    %vm1260 = vcmask 793600
    %v1262 = vsel %vm1260, %v1114, 0
    %v1265 = vsel %vm1260, %v1116, 0
    %v1268 = vsel %vm1260, %v1118, 0
    %v1271 = vsel %vm1260, %v1120, 0
    %v1274 = vsel %vm1260, %v1122, 0
    %v1277 = vsel %vm1260, %v1124, 0
    %v1280 = vsel %vm1260, %v1126, 0
    %v1283 = vsel %vm1260, %v1128, 0
    %v1286 = vsel %vm1260, %v1130, 0
    %v1289 = vsel %vm1260, %v1132, 0
    %v1292 = vsel %vm1260, %v1134, 0
    %v1295 = vsel %vm1260, %v1136, 0
    %v1298 = vsel %vm1260, %v1138, 0
    %v1301 = vsel %vm1260, %v1140, 0
    %v1304 = vsel %vm1260, %v1142, 0
    %v1307 = vsel %vm1260, %v1144, 0
    %v1310 = vsel %vm1260, %v1146, 0
    %v1313 = vsel %vm1260, %v1148, 0
    %v1316 = vsel %vm1260, %v1150, 0
    %v1319 = vsel %vm1260, %v1152, 0
    %v1322 = vsel %vm1260, %v1154, 0
    %v1325 = vsel %vm1260, %v1156, 0
    %v1328 = vsel %vm1260, %v1158, 0
    %v1331 = vsel %vm1260, %v1160, 0
    %v1334 = vsel %vm1260, %v1162, 0
    %v1337 = vsel %vm1260, %v1164, 0
    %v1340 = vsel %vm1260, %v1166, 0
    %v1343 = vsel %vm1260, %v1168, 0
    %v1346 = vsel %vm1260, %v1170, 0
    %v1349 = vsel %vm1260, %v1172, 0
    %v1352 = vsel %vm1260, %v1174, 0
    %v1355 = vsel %vm1260, %v1176, 0
    %v1358 = vsel %vm1260, %v1178, 0
    %v1361 = vsel %vm1260, %v1180, 0
    %v1364 = vsel %vm1260, %v1182, 0
    %v1367 = vsel %vm1260, %v1184, 0
    %v1370 = vsel %vm1260, %v1186, 0
    %v1373 = vsel %vm1260, %v1188, 0
    %v1376 = vsel %vm1260, %v1190, 0
    %v1379 = vsel %vm1260, %v1192, 0
    %v1382 = vsel %vm1260, %v1194, 0
    %v1385 = vsel %vm1260, %v1196, 0
    %v1388 = vsel %vm1260, %v1198, 0
    %v1391 = vsel %vm1260, %v1200, 0
    %v1394 = vsel %vm1260, %v1202, 0
    %v1397 = vsel %vm1260, %v1204, 0
    %v1400 = vsel %vm1260, %v1206, 0
    %v1403 = vsel %vm1260, %v1208, 0
    %v1406 = vsel %vm1260, %v1210, 0
    %vm1408 = vcmask 1040384
    %v1409 = vsel 0, 4294967295, 65535
    %v1410 = vsel %vm1408, %v1409, 0
    %v1412 = vand.u32 %v706, %v1410
    %1414 = vmatprep.subr.bf16.mxu0 0
    %1415 = vmatpush1.bf16.msra.mxu0 %v692
    %1416 = vmatprep.subr.bf16.mxu0 0
    %1417 = vmatpush1.bf16.msra.mxu0 %v693
    %1418 = vmatprep.subr.bf16.mxu0 0
    %1419 = vmatpush1.bf16.msra.mxu0 %v694
    %1420 = vmatprep.subr.bf16.mxu0 0
    %1421 = vmatpush1.bf16.msra.mxu0 %v695
    %1422 = vmatprep.subr.bf16.mxu0 0
    %1423 = vmatpush1.bf16.msra.mxu0 %v696
    %1424 = vmatprep.subr.bf16.mxu0 0
    %1425 = vmatpush1.bf16.msra.mxu0 %v697
    %1426 = vmatprep.subr.bf16.mxu0 0
    %1427 = vmatpush1.bf16.msra.mxu0 %v698
    %1428 = vmatprep.subr.bf16.mxu0 0
    %1429 = vmatpush1.bf16.msra.mxu0 %v699
    %1430 = vmatprep.subr.bf16.mxu0 0
    %1431 = vmatpush1.bf16.msra.mxu0 %v700
    %1432 = vmatprep.subr.bf16.mxu0 0
    %1433 = vmatpush1.bf16.msra.mxu0 %v701
    %1434 = vmatprep.subr.bf16.mxu0 0
    %1435 = vmatpush1.bf16.msra.mxu0 %v702
    %1436 = vmatprep.subr.bf16.mxu0 0
    %1437 = vmatpush1.bf16.msra.mxu0 %v703
    %1438 = vmatprep.subr.bf16.mxu0 0
    %1439 = vmatpush1.bf16.msra.mxu0 %v704
    %1440 = vmatprep.subr.bf16.mxu0 0
    %1441 = vmatpush1.bf16.msra.mxu0 %v705
    %1442 = vmatprep.subr.bf16.mxu0 0
    %1443 = vmatpush1.bf16.msra.mxu0 %v1412
    %1444 = vmatprep.subr.bf16.mxu0 0
    %1445 = vmatpush1.bf16.msra.mxu0 0
    %1446 = vmatprep.mubr.bf16.mxu0 %v1262
    %1447 = vmatmul.mubr.bf16.gmra.mrb[0].mxu0 %v1113
    %v1448 = vpop.f32.mrb[0].mxu0
    %v1449 = vadd.f32 0.0, %v1448
    %v1450 = vpop.f32.mrb[0].mxu0
    %v1451 = vpop.f32.mrb[0].mxu0
    %v1452 = vadd.f32 0.0, %v1451
    %v1453 = vpop.f32.mrb[0].mxu0
    %1454 = vmatprep.mubr.bf16.mxu0 %v1265
    %1455 = vmatmul.mubr.bf16.gmra.mrb[0].mxu0 %v1115
    %v1456 = vpop.f32.mrb[0].mxu0
    %v1457 = vadd.f32 0.0, %v1456
    %v1458 = vpop.f32.mrb[0].mxu0
    %v1459 = vpop.f32.mrb[0].mxu0
    %v1460 = vadd.f32 0.0, %v1459
    %v1461 = vpop.f32.mrb[0].mxu0
    %1462 = vmatprep.mubr.bf16.mxu0 %v1268
    %1463 = vmatmul.mubr.bf16.gmra.mrb[0].mxu0 %v1117
    %v1464 = vpop.f32.mrb[0].mxu0
    %v1465 = vadd.f32 0.0, %v1464
    %v1466 = vpop.f32.mrb[0].mxu0
    %v1467 = vpop.f32.mrb[0].mxu0
    %v1468 = vadd.f32 0.0, %v1467
    %v1469 = vpop.f32.mrb[0].mxu0
    %1470 = vmatprep.mubr.bf16.mxu0 %v1271
    %1471 = vmatmul.mubr.bf16.gmra.mrb[0].mxu0 %v1119
    %v1472 = vpop.f32.mrb[0].mxu0
    %v1473 = vadd.f32 0.0, %v1472
    %v1474 = vpop.f32.mrb[0].mxu0
    %v1475 = vpop.f32.mrb[0].mxu0
    %v1476 = vadd.f32 0.0, %v1475
    %v1477 = vpop.f32.mrb[0].mxu0
    %1478 = vmatprep.mubr.bf16.mxu0 %v1274
    %1479 = vmatmul.mubr.bf16.gmra.mrb[0].mxu0 %v1121
    %v1480 = vpop.f32.mrb[0].mxu0
    %v1481 = vadd.f32 0.0, %v1480
    %v1482 = vpop.f32.mrb[0].mxu0
    %v1483 = vpop.f32.mrb[0].mxu0
    %v1484 = vadd.f32 0.0, %v1483
    %v1485 = vpop.f32.mrb[0].mxu0
    %1486 = vmatprep.mubr.bf16.mxu0 %v1277
    %1487 = vmatmul.mubr.bf16.gmra.mrb[0].mxu0 %v1123
    %v1488 = vpop.f32.mrb[0].mxu0
    %v1489 = vadd.f32 0.0, %v1488
    %v1490 = vpop.f32.mrb[0].mxu0
    %v1491 = vpop.f32.mrb[0].mxu0
    %v1492 = vadd.f32 0.0, %v1491
    %v1493 = vpop.f32.mrb[0].mxu0
    %1494 = vmatprep.mubr.bf16.mxu0 %v1280
    %1495 = vmatmul.mubr.bf16.gmra.mrb[0].mxu0 %v1125
    %v1496 = vpop.f32.mrb[0].mxu0
    %v1497 = vadd.f32 0.0, %v1496
    %v1498 = vpop.f32.mrb[0].mxu0
    %v1499 = vpop.f32.mrb[0].mxu0
    %v1500 = vadd.f32 0.0, %v1499
    %v1501 = vpop.f32.mrb[0].mxu0
    %1502 = vmatprep.mubr.bf16.mxu0 %v1283
    %1503 = vmatmul.mubr.bf16.gmra.mrb[0].mxu0 %v1127
    %v1504 = vpop.f32.mrb[0].mxu0
    %v1505 = vadd.f32 0.0, %v1504
    %v1506 = vpop.f32.mrb[0].mxu0
    %v1507 = vpop.f32.mrb[0].mxu0
    %v1508 = vadd.f32 0.0, %v1507
    %v1509 = vpop.f32.mrb[0].mxu0
    %1510 = vmatprep.mubr.bf16.mxu0 %v1286
    %1511 = vmatmul.mubr.bf16.gmra.mrb[0].mxu0 %v1129
    %v1512 = vpop.f32.mrb[0].mxu0
    %v1513 = vadd.f32 0.0, %v1512
    %v1514 = vpop.f32.mrb[0].mxu0
    %v1515 = vpop.f32.mrb[0].mxu0
    %v1516 = vadd.f32 0.0, %v1515
    %v1517 = vpop.f32.mrb[0].mxu0
    %1518 = vmatprep.mubr.bf16.mxu0 %v1289
    %1519 = vmatmul.mubr.bf16.gmra.mrb[0].mxu0 %v1131
    %v1520 = vpop.f32.mrb[0].mxu0
    %v1521 = vadd.f32 0.0, %v1520
    %v1522 = vpop.f32.mrb[0].mxu0
    %v1523 = vpop.f32.mrb[0].mxu0
    %v1524 = vadd.f32 0.0, %v1523
    %v1525 = vpop.f32.mrb[0].mxu0
    %1526 = vmatprep.mubr.bf16.mxu0 %v1292
    %1527 = vmatmul.mubr.bf16.gmra.mrb[0].mxu0 %v1133
    %v1528 = vpop.f32.mrb[0].mxu0
    %v1529 = vadd.f32 0.0, %v1528
    %v1530 = vpop.f32.mrb[0].mxu0
    %v1531 = vpop.f32.mrb[0].mxu0
    %v1532 = vadd.f32 0.0, %v1531
    %v1533 = vpop.f32.mrb[0].mxu0
    %1534 = vmatprep.mubr.bf16.mxu0 %v1295
    %1535 = vmatmul.mubr.bf16.gmra.mrb[0].mxu0 %v1135
    %v1536 = vpop.f32.mrb[0].mxu0
    %v1537 = vadd.f32 0.0, %v1536
    %v1538 = vpop.f32.mrb[0].mxu0
    %v1539 = vpop.f32.mrb[0].mxu0
    %v1540 = vadd.f32 0.0, %v1539
    %v1541 = vpop.f32.mrb[0].mxu0
    %1542 = vmatprep.mubr.bf16.mxu0 %v1298
    %1543 = vmatmul.mubr.bf16.gmra.mrb[0].mxu0 %v1137
    %v1544 = vpop.f32.mrb[0].mxu0
    %v1545 = vadd.f32 0.0, %v1544
    %v1546 = vpop.f32.mrb[0].mxu0
    %v1547 = vpop.f32.mrb[0].mxu0
    %v1548 = vadd.f32 0.0, %v1547
    %v1549 = vpop.f32.mrb[0].mxu0
    %1550 = vmatprep.mubr.bf16.mxu0 %v1301
    %1551 = vmatmul.mubr.bf16.gmra.mrb[0].mxu0 %v1139
    %v1552 = vpop.f32.mrb[0].mxu0
    %v1553 = vadd.f32 0.0, %v1552
    %v1554 = vpop.f32.mrb[0].mxu0
    %v1555 = vpop.f32.mrb[0].mxu0
    %v1556 = vadd.f32 0.0, %v1555
    %v1557 = vpop.f32.mrb[0].mxu0
    %1558 = vmatprep.mubr.bf16.mxu0 %v1304
    %1559 = vmatmul.mubr.bf16.gmra.mrb[0].mxu0 %v1141
    %v1560 = vpop.f32.mrb[0].mxu0
    %v1561 = vadd.f32 0.0, %v1560
    %v1562 = vpop.f32.mrb[0].mxu0
    %v1563 = vpop.f32.mrb[0].mxu0
    %v1564 = vadd.f32 0.0, %v1563
    %v1565 = vpop.f32.mrb[0].mxu0
    %1566 = vmatprep.mubr.bf16.mxu0 %v1307
    %1567 = vmatmul.mubr.bf16.gmra.mrb[0].mxu0 %v1143
    %v1568 = vpop.f32.mrb[0].mxu0
    %v1569 = vadd.f32 0.0, %v1568
    %v1570 = vpop.f32.mrb[0].mxu0
    %v1571 = vpop.f32.mrb[0].mxu0
    %v1572 = vadd.f32 0.0, %v1571
    %v1573 = vpop.f32.mrb[0].mxu0
    %1574 = vmatprep.mubr.bf16.mxu0 %v1310
    %1575 = vmatmul.mubr.bf16.gmra.mrb[0].mxu0 %v1145
    %v1576 = vpop.f32.mrb[0].mxu0
    %v1577 = vadd.f32 0.0, %v1576
    %v1578 = vpop.f32.mrb[0].mxu0
    %v1579 = vpop.f32.mrb[0].mxu0
    %v1580 = vadd.f32 0.0, %v1579
    %v1581 = vpop.f32.mrb[0].mxu0
    %1582 = vmatprep.mubr.bf16.mxu0 %v1313
    %1583 = vmatmul.mubr.bf16.gmra.mrb[0].mxu0 %v1147
    %v1584 = vpop.f32.mrb[0].mxu0
    %v1585 = vadd.f32 0.0, %v1584
    %v1586 = vpop.f32.mrb[0].mxu0
    %v1587 = vpop.f32.mrb[0].mxu0
    %v1588 = vadd.f32 0.0, %v1587
    %v1589 = vpop.f32.mrb[0].mxu0
    %1590 = vmatprep.mubr.bf16.mxu0 %v1316
    %1591 = vmatmul.mubr.bf16.gmra.mrb[0].mxu0 %v1149
    %v1592 = vpop.f32.mrb[0].mxu0
    %v1593 = vadd.f32 0.0, %v1592
    %v1594 = vpop.f32.mrb[0].mxu0
    %v1595 = vpop.f32.mrb[0].mxu0
    %v1596 = vadd.f32 0.0, %v1595
    %v1597 = vpop.f32.mrb[0].mxu0
    %1598 = vmatprep.mubr.bf16.mxu0 %v1319
    %1599 = vmatmul.mubr.bf16.gmra.mrb[0].mxu0 %v1151
    %v1600 = vpop.f32.mrb[0].mxu0
    %v1601 = vadd.f32 0.0, %v1600
    %v1602 = vpop.f32.mrb[0].mxu0
    %v1603 = vpop.f32.mrb[0].mxu0
    %v1604 = vadd.f32 0.0, %v1603
    %v1605 = vpop.f32.mrb[0].mxu0
    %1606 = vmatprep.mubr.bf16.mxu0 %v1322
    %1607 = vmatmul.mubr.bf16.gmra.mrb[0].mxu0 %v1153
    %v1608 = vpop.f32.mrb[0].mxu0
    %v1609 = vadd.f32 0.0, %v1608
    %v1610 = vpop.f32.mrb[0].mxu0
    %v1611 = vpop.f32.mrb[0].mxu0
    %v1612 = vadd.f32 0.0, %v1611
    %v1613 = vpop.f32.mrb[0].mxu0
    %1614 = vmatprep.mubr.bf16.mxu0 %v1325
    %1615 = vmatmul.mubr.bf16.gmra.mrb[0].mxu0 %v1155
    %v1616 = vpop.f32.mrb[0].mxu0
    %v1617 = vadd.f32 0.0, %v1616
    %v1618 = vpop.f32.mrb[0].mxu0
    %v1619 = vpop.f32.mrb[0].mxu0
    %v1620 = vadd.f32 0.0, %v1619
    %v1621 = vpop.f32.mrb[0].mxu0
    %1622 = vmatprep.mubr.bf16.mxu0 %v1328
    %1623 = vmatmul.mubr.bf16.gmra.mrb[0].mxu0 %v1157
    %v1624 = vpop.f32.mrb[0].mxu0
    %v1625 = vadd.f32 0.0, %v1624
    %v1626 = vpop.f32.mrb[0].mxu0
    %v1627 = vpop.f32.mrb[0].mxu0
    %v1628 = vadd.f32 0.0, %v1627
    %v1629 = vpop.f32.mrb[0].mxu0
    %1630 = vmatprep.mubr.bf16.mxu0 %v1331
    %1631 = vmatmul.mubr.bf16.gmra.mrb[0].mxu0 %v1159
    %v1632 = vpop.f32.mrb[0].mxu0
    %v1633 = vadd.f32 0.0, %v1632
    %v1634 = vpop.f32.mrb[0].mxu0
    %v1635 = vpop.f32.mrb[0].mxu0
    %v1636 = vadd.f32 0.0, %v1635
    %v1637 = vpop.f32.mrb[0].mxu0
    %1638 = vmatprep.mubr.bf16.mxu0 %v1334
    %1639 = vmatmul.mubr.bf16.gmra.mrb[0].mxu0 %v1161
    %v1640 = vpop.f32.mrb[0].mxu0
    %v1641 = vadd.f32 0.0, %v1640
    %v1642 = vpop.f32.mrb[0].mxu0
    %v1643 = vpop.f32.mrb[0].mxu0
    %v1644 = vadd.f32 0.0, %v1643
    %v1645 = vpop.f32.mrb[0].mxu0
    %1646 = vmatprep.mubr.bf16.mxu0 %v1337
    %1647 = vmatmul.mubr.bf16.gmra.mrb[0].mxu0 %v1163
    %v1648 = vpop.f32.mrb[0].mxu0
    %v1649 = vadd.f32 0.0, %v1648
    %v1650 = vpop.f32.mrb[0].mxu0
    %v1651 = vpop.f32.mrb[0].mxu0
    %v1652 = vadd.f32 0.0, %v1651
    %v1653 = vpop.f32.mrb[0].mxu0
    %1654 = vmatprep.mubr.bf16.mxu0 %v1340
    %1655 = vmatmul.mubr.bf16.gmra.mrb[0].mxu0 %v1165
    %v1656 = vpop.f32.mrb[0].mxu0
    %v1657 = vadd.f32 0.0, %v1656
    %v1658 = vpop.f32.mrb[0].mxu0
    %v1659 = vpop.f32.mrb[0].mxu0
    %v1660 = vadd.f32 0.0, %v1659
    %v1661 = vpop.f32.mrb[0].mxu0
    %1662 = vmatprep.mubr.bf16.mxu0 %v1343
    %1663 = vmatmul.mubr.bf16.gmra.mrb[0].mxu0 %v1167
    %v1664 = vpop.f32.mrb[0].mxu0
    %v1665 = vadd.f32 0.0, %v1664
    %v1666 = vpop.f32.mrb[0].mxu0
    %v1667 = vpop.f32.mrb[0].mxu0
    %v1668 = vadd.f32 0.0, %v1667
    %v1669 = vpop.f32.mrb[0].mxu0
    %1670 = vmatprep.mubr.bf16.mxu0 %v1346
    %1671 = vmatmul.mubr.bf16.gmra.mrb[0].mxu0 %v1169
    %v1672 = vpop.f32.mrb[0].mxu0
    %v1673 = vadd.f32 0.0, %v1672
    %v1674 = vpop.f32.mrb[0].mxu0
    %v1675 = vpop.f32.mrb[0].mxu0
    %v1676 = vadd.f32 0.0, %v1675
    %v1677 = vpop.f32.mrb[0].mxu0
    %1678 = vmatprep.mubr.bf16.mxu0 %v1349
    %1679 = vmatmul.mubr.bf16.gmra.mrb[0].mxu0 %v1171
    %v1680 = vpop.f32.mrb[0].mxu0
    %v1681 = vadd.f32 0.0, %v1680
    %v1682 = vpop.f32.mrb[0].mxu0
    %v1683 = vpop.f32.mrb[0].mxu0
    %v1684 = vadd.f32 0.0, %v1683
    %v1685 = vpop.f32.mrb[0].mxu0
    %1686 = vmatprep.mubr.bf16.mxu0 %v1352
    %1687 = vmatmul.mubr.bf16.gmra.mrb[0].mxu0 %v1173
    %v1688 = vpop.f32.mrb[0].mxu0
    %v1689 = vadd.f32 0.0, %v1688
    %v1690 = vpop.f32.mrb[0].mxu0
    %v1691 = vpop.f32.mrb[0].mxu0
    %v1692 = vadd.f32 0.0, %v1691
    %v1693 = vpop.f32.mrb[0].mxu0
    %1694 = vmatprep.mubr.bf16.mxu0 %v1355
    %1695 = vmatmul.mubr.bf16.gmra.mrb[0].mxu0 %v1175
    %v1696 = vpop.f32.mrb[0].mxu0
    %v1697 = vadd.f32 0.0, %v1696
    %v1698 = vpop.f32.mrb[0].mxu0
    %v1699 = vpop.f32.mrb[0].mxu0
    %v1700 = vadd.f32 0.0, %v1699
    %v1701 = vpop.f32.mrb[0].mxu0
    %1702 = vmatprep.mubr.bf16.mxu0 %v1358
    %1703 = vmatmul.mubr.bf16.gmra.mrb[0].mxu0 %v1177
    %v1704 = vpop.f32.mrb[0].mxu0
    %v1705 = vadd.f32 0.0, %v1704
    %v1706 = vpop.f32.mrb[0].mxu0
    %v1707 = vpop.f32.mrb[0].mxu0
    %v1708 = vadd.f32 0.0, %v1707
    %v1709 = vpop.f32.mrb[0].mxu0
    %1710 = vmatprep.mubr.bf16.mxu0 %v1361
    %1711 = vmatmul.mubr.bf16.gmra.mrb[0].mxu0 %v1179
    %v1712 = vpop.f32.mrb[0].mxu0
    %v1713 = vadd.f32 0.0, %v1712
    %v1714 = vpop.f32.mrb[0].mxu0
    %v1715 = vpop.f32.mrb[0].mxu0
    %v1716 = vadd.f32 0.0, %v1715
    %v1717 = vpop.f32.mrb[0].mxu0
    %1718 = vmatprep.mubr.bf16.mxu0 %v1364
    %1719 = vmatmul.mubr.bf16.gmra.mrb[0].mxu0 %v1181
    %v1720 = vpop.f32.mrb[0].mxu0
    %v1721 = vadd.f32 0.0, %v1720
    %v1722 = vpop.f32.mrb[0].mxu0
    %v1723 = vpop.f32.mrb[0].mxu0
    %v1724 = vadd.f32 0.0, %v1723
    %v1725 = vpop.f32.mrb[0].mxu0
    %1726 = vmatprep.mubr.bf16.mxu0 %v1367
    %1727 = vmatmul.mubr.bf16.gmra.mrb[0].mxu0 %v1183
    %v1728 = vpop.f32.mrb[0].mxu0
    %v1729 = vadd.f32 0.0, %v1728
    %v1730 = vpop.f32.mrb[0].mxu0
    %v1731 = vpop.f32.mrb[0].mxu0
    %v1732 = vadd.f32 0.0, %v1731
    %v1733 = vpop.f32.mrb[0].mxu0
    %1734 = vmatprep.mubr.bf16.mxu0 %v1370
    %1735 = vmatmul.mubr.bf16.gmra.mrb[0].mxu0 %v1185
    %v1736 = vpop.f32.mrb[0].mxu0
    %v1737 = vadd.f32 0.0, %v1736
    %v1738 = vpop.f32.mrb[0].mxu0
    %v1739 = vpop.f32.mrb[0].mxu0
    %v1740 = vadd.f32 0.0, %v1739
    %v1741 = vpop.f32.mrb[0].mxu0
    %1742 = vmatprep.mubr.bf16.mxu0 %v1373
    %1743 = vmatmul.mubr.bf16.gmra.mrb[0].mxu0 %v1187
    %v1744 = vpop.f32.mrb[0].mxu0
    %v1745 = vadd.f32 0.0, %v1744
    %v1746 = vpop.f32.mrb[0].mxu0
    %v1747 = vpop.f32.mrb[0].mxu0
    %v1748 = vadd.f32 0.0, %v1747
    %v1749 = vpop.f32.mrb[0].mxu0
    %1750 = vmatprep.mubr.bf16.mxu0 %v1376
    %1751 = vmatmul.mubr.bf16.gmra.mrb[0].mxu0 %v1189
    %v1752 = vpop.f32.mrb[0].mxu0
    %v1753 = vadd.f32 0.0, %v1752
    %v1754 = vpop.f32.mrb[0].mxu0
    %v1755 = vpop.f32.mrb[0].mxu0
    %v1756 = vadd.f32 0.0, %v1755
    %v1757 = vpop.f32.mrb[0].mxu0
    %1758 = vmatprep.mubr.bf16.mxu0 %v1379
    %1759 = vmatmul.mubr.bf16.gmra.mrb[0].mxu0 %v1191
    %v1760 = vpop.f32.mrb[0].mxu0
    %v1761 = vadd.f32 0.0, %v1760
    %v1762 = vpop.f32.mrb[0].mxu0
    %v1763 = vpop.f32.mrb[0].mxu0
    %v1764 = vadd.f32 0.0, %v1763
    %v1765 = vpop.f32.mrb[0].mxu0
    %1766 = vmatprep.mubr.bf16.mxu0 %v1382
    %1767 = vmatmul.mubr.bf16.gmra.mrb[0].mxu0 %v1193
    %v1768 = vpop.f32.mrb[0].mxu0
    %v1769 = vadd.f32 0.0, %v1768
    %v1770 = vpop.f32.mrb[0].mxu0
    %v1771 = vpop.f32.mrb[0].mxu0
    %v1772 = vadd.f32 0.0, %v1771
    %v1773 = vpop.f32.mrb[0].mxu0
    %1774 = vmatprep.mubr.bf16.mxu0 %v1385
    %1775 = vmatmul.mubr.bf16.gmra.mrb[0].mxu0 %v1195
    %v1776 = vpop.f32.mrb[0].mxu0
    %v1777 = vadd.f32 0.0, %v1776
    %v1778 = vpop.f32.mrb[0].mxu0
    %v1779 = vpop.f32.mrb[0].mxu0
    %v1780 = vadd.f32 0.0, %v1779
    %v1781 = vpop.f32.mrb[0].mxu0
    %1782 = vmatprep.mubr.bf16.mxu0 %v1388
    %1783 = vmatmul.mubr.bf16.gmra.mrb[0].mxu0 %v1197
    %v1784 = vpop.f32.mrb[0].mxu0
    %v1785 = vadd.f32 0.0, %v1784
    %v1786 = vpop.f32.mrb[0].mxu0
    %v1787 = vpop.f32.mrb[0].mxu0
    %v1788 = vadd.f32 0.0, %v1787
    %v1789 = vpop.f32.mrb[0].mxu0
    %1790 = vmatprep.mubr.bf16.mxu0 %v1391
    %1791 = vmatmul.mubr.bf16.gmra.mrb[0].mxu0 %v1199
    %v1792 = vpop.f32.mrb[0].mxu0
    %v1793 = vadd.f32 0.0, %v1792
    %v1794 = vpop.f32.mrb[0].mxu0
    %v1795 = vpop.f32.mrb[0].mxu0
    %v1796 = vadd.f32 0.0, %v1795
    %v1797 = vpop.f32.mrb[0].mxu0
    %1798 = vmatprep.mubr.bf16.mxu0 %v1394
    %1799 = vmatmul.mubr.bf16.gmra.mrb[0].mxu0 %v1201
    %v1800 = vpop.f32.mrb[0].mxu0
    %v1801 = vadd.f32 0.0, %v1800
    %v1802 = vpop.f32.mrb[0].mxu0
    %v1803 = vpop.f32.mrb[0].mxu0
    %v1804 = vadd.f32 0.0, %v1803
    %v1805 = vpop.f32.mrb[0].mxu0
    %1806 = vmatprep.mubr.bf16.mxu0 %v1397
    %1807 = vmatmul.mubr.bf16.gmra.mrb[0].mxu0 %v1203
    %v1808 = vpop.f32.mrb[0].mxu0
    %v1809 = vadd.f32 0.0, %v1808
    %v1810 = vpop.f32.mrb[0].mxu0
    %v1811 = vpop.f32.mrb[0].mxu0
    %v1812 = vadd.f32 0.0, %v1811
    %v1813 = vpop.f32.mrb[0].mxu0
    %1814 = vmatprep.mubr.bf16.mxu0 %v1400
    %1815 = vmatmul.mubr.bf16.gmra.mrb[0].mxu0 %v1205
    %v1816 = vpop.f32.mrb[0].mxu0
    %v1817 = vadd.f32 0.0, %v1816
    %v1818 = vpop.f32.mrb[0].mxu0
    %v1819 = vpop.f32.mrb[0].mxu0
    %v1820 = vadd.f32 0.0, %v1819
    %v1821 = vpop.f32.mrb[0].mxu0
    %1822 = vmatprep.mubr.bf16.mxu0 %v1403
    %1823 = vmatmul.mubr.bf16.gmra.mrb[0].mxu0 %v1207
    %v1824 = vpop.f32.mrb[0].mxu0
    %v1825 = vadd.f32 0.0, %v1824
    %v1826 = vpop.f32.mrb[0].mxu0
    %v1827 = vpop.f32.mrb[0].mxu0
    %v1828 = vadd.f32 0.0, %v1827
    %v1829 = vpop.f32.mrb[0].mxu0
    %1830 = vmatprep.mubr.bf16.mxu0 %v1406
    %1831 = vmatmul.mubr.bf16.gmra.mrb[0].mxu0 %v1209
    %v1832 = vpop.f32.mrb[0].mxu0
    %v1833 = vadd.f32 0.0, %v1832
    %v1834 = vpop.f32.mrb[0].mxu0
    %v1835 = vpop.f32.mrb[0].mxu0
    %v1836 = vadd.f32 0.0, %v1835
    %v1837 = vpop.f32.mrb[0].mxu0
    %1838 = vdwg.mxu0
    %vm1839 = vcmask 130048
    %1840 = vst.msk [vmem:[#allocation2] sm:$0xff] %vm1839, %v1449
    %1841 = vst.msk [vmem:[#allocation2 + $0x10] sm:$0xff] %vm1839, %v1452
    %1842 = vst.msk [vmem:[#allocation2 + $0x20] sm:$0xff] %vm1839, %v1457
    %1843 = vst.msk [vmem:[#allocation2 + $0x30] sm:$0xff] %vm1839, %v1460
    %1844 = vst.msk [vmem:[#allocation2 + $0x40] sm:$0xff] %vm1839, %v1465
    %1845 = vst.msk [vmem:[#allocation2 + $0x50] sm:$0xff] %vm1839, %v1468
    %vm1846 = vcmask 122880
    %1847 = vst.msk [vmem:[#allocation2 + $0x60] sm:$0x1] %vm1846, %v1473
    %vm1855 = vcmask 1046528
    %v1856 = vrot.slane %v1473, 1
    %v1857 = vrot.slane %v1476, 1
    %v1858 = vsel %vm1855, %v1856, %v1857
    %v1859 = vrot.slane %v1481, 1
    %v1860 = vsel %vm1855, %v1857, %v1859
    %v1861 = vrot.slane %v1484, 1
    %v1862 = vsel %vm1855, %v1859, %v1861
    %v1863 = vrot.slane %v1489, 1
    %v1864 = vsel %vm1855, %v1861, %v1863
    %v1865 = vrot.slane %v1492, 1
    %v1866 = vsel %vm1855, %v1863, %v1865
    %v1867 = vrot.slane %v1497, 1
    %v1868 = vsel %vm1855, %v1865, %v1867
    %1869 = vrot.lane.b32.xlu0 %v1858, 16
    %v1870 = vpop.permute.xlu0 %1869
    %1871 = vrot.lane.b32.xlu0 %v1860, 16
    %v1872 = vpop.permute.xlu0 %1871
    %1873 = vrot.lane.b32.xlu0 %v1862, 16
    %v1874 = vpop.permute.xlu0 %1873
    %1875 = vrot.lane.b32.xlu0 %v1864, 16
    %v1876 = vpop.permute.xlu0 %1875
    %1877 = vrot.lane.b32.xlu0 %v1866, 16
    %v1878 = vpop.permute.xlu0 %1877
    %1879 = vrot.lane.b32.xlu0 %v1868, 16
    %v1880 = vpop.permute.xlu0 %1879
    %1881 = vrot.lane.b32.xlu0 %v1867, 16
    %v1882 = vpop.permute.xlu0 %1881
    %vm1890 = vcmask 261248
    %1891 = vst.msk [vmem:[#allocation2] sm:$0xff] %vm1890, %v1870
    %1892 = vst.msk [vmem:[#allocation2 + $0x10] sm:$0xff] %vm1890, %v1872
    %1893 = vst.msk [vmem:[#allocation2 + $0x20] sm:$0xff] %vm1890, %v1874
    %1894 = vst.msk [vmem:[#allocation2 + $0x30] sm:$0xff] %vm1890, %v1876
    %1895 = vst.msk [vmem:[#allocation2 + $0x40] sm:$0xff] %vm1890, %v1878
    %1896 = vst.msk [vmem:[#allocation2 + $0x50] sm:$0xff] %vm1890, %v1880
    %vm1897 = vcmask 254080
    %1898 = vst.msk [vmem:[#allocation2 + $0x60] sm:$0x1] %vm1897, %v1882
    %vm1905 = vcmask 1045504
    %v1906 = vrot.slane %v1497, 2
    %v1907 = vrot.slane %v1500, 2
    %v1908 = vsel %vm1905, %v1906, %v1907
    %v1909 = vrot.slane %v1505, 2
    %v1910 = vsel %vm1905, %v1907, %v1909
    %v1911 = vrot.slane %v1508, 2
    %v1912 = vsel %vm1905, %v1909, %v1911
    %v1913 = vrot.slane %v1513, 2
    %v1914 = vsel %vm1905, %v1911, %v1913
    %v1915 = vrot.slane %v1516, 2
    %v1916 = vsel %vm1905, %v1913, %v1915
    %v1917 = vrot.slane %v1521, 2
    %v1918 = vsel %vm1905, %v1915, %v1917
    %1919 = vrot.lane.b32.xlu0 %v1908, 32
    %v1920 = vpop.permute.xlu0 %1919
    %1921 = vrot.lane.b32.xlu0 %v1910, 32
    %v1922 = vpop.permute.xlu0 %1921
    %1923 = vrot.lane.b32.xlu0 %v1912, 32
    %v1924 = vpop.permute.xlu0 %1923
    %1925 = vrot.lane.b32.xlu0 %v1914, 32
    %v1926 = vpop.permute.xlu0 %1925
    %1927 = vrot.lane.b32.xlu0 %v1916, 32
    %v1928 = vpop.permute.xlu0 %1927
    %1929 = vrot.lane.b32.xlu0 %v1918, 32
    %v1930 = vpop.permute.xlu0 %1929
    %1931 = vrot.lane.b32.xlu0 %v1917, 32
    %v1932 = vpop.permute.xlu0 %1931
    %vm1940 = vcmask 392448
    %1941 = vst.msk [vmem:[#allocation2] sm:$0xff] %vm1940, %v1920
    %1942 = vst.msk [vmem:[#allocation2 + $0x10] sm:$0xff] %vm1940, %v1922
    %1943 = vst.msk [vmem:[#allocation2 + $0x20] sm:$0xff] %vm1940, %v1924
    %1944 = vst.msk [vmem:[#allocation2 + $0x30] sm:$0xff] %vm1940, %v1926
    %1945 = vst.msk [vmem:[#allocation2 + $0x40] sm:$0xff] %vm1940, %v1928
    %1946 = vst.msk [vmem:[#allocation2 + $0x50] sm:$0xff] %vm1940, %v1930
    %vm1947 = vcmask 385280
    %1948 = vst.msk [vmem:[#allocation2 + $0x60] sm:$0x1] %vm1947, %v1932
    %vm1955 = vcmask 1044480
    %v1956 = vrot.slane %v1521, 3
    %v1957 = vrot.slane %v1524, 3
    %v1958 = vsel %vm1955, %v1956, %v1957
    %v1959 = vrot.slane %v1529, 3
    %v1960 = vsel %vm1955, %v1957, %v1959
    %v1961 = vrot.slane %v1532, 3
    %v1962 = vsel %vm1955, %v1959, %v1961
    %v1963 = vrot.slane %v1537, 3
    %v1964 = vsel %vm1955, %v1961, %v1963
    %v1965 = vrot.slane %v1540, 3
    %v1966 = vsel %vm1955, %v1963, %v1965
    %v1967 = vrot.slane %v1545, 3
    %v1968 = vsel %vm1955, %v1965, %v1967
    %1969 = vrot.lane.b32.xlu0 %v1958, 48
    %v1970 = vpop.permute.xlu0 %1969
    %1971 = vrot.lane.b32.xlu0 %v1960, 48
    %v1972 = vpop.permute.xlu0 %1971
    %1973 = vrot.lane.b32.xlu0 %v1962, 48
    %v1974 = vpop.permute.xlu0 %1973
    %1975 = vrot.lane.b32.xlu0 %v1964, 48
    %v1976 = vpop.permute.xlu0 %1975
    %1977 = vrot.lane.b32.xlu0 %v1966, 48
    %v1978 = vpop.permute.xlu0 %1977
    %1979 = vrot.lane.b32.xlu0 %v1968, 48
    %v1980 = vpop.permute.xlu0 %1979
    %1981 = vrot.lane.b32.xlu0 %v1967, 48
    %v1982 = vpop.permute.xlu0 %1981
    %vm1990 = vcmask 523648
    %1991 = vst.msk [vmem:[#allocation2] sm:$0xff] %vm1990, %v1970
    %1992 = vst.msk [vmem:[#allocation2 + $0x10] sm:$0xff] %vm1990, %v1972
    %1993 = vst.msk [vmem:[#allocation2 + $0x20] sm:$0xff] %vm1990, %v1974
    %1994 = vst.msk [vmem:[#allocation2 + $0x30] sm:$0xff] %vm1990, %v1976
    %1995 = vst.msk [vmem:[#allocation2 + $0x40] sm:$0xff] %vm1990, %v1978
    %1996 = vst.msk [vmem:[#allocation2 + $0x50] sm:$0xff] %vm1990, %v1980
    %vm1997 = vcmask 516480
    %1998 = vst.msk [vmem:[#allocation2 + $0x60] sm:$0x1] %vm1997, %v1982
    %vm2005 = vcmask 1043456
    %v2006 = vrot.slane %v1545, 4
    %v2007 = vrot.slane %v1548, 4
    %v2008 = vsel %vm2005, %v2006, %v2007
    %v2009 = vrot.slane %v1553, 4
    %v2010 = vsel %vm2005, %v2007, %v2009
    %v2011 = vrot.slane %v1556, 4
    %v2012 = vsel %vm2005, %v2009, %v2011
    %v2013 = vrot.slane %v1561, 4
    %v2014 = vsel %vm2005, %v2011, %v2013
    %v2015 = vrot.slane %v1564, 4
    %v2016 = vsel %vm2005, %v2013, %v2015
    %v2017 = vrot.slane %v1569, 4
    %v2018 = vsel %vm2005, %v2015, %v2017
    %2019 = vrot.lane.b32.xlu0 %v2008, 64
    %v2020 = vpop.permute.xlu0 %2019
    %2021 = vrot.lane.b32.xlu0 %v2010, 64
    %v2022 = vpop.permute.xlu0 %2021
    %2023 = vrot.lane.b32.xlu0 %v2012, 64
    %v2024 = vpop.permute.xlu0 %2023
    %2025 = vrot.lane.b32.xlu0 %v2014, 64
    %v2026 = vpop.permute.xlu0 %2025
    %2027 = vrot.lane.b32.xlu0 %v2016, 64
    %v2028 = vpop.permute.xlu0 %2027
    %2029 = vrot.lane.b32.xlu0 %v2018, 64
    %v2030 = vpop.permute.xlu0 %2029
    %2031 = vrot.lane.b32.xlu0 %v2017, 64
    %v2032 = vpop.permute.xlu0 %2031
    %vm2040 = vcmask 654848
    %2041 = vst.msk [vmem:[#allocation2] sm:$0xff] %vm2040, %v2020
    %2042 = vst.msk [vmem:[#allocation2 + $0x10] sm:$0xff] %vm2040, %v2022
    %2043 = vst.msk [vmem:[#allocation2 + $0x20] sm:$0xff] %vm2040, %v2024
    %2044 = vst.msk [vmem:[#allocation2 + $0x30] sm:$0xff] %vm2040, %v2026
    %2045 = vst.msk [vmem:[#allocation2 + $0x40] sm:$0xff] %vm2040, %v2028
    %2046 = vst.msk [vmem:[#allocation2 + $0x50] sm:$0xff] %vm2040, %v2030
    %vm2047 = vcmask 647680
    %2048 = vst.msk [vmem:[#allocation2 + $0x60] sm:$0x1] %vm2047, %v2032
    %vm2055 = vcmask 1042432
    %v2056 = vrot.slane %v1569, 5
    %v2057 = vrot.slane %v1572, 5
    %v2058 = vsel %vm2055, %v2056, %v2057
    %v2059 = vrot.slane %v1577, 5
    %v2060 = vsel %vm2055, %v2057, %v2059
    %v2061 = vrot.slane %v1580, 5
    %v2062 = vsel %vm2055, %v2059, %v2061
    %v2063 = vrot.slane %v1585, 5
    %v2064 = vsel %vm2055, %v2061, %v2063
    %v2065 = vrot.slane %v1588, 5
    %v2066 = vsel %vm2055, %v2063, %v2065
    %v2067 = vrot.slane %v1593, 5
    %v2068 = vsel %vm2055, %v2065, %v2067
    %2069 = vrot.lane.b32.xlu0 %v2058, 80
    %v2070 = vpop.permute.xlu0 %2069
    %2071 = vrot.lane.b32.xlu0 %v2060, 80
    %v2072 = vpop.permute.xlu0 %2071
    %2073 = vrot.lane.b32.xlu0 %v2062, 80
    %v2074 = vpop.permute.xlu0 %2073
    %2075 = vrot.lane.b32.xlu0 %v2064, 80
    %v2076 = vpop.permute.xlu0 %2075
    %2077 = vrot.lane.b32.xlu0 %v2066, 80
    %v2078 = vpop.permute.xlu0 %2077
    %2079 = vrot.lane.b32.xlu0 %v2068, 80
    %v2080 = vpop.permute.xlu0 %2079
    %2081 = vrot.lane.b32.xlu0 %v2067, 80
    %v2082 = vpop.permute.xlu0 %2081
    %vm2090 = vcmask 786048
    %2091 = vst.msk [vmem:[#allocation2] sm:$0xff] %vm2090, %v2070
    %2092 = vst.msk [vmem:[#allocation2 + $0x10] sm:$0xff] %vm2090, %v2072
    %2093 = vst.msk [vmem:[#allocation2 + $0x20] sm:$0xff] %vm2090, %v2074
    %2094 = vst.msk [vmem:[#allocation2 + $0x30] sm:$0xff] %vm2090, %v2076
    %2095 = vst.msk [vmem:[#allocation2 + $0x40] sm:$0xff] %vm2090, %v2078
    %2096 = vst.msk [vmem:[#allocation2 + $0x50] sm:$0xff] %vm2090, %v2080
    %vm2097 = vcmask 778880
    %2098 = vst.msk [vmem:[#allocation2 + $0x60] sm:$0x1] %vm2097, %v2082
    %vm2105 = vcmask 1041408
    %v2106 = vrot.slane %v1593, 6
    %v2107 = vrot.slane %v1596, 6
    %v2108 = vsel %vm2105, %v2106, %v2107
    %v2109 = vrot.slane %v1601, 6
    %v2110 = vsel %vm2105, %v2107, %v2109
    %v2111 = vrot.slane %v1604, 6
    %v2112 = vsel %vm2105, %v2109, %v2111
    %v2113 = vrot.slane %v1609, 6
    %v2114 = vsel %vm2105, %v2111, %v2113
    %v2115 = vrot.slane %v1612, 6
    %v2116 = vsel %vm2105, %v2113, %v2115
    %v2117 = vrot.slane %v1617, 6
    %v2118 = vsel %vm2105, %v2115, %v2117
    %2119 = vrot.lane.b32.xlu0 %v2108, 96
    %v2120 = vpop.permute.xlu0 %2119
    %2121 = vrot.lane.b32.xlu0 %v2110, 96
    %v2122 = vpop.permute.xlu0 %2121
    %2123 = vrot.lane.b32.xlu0 %v2112, 96
    %v2124 = vpop.permute.xlu0 %2123
    %2125 = vrot.lane.b32.xlu0 %v2114, 96
    %v2126 = vpop.permute.xlu0 %2125
    %2127 = vrot.lane.b32.xlu0 %v2116, 96
    %v2128 = vpop.permute.xlu0 %2127
    %2129 = vrot.lane.b32.xlu0 %v2118, 96
    %v2130 = vpop.permute.xlu0 %2129
    %2131 = vrot.lane.b32.xlu0 %v2117, 96
    %v2132 = vpop.permute.xlu0 %2131
    %vm2140 = vcmask 917248
    %2141 = vst.msk [vmem:[#allocation2] sm:$0xff] %vm2140, %v2120
    %2142 = vst.msk [vmem:[#allocation2 + $0x10] sm:$0xff] %vm2140, %v2122
    %2143 = vst.msk [vmem:[#allocation2 + $0x20] sm:$0xff] %vm2140, %v2124
    %2144 = vst.msk [vmem:[#allocation2 + $0x30] sm:$0xff] %vm2140, %v2126
    %2145 = vst.msk [vmem:[#allocation2 + $0x40] sm:$0xff] %vm2140, %v2128
    %2146 = vst.msk [vmem:[#allocation2 + $0x50] sm:$0xff] %vm2140, %v2130
    %vm2147 = vcmask 910080
    %2148 = vst.msk [vmem:[#allocation2 + $0x60] sm:$0x1] %vm2147, %v2132
    %v2155 = vrot.slane %v1617, 7
    %v2156 = vrot.slane %v1620, 7
    %v2157 = vsel %vm1408, %v2155, %v2156
    %v2158 = vrot.slane %v1625, 7
    %v2159 = vsel %vm1408, %v2156, %v2158
    %v2160 = vrot.slane %v1628, 7
    %v2161 = vsel %vm1408, %v2158, %v2160
    %v2162 = vrot.slane %v1633, 7
    %v2163 = vsel %vm1408, %v2160, %v2162
    %v2164 = vrot.slane %v1636, 7
    %v2165 = vsel %vm1408, %v2162, %v2164
    %v2166 = vrot.slane %v1641, 7
    %v2167 = vsel %vm1408, %v2164, %v2166
    %2168 = vrot.lane.b32.xlu0 %v2157, 112
    %v2169 = vpop.permute.xlu0 %2168
    %2170 = vrot.lane.b32.xlu0 %v2159, 112
    %v2171 = vpop.permute.xlu0 %2170
    %2172 = vrot.lane.b32.xlu0 %v2161, 112
    %v2173 = vpop.permute.xlu0 %2172
    %2174 = vrot.lane.b32.xlu0 %v2163, 112
    %v2175 = vpop.permute.xlu0 %2174
    %2176 = vrot.lane.b32.xlu0 %v2165, 112
    %v2177 = vpop.permute.xlu0 %2176
    %2178 = vrot.lane.b32.xlu0 %v2167, 112
    %v2179 = vpop.permute.xlu0 %2178
    %2180 = vrot.lane.b32.xlu0 %v2166, 112
    %v2181 = vpop.permute.xlu0 %2180
    %vm2189 = vcmask 1048448
    %2190 = vst.msk [vmem:[#allocation2] sm:$0xff] %vm2189, %v2169
    %2191 = vst.msk [vmem:[#allocation2 + $0x10] sm:$0xff] %vm2189, %v2171
    %2192 = vst.msk [vmem:[#allocation2 + $0x20] sm:$0xff] %vm2189, %v2173
    %2193 = vst.msk [vmem:[#allocation2 + $0x30] sm:$0xff] %vm2189, %v2175
    %2194 = vst.msk [vmem:[#allocation2 + $0x40] sm:$0xff] %vm2189, %v2177
    %2195 = vst.msk [vmem:[#allocation2 + $0x50] sm:$0xff] %vm2189, %v2179
    %vm2196 = vcmask 1041280
    %2197 = vst.msk [vmem:[#allocation2 + $0x60] sm:$0x1] %vm2196, %v2181
    %2198 = vst.msk [vmem:[#allocation2 + $0x8] sm:$0xff] %vm1839, %v1644
    %2199 = vst.msk [vmem:[#allocation2 + $0x18] sm:$0xff] %vm1839, %v1649
    %2200 = vst.msk [vmem:[#allocation2 + $0x28] sm:$0xff] %vm1839, %v1652
    %2201 = vst.msk [vmem:[#allocation2 + $0x38] sm:$0xff] %vm1839, %v1657
    %2202 = vst.msk [vmem:[#allocation2 + $0x48] sm:$0xff] %vm1839, %v1660
    %2203 = vst.msk [vmem:[#allocation2 + $0x58] sm:$0xff] %vm1839, %v1665
    %2204 = vst.msk [vmem:[#allocation2 + $0x68] sm:$0x1] %vm1846, %v1668
    %v2212 = vrot.slane %v1668, 1
    %v2213 = vrot.slane %v1673, 1
    %v2214 = vsel %vm1855, %v2212, %v2213
    %v2215 = vrot.slane %v1676, 1
    %v2216 = vsel %vm1855, %v2213, %v2215
    %v2217 = vrot.slane %v1681, 1
    %v2218 = vsel %vm1855, %v2215, %v2217
    %v2219 = vrot.slane %v1684, 1
    %v2220 = vsel %vm1855, %v2217, %v2219
    %v2221 = vrot.slane %v1689, 1
    %v2222 = vsel %vm1855, %v2219, %v2221
    %v2223 = vrot.slane %v1692, 1
    %v2224 = vsel %vm1855, %v2221, %v2223
    %2225 = vrot.lane.b32.xlu0 %v2214, 16
    %v2226 = vpop.permute.xlu0 %2225
    %2227 = vrot.lane.b32.xlu0 %v2216, 16
    %v2228 = vpop.permute.xlu0 %2227
    %2229 = vrot.lane.b32.xlu0 %v2218, 16
    %v2230 = vpop.permute.xlu0 %2229
    %2231 = vrot.lane.b32.xlu0 %v2220, 16
    %v2232 = vpop.permute.xlu0 %2231
    %2233 = vrot.lane.b32.xlu0 %v2222, 16
    %v2234 = vpop.permute.xlu0 %2233
    %2235 = vrot.lane.b32.xlu0 %v2224, 16
    %v2236 = vpop.permute.xlu0 %2235
    %2237 = vrot.lane.b32.xlu0 %v2223, 16
    %v2238 = vpop.permute.xlu0 %2237
    %2246 = vst.msk [vmem:[#allocation2 + $0x8] sm:$0xff] %vm1890, %v2226
    %2247 = vst.msk [vmem:[#allocation2 + $0x18] sm:$0xff] %vm1890, %v2228
    %2248 = vst.msk [vmem:[#allocation2 + $0x28] sm:$0xff] %vm1890, %v2230
    %2249 = vst.msk [vmem:[#allocation2 + $0x38] sm:$0xff] %vm1890, %v2232
    %2250 = vst.msk [vmem:[#allocation2 + $0x48] sm:$0xff] %vm1890, %v2234
    %2251 = vst.msk [vmem:[#allocation2 + $0x58] sm:$0xff] %vm1890, %v2236
    %2252 = vst.msk [vmem:[#allocation2 + $0x68] sm:$0x1] %vm1897, %v2238
    %v2259 = vrot.slane %v1692, 2
    %v2260 = vrot.slane %v1697, 2
    %v2261 = vsel %vm1905, %v2259, %v2260
    %v2262 = vrot.slane %v1700, 2
    %v2263 = vsel %vm1905, %v2260, %v2262
    %v2264 = vrot.slane %v1705, 2
    %v2265 = vsel %vm1905, %v2262, %v2264
    %v2266 = vrot.slane %v1708, 2
    %v2267 = vsel %vm1905, %v2264, %v2266
    %v2268 = vrot.slane %v1713, 2
    %v2269 = vsel %vm1905, %v2266, %v2268
    %v2270 = vrot.slane %v1716, 2
    %v2271 = vsel %vm1905, %v2268, %v2270
    %2272 = vrot.lane.b32.xlu0 %v2261, 32
    %v2273 = vpop.permute.xlu0 %2272
    %2274 = vrot.lane.b32.xlu0 %v2263, 32
    %v2275 = vpop.permute.xlu0 %2274
    %2276 = vrot.lane.b32.xlu0 %v2265, 32
    %v2277 = vpop.permute.xlu0 %2276
    %2278 = vrot.lane.b32.xlu0 %v2267, 32
    %v2279 = vpop.permute.xlu0 %2278
    %2280 = vrot.lane.b32.xlu0 %v2269, 32
    %v2281 = vpop.permute.xlu0 %2280
    %2282 = vrot.lane.b32.xlu0 %v2271, 32
    %v2283 = vpop.permute.xlu0 %2282
    %2284 = vrot.lane.b32.xlu0 %v2270, 32
    %v2285 = vpop.permute.xlu0 %2284
    %2293 = vst.msk [vmem:[#allocation2 + $0x8] sm:$0xff] %vm1940, %v2273
    %2294 = vst.msk [vmem:[#allocation2 + $0x18] sm:$0xff] %vm1940, %v2275
    %2295 = vst.msk [vmem:[#allocation2 + $0x28] sm:$0xff] %vm1940, %v2277
    %2296 = vst.msk [vmem:[#allocation2 + $0x38] sm:$0xff] %vm1940, %v2279
    %2297 = vst.msk [vmem:[#allocation2 + $0x48] sm:$0xff] %vm1940, %v2281
    %2298 = vst.msk [vmem:[#allocation2 + $0x58] sm:$0xff] %vm1940, %v2283
    %2299 = vst.msk [vmem:[#allocation2 + $0x68] sm:$0x1] %vm1947, %v2285
    %v2306 = vrot.slane %v1716, 3
    %v2307 = vrot.slane %v1721, 3
    %v2308 = vsel %vm1955, %v2306, %v2307
    %v2309 = vrot.slane %v1724, 3
    %v2310 = vsel %vm1955, %v2307, %v2309
    %v2311 = vrot.slane %v1729, 3
    %v2312 = vsel %vm1955, %v2309, %v2311
    %v2313 = vrot.slane %v1732, 3
    %v2314 = vsel %vm1955, %v2311, %v2313
    %v2315 = vrot.slane %v1737, 3
    %v2316 = vsel %vm1955, %v2313, %v2315
    %v2317 = vrot.slane %v1740, 3
    %v2318 = vsel %vm1955, %v2315, %v2317
    %2319 = vrot.lane.b32.xlu0 %v2308, 48
    %v2320 = vpop.permute.xlu0 %2319
    %2321 = vrot.lane.b32.xlu0 %v2310, 48
    %v2322 = vpop.permute.xlu0 %2321
    %2323 = vrot.lane.b32.xlu0 %v2312, 48
    %v2324 = vpop.permute.xlu0 %2323
    %2325 = vrot.lane.b32.xlu0 %v2314, 48
    %v2326 = vpop.permute.xlu0 %2325
    %2327 = vrot.lane.b32.xlu0 %v2316, 48
    %v2328 = vpop.permute.xlu0 %2327
    %2329 = vrot.lane.b32.xlu0 %v2318, 48
    %v2330 = vpop.permute.xlu0 %2329
    %2331 = vrot.lane.b32.xlu0 %v2317, 48
    %v2332 = vpop.permute.xlu0 %2331
    %2340 = vst.msk [vmem:[#allocation2 + $0x8] sm:$0xff] %vm1990, %v2320
    %2341 = vst.msk [vmem:[#allocation2 + $0x18] sm:$0xff] %vm1990, %v2322
    %2342 = vst.msk [vmem:[#allocation2 + $0x28] sm:$0xff] %vm1990, %v2324
    %2343 = vst.msk [vmem:[#allocation2 + $0x38] sm:$0xff] %vm1990, %v2326
    %2344 = vst.msk [vmem:[#allocation2 + $0x48] sm:$0xff] %vm1990, %v2328
    %2345 = vst.msk [vmem:[#allocation2 + $0x58] sm:$0xff] %vm1990, %v2330
    %2346 = vst.msk [vmem:[#allocation2 + $0x68] sm:$0x1] %vm1997, %v2332
    %v2353 = vrot.slane %v1740, 4
    %v2354 = vrot.slane %v1745, 4
    %v2355 = vsel %vm2005, %v2353, %v2354
    %v2356 = vrot.slane %v1748, 4
    %v2357 = vsel %vm2005, %v2354, %v2356
    %v2358 = vrot.slane %v1753, 4
    %v2359 = vsel %vm2005, %v2356, %v2358
    %v2360 = vrot.slane %v1756, 4
    %v2361 = vsel %vm2005, %v2358, %v2360
    %v2362 = vrot.slane %v1761, 4
    %v2363 = vsel %vm2005, %v2360, %v2362
    %v2364 = vrot.slane %v1764, 4
    %v2365 = vsel %vm2005, %v2362, %v2364
    %2366 = vrot.lane.b32.xlu0 %v2355, 64
    %v2367 = vpop.permute.xlu0 %2366
    %2368 = vrot.lane.b32.xlu0 %v2357, 64
    %v2369 = vpop.permute.xlu0 %2368
    %2370 = vrot.lane.b32.xlu0 %v2359, 64
    %v2371 = vpop.permute.xlu0 %2370
    %2372 = vrot.lane.b32.xlu0 %v2361, 64
    %v2373 = vpop.permute.xlu0 %2372
    %2374 = vrot.lane.b32.xlu0 %v2363, 64
    %v2375 = vpop.permute.xlu0 %2374
    %2376 = vrot.lane.b32.xlu0 %v2365, 64
    %v2377 = vpop.permute.xlu0 %2376
    %2378 = vrot.lane.b32.xlu0 %v2364, 64
    %v2379 = vpop.permute.xlu0 %2378
    %2387 = vst.msk [vmem:[#allocation2 + $0x8] sm:$0xff] %vm2040, %v2367
    %2388 = vst.msk [vmem:[#allocation2 + $0x18] sm:$0xff] %vm2040, %v2369
    %2389 = vst.msk [vmem:[#allocation2 + $0x28] sm:$0xff] %vm2040, %v2371
    %2390 = vst.msk [vmem:[#allocation2 + $0x38] sm:$0xff] %vm2040, %v2373
    %2391 = vst.msk [vmem:[#allocation2 + $0x48] sm:$0xff] %vm2040, %v2375
    %2392 = vst.msk [vmem:[#allocation2 + $0x58] sm:$0xff] %vm2040, %v2377
    %2393 = vst.msk [vmem:[#allocation2 + $0x68] sm:$0x1] %vm2047, %v2379
    %v2400 = vrot.slane %v1764, 5
    %v2401 = vrot.slane %v1769, 5
    %v2402 = vsel %vm2055, %v2400, %v2401
    %v2403 = vrot.slane %v1772, 5
    %v2404 = vsel %vm2055, %v2401, %v2403
    %v2405 = vrot.slane %v1777, 5
    %v2406 = vsel %vm2055, %v2403, %v2405
    %v2407 = vrot.slane %v1780, 5
    %v2408 = vsel %vm2055, %v2405, %v2407
    %v2409 = vrot.slane %v1785, 5
    %v2410 = vsel %vm2055, %v2407, %v2409
    %v2411 = vrot.slane %v1788, 5
    %v2412 = vsel %vm2055, %v2409, %v2411
    %2413 = vrot.lane.b32.xlu0 %v2402, 80
    %v2414 = vpop.permute.xlu0 %2413
    %2415 = vrot.lane.b32.xlu0 %v2404, 80
    %v2416 = vpop.permute.xlu0 %2415
    %2417 = vrot.lane.b32.xlu0 %v2406, 80
    %v2418 = vpop.permute.xlu0 %2417
    %2419 = vrot.lane.b32.xlu0 %v2408, 80
    %v2420 = vpop.permute.xlu0 %2419
    %2421 = vrot.lane.b32.xlu0 %v2410, 80
    %v2422 = vpop.permute.xlu0 %2421
    %2423 = vrot.lane.b32.xlu0 %v2412, 80
    %v2424 = vpop.permute.xlu0 %2423
    %2425 = vrot.lane.b32.xlu0 %v2411, 80
    %v2426 = vpop.permute.xlu0 %2425
    %2434 = vst.msk [vmem:[#allocation2 + $0x8] sm:$0xff] %vm2090, %v2414
    %2435 = vst.msk [vmem:[#allocation2 + $0x18] sm:$0xff] %vm2090, %v2416
    %2436 = vst.msk [vmem:[#allocation2 + $0x28] sm:$0xff] %vm2090, %v2418
    %2437 = vst.msk [vmem:[#allocation2 + $0x38] sm:$0xff] %vm2090, %v2420
    %2438 = vst.msk [vmem:[#allocation2 + $0x48] sm:$0xff] %vm2090, %v2422
    %2439 = vst.msk [vmem:[#allocation2 + $0x58] sm:$0xff] %vm2090, %v2424
    %2440 = vst.msk [vmem:[#allocation2 + $0x68] sm:$0x1] %vm2097, %v2426
    %v2447 = vrot.slane %v1788, 6
    %v2448 = vrot.slane %v1793, 6
    %v2449 = vsel %vm2105, %v2447, %v2448
    %v2450 = vrot.slane %v1796, 6
    %v2451 = vsel %vm2105, %v2448, %v2450
    %v2452 = vrot.slane %v1801, 6
    %v2453 = vsel %vm2105, %v2450, %v2452
    %v2454 = vrot.slane %v1804, 6
    %v2455 = vsel %vm2105, %v2452, %v2454
    %v2456 = vrot.slane %v1809, 6
    %v2457 = vsel %vm2105, %v2454, %v2456
    %v2458 = vrot.slane %v1812, 6
    %v2459 = vsel %vm2105, %v2456, %v2458
    %2460 = vrot.lane.b32.xlu0 %v2449, 96
    %v2461 = vpop.permute.xlu0 %2460
    %2462 = vrot.lane.b32.xlu0 %v2451, 96
    %v2463 = vpop.permute.xlu0 %2462
    %2464 = vrot.lane.b32.xlu0 %v2453, 96
    %v2465 = vpop.permute.xlu0 %2464
    %2466 = vrot.lane.b32.xlu0 %v2455, 96
    %v2467 = vpop.permute.xlu0 %2466
    %2468 = vrot.lane.b32.xlu0 %v2457, 96
    %v2469 = vpop.permute.xlu0 %2468
    %2470 = vrot.lane.b32.xlu0 %v2459, 96
    %v2471 = vpop.permute.xlu0 %2470
    %2472 = vrot.lane.b32.xlu0 %v2458, 96
    %v2473 = vpop.permute.xlu0 %2472
    %2481 = vst.msk [vmem:[#allocation2 + $0x8] sm:$0xff] %vm2140, %v2461
    %2482 = vst.msk [vmem:[#allocation2 + $0x18] sm:$0xff] %vm2140, %v2463
    %2483 = vst.msk [vmem:[#allocation2 + $0x28] sm:$0xff] %vm2140, %v2465
    %2484 = vst.msk [vmem:[#allocation2 + $0x38] sm:$0xff] %vm2140, %v2467
    %2485 = vst.msk [vmem:[#allocation2 + $0x48] sm:$0xff] %vm2140, %v2469
    %2486 = vst.msk [vmem:[#allocation2 + $0x58] sm:$0xff] %vm2140, %v2471
    %2487 = vst.msk [vmem:[#allocation2 + $0x68] sm:$0x1] %vm2147, %v2473
    %v2494 = vrot.slane %v1812, 7
    %v2495 = vrot.slane %v1817, 7
    %v2496 = vsel %vm1408, %v2494, %v2495
    %v2497 = vrot.slane %v1820, 7
    %v2498 = vsel %vm1408, %v2495, %v2497
    %v2499 = vrot.slane %v1825, 7
    %v2500 = vsel %vm1408, %v2497, %v2499
    %v2501 = vrot.slane %v1828, 7
    %v2502 = vsel %vm1408, %v2499, %v2501
    %v2503 = vrot.slane %v1833, 7
    %v2504 = vsel %vm1408, %v2501, %v2503
    %v2505 = vrot.slane %v1836, 7
    %v2506 = vsel %vm1408, %v2503, %v2505
    %2507 = vrot.lane.b32.xlu0 %v2496, 112
    %v2508 = vpop.permute.xlu0 %2507
    %2509 = vrot.lane.b32.xlu0 %v2498, 112
    %v2510 = vpop.permute.xlu0 %2509
    %2511 = vrot.lane.b32.xlu0 %v2500, 112
    %v2512 = vpop.permute.xlu0 %2511
    %2513 = vrot.lane.b32.xlu0 %v2502, 112
    %v2514 = vpop.permute.xlu0 %2513
    %2515 = vrot.lane.b32.xlu0 %v2504, 112
    %v2516 = vpop.permute.xlu0 %2515
    %2517 = vrot.lane.b32.xlu0 %v2506, 112
    %v2518 = vpop.permute.xlu0 %2517
    %2519 = vrot.lane.b32.xlu0 %v2505, 112
    %v2520 = vpop.permute.xlu0 %2519
    %2528 = vst.msk [vmem:[#allocation2 + $0x8] sm:$0xff] %vm2189, %v2508
    %2529 = vst.msk [vmem:[#allocation2 + $0x18] sm:$0xff] %vm2189, %v2510
    %2530 = vst.msk [vmem:[#allocation2 + $0x28] sm:$0xff] %vm2189, %v2512
    %2531 = vst.msk [vmem:[#allocation2 + $0x38] sm:$0xff] %vm2189, %v2514
    %2532 = vst.msk [vmem:[#allocation2 + $0x48] sm:$0xff] %vm2189, %v2516
    %2533 = vst.msk [vmem:[#allocation2 + $0x58] sm:$0xff] %vm2189, %v2518
    %2534 = vst.msk [vmem:[#allocation2 + $0x68] sm:$0x1] %vm2196, %v2520
    %vm2535 = vsmask.f32 7424
    %v2536 = vshrl.u32 %v706, 16
    %v2538 = vshll.u32 %v706, 16
    %v2540 = vrot.slane %v2538, 1
    %v2541 = vor.u32 %v2536, %v2540
    %v2543 = vshll.u32 %v707, 16
    %v2545 = vrot.slane %v2543, 1
    %v2546 = vsel %vm2535, %v2541, %v2545
    %v2547 = vshrl.u32 %v707, 16
    %v2549 = vor.u32 %v2547, %v2545
    %v2551 = vshll.u32 %v708, 16
    %v2553 = vrot.slane %v2551, 1
    %v2554 = vsel %vm2535, %v2549, %v2553
    %v2555 = vshrl.u32 %v708, 16
    %v2557 = vor.u32 %v2555, %v2553
    %v2559 = vshll.u32 %v709, 16
    %v2561 = vrot.slane %v2559, 1
    %v2562 = vsel %vm2535, %v2557, %v2561
    %v2563 = vshrl.u32 %v709, 16
    %v2565 = vor.u32 %v2563, %v2561
    %v2567 = vshll.u32 %v710, 16
    %v2569 = vrot.slane %v2567, 1
    %v2570 = vsel %vm2535, %v2565, %v2569
    %v2571 = vshrl.u32 %v710, 16
    %v2573 = vor.u32 %v2571, %v2569
    %v2575 = vshll.u32 %v711, 16
    %v2577 = vrot.slane %v2575, 1
    %v2578 = vsel %vm2535, %v2573, %v2577
    %v2579 = vshrl.u32 %v711, 16
    %v2581 = vor.u32 %v2579, %v2577
    %v2583 = vshll.u32 %v712, 16
    %v2585 = vrot.slane %v2583, 1
    %v2586 = vsel %vm2535, %v2581, %v2585
    %v2587 = vshrl.u32 %v712, 16
    %v2589 = vor.u32 %v2587, %v2585
    %v2591 = vshll.u32 %v713, 16
    %v2593 = vrot.slane %v2591, 1
    %v2594 = vsel %vm2535, %v2589, %v2593
    %v2595 = vshrl.u32 %v713, 16
    %v2597 = vor.u32 %v2595, %v2593
    %v2599 = vshll.u32 %v714, 16
    %v2601 = vrot.slane %v2599, 1
    %v2602 = vsel %vm2535, %v2597, %v2601
    %v2603 = vshrl.u32 %v714, 16
    %v2605 = vor.u32 %v2603, %v2601
    %v2607 = vshll.u32 %v715, 16
    %v2609 = vrot.slane %v2607, 1
    %v2610 = vsel %vm2535, %v2605, %v2609
    %v2611 = vshrl.u32 %v715, 16
    %v2613 = vor.u32 %v2611, %v2609
    %v2615 = vshll.u32 %v716, 16
    %v2617 = vrot.slane %v2615, 1
    %v2618 = vsel %vm2535, %v2613, %v2617
    %v2619 = vshrl.u32 %v716, 16
    %v2621 = vor.u32 %v2619, %v2617
    %v2623 = vshll.u32 %v717, 16
    %v2625 = vrot.slane %v2623, 1
    %v2626 = vsel %vm2535, %v2621, %v2625
    %v2627 = vshrl.u32 %v717, 16
    %v2629 = vor.u32 %v2627, %v2625
    %v2631 = vshll.u32 %v718, 16
    %v2633 = vrot.slane %v2631, 1
    %v2634 = vsel %vm2535, %v2629, %v2633
    %v2635 = vshrl.u32 %v718, 16
    %v2637 = vor.u32 %v2635, %v2633
    %v2639 = vshll.u32 %v719, 16
    %v2641 = vrot.slane %v2639, 1
    %v2642 = vsel %vm2535, %v2637, %v2641
    %v2643 = vshrl.u32 %v719, 16
    %v2645 = vor.u32 %v2643, %v2641
    %v2647 = vshll.u32 %v720, 16
    %v2649 = vrot.slane %v2647, 1
    %v2650 = vsel %vm2535, %v2645, %v2649
    %v2651 = vshrl.u32 %v720, 16
    %v2668 = vand.u32 %v2651, %v1410
    %2670 = vmatprep.subr.bf16.mxu0 0
    %2671 = vmatpush1.bf16.msra.mxu0 %v2546
    %2672 = vmatprep.subr.bf16.mxu0 0
    %2673 = vmatpush1.bf16.msra.mxu0 %v2554
    %2674 = vmatprep.subr.bf16.mxu0 0
    %2675 = vmatpush1.bf16.msra.mxu0 %v2562
    %2676 = vmatprep.subr.bf16.mxu0 0
    %2677 = vmatpush1.bf16.msra.mxu0 %v2570
    %2678 = vmatprep.subr.bf16.mxu0 0
    %2679 = vmatpush1.bf16.msra.mxu0 %v2578
    %2680 = vmatprep.subr.bf16.mxu0 0
    %2681 = vmatpush1.bf16.msra.mxu0 %v2586
    %2682 = vmatprep.subr.bf16.mxu0 0
    %2683 = vmatpush1.bf16.msra.mxu0 %v2594
    %2684 = vmatprep.subr.bf16.mxu0 0
    %2685 = vmatpush1.bf16.msra.mxu0 %v2602
    %2686 = vmatprep.subr.bf16.mxu0 0
    %2687 = vmatpush1.bf16.msra.mxu0 %v2610
    %2688 = vmatprep.subr.bf16.mxu0 0
    %2689 = vmatpush1.bf16.msra.mxu0 %v2618
    %2690 = vmatprep.subr.bf16.mxu0 0
    %2691 = vmatpush1.bf16.msra.mxu0 %v2626
    %2692 = vmatprep.subr.bf16.mxu0 0
    %2693 = vmatpush1.bf16.msra.mxu0 %v2634
    %2694 = vmatprep.subr.bf16.mxu0 0
    %2695 = vmatpush1.bf16.msra.mxu0 %v2642
    %2696 = vmatprep.subr.bf16.mxu0 0
    %2697 = vmatpush1.bf16.msra.mxu0 %v2650
    %2698 = vmatprep.subr.bf16.mxu0 0
    %2699 = vmatpush1.bf16.msra.mxu0 %v2668
    %2700 = vmatprep.subr.bf16.mxu0 0
    %2701 = vmatpush1.bf16.msra.mxu0 0
    %2702 = vmatprep.mubr.bf16.mxu0 %v1262
    %2703 = vmatmul.mubr.bf16.gmra.mrb[0].mxu0 %v1113
    %v2704 = vpop.f32.mrb[0].mxu0
    %v2705 = vadd.f32 0.0, %v2704
    %v2706 = vpop.f32.mrb[0].mxu0
    %v2707 = vpop.f32.mrb[0].mxu0
    %v2708 = vadd.f32 0.0, %v2707
    %v2709 = vpop.f32.mrb[0].mxu0
    %2710 = vmatprep.mubr.bf16.mxu0 %v1265
    %2711 = vmatmul.mubr.bf16.gmra.mrb[0].mxu0 %v1115
    %v2712 = vpop.f32.mrb[0].mxu0
    %v2713 = vadd.f32 0.0, %v2712
    %v2714 = vpop.f32.mrb[0].mxu0
    %v2715 = vpop.f32.mrb[0].mxu0
    %v2716 = vadd.f32 0.0, %v2715
    %v2717 = vpop.f32.mrb[0].mxu0
    %2718 = vmatprep.mubr.bf16.mxu0 %v1268
    %2719 = vmatmul.mubr.bf16.gmra.mrb[0].mxu0 %v1117
    %v2720 = vpop.f32.mrb[0].mxu0
    %v2721 = vadd.f32 0.0, %v2720
    %v2722 = vpop.f32.mrb[0].mxu0
    %v2723 = vpop.f32.mrb[0].mxu0
    %v2724 = vadd.f32 0.0, %v2723
    %v2725 = vpop.f32.mrb[0].mxu0
    %2726 = vmatprep.mubr.bf16.mxu0 %v1271
    %2727 = vmatmul.mubr.bf16.gmra.mrb[0].mxu0 %v1119
    %v2728 = vpop.f32.mrb[0].mxu0
    %v2729 = vadd.f32 0.0, %v2728
    %v2730 = vpop.f32.mrb[0].mxu0
    %v2731 = vpop.f32.mrb[0].mxu0
    %v2732 = vadd.f32 0.0, %v2731
    %v2733 = vpop.f32.mrb[0].mxu0
    %2734 = vmatprep.mubr.bf16.mxu0 %v1274
    %2735 = vmatmul.mubr.bf16.gmra.mrb[0].mxu0 %v1121
    %v2736 = vpop.f32.mrb[0].mxu0
    %v2737 = vadd.f32 0.0, %v2736
    %v2738 = vpop.f32.mrb[0].mxu0
    %v2739 = vpop.f32.mrb[0].mxu0
    %v2740 = vadd.f32 0.0, %v2739
    %v2741 = vpop.f32.mrb[0].mxu0
    %2742 = vmatprep.mubr.bf16.mxu0 %v1277
    %2743 = vmatmul.mubr.bf16.gmra.mrb[0].mxu0 %v1123
    %v2744 = vpop.f32.mrb[0].mxu0
    %v2745 = vadd.f32 0.0, %v2744
    %v2746 = vpop.f32.mrb[0].mxu0
    %v2747 = vpop.f32.mrb[0].mxu0
    %v2748 = vadd.f32 0.0, %v2747
    %v2749 = vpop.f32.mrb[0].mxu0
    %2750 = vmatprep.mubr.bf16.mxu0 %v1280
    %2751 = vmatmul.mubr.bf16.gmra.mrb[0].mxu0 %v1125
    %v2752 = vpop.f32.mrb[0].mxu0
    %v2753 = vadd.f32 0.0, %v2752
    %v2754 = vpop.f32.mrb[0].mxu0
    %v2755 = vpop.f32.mrb[0].mxu0
    %v2756 = vadd.f32 0.0, %v2755
    %v2757 = vpop.f32.mrb[0].mxu0
    %2758 = vmatprep.mubr.bf16.mxu0 %v1283
    %2759 = vmatmul.mubr.bf16.gmra.mrb[0].mxu0 %v1127
    %v2760 = vpop.f32.mrb[0].mxu0
    %v2761 = vadd.f32 0.0, %v2760
    %v2762 = vpop.f32.mrb[0].mxu0
    %v2763 = vpop.f32.mrb[0].mxu0
    %v2764 = vadd.f32 0.0, %v2763
    %v2765 = vpop.f32.mrb[0].mxu0
    %2766 = vmatprep.mubr.bf16.mxu0 %v1286
    %2767 = vmatmul.mubr.bf16.gmra.mrb[0].mxu0 %v1129
    %v2768 = vpop.f32.mrb[0].mxu0
    %v2769 = vadd.f32 0.0, %v2768
    %v2770 = vpop.f32.mrb[0].mxu0
    %v2771 = vpop.f32.mrb[0].mxu0
    %v2772 = vadd.f32 0.0, %v2771
    %v2773 = vpop.f32.mrb[0].mxu0
    %2774 = vmatprep.mubr.bf16.mxu0 %v1289
    %2775 = vmatmul.mubr.bf16.gmra.mrb[0].mxu0 %v1131
    %v2776 = vpop.f32.mrb[0].mxu0
    %v2777 = vadd.f32 0.0, %v2776
    %v2778 = vpop.f32.mrb[0].mxu0
    %v2779 = vpop.f32.mrb[0].mxu0
    %v2780 = vadd.f32 0.0, %v2779
    %v2781 = vpop.f32.mrb[0].mxu0
    %2782 = vmatprep.mubr.bf16.mxu0 %v1292
    %2783 = vmatmul.mubr.bf16.gmra.mrb[0].mxu0 %v1133
    %v2784 = vpop.f32.mrb[0].mxu0
    %v2785 = vadd.f32 0.0, %v2784
    %v2786 = vpop.f32.mrb[0].mxu0
    %v2787 = vpop.f32.mrb[0].mxu0
    %v2788 = vadd.f32 0.0, %v2787
    %v2789 = vpop.f32.mrb[0].mxu0
    %2790 = vmatprep.mubr.bf16.mxu0 %v1295
    %2791 = vmatmul.mubr.bf16.gmra.mrb[0].mxu0 %v1135
    %v2792 = vpop.f32.mrb[0].mxu0
    %v2793 = vadd.f32 0.0, %v2792
    %v2794 = vpop.f32.mrb[0].mxu0
    %v2795 = vpop.f32.mrb[0].mxu0
    %v2796 = vadd.f32 0.0, %v2795
    %v2797 = vpop.f32.mrb[0].mxu0
    %2798 = vmatprep.mubr.bf16.mxu0 %v1298
    %2799 = vmatmul.mubr.bf16.gmra.mrb[0].mxu0 %v1137
    %v2800 = vpop.f32.mrb[0].mxu0
    %v2801 = vadd.f32 0.0, %v2800
    %v2802 = vpop.f32.mrb[0].mxu0
    %v2803 = vpop.f32.mrb[0].mxu0
    %v2804 = vadd.f32 0.0, %v2803
    %v2805 = vpop.f32.mrb[0].mxu0
    %2806 = vmatprep.mubr.bf16.mxu0 %v1301
    %2807 = vmatmul.mubr.bf16.gmra.mrb[0].mxu0 %v1139
    %v2808 = vpop.f32.mrb[0].mxu0
    %v2809 = vadd.f32 0.0, %v2808
    %v2810 = vpop.f32.mrb[0].mxu0
    %v2811 = vpop.f32.mrb[0].mxu0
    %v2812 = vadd.f32 0.0, %v2811
    %v2813 = vpop.f32.mrb[0].mxu0
    %2814 = vmatprep.mubr.bf16.mxu0 %v1304
    %2815 = vmatmul.mubr.bf16.gmra.mrb[0].mxu0 %v1141
    %v2816 = vpop.f32.mrb[0].mxu0
    %v2817 = vadd.f32 0.0, %v2816
    %v2818 = vpop.f32.mrb[0].mxu0
    %v2819 = vpop.f32.mrb[0].mxu0
    %v2820 = vadd.f32 0.0, %v2819
    %v2821 = vpop.f32.mrb[0].mxu0
    %2822 = vmatprep.mubr.bf16.mxu0 %v1307
    %2823 = vmatmul.mubr.bf16.gmra.mrb[0].mxu0 %v1143
    %v2824 = vpop.f32.mrb[0].mxu0
    %v2825 = vadd.f32 0.0, %v2824
    %v2826 = vpop.f32.mrb[0].mxu0
    %v2827 = vpop.f32.mrb[0].mxu0
    %v2828 = vadd.f32 0.0, %v2827
    %v2829 = vpop.f32.mrb[0].mxu0
    %2830 = vmatprep.mubr.bf16.mxu0 %v1310
    %2831 = vmatmul.mubr.bf16.gmra.mrb[0].mxu0 %v1145
    %v2832 = vpop.f32.mrb[0].mxu0
    %v2833 = vadd.f32 0.0, %v2832
    %v2834 = vpop.f32.mrb[0].mxu0
    %v2835 = vpop.f32.mrb[0].mxu0
    %v2836 = vadd.f32 0.0, %v2835
    %v2837 = vpop.f32.mrb[0].mxu0
    %2838 = vmatprep.mubr.bf16.mxu0 %v1313
    %2839 = vmatmul.mubr.bf16.gmra.mrb[0].mxu0 %v1147
    %v2840 = vpop.f32.mrb[0].mxu0
    %v2841 = vadd.f32 0.0, %v2840
    %v2842 = vpop.f32.mrb[0].mxu0
    %v2843 = vpop.f32.mrb[0].mxu0
    %v2844 = vadd.f32 0.0, %v2843
    %v2845 = vpop.f32.mrb[0].mxu0
    %2846 = vmatprep.mubr.bf16.mxu0 %v1316
    %2847 = vmatmul.mubr.bf16.gmra.mrb[0].mxu0 %v1149
    %v2848 = vpop.f32.mrb[0].mxu0
    %v2849 = vadd.f32 0.0, %v2848
    %v2850 = vpop.f32.mrb[0].mxu0
    %v2851 = vpop.f32.mrb[0].mxu0
    %v2852 = vadd.f32 0.0, %v2851
    %v2853 = vpop.f32.mrb[0].mxu0
    %2854 = vmatprep.mubr.bf16.mxu0 %v1319
    %2855 = vmatmul.mubr.bf16.gmra.mrb[0].mxu0 %v1151
    %v2856 = vpop.f32.mrb[0].mxu0
    %v2857 = vadd.f32 0.0, %v2856
    %v2858 = vpop.f32.mrb[0].mxu0
    %v2859 = vpop.f32.mrb[0].mxu0
    %v2860 = vadd.f32 0.0, %v2859
    %v2861 = vpop.f32.mrb[0].mxu0
    %2862 = vmatprep.mubr.bf16.mxu0 %v1322
    %2863 = vmatmul.mubr.bf16.gmra.mrb[0].mxu0 %v1153
    %v2864 = vpop.f32.mrb[0].mxu0
    %v2865 = vadd.f32 0.0, %v2864
    %v2866 = vpop.f32.mrb[0].mxu0
    %v2867 = vpop.f32.mrb[0].mxu0
    %v2868 = vadd.f32 0.0, %v2867
    %v2869 = vpop.f32.mrb[0].mxu0
    %2870 = vmatprep.mubr.bf16.mxu0 %v1325
    %2871 = vmatmul.mubr.bf16.gmra.mrb[0].mxu0 %v1155
    %v2872 = vpop.f32.mrb[0].mxu0
    %v2873 = vadd.f32 0.0, %v2872
    %v2874 = vpop.f32.mrb[0].mxu0
    %v2875 = vpop.f32.mrb[0].mxu0
    %v2876 = vadd.f32 0.0, %v2875
    %v2877 = vpop.f32.mrb[0].mxu0
    %2878 = vmatprep.mubr.bf16.mxu0 %v1328
    %2879 = vmatmul.mubr.bf16.gmra.mrb[0].mxu0 %v1157
    %v2880 = vpop.f32.mrb[0].mxu0
    %v2881 = vadd.f32 0.0, %v2880
    %v2882 = vpop.f32.mrb[0].mxu0
    %v2883 = vpop.f32.mrb[0].mxu0
    %v2884 = vadd.f32 0.0, %v2883
    %v2885 = vpop.f32.mrb[0].mxu0
    %2886 = vmatprep.mubr.bf16.mxu0 %v1331
    %2887 = vmatmul.mubr.bf16.gmra.mrb[0].mxu0 %v1159
    %v2888 = vpop.f32.mrb[0].mxu0
    %v2889 = vadd.f32 0.0, %v2888
    %v2890 = vpop.f32.mrb[0].mxu0
    %v2891 = vpop.f32.mrb[0].mxu0
    %v2892 = vadd.f32 0.0, %v2891
    %v2893 = vpop.f32.mrb[0].mxu0
    %2894 = vmatprep.mubr.bf16.mxu0 %v1334
    %2895 = vmatmul.mubr.bf16.gmra.mrb[0].mxu0 %v1161
    %v2896 = vpop.f32.mrb[0].mxu0
    %v2897 = vadd.f32 0.0, %v2896
    %v2898 = vpop.f32.mrb[0].mxu0
    %v2899 = vpop.f32.mrb[0].mxu0
    %v2900 = vadd.f32 0.0, %v2899
    %v2901 = vpop.f32.mrb[0].mxu0
    %2902 = vmatprep.mubr.bf16.mxu0 %v1337
    %2903 = vmatmul.mubr.bf16.gmra.mrb[0].mxu0 %v1163
    %v2904 = vpop.f32.mrb[0].mxu0
    %v2905 = vadd.f32 0.0, %v2904
    %v2906 = vpop.f32.mrb[0].mxu0
    %v2907 = vpop.f32.mrb[0].mxu0
    %v2908 = vadd.f32 0.0, %v2907
    %v2909 = vpop.f32.mrb[0].mxu0
    %2910 = vmatprep.mubr.bf16.mxu0 %v1340
    %2911 = vmatmul.mubr.bf16.gmra.mrb[0].mxu0 %v1165
    %v2912 = vpop.f32.mrb[0].mxu0
    %v2913 = vadd.f32 0.0, %v2912
    %v2914 = vpop.f32.mrb[0].mxu0
    %v2915 = vpop.f32.mrb[0].mxu0
    %v2916 = vadd.f32 0.0, %v2915
    %v2917 = vpop.f32.mrb[0].mxu0
    %2918 = vmatprep.mubr.bf16.mxu0 %v1343
    %2919 = vmatmul.mubr.bf16.gmra.mrb[0].mxu0 %v1167
    %v2920 = vpop.f32.mrb[0].mxu0
    %v2921 = vadd.f32 0.0, %v2920
    %v2922 = vpop.f32.mrb[0].mxu0
    %v2923 = vpop.f32.mrb[0].mxu0
    %v2924 = vadd.f32 0.0, %v2923
    %v2925 = vpop.f32.mrb[0].mxu0
    %2926 = vmatprep.mubr.bf16.mxu0 %v1346
    %2927 = vmatmul.mubr.bf16.gmra.mrb[0].mxu0 %v1169
    %v2928 = vpop.f32.mrb[0].mxu0
    %v2929 = vadd.f32 0.0, %v2928
    %v2930 = vpop.f32.mrb[0].mxu0
    %v2931 = vpop.f32.mrb[0].mxu0
    %v2932 = vadd.f32 0.0, %v2931
    %v2933 = vpop.f32.mrb[0].mxu0
    %2934 = vmatprep.mubr.bf16.mxu0 %v1349
    %2935 = vmatmul.mubr.bf16.gmra.mrb[0].mxu0 %v1171
    %v2936 = vpop.f32.mrb[0].mxu0
    %v2937 = vadd.f32 0.0, %v2936
    %v2938 = vpop.f32.mrb[0].mxu0
    %v2939 = vpop.f32.mrb[0].mxu0
    %v2940 = vadd.f32 0.0, %v2939
    %v2941 = vpop.f32.mrb[0].mxu0
    %2942 = vmatprep.mubr.bf16.mxu0 %v1352
    %2943 = vmatmul.mubr.bf16.gmra.mrb[0].mxu0 %v1173
    %v2944 = vpop.f32.mrb[0].mxu0
    %v2945 = vadd.f32 0.0, %v2944
    %v2946 = vpop.f32.mrb[0].mxu0
    %v2947 = vpop.f32.mrb[0].mxu0
    %v2948 = vadd.f32 0.0, %v2947
    %v2949 = vpop.f32.mrb[0].mxu0
    %2950 = vmatprep.mubr.bf16.mxu0 %v1355
    %2951 = vmatmul.mubr.bf16.gmra.mrb[0].mxu0 %v1175
    %v2952 = vpop.f32.mrb[0].mxu0
    %v2953 = vadd.f32 0.0, %v2952
    %v2954 = vpop.f32.mrb[0].mxu0
    %v2955 = vpop.f32.mrb[0].mxu0
    %v2956 = vadd.f32 0.0, %v2955
    %v2957 = vpop.f32.mrb[0].mxu0
    %2958 = vmatprep.mubr.bf16.mxu0 %v1358
    %2959 = vmatmul.mubr.bf16.gmra.mrb[0].mxu0 %v1177
    %v2960 = vpop.f32.mrb[0].mxu0
    %v2961 = vadd.f32 0.0, %v2960
    %v2962 = vpop.f32.mrb[0].mxu0
    %v2963 = vpop.f32.mrb[0].mxu0
    %v2964 = vadd.f32 0.0, %v2963
    %v2965 = vpop.f32.mrb[0].mxu0
    %2966 = vmatprep.mubr.bf16.mxu0 %v1361
    %2967 = vmatmul.mubr.bf16.gmra.mrb[0].mxu0 %v1179
    %v2968 = vpop.f32.mrb[0].mxu0
    %v2969 = vadd.f32 0.0, %v2968
    %v2970 = vpop.f32.mrb[0].mxu0
    %v2971 = vpop.f32.mrb[0].mxu0
    %v2972 = vadd.f32 0.0, %v2971
    %v2973 = vpop.f32.mrb[0].mxu0
    %2974 = vmatprep.mubr.bf16.mxu0 %v1364
    %2975 = vmatmul.mubr.bf16.gmra.mrb[0].mxu0 %v1181
    %v2976 = vpop.f32.mrb[0].mxu0
    %v2977 = vadd.f32 0.0, %v2976
    %v2978 = vpop.f32.mrb[0].mxu0
    %v2979 = vpop.f32.mrb[0].mxu0
    %v2980 = vadd.f32 0.0, %v2979
    %v2981 = vpop.f32.mrb[0].mxu0
    %2982 = vmatprep.mubr.bf16.mxu0 %v1367
    %2983 = vmatmul.mubr.bf16.gmra.mrb[0].mxu0 %v1183
    %v2984 = vpop.f32.mrb[0].mxu0
    %v2985 = vadd.f32 0.0, %v2984
    %v2986 = vpop.f32.mrb[0].mxu0
    %v2987 = vpop.f32.mrb[0].mxu0
    %v2988 = vadd.f32 0.0, %v2987
    %v2989 = vpop.f32.mrb[0].mxu0
    %2990 = vmatprep.mubr.bf16.mxu0 %v1370
    %2991 = vmatmul.mubr.bf16.gmra.mrb[0].mxu0 %v1185
    %v2992 = vpop.f32.mrb[0].mxu0
    %v2993 = vadd.f32 0.0, %v2992
    %v2994 = vpop.f32.mrb[0].mxu0
    %v2995 = vpop.f32.mrb[0].mxu0
    %v2996 = vadd.f32 0.0, %v2995
    %v2997 = vpop.f32.mrb[0].mxu0
    %2998 = vmatprep.mubr.bf16.mxu0 %v1373
    %2999 = vmatmul.mubr.bf16.gmra.mrb[0].mxu0 %v1187
    %v3000 = vpop.f32.mrb[0].mxu0
    %v3001 = vadd.f32 0.0, %v3000
    %v3002 = vpop.f32.mrb[0].mxu0
    %v3003 = vpop.f32.mrb[0].mxu0
    %v3004 = vadd.f32 0.0, %v3003
    %v3005 = vpop.f32.mrb[0].mxu0
    %3006 = vmatprep.mubr.bf16.mxu0 %v1376
    %3007 = vmatmul.mubr.bf16.gmra.mrb[0].mxu0 %v1189
    %v3008 = vpop.f32.mrb[0].mxu0
    %v3009 = vadd.f32 0.0, %v3008
    %v3010 = vpop.f32.mrb[0].mxu0
    %v3011 = vpop.f32.mrb[0].mxu0
    %v3012 = vadd.f32 0.0, %v3011
    %v3013 = vpop.f32.mrb[0].mxu0
    %3014 = vmatprep.mubr.bf16.mxu0 %v1379
    %3015 = vmatmul.mubr.bf16.gmra.mrb[0].mxu0 %v1191
    %v3016 = vpop.f32.mrb[0].mxu0
    %v3017 = vadd.f32 0.0, %v3016
    %v3018 = vpop.f32.mrb[0].mxu0
    %v3019 = vpop.f32.mrb[0].mxu0
    %v3020 = vadd.f32 0.0, %v3019
    %v3021 = vpop.f32.mrb[0].mxu0
    %3022 = vmatprep.mubr.bf16.mxu0 %v1382
    %3023 = vmatmul.mubr.bf16.gmra.mrb[0].mxu0 %v1193
    %v3024 = vpop.f32.mrb[0].mxu0
    %v3025 = vadd.f32 0.0, %v3024
    %v3026 = vpop.f32.mrb[0].mxu0
    %v3027 = vpop.f32.mrb[0].mxu0
    %v3028 = vadd.f32 0.0, %v3027
    %v3029 = vpop.f32.mrb[0].mxu0
    %3030 = vmatprep.mubr.bf16.mxu0 %v1385
    %3031 = vmatmul.mubr.bf16.gmra.mrb[0].mxu0 %v1195
    %v3032 = vpop.f32.mrb[0].mxu0
    %v3033 = vadd.f32 0.0, %v3032
    %v3034 = vpop.f32.mrb[0].mxu0
    %v3035 = vpop.f32.mrb[0].mxu0
    %v3036 = vadd.f32 0.0, %v3035
    %v3037 = vpop.f32.mrb[0].mxu0
    %3038 = vmatprep.mubr.bf16.mxu0 %v1388
    %3039 = vmatmul.mubr.bf16.gmra.mrb[0].mxu0 %v1197
    %v3040 = vpop.f32.mrb[0].mxu0
    %v3041 = vadd.f32 0.0, %v3040
    %v3042 = vpop.f32.mrb[0].mxu0
    %v3043 = vpop.f32.mrb[0].mxu0
    %v3044 = vadd.f32 0.0, %v3043
    %v3045 = vpop.f32.mrb[0].mxu0
    %3046 = vmatprep.mubr.bf16.mxu0 %v1391
    %3047 = vmatmul.mubr.bf16.gmra.mrb[0].mxu0 %v1199
    %v3048 = vpop.f32.mrb[0].mxu0
    %v3049 = vadd.f32 0.0, %v3048
    %v3050 = vpop.f32.mrb[0].mxu0
    %v3051 = vpop.f32.mrb[0].mxu0
    %v3052 = vadd.f32 0.0, %v3051
    %v3053 = vpop.f32.mrb[0].mxu0
    %3054 = vmatprep.mubr.bf16.mxu0 %v1394
    %3055 = vmatmul.mubr.bf16.gmra.mrb[0].mxu0 %v1201
    %v3056 = vpop.f32.mrb[0].mxu0
    %v3057 = vadd.f32 0.0, %v3056
    %v3058 = vpop.f32.mrb[0].mxu0
    %v3059 = vpop.f32.mrb[0].mxu0
    %v3060 = vadd.f32 0.0, %v3059
    %v3061 = vpop.f32.mrb[0].mxu0
    %3062 = vmatprep.mubr.bf16.mxu0 %v1397
    %3063 = vmatmul.mubr.bf16.gmra.mrb[0].mxu0 %v1203
    %v3064 = vpop.f32.mrb[0].mxu0
    %v3065 = vadd.f32 0.0, %v3064
    %v3066 = vpop.f32.mrb[0].mxu0
    %v3067 = vpop.f32.mrb[0].mxu0
    %v3068 = vadd.f32 0.0, %v3067
    %v3069 = vpop.f32.mrb[0].mxu0
    %3070 = vmatprep.mubr.bf16.mxu0 %v1400
    %3071 = vmatmul.mubr.bf16.gmra.mrb[0].mxu0 %v1205
    %v3072 = vpop.f32.mrb[0].mxu0
    %v3073 = vadd.f32 0.0, %v3072
    %v3074 = vpop.f32.mrb[0].mxu0
    %v3075 = vpop.f32.mrb[0].mxu0
    %v3076 = vadd.f32 0.0, %v3075
    %v3077 = vpop.f32.mrb[0].mxu0
    %3078 = vmatprep.mubr.bf16.mxu0 %v1403
    %3079 = vmatmul.mubr.bf16.gmra.mrb[0].mxu0 %v1207
    %v3080 = vpop.f32.mrb[0].mxu0
    %v3081 = vadd.f32 0.0, %v3080
    %v3082 = vpop.f32.mrb[0].mxu0
    %v3083 = vpop.f32.mrb[0].mxu0
    %v3084 = vadd.f32 0.0, %v3083
    %v3085 = vpop.f32.mrb[0].mxu0
    %3086 = vmatprep.mubr.bf16.mxu0 %v1406
    %3087 = vmatmul.mubr.bf16.gmra.mrb[0].mxu0 %v1209
    %v3088 = vpop.f32.mrb[0].mxu0
    %v3089 = vadd.f32 0.0, %v3088
    %v3090 = vpop.f32.mrb[0].mxu0
    %v3091 = vpop.f32.mrb[0].mxu0
    %v3092 = vadd.f32 0.0, %v3091
    %v3093 = vpop.f32.mrb[0].mxu0
    %3094 = vdwg.mxu0
    %v3102 = vrot.slane %v2705, 7
    %v3103 = vrot.slane %v2708, 7
    %v3104 = vsel %vm1408, %v3102, %v3103
    %v3105 = vrot.slane %v2713, 7
    %v3106 = vsel %vm1408, %v3103, %v3105
    %v3107 = vrot.slane %v2716, 7
    %v3108 = vsel %vm1408, %v3105, %v3107
    %v3109 = vrot.slane %v2721, 7
    %v3110 = vsel %vm1408, %v3107, %v3109
    %v3111 = vrot.slane %v2724, 7
    %v3112 = vsel %vm1408, %v3109, %v3111
    %v3113 = vrot.slane %v2729, 7
    %v3114 = vsel %vm1408, %v3111, %v3113
    %vm3122 = vcmask 130049
    %3123 = vst.msk [vmem:[#allocation2 + $0x60] sm:$0xfe] %vm3122, %v3102
    %3124 = vst.msk [vmem:[#allocation2 + $0x70] sm:$0xff] %vm1839, %v3104
    %3125 = vst.msk [vmem:[#allocation2 + $0x80] sm:$0xff] %vm1839, %v3106
    %3126 = vst.msk [vmem:[#allocation2 + $0x90] sm:$0xff] %vm1839, %v3108
    %3127 = vst.msk [vmem:[#allocation2 + $0xa0] sm:$0xff] %vm1839, %v3110
    %3128 = vst.msk [vmem:[#allocation2 + $0xb0] sm:$0xff] %vm1839, %v3112
    %vm3129 = vcmask 123904
    %3130 = vst.msk [vmem:[#allocation2 + $0xc0] sm:$0x3] %vm3129, %v3114
    %3137 = vrot.lane.b32.xlu0 %v2729, 16
    %v3138 = vpop.permute.xlu0 %3137
    %3139 = vrot.lane.b32.xlu0 %v2732, 16
    %v3140 = vpop.permute.xlu0 %3139
    %3141 = vrot.lane.b32.xlu0 %v2737, 16
    %v3142 = vpop.permute.xlu0 %3141
    %3143 = vrot.lane.b32.xlu0 %v2740, 16
    %v3144 = vpop.permute.xlu0 %3143
    %3145 = vrot.lane.b32.xlu0 %v2745, 16
    %v3146 = vpop.permute.xlu0 %3145
    %3147 = vrot.lane.b32.xlu0 %v2748, 16
    %v3148 = vpop.permute.xlu0 %3147
    %3149 = vrot.lane.b32.xlu0 %v2753, 16
    %v3150 = vpop.permute.xlu0 %3149
    %vm3158 = vcmask 261249
    %3159 = vst.msk [vmem:[#allocation2 + $0x60] sm:$0xfe] %vm3158, %v3138
    %3160 = vst.msk [vmem:[#allocation2 + $0x70] sm:$0xff] %vm1890, %v3140
    %3161 = vst.msk [vmem:[#allocation2 + $0x80] sm:$0xff] %vm1890, %v3142
    %3162 = vst.msk [vmem:[#allocation2 + $0x90] sm:$0xff] %vm1890, %v3144
    %3163 = vst.msk [vmem:[#allocation2 + $0xa0] sm:$0xff] %vm1890, %v3146
    %3164 = vst.msk [vmem:[#allocation2 + $0xb0] sm:$0xff] %vm1890, %v3148
    %vm3165 = vcmask 255104
    %3166 = vst.msk [vmem:[#allocation2 + $0xc0] sm:$0x3] %vm3165, %v3150
    %v3173 = vrot.slane %v2753, 1
    %v3174 = vrot.slane %v2756, 1
    %v3175 = vsel %vm1855, %v3173, %v3174
    %v3176 = vrot.slane %v2761, 1
    %v3177 = vsel %vm1855, %v3174, %v3176
    %v3178 = vrot.slane %v2764, 1
    %v3179 = vsel %vm1855, %v3176, %v3178
    %v3180 = vrot.slane %v2769, 1
    %v3181 = vsel %vm1855, %v3178, %v3180
    %v3182 = vrot.slane %v2772, 1
    %v3183 = vsel %vm1855, %v3180, %v3182
    %v3184 = vrot.slane %v2777, 1
    %v3185 = vsel %vm1855, %v3182, %v3184
    %3186 = vrot.lane.b32.xlu0 %v3175, 32
    %v3187 = vpop.permute.xlu0 %3186
    %3188 = vrot.lane.b32.xlu0 %v3177, 32
    %v3189 = vpop.permute.xlu0 %3188
    %3190 = vrot.lane.b32.xlu0 %v3179, 32
    %v3191 = vpop.permute.xlu0 %3190
    %3192 = vrot.lane.b32.xlu0 %v3181, 32
    %v3193 = vpop.permute.xlu0 %3192
    %3194 = vrot.lane.b32.xlu0 %v3183, 32
    %v3195 = vpop.permute.xlu0 %3194
    %3196 = vrot.lane.b32.xlu0 %v3185, 32
    %v3197 = vpop.permute.xlu0 %3196
    %3198 = vrot.lane.b32.xlu0 %v3184, 32
    %v3199 = vpop.permute.xlu0 %3198
    %vm3207 = vcmask 392449
    %3208 = vst.msk [vmem:[#allocation2 + $0x60] sm:$0xfe] %vm3207, %v3187
    %3209 = vst.msk [vmem:[#allocation2 + $0x70] sm:$0xff] %vm1940, %v3189
    %3210 = vst.msk [vmem:[#allocation2 + $0x80] sm:$0xff] %vm1940, %v3191
    %3211 = vst.msk [vmem:[#allocation2 + $0x90] sm:$0xff] %vm1940, %v3193
    %3212 = vst.msk [vmem:[#allocation2 + $0xa0] sm:$0xff] %vm1940, %v3195
    %3213 = vst.msk [vmem:[#allocation2 + $0xb0] sm:$0xff] %vm1940, %v3197
    %vm3214 = vcmask 386304
    %3215 = vst.msk [vmem:[#allocation2 + $0xc0] sm:$0x3] %vm3214, %v3199
    %v3222 = vrot.slane %v2777, 2
    %v3223 = vrot.slane %v2780, 2
    %v3224 = vsel %vm1905, %v3222, %v3223
    %v3225 = vrot.slane %v2785, 2
    %v3226 = vsel %vm1905, %v3223, %v3225
    %v3227 = vrot.slane %v2788, 2
    %v3228 = vsel %vm1905, %v3225, %v3227
    %v3229 = vrot.slane %v2793, 2
    %v3230 = vsel %vm1905, %v3227, %v3229
    %v3231 = vrot.slane %v2796, 2
    %v3232 = vsel %vm1905, %v3229, %v3231
    %v3233 = vrot.slane %v2801, 2
    %v3234 = vsel %vm1905, %v3231, %v3233
    %3235 = vrot.lane.b32.xlu0 %v3224, 48
    %v3236 = vpop.permute.xlu0 %3235
    %3237 = vrot.lane.b32.xlu0 %v3226, 48
    %v3238 = vpop.permute.xlu0 %3237
    %3239 = vrot.lane.b32.xlu0 %v3228, 48
    %v3240 = vpop.permute.xlu0 %3239
    %3241 = vrot.lane.b32.xlu0 %v3230, 48
    %v3242 = vpop.permute.xlu0 %3241
    %3243 = vrot.lane.b32.xlu0 %v3232, 48
    %v3244 = vpop.permute.xlu0 %3243
    %3245 = vrot.lane.b32.xlu0 %v3234, 48
    %v3246 = vpop.permute.xlu0 %3245
    %3247 = vrot.lane.b32.xlu0 %v3233, 48
    %v3248 = vpop.permute.xlu0 %3247
    %vm3256 = vcmask 523649
    %3257 = vst.msk [vmem:[#allocation2 + $0x60] sm:$0xfe] %vm3256, %v3236
    %3258 = vst.msk [vmem:[#allocation2 + $0x70] sm:$0xff] %vm1990, %v3238
    %3259 = vst.msk [vmem:[#allocation2 + $0x80] sm:$0xff] %vm1990, %v3240
    %3260 = vst.msk [vmem:[#allocation2 + $0x90] sm:$0xff] %vm1990, %v3242
    %3261 = vst.msk [vmem:[#allocation2 + $0xa0] sm:$0xff] %vm1990, %v3244
    %3262 = vst.msk [vmem:[#allocation2 + $0xb0] sm:$0xff] %vm1990, %v3246
    %vm3263 = vcmask 517504
    %3264 = vst.msk [vmem:[#allocation2 + $0xc0] sm:$0x3] %vm3263, %v3248
    %v3271 = vrot.slane %v2801, 3
    %v3272 = vrot.slane %v2804, 3
    %v3273 = vsel %vm1955, %v3271, %v3272
    %v3274 = vrot.slane %v2809, 3
    %v3275 = vsel %vm1955, %v3272, %v3274
    %v3276 = vrot.slane %v2812, 3
    %v3277 = vsel %vm1955, %v3274, %v3276
    %v3278 = vrot.slane %v2817, 3
    %v3279 = vsel %vm1955, %v3276, %v3278
    %v3280 = vrot.slane %v2820, 3
    %v3281 = vsel %vm1955, %v3278, %v3280
    %v3282 = vrot.slane %v2825, 3
    %v3283 = vsel %vm1955, %v3280, %v3282
    %3284 = vrot.lane.b32.xlu0 %v3273, 64
    %v3285 = vpop.permute.xlu0 %3284
    %3286 = vrot.lane.b32.xlu0 %v3275, 64
    %v3287 = vpop.permute.xlu0 %3286
    %3288 = vrot.lane.b32.xlu0 %v3277, 64
    %v3289 = vpop.permute.xlu0 %3288
    %3290 = vrot.lane.b32.xlu0 %v3279, 64
    %v3291 = vpop.permute.xlu0 %3290
    %3292 = vrot.lane.b32.xlu0 %v3281, 64
    %v3293 = vpop.permute.xlu0 %3292
    %3294 = vrot.lane.b32.xlu0 %v3283, 64
    %v3295 = vpop.permute.xlu0 %3294
    %3296 = vrot.lane.b32.xlu0 %v3282, 64
    %v3297 = vpop.permute.xlu0 %3296
    %vm3305 = vcmask 654849
    %3306 = vst.msk [vmem:[#allocation2 + $0x60] sm:$0xfe] %vm3305, %v3285
    %3307 = vst.msk [vmem:[#allocation2 + $0x70] sm:$0xff] %vm2040, %v3287
    %3308 = vst.msk [vmem:[#allocation2 + $0x80] sm:$0xff] %vm2040, %v3289
    %3309 = vst.msk [vmem:[#allocation2 + $0x90] sm:$0xff] %vm2040, %v3291
    %3310 = vst.msk [vmem:[#allocation2 + $0xa0] sm:$0xff] %vm2040, %v3293
    %3311 = vst.msk [vmem:[#allocation2 + $0xb0] sm:$0xff] %vm2040, %v3295
    %vm3312 = vcmask 648704
    %3313 = vst.msk [vmem:[#allocation2 + $0xc0] sm:$0x3] %vm3312, %v3297
    %v3320 = vrot.slane %v2825, 4
    %v3321 = vrot.slane %v2828, 4
    %v3322 = vsel %vm2005, %v3320, %v3321
    %v3323 = vrot.slane %v2833, 4
    %v3324 = vsel %vm2005, %v3321, %v3323
    %v3325 = vrot.slane %v2836, 4
    %v3326 = vsel %vm2005, %v3323, %v3325
    %v3327 = vrot.slane %v2841, 4
    %v3328 = vsel %vm2005, %v3325, %v3327
    %v3329 = vrot.slane %v2844, 4
    %v3330 = vsel %vm2005, %v3327, %v3329
    %v3331 = vrot.slane %v2849, 4
    %v3332 = vsel %vm2005, %v3329, %v3331
    %3333 = vrot.lane.b32.xlu0 %v3322, 80
    %v3334 = vpop.permute.xlu0 %3333
    %3335 = vrot.lane.b32.xlu0 %v3324, 80
    %v3336 = vpop.permute.xlu0 %3335
    %3337 = vrot.lane.b32.xlu0 %v3326, 80
    %v3338 = vpop.permute.xlu0 %3337
    %3339 = vrot.lane.b32.xlu0 %v3328, 80
    %v3340 = vpop.permute.xlu0 %3339
    %3341 = vrot.lane.b32.xlu0 %v3330, 80
    %v3342 = vpop.permute.xlu0 %3341
    %3343 = vrot.lane.b32.xlu0 %v3332, 80
    %v3344 = vpop.permute.xlu0 %3343
    %3345 = vrot.lane.b32.xlu0 %v3331, 80
    %v3346 = vpop.permute.xlu0 %3345
    %vm3354 = vcmask 786049
    %3355 = vst.msk [vmem:[#allocation2 + $0x60] sm:$0xfe] %vm3354, %v3334
    %3356 = vst.msk [vmem:[#allocation2 + $0x70] sm:$0xff] %vm2090, %v3336
    %3357 = vst.msk [vmem:[#allocation2 + $0x80] sm:$0xff] %vm2090, %v3338
    %3358 = vst.msk [vmem:[#allocation2 + $0x90] sm:$0xff] %vm2090, %v3340
    %3359 = vst.msk [vmem:[#allocation2 + $0xa0] sm:$0xff] %vm2090, %v3342
    %3360 = vst.msk [vmem:[#allocation2 + $0xb0] sm:$0xff] %vm2090, %v3344
    %vm3361 = vcmask 779904
    %3362 = vst.msk [vmem:[#allocation2 + $0xc0] sm:$0x3] %vm3361, %v3346
    %v3369 = vrot.slane %v2849, 5
    %v3370 = vrot.slane %v2852, 5
    %v3371 = vsel %vm2055, %v3369, %v3370
    %v3372 = vrot.slane %v2857, 5
    %v3373 = vsel %vm2055, %v3370, %v3372
    %v3374 = vrot.slane %v2860, 5
    %v3375 = vsel %vm2055, %v3372, %v3374
    %v3376 = vrot.slane %v2865, 5
    %v3377 = vsel %vm2055, %v3374, %v3376
    %v3378 = vrot.slane %v2868, 5
    %v3379 = vsel %vm2055, %v3376, %v3378
    %v3380 = vrot.slane %v2873, 5
    %v3381 = vsel %vm2055, %v3378, %v3380
    %3382 = vrot.lane.b32.xlu0 %v3371, 96
    %v3383 = vpop.permute.xlu0 %3382
    %3384 = vrot.lane.b32.xlu0 %v3373, 96
    %v3385 = vpop.permute.xlu0 %3384
    %3386 = vrot.lane.b32.xlu0 %v3375, 96
    %v3387 = vpop.permute.xlu0 %3386
    %3388 = vrot.lane.b32.xlu0 %v3377, 96
    %v3389 = vpop.permute.xlu0 %3388
    %3390 = vrot.lane.b32.xlu0 %v3379, 96
    %v3391 = vpop.permute.xlu0 %3390
    %3392 = vrot.lane.b32.xlu0 %v3381, 96
    %v3393 = vpop.permute.xlu0 %3392
    %3394 = vrot.lane.b32.xlu0 %v3380, 96
    %v3395 = vpop.permute.xlu0 %3394
    %vm3403 = vcmask 917249
    %3404 = vst.msk [vmem:[#allocation2 + $0x60] sm:$0xfe] %vm3403, %v3383
    %3405 = vst.msk [vmem:[#allocation2 + $0x70] sm:$0xff] %vm2140, %v3385
    %3406 = vst.msk [vmem:[#allocation2 + $0x80] sm:$0xff] %vm2140, %v3387
    %3407 = vst.msk [vmem:[#allocation2 + $0x90] sm:$0xff] %vm2140, %v3389
    %3408 = vst.msk [vmem:[#allocation2 + $0xa0] sm:$0xff] %vm2140, %v3391
    %3409 = vst.msk [vmem:[#allocation2 + $0xb0] sm:$0xff] %vm2140, %v3393
    %vm3410 = vcmask 911104
    %3411 = vst.msk [vmem:[#allocation2 + $0xc0] sm:$0x3] %vm3410, %v3395
    %v3418 = vrot.slane %v2873, 6
    %v3419 = vrot.slane %v2876, 6
    %v3420 = vsel %vm2105, %v3418, %v3419
    %v3421 = vrot.slane %v2881, 6
    %v3422 = vsel %vm2105, %v3419, %v3421
    %v3423 = vrot.slane %v2884, 6
    %v3424 = vsel %vm2105, %v3421, %v3423
    %v3425 = vrot.slane %v2889, 6
    %v3426 = vsel %vm2105, %v3423, %v3425
    %v3427 = vrot.slane %v2892, 6
    %v3428 = vsel %vm2105, %v3425, %v3427
    %v3429 = vrot.slane %v2897, 6
    %v3430 = vsel %vm2105, %v3427, %v3429
    %3431 = vrot.lane.b32.xlu0 %v3420, 112
    %v3432 = vpop.permute.xlu0 %3431
    %3433 = vrot.lane.b32.xlu0 %v3422, 112
    %v3434 = vpop.permute.xlu0 %3433
    %3435 = vrot.lane.b32.xlu0 %v3424, 112
    %v3436 = vpop.permute.xlu0 %3435
    %3437 = vrot.lane.b32.xlu0 %v3426, 112
    %v3438 = vpop.permute.xlu0 %3437
    %3439 = vrot.lane.b32.xlu0 %v3428, 112
    %v3440 = vpop.permute.xlu0 %3439
    %3441 = vrot.lane.b32.xlu0 %v3430, 112
    %v3442 = vpop.permute.xlu0 %3441
    %3443 = vrot.lane.b32.xlu0 %v3429, 112
    %v3444 = vpop.permute.xlu0 %3443
    %vm3452 = vcmask 1048449
    %3453 = vst.msk [vmem:[#allocation2 + $0x60] sm:$0xfe] %vm3452, %v3432
    %3454 = vst.msk [vmem:[#allocation2 + $0x70] sm:$0xff] %vm2189, %v3434
    %3455 = vst.msk [vmem:[#allocation2 + $0x80] sm:$0xff] %vm2189, %v3436
    %3456 = vst.msk [vmem:[#allocation2 + $0x90] sm:$0xff] %vm2189, %v3438
    %3457 = vst.msk [vmem:[#allocation2 + $0xa0] sm:$0xff] %vm2189, %v3440
    %3458 = vst.msk [vmem:[#allocation2 + $0xb0] sm:$0xff] %vm2189, %v3442
    %vm3459 = vcmask 1042304
    %3460 = vst.msk [vmem:[#allocation2 + $0xc0] sm:$0x3] %vm3459, %v3444
    %v3468 = vrot.slane %v2900, 7
    %v3469 = vrot.slane %v2905, 7
    %v3470 = vsel %vm1408, %v3468, %v3469
    %v3471 = vrot.slane %v2908, 7
    %v3472 = vsel %vm1408, %v3469, %v3471
    %v3473 = vrot.slane %v2913, 7
    %v3474 = vsel %vm1408, %v3471, %v3473
    %v3475 = vrot.slane %v2916, 7
    %v3476 = vsel %vm1408, %v3473, %v3475
    %v3477 = vrot.slane %v2921, 7
    %v3478 = vsel %vm1408, %v3475, %v3477
    %v3479 = vrot.slane %v2924, 7
    %v3480 = vsel %vm1408, %v3477, %v3479
    %3488 = vst.msk [vmem:[#allocation2 + $0x68] sm:$0xfe] %vm3122, %v3468
    %3489 = vst.msk [vmem:[#allocation2 + $0x78] sm:$0xff] %vm1839, %v3470
    %3490 = vst.msk [vmem:[#allocation2 + $0x88] sm:$0xff] %vm1839, %v3472
    %3491 = vst.msk [vmem:[#allocation2 + $0x98] sm:$0xff] %vm1839, %v3474
    %3492 = vst.msk [vmem:[#allocation2 + $0xa8] sm:$0xff] %vm1839, %v3476
    %3493 = vst.msk [vmem:[#allocation2 + $0xb8] sm:$0xff] %vm1839, %v3478
    %3494 = vst.msk [vmem:[#allocation2 + $0xc8] sm:$0x3] %vm3129, %v3480
    %3501 = vrot.lane.b32.xlu0 %v2924, 16
    %v3502 = vpop.permute.xlu0 %3501
    %3503 = vrot.lane.b32.xlu0 %v2929, 16
    %v3504 = vpop.permute.xlu0 %3503
    %3505 = vrot.lane.b32.xlu0 %v2932, 16
    %v3506 = vpop.permute.xlu0 %3505
    %3507 = vrot.lane.b32.xlu0 %v2937, 16
    %v3508 = vpop.permute.xlu0 %3507
    %3509 = vrot.lane.b32.xlu0 %v2940, 16
    %v3510 = vpop.permute.xlu0 %3509
    %3511 = vrot.lane.b32.xlu0 %v2945, 16
    %v3512 = vpop.permute.xlu0 %3511
    %3513 = vrot.lane.b32.xlu0 %v2948, 16
    %v3514 = vpop.permute.xlu0 %3513
    %3522 = vst.msk [vmem:[#allocation2 + $0x68] sm:$0xfe] %vm3158, %v3502
    %3523 = vst.msk [vmem:[#allocation2 + $0x78] sm:$0xff] %vm1890, %v3504
    %3524 = vst.msk [vmem:[#allocation2 + $0x88] sm:$0xff] %vm1890, %v3506
    %3525 = vst.msk [vmem:[#allocation2 + $0x98] sm:$0xff] %vm1890, %v3508
    %3526 = vst.msk [vmem:[#allocation2 + $0xa8] sm:$0xff] %vm1890, %v3510
    %3527 = vst.msk [vmem:[#allocation2 + $0xb8] sm:$0xff] %vm1890, %v3512
    %3528 = vst.msk [vmem:[#allocation2 + $0xc8] sm:$0x3] %vm3165, %v3514
    %v3535 = vrot.slane %v2948, 1
    %v3536 = vrot.slane %v2953, 1
    %v3537 = vsel %vm1855, %v3535, %v3536
    %v3538 = vrot.slane %v2956, 1
    %v3539 = vsel %vm1855, %v3536, %v3538
    %v3540 = vrot.slane %v2961, 1
    %v3541 = vsel %vm1855, %v3538, %v3540
    %v3542 = vrot.slane %v2964, 1
    %v3543 = vsel %vm1855, %v3540, %v3542
    %v3544 = vrot.slane %v2969, 1
    %v3545 = vsel %vm1855, %v3542, %v3544
    %v3546 = vrot.slane %v2972, 1
    %v3547 = vsel %vm1855, %v3544, %v3546
    %3548 = vrot.lane.b32.xlu0 %v3537, 32
    %v3549 = vpop.permute.xlu0 %3548
    %3550 = vrot.lane.b32.xlu0 %v3539, 32
    %v3551 = vpop.permute.xlu0 %3550
    %3552 = vrot.lane.b32.xlu0 %v3541, 32
    %v3553 = vpop.permute.xlu0 %3552
    %3554 = vrot.lane.b32.xlu0 %v3543, 32
    %v3555 = vpop.permute.xlu0 %3554
    %3556 = vrot.lane.b32.xlu0 %v3545, 32
    %v3557 = vpop.permute.xlu0 %3556
    %3558 = vrot.lane.b32.xlu0 %v3547, 32
    %v3559 = vpop.permute.xlu0 %3558
    %3560 = vrot.lane.b32.xlu0 %v3546, 32
    %v3561 = vpop.permute.xlu0 %3560
    %3569 = vst.msk [vmem:[#allocation2 + $0x68] sm:$0xfe] %vm3207, %v3549
    %3570 = vst.msk [vmem:[#allocation2 + $0x78] sm:$0xff] %vm1940, %v3551
    %3571 = vst.msk [vmem:[#allocation2 + $0x88] sm:$0xff] %vm1940, %v3553
    %3572 = vst.msk [vmem:[#allocation2 + $0x98] sm:$0xff] %vm1940, %v3555
    %3573 = vst.msk [vmem:[#allocation2 + $0xa8] sm:$0xff] %vm1940, %v3557
    %3574 = vst.msk [vmem:[#allocation2 + $0xb8] sm:$0xff] %vm1940, %v3559
    %3575 = vst.msk [vmem:[#allocation2 + $0xc8] sm:$0x3] %vm3214, %v3561
    %v3582 = vrot.slane %v2972, 2
    %v3583 = vrot.slane %v2977, 2
    %v3584 = vsel %vm1905, %v3582, %v3583
    %v3585 = vrot.slane %v2980, 2
    %v3586 = vsel %vm1905, %v3583, %v3585
    %v3587 = vrot.slane %v2985, 2
    %v3588 = vsel %vm1905, %v3585, %v3587
    %v3589 = vrot.slane %v2988, 2
    %v3590 = vsel %vm1905, %v3587, %v3589
    %v3591 = vrot.slane %v2993, 2
    %v3592 = vsel %vm1905, %v3589, %v3591
    %v3593 = vrot.slane %v2996, 2
    %v3594 = vsel %vm1905, %v3591, %v3593
    %3595 = vrot.lane.b32.xlu0 %v3584, 48
    %v3596 = vpop.permute.xlu0 %3595
    %3597 = vrot.lane.b32.xlu0 %v3586, 48
    %v3598 = vpop.permute.xlu0 %3597
    %3599 = vrot.lane.b32.xlu0 %v3588, 48
    %v3600 = vpop.permute.xlu0 %3599
    %3601 = vrot.lane.b32.xlu0 %v3590, 48
    %v3602 = vpop.permute.xlu0 %3601
    %3603 = vrot.lane.b32.xlu0 %v3592, 48
    %v3604 = vpop.permute.xlu0 %3603
    %3605 = vrot.lane.b32.xlu0 %v3594, 48
    %v3606 = vpop.permute.xlu0 %3605
    %3607 = vrot.lane.b32.xlu0 %v3593, 48
    %v3608 = vpop.permute.xlu0 %3607
    %3616 = vst.msk [vmem:[#allocation2 + $0x68] sm:$0xfe] %vm3256, %v3596
    %3617 = vst.msk [vmem:[#allocation2 + $0x78] sm:$0xff] %vm1990, %v3598
    %3618 = vst.msk [vmem:[#allocation2 + $0x88] sm:$0xff] %vm1990, %v3600
    %3619 = vst.msk [vmem:[#allocation2 + $0x98] sm:$0xff] %vm1990, %v3602
    %3620 = vst.msk [vmem:[#allocation2 + $0xa8] sm:$0xff] %vm1990, %v3604
    %3621 = vst.msk [vmem:[#allocation2 + $0xb8] sm:$0xff] %vm1990, %v3606
    %3622 = vst.msk [vmem:[#allocation2 + $0xc8] sm:$0x3] %vm3263, %v3608
    %v3629 = vrot.slane %v2996, 3
    %v3630 = vrot.slane %v3001, 3
    %v3631 = vsel %vm1955, %v3629, %v3630
    %v3632 = vrot.slane %v3004, 3
    %v3633 = vsel %vm1955, %v3630, %v3632
    %v3634 = vrot.slane %v3009, 3
    %v3635 = vsel %vm1955, %v3632, %v3634
    %v3636 = vrot.slane %v3012, 3
    %v3637 = vsel %vm1955, %v3634, %v3636
    %v3638 = vrot.slane %v3017, 3
    %v3639 = vsel %vm1955, %v3636, %v3638
    %v3640 = vrot.slane %v3020, 3
    %v3641 = vsel %vm1955, %v3638, %v3640
    %3642 = vrot.lane.b32.xlu0 %v3631, 64
    %v3643 = vpop.permute.xlu0 %3642
    %3644 = vrot.lane.b32.xlu0 %v3633, 64
    %v3645 = vpop.permute.xlu0 %3644
    %3646 = vrot.lane.b32.xlu0 %v3635, 64
    %v3647 = vpop.permute.xlu0 %3646
    %3648 = vrot.lane.b32.xlu0 %v3637, 64
    %v3649 = vpop.permute.xlu0 %3648
    %3650 = vrot.lane.b32.xlu0 %v3639, 64
    %v3651 = vpop.permute.xlu0 %3650
    %3652 = vrot.lane.b32.xlu0 %v3641, 64
    %v3653 = vpop.permute.xlu0 %3652
    %3654 = vrot.lane.b32.xlu0 %v3640, 64
    %v3655 = vpop.permute.xlu0 %3654
    %3663 = vst.msk [vmem:[#allocation2 + $0x68] sm:$0xfe] %vm3305, %v3643
    %3664 = vst.msk [vmem:[#allocation2 + $0x78] sm:$0xff] %vm2040, %v3645
    %3665 = vst.msk [vmem:[#allocation2 + $0x88] sm:$0xff] %vm2040, %v3647
    %3666 = vst.msk [vmem:[#allocation2 + $0x98] sm:$0xff] %vm2040, %v3649
    %3667 = vst.msk [vmem:[#allocation2 + $0xa8] sm:$0xff] %vm2040, %v3651
    %3668 = vst.msk [vmem:[#allocation2 + $0xb8] sm:$0xff] %vm2040, %v3653
    %3669 = vst.msk [vmem:[#allocation2 + $0xc8] sm:$0x3] %vm3312, %v3655
    %v3676 = vrot.slane %v3020, 4
    %v3677 = vrot.slane %v3025, 4
    %v3678 = vsel %vm2005, %v3676, %v3677
    %v3679 = vrot.slane %v3028, 4
    %v3680 = vsel %vm2005, %v3677, %v3679
    %v3681 = vrot.slane %v3033, 4
    %v3682 = vsel %vm2005, %v3679, %v3681
    %v3683 = vrot.slane %v3036, 4
    %v3684 = vsel %vm2005, %v3681, %v3683
    %v3685 = vrot.slane %v3041, 4
    %v3686 = vsel %vm2005, %v3683, %v3685
    %v3687 = vrot.slane %v3044, 4
    %v3688 = vsel %vm2005, %v3685, %v3687
    %3689 = vrot.lane.b32.xlu0 %v3678, 80
    %v3690 = vpop.permute.xlu0 %3689
    %3691 = vrot.lane.b32.xlu0 %v3680, 80
    %v3692 = vpop.permute.xlu0 %3691
    %3693 = vrot.lane.b32.xlu0 %v3682, 80
    %v3694 = vpop.permute.xlu0 %3693
    %3695 = vrot.lane.b32.xlu0 %v3684, 80
    %v3696 = vpop.permute.xlu0 %3695
    %3697 = vrot.lane.b32.xlu0 %v3686, 80
    %v3698 = vpop.permute.xlu0 %3697
    %3699 = vrot.lane.b32.xlu0 %v3688, 80
    %v3700 = vpop.permute.xlu0 %3699
    %3701 = vrot.lane.b32.xlu0 %v3687, 80
    %v3702 = vpop.permute.xlu0 %3701
    %3710 = vst.msk [vmem:[#allocation2 + $0x68] sm:$0xfe] %vm3354, %v3690
    %3711 = vst.msk [vmem:[#allocation2 + $0x78] sm:$0xff] %vm2090, %v3692
    %3712 = vst.msk [vmem:[#allocation2 + $0x88] sm:$0xff] %vm2090, %v3694
    %3713 = vst.msk [vmem:[#allocation2 + $0x98] sm:$0xff] %vm2090, %v3696
    %3714 = vst.msk [vmem:[#allocation2 + $0xa8] sm:$0xff] %vm2090, %v3698
    %3715 = vst.msk [vmem:[#allocation2 + $0xb8] sm:$0xff] %vm2090, %v3700
    %3716 = vst.msk [vmem:[#allocation2 + $0xc8] sm:$0x3] %vm3361, %v3702
    %v3723 = vrot.slane %v3044, 5
    %v3724 = vrot.slane %v3049, 5
    %v3725 = vsel %vm2055, %v3723, %v3724
    %v3726 = vrot.slane %v3052, 5
    %v3727 = vsel %vm2055, %v3724, %v3726
    %v3728 = vrot.slane %v3057, 5
    %v3729 = vsel %vm2055, %v3726, %v3728
    %v3730 = vrot.slane %v3060, 5
    %v3731 = vsel %vm2055, %v3728, %v3730
    %v3732 = vrot.slane %v3065, 5
    %v3733 = vsel %vm2055, %v3730, %v3732
    %v3734 = vrot.slane %v3068, 5
    %v3735 = vsel %vm2055, %v3732, %v3734
    %3736 = vrot.lane.b32.xlu0 %v3725, 96
    %v3737 = vpop.permute.xlu0 %3736
    %3738 = vrot.lane.b32.xlu0 %v3727, 96
    %v3739 = vpop.permute.xlu0 %3738
    %3740 = vrot.lane.b32.xlu0 %v3729, 96
    %v3741 = vpop.permute.xlu0 %3740
    %3742 = vrot.lane.b32.xlu0 %v3731, 96
    %v3743 = vpop.permute.xlu0 %3742
    %3744 = vrot.lane.b32.xlu0 %v3733, 96
    %v3745 = vpop.permute.xlu0 %3744
    %3746 = vrot.lane.b32.xlu0 %v3735, 96
    %v3747 = vpop.permute.xlu0 %3746
    %3748 = vrot.lane.b32.xlu0 %v3734, 96
    %v3749 = vpop.permute.xlu0 %3748
    %3757 = vst.msk [vmem:[#allocation2 + $0x68] sm:$0xfe] %vm3403, %v3737
    %3758 = vst.msk [vmem:[#allocation2 + $0x78] sm:$0xff] %vm2140, %v3739
    %3759 = vst.msk [vmem:[#allocation2 + $0x88] sm:$0xff] %vm2140, %v3741
    %3760 = vst.msk [vmem:[#allocation2 + $0x98] sm:$0xff] %vm2140, %v3743
    %3761 = vst.msk [vmem:[#allocation2 + $0xa8] sm:$0xff] %vm2140, %v3745
    %3762 = vst.msk [vmem:[#allocation2 + $0xb8] sm:$0xff] %vm2140, %v3747
    %3763 = vst.msk [vmem:[#allocation2 + $0xc8] sm:$0x3] %vm3410, %v3749
    %v3770 = vrot.slane %v3068, 6
    %v3771 = vrot.slane %v3073, 6
    %v3772 = vsel %vm2105, %v3770, %v3771
    %v3773 = vrot.slane %v3076, 6
    %v3774 = vsel %vm2105, %v3771, %v3773
    %v3775 = vrot.slane %v3081, 6
    %v3776 = vsel %vm2105, %v3773, %v3775
    %v3777 = vrot.slane %v3084, 6
    %v3778 = vsel %vm2105, %v3775, %v3777
    %v3779 = vrot.slane %v3089, 6
    %v3780 = vsel %vm2105, %v3777, %v3779
    %v3781 = vrot.slane %v3092, 6
    %v3782 = vsel %vm2105, %v3779, %v3781
    %3783 = vrot.lane.b32.xlu0 %v3772, 112
    %v3784 = vpop.permute.xlu0 %3783
    %3785 = vrot.lane.b32.xlu0 %v3774, 112
    %v3786 = vpop.permute.xlu0 %3785
    %3787 = vrot.lane.b32.xlu0 %v3776, 112
    %v3788 = vpop.permute.xlu0 %3787
    %3789 = vrot.lane.b32.xlu0 %v3778, 112
    %v3790 = vpop.permute.xlu0 %3789
    %3791 = vrot.lane.b32.xlu0 %v3780, 112
    %v3792 = vpop.permute.xlu0 %3791
    %3793 = vrot.lane.b32.xlu0 %v3782, 112
    %v3794 = vpop.permute.xlu0 %3793
    %3795 = vrot.lane.b32.xlu0 %v3781, 112
    %v3796 = vpop.permute.xlu0 %3795
    %3804 = vst.msk [vmem:[#allocation2 + $0x68] sm:$0xfe] %vm3452, %v3784
    %3805 = vst.msk [vmem:[#allocation2 + $0x78] sm:$0xff] %vm2189, %v3786
    %3806 = vst.msk [vmem:[#allocation2 + $0x88] sm:$0xff] %vm2189, %v3788
    %3807 = vst.msk [vmem:[#allocation2 + $0x98] sm:$0xff] %vm2189, %v3790
    %3808 = vst.msk [vmem:[#allocation2 + $0xa8] sm:$0xff] %vm2189, %v3792
    %3809 = vst.msk [vmem:[#allocation2 + $0xb8] sm:$0xff] %vm2189, %v3794
    %3810 = vst.msk [vmem:[#allocation2 + $0xc8] sm:$0x3] %vm3459, %v3796
    %v3811 = vld [vmem:[#allocation2] sm:$0xff]
    %v3812 = vld [vmem:[#allocation2 + $0x8] sm:$0xff]
    %v3813 = vld [vmem:[#allocation2 + $0x10] sm:$0xff]
    %v3814 = vld [vmem:[#allocation2 + $0x18] sm:$0xff]
    %v3815 = vld [vmem:[#allocation2 + $0x20] sm:$0xff]
    %v3816 = vld [vmem:[#allocation2 + $0x28] sm:$0xff]
    %v3817 = vld [vmem:[#allocation2 + $0x30] sm:$0xff]
    %v3818 = vld [vmem:[#allocation2 + $0x38] sm:$0xff]
    %v3819 = vld [vmem:[#allocation2 + $0x40] sm:$0xff]
    %v3820 = vld [vmem:[#allocation2 + $0x48] sm:$0xff]
    %v3821 = vld [vmem:[#allocation2 + $0x50] sm:$0xff]
    %v3822 = vld [vmem:[#allocation2 + $0x58] sm:$0xff]
    %v3823 = vld [vmem:[#allocation2 + $0x60] sm:$0xff]
    %v3824 = vld [vmem:[#allocation2 + $0x68] sm:$0xff]
    %v3825 = vld [vmem:[#allocation2 + $0x70] sm:$0xff]
    %v3826 = vld [vmem:[#allocation2 + $0x78] sm:$0xff]
    %v3827 = vld [vmem:[#allocation2 + $0x80] sm:$0xff]
    %v3828 = vld [vmem:[#allocation2 + $0x88] sm:$0xff]
    %v3829 = vld [vmem:[#allocation2 + $0x90] sm:$0xff]
    %v3830 = vld [vmem:[#allocation2 + $0x98] sm:$0xff]
    %v3831 = vld [vmem:[#allocation2 + $0xa0] sm:$0xff]
    %v3832 = vld [vmem:[#allocation2 + $0xa8] sm:$0xff]
    %v3833 = vld [vmem:[#allocation2 + $0xb0] sm:$0xff]
    %v3834 = vld [vmem:[#allocation2 + $0xb8] sm:$0xff]
    %v3835 = vld [vmem:[#allocation2 + $0xc0] sm:$0x3]
    %v3836 = vld [vmem:[#allocation2 + $0xc8] sm:$0x3]
    %v3837 = vpack.c.bf16 %v3813, %v3811
    %v3838 = vpack.c.bf16 %v3814, %v3812
    %v3839 = vpack.c.bf16 %v3817, %v3815
    %v3840 = vpack.c.bf16 %v3818, %v3816
    %v3841 = vpack.c.bf16 %v3821, %v3819
    %v3842 = vpack.c.bf16 %v3822, %v3820
    %v3843 = vpack.c.bf16 %v3825, %v3823
    %v3844 = vpack.c.bf16 %v3826, %v3824
    %v3845 = vpack.c.bf16 %v3829, %v3827
    %v3846 = vpack.c.bf16 %v3830, %v3828
    %v3847 = vpack.c.bf16 %v3833, %v3831
    %v3848 = vpack.c.bf16 %v3834, %v3832
    %v3849 = vpack.c.bf16 %v3835, %v3835
    %v3850 = vpack.c.bf16 %v3836, %v3836
    %v3851 = vld [vmem:[%s4] sm:$0xf]
    %v3852 = vld [vmem:[%s4 + $0x4] sm:$0xf]
    %v3853 = vld [vmem:[%s4 + $0x8] sm:$0xf]
    %v3854 = vld [vmem:[%s4 + $0xc] sm:$0xf]
    %v3855 = vld [vmem:[%s4 + $0x10] sm:$0xf]
    %v3856 = vld [vmem:[%s4 + $0x14] sm:$0xf]
    %v3857 = vld [vmem:[%s4 + $0x18] sm:$0xf]
    %v3858 = vld [vmem:[%s4 + $0x1c] sm:$0xf]
    %v3859 = vld [vmem:[%s4 + $0x20] sm:$0xf]
    %v3860 = vld [vmem:[%s4 + $0x24] sm:$0xf]
    %v3861 = vld [vmem:[%s4 + $0x28] sm:$0xf]
    %v3862 = vld [vmem:[%s4 + $0x2c] sm:$0xf]
    %v3863 = vld [vmem:[%s4 + $0x30] sm:$0xf]
    %v3864 = vld [vmem:[%s4 + $0x34] sm:$0xf]
    %v3865 = vld [vmem:[%s4 + $0x38] sm:$0xf]
    %v3866 = vld [vmem:[%s4 + $0x3c] sm:$0xf]
    %v3867 = vld [vmem:[%s4 + $0x40] sm:$0xf]
    %v3868 = vld [vmem:[%s4 + $0x44] sm:$0xf]
    %v3869 = vld [vmem:[%s4 + $0x48] sm:$0xf]
    %v3870 = vld [vmem:[%s4 + $0x4c] sm:$0xf]
    %v3871 = vld [vmem:[%s4 + $0x50] sm:$0xf]
    %v3872 = vld [vmem:[%s4 + $0x54] sm:$0xf]
    %v3873 = vld [vmem:[%s4 + $0x58] sm:$0xf]
    %v3874 = vld [vmem:[%s4 + $0x5c] sm:$0xf]
    %v3875 = vld [vmem:[%s4 + $0x60] sm:$0xf]
    %v3876 = vld [vmem:[%s4 + $0x64] sm:$0xf]
    %v3877 = vld [vmem:[%s4 + $0x68] sm:$0xf]
    %v3878 = vld [vmem:[%s4 + $0x6c] sm:$0xf]
    %v3879 = vld [vmem:[%s4 + $0x70] sm:$0xf]
    %v3880 = vld [vmem:[%s4 + $0x74] sm:$0xf]
    %v3881 = vld [vmem:[%s4 + $0x78] sm:$0xf]
    %v3882 = vld [vmem:[%s4 + $0x7c] sm:$0xf]
    %v3883 = vld [vmem:[%s5] sm:$0x1]
    %v3885 = vlaneseq
    %v3886 = vshrl.u32 %v3885, 7
    %v3887 = vsub.s32 0, %v3886
    %v3888 = vrot.slane %v3883, %v3887
    %v3922 = vunpack.c.l.b16 %v3851
    %v3923 = vunpack.c.l.b16 %v3852
    %v3924 = vunpack.c.l.b16 %v3853
    %v3925 = vunpack.c.l.b16 %v3854
    %v3926 = vunpack.c.l.b16 %v3855
    %v3927 = vunpack.c.l.b16 %v3856
    %v3928 = vunpack.c.l.b16 %v3857
    %v3929 = vunpack.c.l.b16 %v3858
    %v3930 = vunpack.c.l.b16 %v3859
    %v3931 = vunpack.c.l.b16 %v3860
    %v3932 = vunpack.c.l.b16 %v3861
    %v3933 = vunpack.c.l.b16 %v3862
    %v3934 = vunpack.c.l.b16 %v3863
    %v3935 = vunpack.c.l.b16 %v3864
    %v3936 = vunpack.c.l.b16 %v3865
    %v3937 = vunpack.c.l.b16 %v3866
    %v3938 = vunpack.c.l.b16 %v3867
    %v3939 = vunpack.c.l.b16 %v3868
    %v3940 = vunpack.c.l.b16 %v3869
    %v3941 = vunpack.c.l.b16 %v3870
    %v3942 = vunpack.c.l.b16 %v3871
    %v3943 = vunpack.c.l.b16 %v3872
    %v3944 = vunpack.c.l.b16 %v3873
    %v3945 = vunpack.c.l.b16 %v3874
    %v3946 = vunpack.c.l.b16 %v3875
    %v3947 = vunpack.c.l.b16 %v3876
    %v3948 = vunpack.c.l.b16 %v3877
    %v3949 = vunpack.c.l.b16 %v3878
    %v3950 = vunpack.c.l.b16 %v3879
    %v3951 = vunpack.c.l.b16 %v3880
    %v3952 = vunpack.c.l.b16 %v3881
    %v3953 = vunpack.c.l.b16 %v3882
    %v3954 = vpack.c.b16 %v3923, %v3922
    %v3955 = vpack.c.b16 %v3925, %v3924
    %v3956 = vpack.c.b16 %v3927, %v3926
    %v3957 = vpack.c.b16 %v3929, %v3928
    %v3958 = vpack.c.b16 %v3931, %v3930
    %v3959 = vpack.c.b16 %v3933, %v3932
    %v3960 = vpack.c.b16 %v3935, %v3934
    %v3961 = vpack.c.b16 %v3937, %v3936
    %v3962 = vpack.c.b16 %v3939, %v3938
    %v3963 = vpack.c.b16 %v3941, %v3940
    %v3964 = vpack.c.b16 %v3943, %v3942
    %v3965 = vpack.c.b16 %v3945, %v3944
    %v3966 = vpack.c.b16 %v3947, %v3946
    %v3967 = vpack.c.b16 %v3949, %v3948
    %v3968 = vpack.c.b16 %v3951, %v3950
    %v3969 = vpack.c.b16 %v3953, %v3952
    %3986 = vmatprep.subr.bf16.mxu0 0
    %3987 = vmatpush1.bf16.msra.mxu0 %v3954
    %3988 = vmatprep.subr.bf16.mxu0 0
    %3989 = vmatpush1.bf16.msra.mxu0 %v3955
    %3990 = vmatprep.subr.bf16.mxu0 0
    %3991 = vmatpush1.bf16.msra.mxu0 %v3956
    %3992 = vmatprep.subr.bf16.mxu0 0
    %3993 = vmatpush1.bf16.msra.mxu0 %v3957
    %3994 = vmatprep.subr.bf16.mxu0 0
    %3995 = vmatpush1.bf16.msra.mxu0 %v3958
    %3996 = vmatprep.subr.bf16.mxu0 0
    %3997 = vmatpush1.bf16.msra.mxu0 %v3959
    %3998 = vmatprep.subr.bf16.mxu0 0
    %3999 = vmatpush1.bf16.msra.mxu0 %v3960
    %4000 = vmatprep.subr.bf16.mxu0 0
    %4001 = vmatpush1.bf16.msra.mxu0 %v3961
    %4002 = vmatprep.subr.bf16.mxu0 0
    %4003 = vmatpush1.bf16.msra.mxu0 %v3962
    %4004 = vmatprep.subr.bf16.mxu0 0
    %4005 = vmatpush1.bf16.msra.mxu0 %v3963
    %4006 = vmatprep.subr.bf16.mxu0 0
    %4007 = vmatpush1.bf16.msra.mxu0 %v3964
    %4008 = vmatprep.subr.bf16.mxu0 0
    %4009 = vmatpush1.bf16.msra.mxu0 %v3965
    %4010 = vmatprep.subr.bf16.mxu0 0
    %4011 = vmatpush1.bf16.msra.mxu0 %v3966
    %4012 = vmatprep.subr.bf16.mxu0 0
    %4013 = vmatpush1.bf16.msra.mxu0 %v3967
    %4014 = vmatprep.subr.bf16.mxu0 0
    %4015 = vmatpush1.bf16.msra.mxu0 %v3968
    %4016 = vmatprep.subr.bf16.mxu0 0
    %4017 = vmatpush1.bf16.msra.mxu0 %v3969
    %4018 = vmatprep.mubr.bf16.mxu0 %v3838
    %4019 = vmatmul.mubr.bf16.gmra.mrb[0].mxu0 %v3837
    %v4020 = vpop.f32.mrb[0].mxu0
    %v4021 = vadd.f32 %v3888, %v4020
    %v4022 = vpop.f32.mrb[0].mxu0
    %v4023 = vpop.f32.mrb[0].mxu0
    %v4024 = vadd.f32 %v3888, %v4023
    %v4025 = vpop.f32.mrb[0].mxu0
    %4026 = vmatprep.mubr.bf16.mxu0 %v3840
    %4027 = vmatmul.mubr.bf16.gmra.mrb[0].mxu0 %v3839
    %v4028 = vpop.f32.mrb[0].mxu0
    %v4029 = vadd.f32 %v3888, %v4028
    %v4030 = vpop.f32.mrb[0].mxu0
    %v4031 = vpop.f32.mrb[0].mxu0
    %v4032 = vadd.f32 %v3888, %v4031
    %v4033 = vpop.f32.mrb[0].mxu0
    %4034 = vmatprep.mubr.bf16.mxu0 %v3842
    %4035 = vmatmul.mubr.bf16.gmra.mrb[0].mxu0 %v3841
    %v4036 = vpop.f32.mrb[0].mxu0
    %v4037 = vadd.f32 %v3888, %v4036
    %v4038 = vpop.f32.mrb[0].mxu0
    %v4039 = vpop.f32.mrb[0].mxu0
    %v4040 = vadd.f32 %v3888, %v4039
    %v4041 = vpop.f32.mrb[0].mxu0
    %4042 = vmatprep.mubr.bf16.mxu0 %v3844
    %4043 = vmatmul.mubr.bf16.gmra.mrb[0].mxu0 %v3843
    %v4044 = vpop.f32.mrb[0].mxu0
    %v4045 = vadd.f32 %v3888, %v4044
    %v4046 = vpop.f32.mrb[0].mxu0
    %v4047 = vpop.f32.mrb[0].mxu0
    %v4048 = vadd.f32 %v3888, %v4047
    %v4049 = vpop.f32.mrb[0].mxu0
    %4050 = vmatprep.mubr.bf16.mxu0 %v3846
    %4051 = vmatmul.mubr.bf16.gmra.mrb[0].mxu0 %v3845
    %v4052 = vpop.f32.mrb[0].mxu0
    %v4053 = vadd.f32 %v3888, %v4052
    %v4054 = vpop.f32.mrb[0].mxu0
    %v4055 = vpop.f32.mrb[0].mxu0
    %v4056 = vadd.f32 %v3888, %v4055
    %v4057 = vpop.f32.mrb[0].mxu0
    %4058 = vmatprep.mubr.bf16.mxu0 %v3848
    %4059 = vmatmul.mubr.bf16.gmra.mrb[0].mxu0 %v3847
    %v4060 = vpop.f32.mrb[0].mxu0
    %v4061 = vadd.f32 %v3888, %v4060
    %v4062 = vpop.f32.mrb[0].mxu0
    %v4063 = vpop.f32.mrb[0].mxu0
    %v4064 = vadd.f32 %v3888, %v4063
    %v4065 = vpop.f32.mrb[0].mxu0
    %4066 = vmatprep.mubr.bf16.mxu0 %v3850
    %4067 = vmatmul.mubr.bf16.gmra.mrb[0].mxu0 %v3849
    %v4068 = vpop.f32.mrb[0].mxu0
    %v4069 = vadd.f32 %v3888, %v4068
    %v4070 = vpop.f32.mrb[0].mxu0
    %v4071 = vpop.f32.mrb[0].mxu0
    %v4072 = vpop.f32.mrb[0].mxu0
    %4073 = vdwg.mxu0
    %v4074 = vmax.f32 %v4021, 0.0
    %v4075 = vmax.f32 %v4024, 0.0
    %v4076 = vmax.f32 %v4029, 0.0
    %v4077 = vmax.f32 %v4032, 0.0
    %v4078 = vmax.f32 %v4037, 0.0
    %v4079 = vmax.f32 %v4040, 0.0
    %v4080 = vmax.f32 %v4045, 0.0
    %v4081 = vmax.f32 %v4048, 0.0
    %v4082 = vmax.f32 %v4053, 0.0
    %v4083 = vmax.f32 %v4056, 0.0
    %v4084 = vmax.f32 %v4061, 0.0
    %v4085 = vmax.f32 %v4064, 0.0
    %v4086 = vmax.f32 %v4069, 0.0
    %v4087 = vpack.c.bf16 %v4075, %v4074
    %v4088 = vpack.c.bf16 %v4077, %v4076
    %v4089 = vpack.c.bf16 %v4079, %v4078
    %v4090 = vpack.c.bf16 %v4081, %v4080
    %v4091 = vpack.c.bf16 %v4083, %v4082
    %v4092 = vpack.c.bf16 %v4085, %v4084
    %v4093 = vpack.c.bf16 %v4086, %v4086
    %v4094 = vld [vmem:[%s6] sm:$0xf]
    %v4095 = vld [vmem:[%s6 + $0x4] sm:$0xf]
    %v4096 = vld [vmem:[%s6 + $0x8] sm:$0xf]
    %v4097 = vld [vmem:[%s6 + $0xc] sm:$0xf]
    %v4098 = vld [vmem:[%s6 + $0x10] sm:$0xf]
    %v4099 = vld [vmem:[%s6 + $0x14] sm:$0xf]
    %v4100 = vld [vmem:[%s6 + $0x18] sm:$0xf]
    %v4101 = vld [vmem:[%s6 + $0x1c] sm:$0xf]
    %v4102 = vld [vmem:[%s6 + $0x20] sm:$0xf]
    %v4103 = vld [vmem:[%s6 + $0x24] sm:$0xf]
    %v4104 = vld [vmem:[%s6 + $0x28] sm:$0xf]
    %v4105 = vld [vmem:[%s6 + $0x2c] sm:$0xf]
    %v4106 = vld [vmem:[%s6 + $0x30] sm:$0xf]
    %v4107 = vld [vmem:[%s6 + $0x34] sm:$0xf]
    %v4108 = vld [vmem:[%s6 + $0x38] sm:$0xf]
    %v4109 = vld [vmem:[%s6 + $0x3c] sm:$0xf]
    %v4110 = vld [vmem:[%s6 + $0x40] sm:$0xf]
    %v4111 = vld [vmem:[%s6 + $0x44] sm:$0xf]
    %v4130 = vunpack.c.l.b16 %v4094
    %v4131 = vunpack.c.l.b16 %v4095
    %v4132 = vunpack.c.l.b16 %v4096
    %v4133 = vunpack.c.l.b16 %v4097
    %v4134 = vunpack.c.l.b16 %v4098
    %v4135 = vunpack.c.l.b16 %v4099
    %v4136 = vunpack.c.l.b16 %v4100
    %v4137 = vunpack.c.l.b16 %v4101
    %v4138 = vunpack.c.l.b16 %v4102
    %v4139 = vunpack.c.l.b16 %v4103
    %v4140 = vunpack.c.l.b16 %v4104
    %v4141 = vunpack.c.l.b16 %v4105
    %v4142 = vunpack.c.l.b16 %v4106
    %v4143 = vunpack.c.l.b16 %v4107
    %v4144 = vunpack.c.l.b16 %v4108
    %v4145 = vunpack.c.l.b16 %v4109
    %v4146 = vunpack.c.l.b16 %v4110
    %v4147 = vunpack.c.l.b16 %v4111
    %v4148 = vpack.c.b16 %v4131, %v4130
    %v4149 = vpack.c.b16 %v4133, %v4132
    %v4150 = vpack.c.b16 %v4135, %v4134
    %v4151 = vpack.c.b16 %v4137, %v4136
    %v4152 = vpack.c.b16 %v4139, %v4138
    %v4153 = vpack.c.b16 %v4141, %v4140
    %v4154 = vpack.c.b16 %v4143, %v4142
    %v4155 = vpack.c.b16 %v4145, %v4144
    %v4156 = vpack.c.b16 %v4147, %v4146
    %vm4157 = vcmask 400384
    %v4159 = vsel %vm4157, %v4148, 0
    %v4162 = vsel %vm4157, %v4149, 0
    %v4165 = vsel %vm4157, %v4150, 0
    %v4168 = vsel %vm4157, %v4151, 0
    %v4171 = vsel %vm4157, %v4152, 0
    %v4174 = vsel %vm4157, %v4153, 0
    %v4177 = vsel %vm4157, %v4154, 0
    %v4180 = vsel %vm4157, %v4155, 0
    %v4183 = vsel %vm4157, %v4156, 0
    %v4186 = vand.u32 %v4090, %v1410
    %4188 = vmatprep.subr.bf16.mxu0 0
    %4189 = vmatpush1.bf16.msra.mxu0 %v4087
    %4190 = vmatprep.subr.bf16.mxu0 0
    %4191 = vmatpush1.bf16.msra.mxu0 %v4088
    %4192 = vmatprep.subr.bf16.mxu0 0
    %4193 = vmatpush1.bf16.msra.mxu0 %v4089
    %4194 = vmatprep.subr.bf16.mxu0 0
    %4195 = vmatpush1.bf16.msra.mxu0 %v4186
    %4196 = vmatprep.subr.bf16.mxu0 0
    %4197 = vmatpush1.bf16.msra.mxu0 0
    %4198 = vmatprep.subr.bf16.mxu0 0
    %4199 = vmatpush1.bf16.msra.mxu0 0
    %4200 = vmatprep.subr.bf16.mxu0 0
    %4201 = vmatpush1.bf16.msra.mxu0 0
    %4202 = vmatprep.subr.bf16.mxu0 0
    %4203 = vmatpush1.bf16.msra.mxu0 0
    %4204 = vmatprep.subr.bf16.mxu0 0
    %4205 = vmatpush1.bf16.msra.mxu0 0
    %4206 = vmatprep.subr.bf16.mxu0 0
    %4207 = vmatpush1.bf16.msra.mxu0 0
    %4208 = vmatprep.subr.bf16.mxu0 0
    %4209 = vmatpush1.bf16.msra.mxu0 0
    %4210 = vmatprep.subr.bf16.mxu0 0
    %4211 = vmatpush1.bf16.msra.mxu0 0
    %4212 = vmatprep.subr.bf16.mxu0 0
    %4213 = vmatpush1.bf16.msra.mxu0 0
    %4214 = vmatprep.subr.bf16.mxu0 0
    %4215 = vmatpush1.bf16.msra.mxu0 0
    %4216 = vmatprep.subr.bf16.mxu0 0
    %4217 = vmatpush1.bf16.msra.mxu0 0
    %4218 = vmatprep.subr.bf16.mxu0 0
    %4219 = vmatpush1.bf16.msra.mxu0 0
    %4220 = vmatprep.mubr.bf16.mxu0 0
    %4221 = vmatmul.mubr.bf16.gmra.mrb[0].mxu0 %v4159
    %v4222 = vpop.f32.mrb[0].mxu0
    %v4223 = vadd.f32 0.0, %v4222
    %v4224 = vpop.f32.mrb[0].mxu0
    %v4225 = vpop.f32.mrb[0].mxu0
    %v4226 = vadd.f32 0.0, %v4225
    %v4227 = vpop.f32.mrb[0].mxu0
    %4228 = vmatprep.mubr.bf16.mxu0 0
    %4229 = vmatmul.mubr.bf16.gmra.mrb[0].mxu0 %v4162
    %v4230 = vpop.f32.mrb[0].mxu0
    %v4231 = vadd.f32 0.0, %v4230
    %v4232 = vpop.f32.mrb[0].mxu0
    %v4233 = vpop.f32.mrb[0].mxu0
    %v4234 = vadd.f32 0.0, %v4233
    %v4235 = vpop.f32.mrb[0].mxu0
    %4236 = vmatprep.mubr.bf16.mxu0 0
    %4237 = vmatmul.mubr.bf16.gmra.mrb[0].mxu0 %v4165
    %v4238 = vpop.f32.mrb[0].mxu0
    %v4239 = vadd.f32 0.0, %v4238
    %v4240 = vpop.f32.mrb[0].mxu0
    %v4241 = vpop.f32.mrb[0].mxu0
    %v4242 = vadd.f32 0.0, %v4241
    %v4243 = vpop.f32.mrb[0].mxu0
    %4244 = vmatprep.mubr.bf16.mxu0 0
    %4245 = vmatmul.mubr.bf16.gmra.mrb[0].mxu0 %v4168
    %v4246 = vpop.f32.mrb[0].mxu0
    %v4247 = vadd.f32 0.0, %v4246
    %v4248 = vpop.f32.mrb[0].mxu0
    %v4249 = vpop.f32.mrb[0].mxu0
    %v4250 = vadd.f32 0.0, %v4249
    %v4251 = vpop.f32.mrb[0].mxu0
    %4252 = vmatprep.mubr.bf16.mxu0 0
    %4253 = vmatmul.mubr.bf16.gmra.mrb[0].mxu0 %v4171
    %v4254 = vpop.f32.mrb[0].mxu0
    %v4255 = vadd.f32 0.0, %v4254
    %v4256 = vpop.f32.mrb[0].mxu0
    %v4257 = vpop.f32.mrb[0].mxu0
    %v4258 = vadd.f32 0.0, %v4257
    %v4259 = vpop.f32.mrb[0].mxu0
    %4260 = vmatprep.mubr.bf16.mxu0 0
    %4261 = vmatmul.mubr.bf16.gmra.mrb[0].mxu0 %v4174
    %v4262 = vpop.f32.mrb[0].mxu0
    %v4263 = vadd.f32 0.0, %v4262
    %v4264 = vpop.f32.mrb[0].mxu0
    %v4265 = vpop.f32.mrb[0].mxu0
    %v4266 = vadd.f32 0.0, %v4265
    %v4267 = vpop.f32.mrb[0].mxu0
    %4268 = vmatprep.mubr.bf16.mxu0 0
    %4269 = vmatmul.mubr.bf16.gmra.mrb[0].mxu0 %v4177
    %v4270 = vpop.f32.mrb[0].mxu0
    %v4271 = vadd.f32 0.0, %v4270
    %v4272 = vpop.f32.mrb[0].mxu0
    %v4273 = vpop.f32.mrb[0].mxu0
    %v4274 = vadd.f32 0.0, %v4273
    %v4275 = vpop.f32.mrb[0].mxu0
    %4276 = vmatprep.mubr.bf16.mxu0 0
    %4277 = vmatmul.mubr.bf16.gmra.mrb[0].mxu0 %v4180
    %v4278 = vpop.f32.mrb[0].mxu0
    %v4279 = vadd.f32 0.0, %v4278
    %v4280 = vpop.f32.mrb[0].mxu0
    %v4281 = vpop.f32.mrb[0].mxu0
    %v4282 = vadd.f32 0.0, %v4281
    %v4283 = vpop.f32.mrb[0].mxu0
    %4284 = vmatprep.mubr.bf16.mxu0 0
    %4285 = vmatmul.mubr.bf16.gmra.mrb[0].mxu0 %v4183
    %v4286 = vpop.f32.mrb[0].mxu0
    %v4287 = vadd.f32 0.0, %v4286
    %v4288 = vpop.f32.mrb[0].mxu0
    %v4289 = vpop.f32.mrb[0].mxu0
    %v4290 = vadd.f32 0.0, %v4289
    %v4291 = vpop.f32.mrb[0].mxu0
    %4292 = vdwg.mxu0
    %vm4293 = vcmask 261120
    %4294 = vst.msk [vmem:[#allocation3] sm:$0xff] %vm4293, %v4223
    %vm4295 = vcmask 253952
    %4296 = vst.msk [vmem:[#allocation3 + $0x20] sm:$0x1] %vm4295, %v4226
    %v4299 = vrot.slane %v4226, 1
    %v4300 = vrot.slane %v4231, 1
    %v4301 = vsel %vm1855, %v4299, %v4300
    %4302 = vrot.lane.b32.xlu0 %v4301, 32
    %v4303 = vpop.permute.xlu0 %4302
    %4304 = vrot.lane.b32.xlu0 %v4300, 32
    %v4305 = vpop.permute.xlu0 %4304
    %vm4308 = vcmask 523520
    %4309 = vst.msk [vmem:[#allocation3] sm:$0xff] %vm4308, %v4303
    %vm4310 = vcmask 516352
    %4311 = vst.msk [vmem:[#allocation3 + $0x20] sm:$0x1] %vm4310, %v4305
    %v4313 = vrot.slane %v4231, 2
    %v4314 = vrot.slane %v4234, 2
    %v4315 = vsel %vm1905, %v4313, %v4314
    %4316 = vrot.lane.b32.xlu0 %v4315, 64
    %v4317 = vpop.permute.xlu0 %4316
    %4318 = vrot.lane.b32.xlu0 %v4314, 64
    %v4319 = vpop.permute.xlu0 %4318
    %vm4322 = vcmask 785920
    %4323 = vst.msk [vmem:[#allocation3] sm:$0xff] %vm4322, %v4317
    %vm4324 = vcmask 778752
    %4325 = vst.msk [vmem:[#allocation3 + $0x20] sm:$0x1] %vm4324, %v4319
    %v4327 = vrot.slane %v4234, 3
    %v4328 = vrot.slane %v4239, 3
    %v4329 = vsel %vm1955, %v4327, %v4328
    %4330 = vrot.lane.b32.xlu0 %v4329, 96
    %v4331 = vpop.permute.xlu0 %4330
    %4332 = vrot.lane.b32.xlu0 %v4328, 96
    %v4333 = vpop.permute.xlu0 %4332
    %vm4336 = vcmask 1048320
    %4337 = vst.msk [vmem:[#allocation3] sm:$0xff] %vm4336, %v4331
    %vm4338 = vcmask 1041152
    %4339 = vst.msk [vmem:[#allocation3 + $0x20] sm:$0x1] %vm4338, %v4333
    %v4341 = vrot.slane %v4239, 4
    %v4342 = vrot.slane %v4242, 4
    %v4343 = vsel %vm2005, %v4341, %v4342
    %4346 = vst.msk [vmem:[#allocation3 + $0x8] sm:$0xff] %vm4293, %v4343
    %4347 = vst.msk [vmem:[#allocation3 + $0x28] sm:$0x1] %vm4295, %v4342
    %v4349 = vrot.slane %v4242, 5
    %v4350 = vrot.slane %v4247, 5
    %v4351 = vsel %vm2055, %v4349, %v4350
    %4352 = vrot.lane.b32.xlu0 %v4351, 32
    %v4353 = vpop.permute.xlu0 %4352
    %4354 = vrot.lane.b32.xlu0 %v4350, 32
    %v4355 = vpop.permute.xlu0 %4354
    %4358 = vst.msk [vmem:[#allocation3 + $0x8] sm:$0xff] %vm4308, %v4353
    %4359 = vst.msk [vmem:[#allocation3 + $0x28] sm:$0x1] %vm4310, %v4355
    %v4361 = vrot.slane %v4247, 6
    %v4362 = vrot.slane %v4250, 6
    %v4363 = vsel %vm2105, %v4361, %v4362
    %4364 = vrot.lane.b32.xlu0 %v4363, 64
    %v4365 = vpop.permute.xlu0 %4364
    %4366 = vrot.lane.b32.xlu0 %v4362, 64
    %v4367 = vpop.permute.xlu0 %4366
    %4370 = vst.msk [vmem:[#allocation3 + $0x8] sm:$0xff] %vm4322, %v4365
    %4371 = vst.msk [vmem:[#allocation3 + $0x28] sm:$0x1] %vm4324, %v4367
    %v4373 = vrot.slane %v4250, 7
    %v4374 = vrot.slane %v4255, 7
    %v4375 = vsel %vm1408, %v4373, %v4374
    %4376 = vrot.lane.b32.xlu0 %v4375, 96
    %v4377 = vpop.permute.xlu0 %4376
    %4378 = vrot.lane.b32.xlu0 %v4374, 96
    %v4379 = vpop.permute.xlu0 %4378
    %4382 = vst.msk [vmem:[#allocation3 + $0x8] sm:$0xff] %vm4336, %v4377
    %4383 = vst.msk [vmem:[#allocation3 + $0x28] sm:$0x1] %vm4338, %v4379
    %4384 = vst.msk [vmem:[#allocation3 + $0x10] sm:$0xff] %vm4293, %v4258
    %4385 = vst.msk [vmem:[#allocation3 + $0x30] sm:$0x1] %vm4295, %v4263
    %v4388 = vrot.slane %v4263, 1
    %v4389 = vrot.slane %v4266, 1
    %v4390 = vsel %vm1855, %v4388, %v4389
    %4391 = vrot.lane.b32.xlu0 %v4390, 32
    %v4392 = vpop.permute.xlu0 %4391
    %4393 = vrot.lane.b32.xlu0 %v4389, 32
    %v4394 = vpop.permute.xlu0 %4393
    %4397 = vst.msk [vmem:[#allocation3 + $0x10] sm:$0xff] %vm4308, %v4392
    %4398 = vst.msk [vmem:[#allocation3 + $0x30] sm:$0x1] %vm4310, %v4394
    %v4400 = vrot.slane %v4266, 2
    %v4401 = vrot.slane %v4271, 2
    %v4402 = vsel %vm1905, %v4400, %v4401
    %4403 = vrot.lane.b32.xlu0 %v4402, 64
    %v4404 = vpop.permute.xlu0 %4403
    %4405 = vrot.lane.b32.xlu0 %v4401, 64
    %v4406 = vpop.permute.xlu0 %4405
    %4409 = vst.msk [vmem:[#allocation3 + $0x10] sm:$0xff] %vm4322, %v4404
    %4410 = vst.msk [vmem:[#allocation3 + $0x30] sm:$0x1] %vm4324, %v4406
    %v4412 = vrot.slane %v4271, 3
    %v4413 = vrot.slane %v4274, 3
    %v4414 = vsel %vm1955, %v4412, %v4413
    %4415 = vrot.lane.b32.xlu0 %v4414, 96
    %v4416 = vpop.permute.xlu0 %4415
    %4417 = vrot.lane.b32.xlu0 %v4413, 96
    %v4418 = vpop.permute.xlu0 %4417
    %4421 = vst.msk [vmem:[#allocation3 + $0x10] sm:$0xff] %vm4336, %v4416
    %4422 = vst.msk [vmem:[#allocation3 + $0x30] sm:$0x1] %vm4338, %v4418
    %v4424 = vrot.slane %v4274, 4
    %v4425 = vrot.slane %v4279, 4
    %v4426 = vsel %vm2005, %v4424, %v4425
    %4429 = vst.msk [vmem:[#allocation3 + $0x18] sm:$0xff] %vm4293, %v4426
    %4430 = vst.msk [vmem:[#allocation3 + $0x38] sm:$0x1] %vm4295, %v4425
    %v4432 = vrot.slane %v4279, 5
    %v4433 = vrot.slane %v4282, 5
    %v4434 = vsel %vm2055, %v4432, %v4433
    %4435 = vrot.lane.b32.xlu0 %v4434, 32
    %v4436 = vpop.permute.xlu0 %4435
    %4437 = vrot.lane.b32.xlu0 %v4433, 32
    %v4438 = vpop.permute.xlu0 %4437
    %4441 = vst.msk [vmem:[#allocation3 + $0x18] sm:$0xff] %vm4308, %v4436
    %4442 = vst.msk [vmem:[#allocation3 + $0x38] sm:$0x1] %vm4310, %v4438
    %v4444 = vrot.slane %v4282, 6
    %v4445 = vrot.slane %v4287, 6
    %v4446 = vsel %vm2105, %v4444, %v4445
    %4447 = vrot.lane.b32.xlu0 %v4446, 64
    %v4448 = vpop.permute.xlu0 %4447
    %4449 = vrot.lane.b32.xlu0 %v4445, 64
    %v4450 = vpop.permute.xlu0 %4449
    %4453 = vst.msk [vmem:[#allocation3 + $0x18] sm:$0xff] %vm4322, %v4448
    %4454 = vst.msk [vmem:[#allocation3 + $0x38] sm:$0x1] %vm4324, %v4450
    %v4456 = vrot.slane %v4287, 7
    %v4457 = vrot.slane %v4290, 7
    %v4458 = vsel %vm1408, %v4456, %v4457
    %4459 = vrot.lane.b32.xlu0 %v4458, 96
    %v4460 = vpop.permute.xlu0 %4459
    %4461 = vrot.lane.b32.xlu0 %v4457, 96
    %v4462 = vpop.permute.xlu0 %4461
    %4465 = vst.msk [vmem:[#allocation3 + $0x18] sm:$0xff] %vm4336, %v4460
    %4466 = vst.msk [vmem:[#allocation3 + $0x38] sm:$0x1] %vm4338, %v4462
    %v4467 = vshrl.u32 %v4090, 16
    %v4469 = vshll.u32 %v4090, 16
    %v4471 = vrot.slane %v4469, 1
    %v4472 = vor.u32 %v4467, %v4471
    %v4474 = vshll.u32 %v4091, 16
    %v4476 = vrot.slane %v4474, 1
    %v4477 = vsel %vm2535, %v4472, %v4476
    %v4478 = vshrl.u32 %v4091, 16
    %v4480 = vor.u32 %v4478, %v4476
    %v4482 = vshll.u32 %v4092, 16
    %v4484 = vrot.slane %v4482, 1
    %v4485 = vsel %vm2535, %v4480, %v4484
    %v4486 = vshrl.u32 %v4092, 16
    %v4488 = vor.u32 %v4486, %v4484
    %v4490 = vshll.u32 %v4093, 16
    %v4492 = vrot.slane %v4490, 1
    %v4493 = vsel %vm2535, %v4488, %v4492
    %v4494 = vshrl.u32 %v4093, 16
    %v4500 = vand.u32 %v4494, %v1410
    %4502 = vmatprep.subr.bf16.mxu0 0
    %4503 = vmatpush1.bf16.msra.mxu0 %v4477
    %4504 = vmatprep.subr.bf16.mxu0 0
    %4505 = vmatpush1.bf16.msra.mxu0 %v4485
    %4506 = vmatprep.subr.bf16.mxu0 0
    %4507 = vmatpush1.bf16.msra.mxu0 %v4493
    %4508 = vmatprep.subr.bf16.mxu0 0
    %4509 = vmatpush1.bf16.msra.mxu0 %v4500
    %4510 = vmatprep.subr.bf16.mxu0 0
    %4511 = vmatpush1.bf16.msra.mxu0 0
    %4512 = vmatprep.subr.bf16.mxu0 0
    %4513 = vmatpush1.bf16.msra.mxu0 0
    %4514 = vmatprep.subr.bf16.mxu0 0
    %4515 = vmatpush1.bf16.msra.mxu0 0
    %4516 = vmatprep.subr.bf16.mxu0 0
    %4517 = vmatpush1.bf16.msra.mxu0 0
    %4518 = vmatprep.subr.bf16.mxu0 0
    %4519 = vmatpush1.bf16.msra.mxu0 0
    %4520 = vmatprep.subr.bf16.mxu0 0
    %4521 = vmatpush1.bf16.msra.mxu0 0
    %4522 = vmatprep.subr.bf16.mxu0 0
    %4523 = vmatpush1.bf16.msra.mxu0 0
    %4524 = vmatprep.subr.bf16.mxu0 0
    %4525 = vmatpush1.bf16.msra.mxu0 0
    %4526 = vmatprep.subr.bf16.mxu0 0
    %4527 = vmatpush1.bf16.msra.mxu0 0
    %4528 = vmatprep.subr.bf16.mxu0 0
    %4529 = vmatpush1.bf16.msra.mxu0 0
    %4530 = vmatprep.subr.bf16.mxu0 0
    %4531 = vmatpush1.bf16.msra.mxu0 0
    %4532 = vmatprep.subr.bf16.mxu0 0
    %4533 = vmatpush1.bf16.msra.mxu0 0
    %4534 = vmatprep.mubr.bf16.mxu0 0
    %4535 = vmatmul.mubr.bf16.gmra.mrb[0].mxu0 %v4159
    %v4536 = vpop.f32.mrb[0].mxu0
    %v4537 = vadd.f32 0.0, %v4536
    %v4538 = vpop.f32.mrb[0].mxu0
    %v4539 = vpop.f32.mrb[0].mxu0
    %v4540 = vadd.f32 0.0, %v4539
    %v4541 = vpop.f32.mrb[0].mxu0
    %4542 = vmatprep.mubr.bf16.mxu0 0
    %4543 = vmatmul.mubr.bf16.gmra.mrb[0].mxu0 %v4162
    %v4544 = vpop.f32.mrb[0].mxu0
    %v4545 = vadd.f32 0.0, %v4544
    %v4546 = vpop.f32.mrb[0].mxu0
    %v4547 = vpop.f32.mrb[0].mxu0
    %v4548 = vadd.f32 0.0, %v4547
    %v4549 = vpop.f32.mrb[0].mxu0
    %4550 = vmatprep.mubr.bf16.mxu0 0
    %4551 = vmatmul.mubr.bf16.gmra.mrb[0].mxu0 %v4165
    %v4552 = vpop.f32.mrb[0].mxu0
    %v4553 = vadd.f32 0.0, %v4552
    %v4554 = vpop.f32.mrb[0].mxu0
    %v4555 = vpop.f32.mrb[0].mxu0
    %v4556 = vadd.f32 0.0, %v4555
    %v4557 = vpop.f32.mrb[0].mxu0
    %4558 = vmatprep.mubr.bf16.mxu0 0
    %4559 = vmatmul.mubr.bf16.gmra.mrb[0].mxu0 %v4168
    %v4560 = vpop.f32.mrb[0].mxu0
    %v4561 = vadd.f32 0.0, %v4560
    %v4562 = vpop.f32.mrb[0].mxu0
    %v4563 = vpop.f32.mrb[0].mxu0
    %v4564 = vadd.f32 0.0, %v4563
    %v4565 = vpop.f32.mrb[0].mxu0
    %4566 = vmatprep.mubr.bf16.mxu0 0
    %4567 = vmatmul.mubr.bf16.gmra.mrb[0].mxu0 %v4171
    %v4568 = vpop.f32.mrb[0].mxu0
    %v4569 = vadd.f32 0.0, %v4568
    %v4570 = vpop.f32.mrb[0].mxu0
    %v4571 = vpop.f32.mrb[0].mxu0
    %v4572 = vadd.f32 0.0, %v4571
    %v4573 = vpop.f32.mrb[0].mxu0
    %4574 = vmatprep.mubr.bf16.mxu0 0
    %4575 = vmatmul.mubr.bf16.gmra.mrb[0].mxu0 %v4174
    %v4576 = vpop.f32.mrb[0].mxu0
    %v4577 = vadd.f32 0.0, %v4576
    %v4578 = vpop.f32.mrb[0].mxu0
    %v4579 = vpop.f32.mrb[0].mxu0
    %v4580 = vadd.f32 0.0, %v4579
    %v4581 = vpop.f32.mrb[0].mxu0
    %4582 = vmatprep.mubr.bf16.mxu0 0
    %4583 = vmatmul.mubr.bf16.gmra.mrb[0].mxu0 %v4177
    %v4584 = vpop.f32.mrb[0].mxu0
    %v4585 = vadd.f32 0.0, %v4584
    %v4586 = vpop.f32.mrb[0].mxu0
    %v4587 = vpop.f32.mrb[0].mxu0
    %v4588 = vadd.f32 0.0, %v4587
    %v4589 = vpop.f32.mrb[0].mxu0
    %4590 = vmatprep.mubr.bf16.mxu0 0
    %4591 = vmatmul.mubr.bf16.gmra.mrb[0].mxu0 %v4180
    %v4592 = vpop.f32.mrb[0].mxu0
    %v4593 = vadd.f32 0.0, %v4592
    %v4594 = vpop.f32.mrb[0].mxu0
    %v4595 = vpop.f32.mrb[0].mxu0
    %v4596 = vadd.f32 0.0, %v4595
    %v4597 = vpop.f32.mrb[0].mxu0
    %4598 = vmatprep.mubr.bf16.mxu0 0
    %4599 = vmatmul.mubr.bf16.gmra.mrb[0].mxu0 %v4183
    %v4600 = vpop.f32.mrb[0].mxu0
    %v4601 = vadd.f32 0.0, %v4600
    %v4602 = vpop.f32.mrb[0].mxu0
    %v4603 = vpop.f32.mrb[0].mxu0
    %v4604 = vadd.f32 0.0, %v4603
    %v4605 = vpop.f32.mrb[0].mxu0
    %4606 = vdwg.mxu0
    %v4609 = vrot.slane %v4537, 7
    %v4610 = vrot.slane %v4540, 7
    %v4611 = vsel %vm1408, %v4609, %v4610
    %vm4614 = vcmask 261121
    %4615 = vst.msk [vmem:[#allocation3 + $0x20] sm:$0xfe] %vm4614, %v4609
    %vm4616 = vcmask 254976
    %4617 = vst.msk [vmem:[#allocation3 + $0x40] sm:$0x3] %vm4616, %v4611
    %4619 = vrot.lane.b32.xlu0 %v4540, 32
    %v4620 = vpop.permute.xlu0 %4619
    %4621 = vrot.lane.b32.xlu0 %v4545, 32
    %v4622 = vpop.permute.xlu0 %4621
    %vm4625 = vcmask 523521
    %4626 = vst.msk [vmem:[#allocation3 + $0x20] sm:$0xfe] %vm4625, %v4620
    %vm4627 = vcmask 517376
    %4628 = vst.msk [vmem:[#allocation3 + $0x40] sm:$0x3] %vm4627, %v4622
    %v4630 = vrot.slane %v4545, 1
    %v4631 = vrot.slane %v4548, 1
    %v4632 = vsel %vm1855, %v4630, %v4631
    %4633 = vrot.lane.b32.xlu0 %v4632, 64
    %v4634 = vpop.permute.xlu0 %4633
    %4635 = vrot.lane.b32.xlu0 %v4631, 64
    %v4636 = vpop.permute.xlu0 %4635
    %vm4639 = vcmask 785921
    %4640 = vst.msk [vmem:[#allocation3 + $0x20] sm:$0xfe] %vm4639, %v4634
    %vm4641 = vcmask 779776
    %4642 = vst.msk [vmem:[#allocation3 + $0x40] sm:$0x3] %vm4641, %v4636
    %v4644 = vrot.slane %v4548, 2
    %v4645 = vrot.slane %v4553, 2
    %v4646 = vsel %vm1905, %v4644, %v4645
    %4647 = vrot.lane.b32.xlu0 %v4646, 96
    %v4648 = vpop.permute.xlu0 %4647
    %4649 = vrot.lane.b32.xlu0 %v4645, 96
    %v4650 = vpop.permute.xlu0 %4649
    %vm4653 = vcmask 1048321
    %4654 = vst.msk [vmem:[#allocation3 + $0x20] sm:$0xfe] %vm4653, %v4648
    %vm4655 = vcmask 1042176
    %4656 = vst.msk [vmem:[#allocation3 + $0x40] sm:$0x3] %vm4655, %v4650
    %v4658 = vrot.slane %v4553, 3
    %v4659 = vrot.slane %v4556, 3
    %v4660 = vsel %vm1955, %v4658, %v4659
    %4663 = vst.msk [vmem:[#allocation3 + $0x28] sm:$0xfe] %vm4614, %v4660
    %4664 = vst.msk [vmem:[#allocation3 + $0x48] sm:$0x3] %vm4616, %v4659
    %v4666 = vrot.slane %v4556, 4
    %v4667 = vrot.slane %v4561, 4
    %v4668 = vsel %vm2005, %v4666, %v4667
    %4669 = vrot.lane.b32.xlu0 %v4668, 32
    %v4670 = vpop.permute.xlu0 %4669
    %4671 = vrot.lane.b32.xlu0 %v4667, 32
    %v4672 = vpop.permute.xlu0 %4671
    %4675 = vst.msk [vmem:[#allocation3 + $0x28] sm:$0xfe] %vm4625, %v4670
    %4676 = vst.msk [vmem:[#allocation3 + $0x48] sm:$0x3] %vm4627, %v4672
    %v4678 = vrot.slane %v4561, 5
    %v4679 = vrot.slane %v4564, 5
    %v4680 = vsel %vm2055, %v4678, %v4679
    %4681 = vrot.lane.b32.xlu0 %v4680, 64
    %v4682 = vpop.permute.xlu0 %4681
    %4683 = vrot.lane.b32.xlu0 %v4679, 64
    %v4684 = vpop.permute.xlu0 %4683
    %4687 = vst.msk [vmem:[#allocation3 + $0x28] sm:$0xfe] %vm4639, %v4682
    %4688 = vst.msk [vmem:[#allocation3 + $0x48] sm:$0x3] %vm4641, %v4684
    %v4690 = vrot.slane %v4564, 6
    %v4691 = vrot.slane %v4569, 6
    %v4692 = vsel %vm2105, %v4690, %v4691
    %4693 = vrot.lane.b32.xlu0 %v4692, 96
    %v4694 = vpop.permute.xlu0 %4693
    %4695 = vrot.lane.b32.xlu0 %v4691, 96
    %v4696 = vpop.permute.xlu0 %4695
    %4699 = vst.msk [vmem:[#allocation3 + $0x28] sm:$0xfe] %vm4653, %v4694
    %4700 = vst.msk [vmem:[#allocation3 + $0x48] sm:$0x3] %vm4655, %v4696
    %v4703 = vrot.slane %v4572, 7
    %v4704 = vrot.slane %v4577, 7
    %v4705 = vsel %vm1408, %v4703, %v4704
    %4708 = vst.msk [vmem:[#allocation3 + $0x30] sm:$0xfe] %vm4614, %v4703
    %4709 = vst.msk [vmem:[#allocation3 + $0x50] sm:$0x3] %vm4616, %v4705
    %4711 = vrot.lane.b32.xlu0 %v4577, 32
    %v4712 = vpop.permute.xlu0 %4711
    %4713 = vrot.lane.b32.xlu0 %v4580, 32
    %v4714 = vpop.permute.xlu0 %4713
    %4717 = vst.msk [vmem:[#allocation3 + $0x30] sm:$0xfe] %vm4625, %v4712
    %4718 = vst.msk [vmem:[#allocation3 + $0x50] sm:$0x3] %vm4627, %v4714
    %v4720 = vrot.slane %v4580, 1
    %v4721 = vrot.slane %v4585, 1
    %v4722 = vsel %vm1855, %v4720, %v4721
    %4723 = vrot.lane.b32.xlu0 %v4722, 64
    %v4724 = vpop.permute.xlu0 %4723
    %4725 = vrot.lane.b32.xlu0 %v4721, 64
    %v4726 = vpop.permute.xlu0 %4725
    %4729 = vst.msk [vmem:[#allocation3 + $0x30] sm:$0xfe] %vm4639, %v4724
    %4730 = vst.msk [vmem:[#allocation3 + $0x50] sm:$0x3] %vm4641, %v4726
    %v4732 = vrot.slane %v4585, 2
    %v4733 = vrot.slane %v4588, 2
    %v4734 = vsel %vm1905, %v4732, %v4733
    %4735 = vrot.lane.b32.xlu0 %v4734, 96
    %v4736 = vpop.permute.xlu0 %4735
    %4737 = vrot.lane.b32.xlu0 %v4733, 96
    %v4738 = vpop.permute.xlu0 %4737
    %4741 = vst.msk [vmem:[#allocation3 + $0x30] sm:$0xfe] %vm4653, %v4736
    %4742 = vst.msk [vmem:[#allocation3 + $0x50] sm:$0x3] %vm4655, %v4738
    %v4744 = vrot.slane %v4588, 3
    %v4745 = vrot.slane %v4593, 3
    %v4746 = vsel %vm1955, %v4744, %v4745
    %4749 = vst.msk [vmem:[#allocation3 + $0x38] sm:$0xfe] %vm4614, %v4746
    %4750 = vst.msk [vmem:[#allocation3 + $0x58] sm:$0x3] %vm4616, %v4745
    %v4752 = vrot.slane %v4593, 4
    %v4753 = vrot.slane %v4596, 4
    %v4754 = vsel %vm2005, %v4752, %v4753
    %4755 = vrot.lane.b32.xlu0 %v4754, 32
    %v4756 = vpop.permute.xlu0 %4755
    %4757 = vrot.lane.b32.xlu0 %v4753, 32
    %v4758 = vpop.permute.xlu0 %4757
    %4761 = vst.msk [vmem:[#allocation3 + $0x38] sm:$0xfe] %vm4625, %v4756
    %4762 = vst.msk [vmem:[#allocation3 + $0x58] sm:$0x3] %vm4627, %v4758
    %v4764 = vrot.slane %v4596, 5
    %v4765 = vrot.slane %v4601, 5
    %v4766 = vsel %vm2055, %v4764, %v4765
    %4767 = vrot.lane.b32.xlu0 %v4766, 64
    %v4768 = vpop.permute.xlu0 %4767
    %4769 = vrot.lane.b32.xlu0 %v4765, 64
    %v4770 = vpop.permute.xlu0 %4769
    %4773 = vst.msk [vmem:[#allocation3 + $0x38] sm:$0xfe] %vm4639, %v4768
    %4774 = vst.msk [vmem:[#allocation3 + $0x58] sm:$0x3] %vm4641, %v4770
    %v4776 = vrot.slane %v4601, 6
    %v4777 = vrot.slane %v4604, 6
    %v4778 = vsel %vm2105, %v4776, %v4777
    %4779 = vrot.lane.b32.xlu0 %v4778, 96
    %v4780 = vpop.permute.xlu0 %4779
    %4781 = vrot.lane.b32.xlu0 %v4777, 96
    %v4782 = vpop.permute.xlu0 %4781
    %4785 = vst.msk [vmem:[#allocation3 + $0x38] sm:$0xfe] %vm4653, %v4780
    %4786 = vst.msk [vmem:[#allocation3 + $0x58] sm:$0x3] %vm4655, %v4782
    %v4787 = vld [vmem:[#allocation3] sm:$0xff]
    %v4788 = vld [vmem:[#allocation3 + $0x8] sm:$0xff]
    %v4789 = vld [vmem:[#allocation3 + $0x10] sm:$0xff]
    %v4790 = vld [vmem:[#allocation3 + $0x18] sm:$0xff]
    %v4791 = vld [vmem:[#allocation3 + $0x20] sm:$0xff]
    %v4792 = vld [vmem:[#allocation3 + $0x28] sm:$0xff]
    %v4793 = vld [vmem:[#allocation3 + $0x30] sm:$0xff]
    %v4794 = vld [vmem:[#allocation3 + $0x38] sm:$0xff]
    %v4795 = vld [vmem:[#allocation3 + $0x40] sm:$0x3]
    %v4796 = vld [vmem:[#allocation3 + $0x48] sm:$0x3]
    %v4797 = vld [vmem:[#allocation3 + $0x50] sm:$0x3]
    %v4798 = vld [vmem:[#allocation3 + $0x58] sm:$0x3]
    %v4799 = vpack.c.bf16 %v4791, %v4787
    %v4800 = vpack.c.bf16 %v4792, %v4788
    %v4801 = vpack.c.bf16 %v4793, %v4789
    %v4802 = vpack.c.bf16 %v4794, %v4790
    %v4803 = vpack.c.bf16 %v4795, %v4795
    %v4804 = vpack.c.bf16 %v4796, %v4796
    %v4805 = vpack.c.bf16 %v4797, %v4797
    %v4806 = vpack.c.bf16 %v4798, %v4798
    %v4807 = vld [vmem:[%s7] sm:$0xf]
    %v4808 = vld [vmem:[%s7 + $0x4] sm:$0xf]
    %v4809 = vld [vmem:[%s7 + $0x8] sm:$0xf]
    %v4810 = vld [vmem:[%s7 + $0xc] sm:$0xf]
    %v4811 = vld [vmem:[%s7 + $0x10] sm:$0xf]
    %v4812 = vld [vmem:[%s7 + $0x14] sm:$0xf]
    %v4813 = vld [vmem:[%s7 + $0x18] sm:$0xf]
    %v4814 = vld [vmem:[%s7 + $0x1c] sm:$0xf]
    %v4815 = vld [vmem:[%s7 + $0x20] sm:$0xf]
    %v4816 = vld [vmem:[%s7 + $0x24] sm:$0xf]
    %v4817 = vld [vmem:[%s7 + $0x28] sm:$0xf]
    %v4818 = vld [vmem:[%s7 + $0x2c] sm:$0xf]
    %v4819 = vld [vmem:[%s7 + $0x30] sm:$0xf]
    %v4820 = vld [vmem:[%s7 + $0x34] sm:$0xf]
    %v4821 = vld [vmem:[%s7 + $0x38] sm:$0xf]
    %v4822 = vld [vmem:[%s7 + $0x3c] sm:$0xf]
    %v4823 = vld [vmem:[%s7 + $0x40] sm:$0xf]
    %v4824 = vld [vmem:[%s7 + $0x44] sm:$0xf]
    %v4825 = vld [vmem:[%s7 + $0x48] sm:$0xf]
    %v4826 = vld [vmem:[%s7 + $0x4c] sm:$0xf]
    %v4827 = vld [vmem:[%s7 + $0x50] sm:$0xf]
    %v4828 = vld [vmem:[%s7 + $0x54] sm:$0xf]
    %v4829 = vld [vmem:[%s7 + $0x58] sm:$0xf]
    %v4830 = vld [vmem:[%s7 + $0x5c] sm:$0xf]
    %v4831 = vld [vmem:[%s7 + $0x60] sm:$0xf]
    %v4832 = vld [vmem:[%s7 + $0x64] sm:$0xf]
    %v4833 = vld [vmem:[%s7 + $0x68] sm:$0xf]
    %v4834 = vld [vmem:[%s7 + $0x6c] sm:$0xf]
    %v4835 = vld [vmem:[%s7 + $0x70] sm:$0xf]
    %v4836 = vld [vmem:[%s7 + $0x74] sm:$0xf]
    %v4837 = vld [vmem:[%s7 + $0x78] sm:$0xf]
    %v4838 = vld [vmem:[%s7 + $0x7c] sm:$0xf]
    %v4839 = vld [vmem:[%s7 + $0x80] sm:$0xf]
    %v4840 = vld [vmem:[%s7 + $0x84] sm:$0xf]
    %v4841 = vld [vmem:[%s7 + $0x88] sm:$0xf]
    %v4842 = vld [vmem:[%s7 + $0x8c] sm:$0xf]
    %v4843 = vld [vmem:[%s7 + $0x90] sm:$0xf]
    %v4844 = vld [vmem:[%s7 + $0x94] sm:$0xf]
    %v4845 = vld [vmem:[%s7 + $0x98] sm:$0xf]
    %v4846 = vld [vmem:[%s7 + $0x9c] sm:$0xf]
    %v4847 = vld [vmem:[%s7 + $0xa0] sm:$0xf]
    %v4848 = vld [vmem:[%s7 + $0xa4] sm:$0xf]
    %v4849 = vld [vmem:[%s7 + $0xa8] sm:$0xf]
    %v4850 = vld [vmem:[%s7 + $0xac] sm:$0xf]
    %v4851 = vld [vmem:[%s7 + $0xb0] sm:$0xf]
    %v4852 = vld [vmem:[%s7 + $0xb4] sm:$0xf]
    %v4853 = vld [vmem:[%s7 + $0xb8] sm:$0xf]
    %v4854 = vld [vmem:[%s7 + $0xbc] sm:$0xf]
    %v4855 = vld [vmem:[%s7 + $0xc0] sm:$0xf]
    %v4856 = vld [vmem:[%s7 + $0xc4] sm:$0xf]
    %v4857 = vld [vmem:[%s7 + $0xc8] sm:$0xf]
    %v4858 = vld [vmem:[%s7 + $0xcc] sm:$0xf]
    %v4859 = vld [vmem:[%s7 + $0xd0] sm:$0xf]
    %v4860 = vld [vmem:[%s7 + $0xd4] sm:$0xf]
    %v4861 = vld [vmem:[%s7 + $0xd8] sm:$0xf]
    %v4862 = vld [vmem:[%s7 + $0xdc] sm:$0xf]
    %v4863 = vld [vmem:[%s7 + $0xe0] sm:$0xf]
    %v4864 = vld [vmem:[%s7 + $0xe4] sm:$0xf]
    %v4865 = vld [vmem:[%s7 + $0xe8] sm:$0xf]
    %v4866 = vld [vmem:[%s7 + $0xec] sm:$0xf]
    %v4867 = vld [vmem:[%s7 + $0xf0] sm:$0xf]
    %v4868 = vld [vmem:[%s7 + $0xf4] sm:$0xf]
    %v4869 = vld [vmem:[%s7 + $0xf8] sm:$0xf]
    %v4870 = vld [vmem:[%s7 + $0xfc] sm:$0xf]
    %v4871 = vld [vmem:[%s8] sm:$0x1]
    %v4873 = vlaneseq
    %v4874 = vshrl.u32 %v4873, 7
    %v4875 = vsub.s32 0, %v4874
    %v4876 = vrot.slane %v4871, %v4875
    %v4942 = vunpack.c.l.b16 %v4807
    %v4943 = vunpack.c.l.b16 %v4808
    %v4944 = vunpack.c.l.b16 %v4809
    %v4945 = vunpack.c.l.b16 %v4810
    %v4946 = vunpack.c.l.b16 %v4811
    %v4947 = vunpack.c.l.b16 %v4812
    %v4948 = vunpack.c.l.b16 %v4813
    %v4949 = vunpack.c.l.b16 %v4814
    %v4950 = vunpack.c.l.b16 %v4815
    %v4951 = vunpack.c.l.b16 %v4816
    %v4952 = vunpack.c.l.b16 %v4817
    %v4953 = vunpack.c.l.b16 %v4818
    %v4954 = vunpack.c.l.b16 %v4819
    %v4955 = vunpack.c.l.b16 %v4820
    %v4956 = vunpack.c.l.b16 %v4821
    %v4957 = vunpack.c.l.b16 %v4822
    %v4958 = vunpack.c.l.b16 %v4823
    %v4959 = vunpack.c.l.b16 %v4824
    %v4960 = vunpack.c.l.b16 %v4825
    %v4961 = vunpack.c.l.b16 %v4826
    %v4962 = vunpack.c.l.b16 %v4827
    %v4963 = vunpack.c.l.b16 %v4828
    %v4964 = vunpack.c.l.b16 %v4829
    %v4965 = vunpack.c.l.b16 %v4830
    %v4966 = vunpack.c.l.b16 %v4831
    %v4967 = vunpack.c.l.b16 %v4832
    %v4968 = vunpack.c.l.b16 %v4833
    %v4969 = vunpack.c.l.b16 %v4834
    %v4970 = vunpack.c.l.b16 %v4835
    %v4971 = vunpack.c.l.b16 %v4836
    %v4972 = vunpack.c.l.b16 %v4837
    %v4973 = vunpack.c.l.b16 %v4838
    %v4974 = vunpack.c.l.b16 %v4839
    %v4975 = vunpack.c.l.b16 %v4840
    %v4976 = vunpack.c.l.b16 %v4841
    %v4977 = vunpack.c.l.b16 %v4842
    %v4978 = vunpack.c.l.b16 %v4843
    %v4979 = vunpack.c.l.b16 %v4844
    %v4980 = vunpack.c.l.b16 %v4845
    %v4981 = vunpack.c.l.b16 %v4846
    %v4982 = vunpack.c.l.b16 %v4847
    %v4983 = vunpack.c.l.b16 %v4848
    %v4984 = vunpack.c.l.b16 %v4849
    %v4985 = vunpack.c.l.b16 %v4850
    %v4986 = vunpack.c.l.b16 %v4851
    %v4987 = vunpack.c.l.b16 %v4852
    %v4988 = vunpack.c.l.b16 %v4853
    %v4989 = vunpack.c.l.b16 %v4854
    %v4990 = vunpack.c.l.b16 %v4855
    %v4991 = vunpack.c.l.b16 %v4856
    %v4992 = vunpack.c.l.b16 %v4857
    %v4993 = vunpack.c.l.b16 %v4858
    %v4994 = vunpack.c.l.b16 %v4859
    %v4995 = vunpack.c.l.b16 %v4860
    %v4996 = vunpack.c.l.b16 %v4861
    %v4997 = vunpack.c.l.b16 %v4862
    %v4998 = vunpack.c.l.b16 %v4863
    %v4999 = vunpack.c.l.b16 %v4864
    %v5000 = vunpack.c.l.b16 %v4865
    %v5001 = vunpack.c.l.b16 %v4866
    %v5002 = vunpack.c.l.b16 %v4867
    %v5003 = vunpack.c.l.b16 %v4868
    %v5004 = vunpack.c.l.b16 %v4869
    %v5005 = vunpack.c.l.b16 %v4870
    %v5006 = vpack.c.b16 %v4943, %v4942
    %v5007 = vpack.c.b16 %v4945, %v4944
    %v5008 = vpack.c.b16 %v4947, %v4946
    %v5009 = vpack.c.b16 %v4949, %v4948
    %v5010 = vpack.c.b16 %v4951, %v4950
    %v5011 = vpack.c.b16 %v4953, %v4952
    %v5012 = vpack.c.b16 %v4955, %v4954
    %v5013 = vpack.c.b16 %v4957, %v4956
    %v5014 = vpack.c.b16 %v4959, %v4958
    %v5015 = vpack.c.b16 %v4961, %v4960
    %v5016 = vpack.c.b16 %v4963, %v4962
    %v5017 = vpack.c.b16 %v4965, %v4964
    %v5018 = vpack.c.b16 %v4967, %v4966
    %v5019 = vpack.c.b16 %v4969, %v4968
    %v5020 = vpack.c.b16 %v4971, %v4970
    %v5021 = vpack.c.b16 %v4973, %v4972
    %v5022 = vpack.c.b16 %v4975, %v4974
    %v5023 = vpack.c.b16 %v4977, %v4976
    %v5024 = vpack.c.b16 %v4979, %v4978
    %v5025 = vpack.c.b16 %v4981, %v4980
    %v5026 = vpack.c.b16 %v4983, %v4982
    %v5027 = vpack.c.b16 %v4985, %v4984
    %v5028 = vpack.c.b16 %v4987, %v4986
    %v5029 = vpack.c.b16 %v4989, %v4988
    %v5030 = vpack.c.b16 %v4991, %v4990
    %v5031 = vpack.c.b16 %v4993, %v4992
    %v5032 = vpack.c.b16 %v4995, %v4994
    %v5033 = vpack.c.b16 %v4997, %v4996
    %v5034 = vpack.c.b16 %v4999, %v4998
    %v5035 = vpack.c.b16 %v5001, %v5000
    %v5036 = vpack.c.b16 %v5003, %v5002
    %v5037 = vpack.c.b16 %v5005, %v5004
    %5070 = vmatprep.subr.bf16.mxu0 0
    %5071 = vmatpush1.bf16.msra.mxu0 %v5006
    %5072 = vmatprep.subr.bf16.mxu0 0
    %5073 = vmatpush1.bf16.msra.mxu0 %v5007
    %5074 = vmatprep.subr.bf16.mxu0 0
    %5075 = vmatpush1.bf16.msra.mxu0 %v5008
    %5076 = vmatprep.subr.bf16.mxu0 0
    %5077 = vmatpush1.bf16.msra.mxu0 %v5009
    %5078 = vmatprep.subr.bf16.mxu0 0
    %5079 = vmatpush1.bf16.msra.mxu0 %v5010
    %5080 = vmatprep.subr.bf16.mxu0 0
    %5081 = vmatpush1.bf16.msra.mxu0 %v5011
    %5082 = vmatprep.subr.bf16.mxu0 0
    %5083 = vmatpush1.bf16.msra.mxu0 %v5012
    %5084 = vmatprep.subr.bf16.mxu0 0
    %5085 = vmatpush1.bf16.msra.mxu0 %v5013
    %5086 = vmatprep.subr.bf16.mxu0 0
    %5087 = vmatpush1.bf16.msra.mxu0 %v5014
    %5088 = vmatprep.subr.bf16.mxu0 0
    %5089 = vmatpush1.bf16.msra.mxu0 %v5015
    %5090 = vmatprep.subr.bf16.mxu0 0
    %5091 = vmatpush1.bf16.msra.mxu0 %v5016
    %5092 = vmatprep.subr.bf16.mxu0 0
    %5093 = vmatpush1.bf16.msra.mxu0 %v5017
    %5094 = vmatprep.subr.bf16.mxu0 0
    %5095 = vmatpush1.bf16.msra.mxu0 %v5018
    %5096 = vmatprep.subr.bf16.mxu0 0
    %5097 = vmatpush1.bf16.msra.mxu0 %v5019
    %5098 = vmatprep.subr.bf16.mxu0 0
    %5099 = vmatpush1.bf16.msra.mxu0 %v5020
    %5100 = vmatprep.subr.bf16.mxu0 0
    %5101 = vmatpush1.bf16.msra.mxu0 %v5021
    %5102 = vmatprep.mubr.bf16.mxu0 %v4800
    %5103 = vmatmul.mubr.bf16.gmra.mrb[0].mxu0 %v4799
    %v5104 = vpop.f32.mrb[0].mxu0
    %v5105 = vadd.f32 %v4876, %v5104
    %v5106 = vpop.f32.mrb[0].mxu0
    %v5107 = vpop.f32.mrb[0].mxu0
    %v5108 = vadd.f32 %v4876, %v5107
    %v5109 = vpop.f32.mrb[0].mxu0
    %5110 = vmatprep.mubr.bf16.mxu0 %v4804
    %5111 = vmatmul.mubr.bf16.gmra.mrb[0].mxu0 %v4803
    %v5112 = vpop.f32.mrb[0].mxu0
    %v5113 = vadd.f32 %v4876, %v5112
    %v5114 = vpop.f32.mrb[0].mxu0
    %v5115 = vpop.f32.mrb[0].mxu0
    %v5116 = vpop.f32.mrb[0].mxu0
    %5117 = vdwg.mxu0
    %5118 = vmatprep.subr.bf16.mxu0 0
    %5119 = vmatpush1.bf16.msra.mxu0 %v5022
    %5120 = vmatprep.subr.bf16.mxu0 0
    %5121 = vmatpush1.bf16.msra.mxu0 %v5023
    %5122 = vmatprep.subr.bf16.mxu0 0
    %5123 = vmatpush1.bf16.msra.mxu0 %v5024
    %5124 = vmatprep.subr.bf16.mxu0 0
    %5125 = vmatpush1.bf16.msra.mxu0 %v5025
    %5126 = vmatprep.subr.bf16.mxu0 0
    %5127 = vmatpush1.bf16.msra.mxu0 %v5026
    %5128 = vmatprep.subr.bf16.mxu0 0
    %5129 = vmatpush1.bf16.msra.mxu0 %v5027
    %5130 = vmatprep.subr.bf16.mxu0 0
    %5131 = vmatpush1.bf16.msra.mxu0 %v5028
    %5132 = vmatprep.subr.bf16.mxu0 0
    %5133 = vmatpush1.bf16.msra.mxu0 %v5029
    %5134 = vmatprep.subr.bf16.mxu0 0
    %5135 = vmatpush1.bf16.msra.mxu0 %v5030
    %5136 = vmatprep.subr.bf16.mxu0 0
    %5137 = vmatpush1.bf16.msra.mxu0 %v5031
    %5138 = vmatprep.subr.bf16.mxu0 0
    %5139 = vmatpush1.bf16.msra.mxu0 %v5032
    %5140 = vmatprep.subr.bf16.mxu0 0
    %5141 = vmatpush1.bf16.msra.mxu0 %v5033
    %5142 = vmatprep.subr.bf16.mxu0 0
    %5143 = vmatpush1.bf16.msra.mxu0 %v5034
    %5144 = vmatprep.subr.bf16.mxu0 0
    %5145 = vmatpush1.bf16.msra.mxu0 %v5035
    %5146 = vmatprep.subr.bf16.mxu0 0
    %5147 = vmatpush1.bf16.msra.mxu0 %v5036
    %5148 = vmatprep.subr.bf16.mxu0 0
    %5149 = vmatpush1.bf16.msra.mxu0 %v5037
    %5150 = vmatprep.mubr.bf16.mxu0 %v4802
    %5151 = vmatmul.mubr.bf16.gmra.mrb[0].mxu0 %v4801
    %v5152 = vpop.f32.mrb[0].mxu0
    %v5153 = vadd.f32 %v5105, %v5152
    %v5154 = vpop.f32.mrb[0].mxu0
    %v5155 = vpop.f32.mrb[0].mxu0
    %v5156 = vadd.f32 %v5108, %v5155
    %v5157 = vpop.f32.mrb[0].mxu0
    %5158 = vmatprep.mubr.bf16.mxu0 %v4806
    %5159 = vmatmul.mubr.bf16.gmra.mrb[0].mxu0 %v4805
    %v5160 = vpop.f32.mrb[0].mxu0
    %v5161 = vadd.f32 %v5113, %v5160
    %v5162 = vpop.f32.mrb[0].mxu0
    %v5163 = vpop.f32.mrb[0].mxu0
    %v5164 = vpop.f32.mrb[0].mxu0
    %5165 = vdwg.mxu0
    %v5166 = vmax.f32 %v5153, 0.0
    %v5167 = vmax.f32 %v5156, 0.0
    %v5168 = vmax.f32 %v5161, 0.0
    %vm5169 = vcmask 516096
    %5170 = vst.msk [vmem:[#allocation4] sm:$0x1] %vm5169, %v5166
    %v5173 = vunpack.c.l.s4 1983009808
    %v5174 = vunpack.c.0.s8 %v5173
    %v5175 = vlaneseq
    %v5176 = vshrl.u32 %v5175, 7
    %v5177 = vsub.s32 %v5174, %v5176
    %v5178 = vrot.slane %v5166, %v5177
    %v5179 = vrot.slane %v5178, 7
    %v5180 = vrot.slane %v5179, 2
    %5181 = vrot.lane.b32.xlu0 %v5180, 64
    %v5182 = vpop.permute.xlu0 %5181
    %vm5184 = vcmask 1040896
    %5185 = vst.msk [vmem:[#allocation4] sm:$0x1] %vm5184, %v5182
    %v5186 = vcombine.high %v5178, %v5178
    %5188 = vst.msk [vmem:[#allocation4 + $0x2] sm:$0x1] %vm5169, %v5186
    %v5189 = vrot.slane %v5186, 7
    %v5190 = vrot.slane %v5189, 2
    %5191 = vrot.lane.b32.xlu0 %v5190, 64
    %v5192 = vpop.permute.xlu0 %5191
    %5194 = vst.msk [vmem:[#allocation4 + $0x2] sm:$0x1] %vm5184, %v5192
    %v5195 = vcombine.high %v5166, %v5166
    %v5197 = vunpack.c.l.s4 1983009808
    %v5198 = vunpack.c.0.s8 %v5197
    %v5199 = vlaneseq
    %v5200 = vshrl.u32 %v5199, 7
    %v5201 = vsub.s32 %v5198, %v5200
    %v5202 = vrot.slane %v5195, %v5201
    %5204 = vst.msk [vmem:[#allocation4 + $0x4] sm:$0x1] %vm5169, %v5202
    %v5205 = vrot.slane %v5202, 7
    %v5206 = vrot.slane %v5205, 2
    %5207 = vrot.lane.b32.xlu0 %v5206, 64
    %v5208 = vpop.permute.xlu0 %5207
    %5210 = vst.msk [vmem:[#allocation4 + $0x4] sm:$0x1] %vm5184, %v5208
    %v5211 = vcombine.high %v5202, %v5202
    %5213 = vst.msk [vmem:[#allocation4 + $0x6] sm:$0x1] %vm5169, %v5211
    %v5214 = vrot.slane %v5211, 7
    %v5215 = vrot.slane %v5214, 2
    %5216 = vrot.lane.b32.xlu0 %v5215, 64
    %v5217 = vpop.permute.xlu0 %5216
    %5219 = vst.msk [vmem:[#allocation4 + $0x6] sm:$0x1] %vm5184, %v5217
    %5220 = vst.msk [vmem:[#allocation4 + $0x8] sm:$0x1] %vm5169, %v5167
    %v5223 = vunpack.c.l.s4 1983009808
    %v5224 = vunpack.c.0.s8 %v5223
    %v5225 = vlaneseq
    %v5226 = vshrl.u32 %v5225, 7
    %v5227 = vsub.s32 %v5224, %v5226
    %v5228 = vrot.slane %v5167, %v5227
    %v5229 = vrot.slane %v5228, 7
    %v5230 = vrot.slane %v5229, 2
    %5232 = vst.msk [vmem:[#allocation4 + $0x1] sm:$0x1] %vm5169, %v5230
    %v5233 = vcombine.high %v5228, %v5228
    %5234 = vrot.lane.b32.xlu0 %v5233, 64
    %v5235 = vpop.permute.xlu0 %5234
    %5237 = vst.msk [vmem:[#allocation4 + $0x1] sm:$0x1] %vm5184, %v5235
    %v5238 = vrot.slane %v5233, 7
    %v5239 = vrot.slane %v5238, 2
    %5241 = vst.msk [vmem:[#allocation4 + $0x3] sm:$0x1] %vm5169, %v5239
    %v5242 = vcombine.high %v5167, %v5167
    %v5244 = vunpack.c.l.s4 1983009808
    %v5245 = vunpack.c.0.s8 %v5244
    %v5246 = vlaneseq
    %v5247 = vshrl.u32 %v5246, 7
    %v5248 = vsub.s32 %v5245, %v5247
    %v5249 = vrot.slane %v5242, %v5248
    %5250 = vrot.lane.b32.xlu0 %v5249, 64
    %v5251 = vpop.permute.xlu0 %5250
    %5253 = vst.msk [vmem:[#allocation4 + $0x3] sm:$0x1] %vm5184, %v5251
    %v5254 = vrot.slane %v5249, 7
    %v5255 = vrot.slane %v5254, 2
    %5257 = vst.msk [vmem:[#allocation4 + $0x5] sm:$0x1] %vm5169, %v5255
    %v5258 = vcombine.high %v5249, %v5249
    %5259 = vrot.lane.b32.xlu0 %v5258, 64
    %v5260 = vpop.permute.xlu0 %5259
    %5262 = vst.msk [vmem:[#allocation4 + $0x5] sm:$0x1] %vm5184, %v5260
    %v5263 = vrot.slane %v5258, 7
    %v5264 = vrot.slane %v5263, 2
    %5266 = vst.msk [vmem:[#allocation4 + $0x7] sm:$0x1] %vm5169, %v5264
    %v5269 = vunpack.c.l.s4 1983009808
    %v5270 = vunpack.c.0.s8 %v5269
    %v5271 = vlaneseq
    %v5272 = vshrl.u32 %v5271, 7
    %v5273 = vsub.s32 %v5270, %v5272
    %v5274 = vrot.slane %v5168, %v5273
    %5275 = vrot.lane.b32.xlu0 %v5274, 64
    %v5276 = vpop.permute.xlu0 %5275
    %5278 = vst.msk [vmem:[#allocation4 + $0x7] sm:$0x1] %vm5184, %v5276
    %v5279 = vrot.slane %v5274, 7
    %v5280 = vrot.slane %v5279, 2
    %5282 = vst.msk [vmem:[#allocation4 + $0x9] sm:$0x1] %vm5169, %v5280
    %v5283 = vld [vmem:[#allocation4] sm:$0xff]
    %v5284 = vld [vmem:[#allocation4 + $0x8] sm:$0x3]
    %v5287 = vcombine.high %v5283, %v5283
    %v5289 = vunpack.c.l.s4 1983009808
    %v5290 = vunpack.c.0.s8 %v5289
    %v5291 = vlaneseq
    %v5292 = vshrl.u32 %v5291, 7
    %v5293 = vsub.s32 %v5290, %v5292
    %v5294 = vrot.slane %v5283, %v5293
    %v5296 = vunpack.c.l.s4 1983009808
    %v5297 = vunpack.c.0.s8 %v5296
    %v5298 = vlaneseq
    %v5299 = vshrl.u32 %v5298, 7
    %v5300 = vsub.s32 %v5297, %v5299
    %v5301 = vrot.slane %v5287, %v5300
    %v5302 = vcombine.high %v5294, %v5294
    %v5303 = vcombine.high %v5301, %v5301
    %v5305 = vunpack.c.l.s4 1983009808
    %v5306 = vunpack.c.0.s8 %v5305
    %v5307 = vlaneseq
    %v5308 = vshrl.u32 %v5307, 7
    %v5309 = vsub.s32 %v5306, %v5308
    %v5310 = vrot.slane %v5284, %v5309
    %v5316 = vpack.c.bf16 %v5294, %v5294
    %v5317 = vpack.c.bf16 %v5302, %v5302
    %v5318 = vpack.c.bf16 %v5301, %v5301
    %v5319 = vpack.c.bf16 %v5303, %v5303
    %v5320 = vpack.c.bf16 %v5310, %v5310
    %v5321 = vld [vmem:[%s9] sm:$0xff]
    %v5322 = vld [vmem:[%s9 + $0x8] sm:$0xff]
    %v5323 = vld [vmem:[%s9 + $0x10] sm:$0xff]
    %v5324 = vld [vmem:[%s9 + $0x18] sm:$0xf]
    %v5325 = vld [vmem:[%s9 + $0x1c] sm:$0xff]
    %v5326 = vld [vmem:[%s9 + $0x24] sm:$0xff]
    %v5327 = vld [vmem:[%s9 + $0x2c] sm:$0xff]
    %v5328 = vld [vmem:[%s9 + $0x34] sm:$0xf]
    %v5329 = vld [vmem:[%s9 + $0x38] sm:$0xff]
    %v5330 = vld [vmem:[%s9 + $0x40] sm:$0xff]
    %v5331 = vld [vmem:[%s9 + $0x48] sm:$0xff]
    %v5332 = vld [vmem:[%s9 + $0x50] sm:$0xf]
    %v5333 = vld [vmem:[%s9 + $0x54] sm:$0xff]
    %v5334 = vld [vmem:[%s9 + $0x5c] sm:$0xff]
    %v5335 = vld [vmem:[%s9 + $0x64] sm:$0xff]
    %v5336 = vld [vmem:[%s9 + $0x6c] sm:$0xf]
    %v5337 = vld [vmem:[%s9 + $0x70] sm:$0xff]
    %v5338 = vld [vmem:[%s9 + $0x78] sm:$0xff]
    %v5339 = vld [vmem:[%s9 + $0x80] sm:$0xff]
    %v5340 = vld [vmem:[%s9 + $0x88] sm:$0xf]
    %v5341 = vld [vmem:[%s9 + $0x8c] sm:$0xff]
    %v5342 = vld [vmem:[%s9 + $0x94] sm:$0xff]
    %v5343 = vld [vmem:[%s9 + $0x9c] sm:$0xff]
    %v5344 = vld [vmem:[%s9 + $0xa4] sm:$0xf]
    %v5345 = vld [vmem:[%s9 + $0xa8] sm:$0xff]
    %v5346 = vld [vmem:[%s9 + $0xb0] sm:$0xff]
    %v5347 = vld [vmem:[%s9 + $0xb8] sm:$0xff]
    %v5348 = vld [vmem:[%s9 + $0xc0] sm:$0xf]
    %v5349 = vld [vmem:[%s9 + $0xc4] sm:$0xff]
    %v5350 = vld [vmem:[%s9 + $0xcc] sm:$0xff]
    %v5351 = vld [vmem:[%s9 + $0xd4] sm:$0xff]
    %v5352 = vld [vmem:[%s9 + $0xdc] sm:$0xf]
    %v5353 = vld [vmem:[%s9 + $0xe0] sm:$0xff]
    %v5354 = vld [vmem:[%s9 + $0xe8] sm:$0xff]
    %v5355 = vld [vmem:[%s9 + $0xf0] sm:$0xff]
    %v5356 = vld [vmem:[%s9 + $0xf8] sm:$0xf]
    %v5357 = vld [vmem:[%s9 + $0xfc] sm:$0xff]
    %v5358 = vld [vmem:[%s9 + $0x104] sm:$0xff]
    %v5359 = vld [vmem:[%s9 + $0x10c] sm:$0xff]
    %v5360 = vld [vmem:[%s9 + $0x114] sm:$0xf]
    %v5361 = vld [vmem:[%s9 + $0x118] sm:$0xff]
    %v5362 = vld [vmem:[%s9 + $0x120] sm:$0xff]
    %v5363 = vld [vmem:[%s9 + $0x128] sm:$0xff]
    %v5364 = vld [vmem:[%s9 + $0x130] sm:$0xf]
    %v5365 = vld [vmem:[%s9 + $0x134] sm:$0xff]
    %v5366 = vld [vmem:[%s9 + $0x13c] sm:$0xff]
    %v5367 = vld [vmem:[%s9 + $0x144] sm:$0xff]
    %v5368 = vld [vmem:[%s9 + $0x14c] sm:$0xf]
    %v5369 = vld [vmem:[%s9 + $0x150] sm:$0xff]
    %v5370 = vld [vmem:[%s9 + $0x158] sm:$0xff]
    %v5371 = vld [vmem:[%s9 + $0x160] sm:$0xff]
    %v5372 = vld [vmem:[%s9 + $0x168] sm:$0xf]
    %v5373 = vld [vmem:[%s9 + $0x16c] sm:$0xff]
    %v5374 = vld [vmem:[%s9 + $0x174] sm:$0xff]
    %v5375 = vld [vmem:[%s9 + $0x17c] sm:$0xff]
    %v5376 = vld [vmem:[%s9 + $0x184] sm:$0xf]
    %v5377 = vld [vmem:[%s9 + $0x188] sm:$0xff]
    %v5378 = vld [vmem:[%s9 + $0x190] sm:$0xff]
    %v5379 = vld [vmem:[%s9 + $0x198] sm:$0xff]
    %v5380 = vld [vmem:[%s9 + $0x1a0] sm:$0xf]
    %v5381 = vld [vmem:[%s9 + $0x1a4] sm:$0xff]
    %v5382 = vld [vmem:[%s9 + $0x1ac] sm:$0xff]
    %v5383 = vld [vmem:[%s9 + $0x1b4] sm:$0xff]
    %v5384 = vld [vmem:[%s9 + $0x1bc] sm:$0xf]
    %v5385 = vld [vmem:[%s9 + $0x1c0] sm:$0xff]
    %v5386 = vld [vmem:[%s9 + $0x1c8] sm:$0xff]
    %v5387 = vld [vmem:[%s9 + $0x1d0] sm:$0xff]
    %v5388 = vld [vmem:[%s9 + $0x1d8] sm:$0xf]
    %v5389 = vld [vmem:[%s9 + $0x1dc] sm:$0xff]
    %v5390 = vld [vmem:[%s9 + $0x1e4] sm:$0xff]
    %v5391 = vld [vmem:[%s9 + $0x1ec] sm:$0xff]
    %v5392 = vld [vmem:[%s9 + $0x1f4] sm:$0xf]
    %v5393 = vld [vmem:[%s9 + $0x1f8] sm:$0xff]
    %v5394 = vld [vmem:[%s9 + $0x200] sm:$0xff]
    %v5395 = vld [vmem:[%s9 + $0x208] sm:$0xff]
    %v5396 = vld [vmem:[%s9 + $0x210] sm:$0xf]
    %v5397 = vld [vmem:[%s9 + $0x214] sm:$0xff]
    %v5398 = vld [vmem:[%s9 + $0x21c] sm:$0xff]
    %v5399 = vld [vmem:[%s9 + $0x224] sm:$0xff]
    %v5400 = vld [vmem:[%s9 + $0x22c] sm:$0xf]
    %v5401 = vld [vmem:[%s9 + $0x230] sm:$0xff]
    %v5402 = vld [vmem:[%s9 + $0x238] sm:$0xff]
    %v5403 = vld [vmem:[%s9 + $0x240] sm:$0xff]
    %v5404 = vld [vmem:[%s9 + $0x248] sm:$0xf]
    %v5405 = vld [vmem:[%s9 + $0x24c] sm:$0xff]
    %v5406 = vld [vmem:[%s9 + $0x254] sm:$0xff]
    %v5407 = vld [vmem:[%s9 + $0x25c] sm:$0xff]
    %v5408 = vld [vmem:[%s9 + $0x264] sm:$0xf]
    %v5409 = vld [vmem:[%s9 + $0x268] sm:$0xff]
    %v5410 = vld [vmem:[%s9 + $0x270] sm:$0xff]
    %v5411 = vld [vmem:[%s9 + $0x278] sm:$0xff]
    %v5412 = vld [vmem:[%s9 + $0x280] sm:$0xf]
    %v5413 = vld [vmem:[%s9 + $0x284] sm:$0xff]
    %v5414 = vld [vmem:[%s9 + $0x28c] sm:$0xff]
    %v5415 = vld [vmem:[%s9 + $0x294] sm:$0xff]
    %v5416 = vld [vmem:[%s9 + $0x29c] sm:$0xf]
    %v5417 = vld [vmem:[%s9 + $0x2a0] sm:$0xff]
    %v5418 = vld [vmem:[%s9 + $0x2a8] sm:$0xff]
    %v5419 = vld [vmem:[%s9 + $0x2b0] sm:$0xff]
    %v5420 = vld [vmem:[%s9 + $0x2b8] sm:$0xf]
    %v5421 = vld [vmem:[%s9 + $0x2bc] sm:$0xff]
    %v5422 = vld [vmem:[%s9 + $0x2c4] sm:$0xff]
    %v5423 = vld [vmem:[%s9 + $0x2cc] sm:$0xff]
    %v5424 = vld [vmem:[%s9 + $0x2d4] sm:$0xf]
    %v5425 = vld [vmem:[%s9 + $0x2d8] sm:$0xff]
    %v5426 = vld [vmem:[%s9 + $0x2e0] sm:$0xff]
    %v5427 = vld [vmem:[%s9 + $0x2e8] sm:$0xff]
    %v5428 = vld [vmem:[%s9 + $0x2f0] sm:$0xf]
    %v5429 = vld [vmem:[%s9 + $0x2f4] sm:$0xff]
    %v5430 = vld [vmem:[%s9 + $0x2fc] sm:$0xff]
    %v5431 = vld [vmem:[%s9 + $0x304] sm:$0xff]
    %v5432 = vld [vmem:[%s9 + $0x30c] sm:$0xf]
    %v5433 = vld [vmem:[%s9 + $0x310] sm:$0xff]
    %v5434 = vld [vmem:[%s9 + $0x318] sm:$0xff]
    %v5435 = vld [vmem:[%s9 + $0x320] sm:$0xff]
    %v5436 = vld [vmem:[%s9 + $0x328] sm:$0xf]
    %v5437 = vld [vmem:[%s9 + $0x32c] sm:$0xff]
    %v5438 = vld [vmem:[%s9 + $0x334] sm:$0xff]
    %v5439 = vld [vmem:[%s9 + $0x33c] sm:$0xff]
    %v5440 = vld [vmem:[%s9 + $0x344] sm:$0xf]
    %v5441 = vld [vmem:[%s9 + $0x348] sm:$0xff]
    %v5442 = vld [vmem:[%s9 + $0x350] sm:$0xff]
    %v5443 = vld [vmem:[%s9 + $0x358] sm:$0xff]
    %v5444 = vld [vmem:[%s9 + $0x360] sm:$0xf]
    %v5445 = vld [vmem:[%s9 + $0x364] sm:$0xff]
    %v5446 = vld [vmem:[%s9 + $0x36c] sm:$0xff]
    %v5447 = vld [vmem:[%s9 + $0x374] sm:$0xff]
    %v5448 = vld [vmem:[%s9 + $0x37c] sm:$0xf]
    %v5449 = vld [vmem:[%s9 + $0x380] sm:$0xff]
    %v5450 = vld [vmem:[%s9 + $0x388] sm:$0xff]
    %v5451 = vld [vmem:[%s9 + $0x390] sm:$0xff]
    %v5452 = vld [vmem:[%s9 + $0x398] sm:$0xf]
    %v5453 = vld [vmem:[%s9 + $0x39c] sm:$0xff]
    %v5454 = vld [vmem:[%s9 + $0x3a4] sm:$0xff]
    %v5455 = vld [vmem:[%s9 + $0x3ac] sm:$0xff]
    %v5456 = vld [vmem:[%s9 + $0x3b4] sm:$0xf]
    %v5457 = vld [vmem:[%s9 + $0x3b8] sm:$0xff]
    %v5458 = vld [vmem:[%s9 + $0x3c0] sm:$0xff]
    %v5459 = vld [vmem:[%s9 + $0x3c8] sm:$0xff]
    %v5460 = vld [vmem:[%s9 + $0x3d0] sm:$0xf]
    %v5461 = vld [vmem:[%s9 + $0x3d4] sm:$0xff]
    %v5462 = vld [vmem:[%s9 + $0x3dc] sm:$0xff]
    %v5463 = vld [vmem:[%s9 + $0x3e4] sm:$0xff]
    %v5464 = vld [vmem:[%s9 + $0x3ec] sm:$0xf]
    %v5465 = vld [vmem:[%s9 + $0x3f0] sm:$0xff]
    %v5466 = vld [vmem:[%s9 + $0x3f8] sm:$0xff]
    %v5467 = vld [vmem:[%s9 + $0x400] sm:$0xff]
    %v5468 = vld [vmem:[%s9 + $0x408] sm:$0xf]
    %v5469 = vld [vmem:[%s9 + $0x40c] sm:$0xff]
    %v5470 = vld [vmem:[%s9 + $0x414] sm:$0xff]
    %v5471 = vld [vmem:[%s9 + $0x41c] sm:$0xff]
    %v5472 = vld [vmem:[%s9 + $0x424] sm:$0xf]
    %v5473 = vld [vmem:[%s9 + $0x428] sm:$0xff]
    %v5474 = vld [vmem:[%s9 + $0x430] sm:$0xff]
    %v5475 = vld [vmem:[%s9 + $0x438] sm:$0xff]
    %v5476 = vld [vmem:[%s9 + $0x440] sm:$0xf]
    %v5477 = vld [vmem:[%s9 + $0x444] sm:$0xff]
    %v5478 = vld [vmem:[%s9 + $0x44c] sm:$0xff]
    %v5479 = vld [vmem:[%s9 + $0x454] sm:$0xff]
    %v5480 = vld [vmem:[%s9 + $0x45c] sm:$0xf]
    %v5481 = vld [vmem:[%s9 + $0x460] sm:$0xff]
    %v5482 = vld [vmem:[%s9 + $0x468] sm:$0xff]
    %v5483 = vld [vmem:[%s9 + $0x470] sm:$0xff]
    %v5484 = vld [vmem:[%s9 + $0x478] sm:$0xf]
    %v5485 = vld [vmem:[%s9 + $0x47c] sm:$0xff]
    %v5486 = vld [vmem:[%s9 + $0x484] sm:$0xff]
    %v5487 = vld [vmem:[%s9 + $0x48c] sm:$0xff]
    %v5488 = vld [vmem:[%s9 + $0x494] sm:$0xf]
    %v5489 = vld [vmem:[%s9 + $0x498] sm:$0xff]
    %v5490 = vld [vmem:[%s9 + $0x4a0] sm:$0xff]
    %v5491 = vld [vmem:[%s9 + $0x4a8] sm:$0xff]
    %v5492 = vld [vmem:[%s9 + $0x4b0] sm:$0xf]
    %v5493 = vld [vmem:[%s9 + $0x4b4] sm:$0xff]
    %v5494 = vld [vmem:[%s9 + $0x4bc] sm:$0xff]
    %v5495 = vld [vmem:[%s9 + $0x4c4] sm:$0xff]
    %v5496 = vld [vmem:[%s9 + $0x4cc] sm:$0xf]
    %v5497 = vld [vmem:[%s9 + $0x4d0] sm:$0xff]
    %v5498 = vld [vmem:[%s9 + $0x4d8] sm:$0xff]
    %v5499 = vld [vmem:[%s9 + $0x4e0] sm:$0xff]
    %v5500 = vld [vmem:[%s9 + $0x4e8] sm:$0xf]
    %v5501 = vld [vmem:[%s9 + $0x4ec] sm:$0xff]
    %v5502 = vld [vmem:[%s9 + $0x4f4] sm:$0xff]
    %v5503 = vld [vmem:[%s9 + $0x4fc] sm:$0xff]
    %v5504 = vld [vmem:[%s9 + $0x504] sm:$0xf]
    %v5505 = vld [vmem:[%s9 + $0x508] sm:$0xff]
    %v5506 = vld [vmem:[%s9 + $0x510] sm:$0xff]
    %v5507 = vld [vmem:[%s9 + $0x518] sm:$0xff]
    %v5508 = vld [vmem:[%s9 + $0x520] sm:$0xf]
    %v5509 = vld [vmem:[%s9 + $0x524] sm:$0xff]
    %v5510 = vld [vmem:[%s9 + $0x52c] sm:$0xff]
    %v5511 = vld [vmem:[%s9 + $0x534] sm:$0xff]
    %v5512 = vld [vmem:[%s9 + $0x53c] sm:$0xf]
    %v5513 = vld [vmem:[%s9 + $0x540] sm:$0xff]
    %v5514 = vld [vmem:[%s9 + $0x548] sm:$0xff]
    %v5515 = vld [vmem:[%s9 + $0x550] sm:$0xff]
    %v5516 = vld [vmem:[%s9 + $0x558] sm:$0xf]
    %v5517 = vld [vmem:[%s9 + $0x55c] sm:$0xff]
    %v5518 = vld [vmem:[%s9 + $0x564] sm:$0xff]
    %v5519 = vld [vmem:[%s9 + $0x56c] sm:$0xff]
    %v5520 = vld [vmem:[%s9 + $0x574] sm:$0xf]
    %v5521 = vld [vmem:[%s9 + $0x578] sm:$0xff]
    %v5522 = vld [vmem:[%s9 + $0x580] sm:$0xff]
    %v5523 = vld [vmem:[%s9 + $0x588] sm:$0xff]
    %v5524 = vld [vmem:[%s9 + $0x590] sm:$0xf]
    %v5525 = vld [vmem:[%s9 + $0x594] sm:$0xff]
    %v5526 = vld [vmem:[%s9 + $0x59c] sm:$0xff]
    %v5527 = vld [vmem:[%s9 + $0x5a4] sm:$0xff]
    %v5528 = vld [vmem:[%s9 + $0x5ac] sm:$0xf]
    %v5529 = vld [vmem:[%s9 + $0x5b0] sm:$0xff]
    %v5530 = vld [vmem:[%s9 + $0x5b8] sm:$0xff]
    %v5531 = vld [vmem:[%s9 + $0x5c0] sm:$0xff]
    %v5532 = vld [vmem:[%s9 + $0x5c8] sm:$0xf]
    %v5533 = vld [vmem:[%s9 + $0x5cc] sm:$0xff]
    %v5534 = vld [vmem:[%s9 + $0x5d4] sm:$0xff]
    %v5535 = vld [vmem:[%s9 + $0x5dc] sm:$0xff]
    %v5536 = vld [vmem:[%s9 + $0x5e4] sm:$0xf]
    %v5537 = vld [vmem:[%s9 + $0x5e8] sm:$0xff]
    %v5538 = vld [vmem:[%s9 + $0x5f0] sm:$0xff]
    %v5539 = vld [vmem:[%s9 + $0x5f8] sm:$0xff]
    %v5540 = vld [vmem:[%s9 + $0x600] sm:$0xf]
    %v5541 = vld [vmem:[%s9 + $0x604] sm:$0xff]
    %v5542 = vld [vmem:[%s9 + $0x60c] sm:$0xff]
    %v5543 = vld [vmem:[%s9 + $0x614] sm:$0xff]
    %v5544 = vld [vmem:[%s9 + $0x61c] sm:$0xf]
    %v5545 = vld [vmem:[%s9 + $0x620] sm:$0xff]
    %v5546 = vld [vmem:[%s9 + $0x628] sm:$0xff]
    %v5547 = vld [vmem:[%s9 + $0x630] sm:$0xff]
    %v5548 = vld [vmem:[%s9 + $0x638] sm:$0xf]
    %v5549 = vld [vmem:[%s9 + $0x63c] sm:$0xff]
    %v5550 = vld [vmem:[%s9 + $0x644] sm:$0xff]
    %v5551 = vld [vmem:[%s9 + $0x64c] sm:$0xff]
    %v5552 = vld [vmem:[%s9 + $0x654] sm:$0xf]
    %v5553 = vld [vmem:[%s9 + $0x658] sm:$0xff]
    %v5554 = vld [vmem:[%s9 + $0x660] sm:$0xff]
    %v5555 = vld [vmem:[%s9 + $0x668] sm:$0xff]
    %v5556 = vld [vmem:[%s9 + $0x670] sm:$0xf]
    %v5557 = vld [vmem:[%s9 + $0x674] sm:$0xff]
    %v5558 = vld [vmem:[%s9 + $0x67c] sm:$0xff]
    %v5559 = vld [vmem:[%s9 + $0x684] sm:$0xff]
    %v5560 = vld [vmem:[%s9 + $0x68c] sm:$0xf]
    %v5561 = vld [vmem:[%s9 + $0x690] sm:$0xff]
    %v5562 = vld [vmem:[%s9 + $0x698] sm:$0xff]
    %v5563 = vld [vmem:[%s9 + $0x6a0] sm:$0xff]
    %v5564 = vld [vmem:[%s9 + $0x6a8] sm:$0xf]
    %v5565 = vld [vmem:[%s9 + $0x6ac] sm:$0xff]
    %v5566 = vld [vmem:[%s9 + $0x6b4] sm:$0xff]
    %v5567 = vld [vmem:[%s9 + $0x6bc] sm:$0xff]
    %v5568 = vld [vmem:[%s9 + $0x6c4] sm:$0xf]
    %v5569 = vld [vmem:[%s9 + $0x6c8] sm:$0xff]
    %v5570 = vld [vmem:[%s9 + $0x6d0] sm:$0xff]
    %v5571 = vld [vmem:[%s9 + $0x6d8] sm:$0xff]
    %v5572 = vld [vmem:[%s9 + $0x6e0] sm:$0xf]
    %v5573 = vld [vmem:[%s9 + $0x6e4] sm:$0xff]
    %v5574 = vld [vmem:[%s9 + $0x6ec] sm:$0xff]
    %v5575 = vld [vmem:[%s9 + $0x6f4] sm:$0xff]
    %v5576 = vld [vmem:[%s9 + $0x6fc] sm:$0xf]
    %v5577 = vld [vmem:[%s9 + $0x700] sm:$0xff]
    %v5578 = vld [vmem:[%s9 + $0x708] sm:$0xff]
    %v5579 = vld [vmem:[%s9 + $0x710] sm:$0xff]
    %v5580 = vld [vmem:[%s9 + $0x718] sm:$0xf]
    %v5581 = vld [vmem:[%s9 + $0x71c] sm:$0xff]
    %v5582 = vld [vmem:[%s9 + $0x724] sm:$0xff]
    %v5583 = vld [vmem:[%s9 + $0x72c] sm:$0xff]
    %v5584 = vld [vmem:[%s9 + $0x734] sm:$0xf]
    %v5585 = vld [vmem:[%s9 + $0x738] sm:$0xff]
    %v5586 = vld [vmem:[%s9 + $0x740] sm:$0xff]
    %v5587 = vld [vmem:[%s9 + $0x748] sm:$0xff]
    %v5588 = vld [vmem:[%s9 + $0x750] sm:$0xf]
    %v5589 = vld [vmem:[%s9 + $0x754] sm:$0xff]
    %v5590 = vld [vmem:[%s9 + $0x75c] sm:$0xff]
    %v5591 = vld [vmem:[%s9 + $0x764] sm:$0xff]
    %v5592 = vld [vmem:[%s9 + $0x76c] sm:$0xf]
    %v5593 = vld [vmem:[%s9 + $0x770] sm:$0xff]
    %v5594 = vld [vmem:[%s9 + $0x778] sm:$0xff]
    %v5595 = vld [vmem:[%s9 + $0x780] sm:$0xff]
    %v5596 = vld [vmem:[%s9 + $0x788] sm:$0xf]
    %v5597 = vld [vmem:[%s9 + $0x78c] sm:$0xff]
    %v5598 = vld [vmem:[%s9 + $0x794] sm:$0xff]
    %v5599 = vld [vmem:[%s9 + $0x79c] sm:$0xff]
    %v5600 = vld [vmem:[%s9 + $0x7a4] sm:$0xf]
    %v5601 = vld [vmem:[%s9 + $0x7a8] sm:$0xff]
    %v5602 = vld [vmem:[%s9 + $0x7b0] sm:$0xff]
    %v5603 = vld [vmem:[%s9 + $0x7b8] sm:$0xff]
    %v5604 = vld [vmem:[%s9 + $0x7c0] sm:$0xf]
    %v5605 = vld [vmem:[%s9 + $0x7c4] sm:$0xff]
    %v5606 = vld [vmem:[%s9 + $0x7cc] sm:$0xff]
    %v5607 = vld [vmem:[%s9 + $0x7d4] sm:$0xff]
    %v5608 = vld [vmem:[%s9 + $0x7dc] sm:$0xf]
    %v5609 = vld [vmem:[%s10] sm:$0xff]
    %v5611 = vlaneseq
    %v5612 = vshrl.u32 %v5611, 7
    %v5613 = vsub.s32 0, %v5612
    %v5614 = vrot.slane %v5609, %v5613
    %v5615 = vlaneseq
    %v5616 = vshrl.u32 %v5615, 7
    %v5617 = vsub.s32 1, %v5616
    %v5618 = vrot.slane %v5609, %v5617
    %v5619 = vlaneseq
    %v5620 = vshrl.u32 %v5619, 7
    %v5621 = vsub.s32 2, %v5620
    %v5622 = vrot.slane %v5609, %v5621
    %v5623 = vlaneseq
    %v5624 = vshrl.u32 %v5623, 7
    %v5625 = vsub.s32 3, %v5624
    %v5626 = vrot.slane %v5609, %v5625
    %v5627 = vlaneseq
    %v5628 = vshrl.u32 %v5627, 7
    %v5629 = vsub.s32 4, %v5628
    %v5630 = vrot.slane %v5609, %v5629
    %v5631 = vlaneseq
    %v5632 = vshrl.u32 %v5631, 7
    %v5633 = vsub.s32 5, %v5632
    %v5634 = vrot.slane %v5609, %v5633
    %v5635 = vlaneseq
    %v5636 = vshrl.u32 %v5635, 7
    %v5637 = vsub.s32 6, %v5636
    %v5638 = vrot.slane %v5609, %v5637
    %v5934 = vunpack.c.l.b16 %v5321
    %v5935 = vunpack.c.h.b16 %v5321
    %v5936 = vunpack.c.l.b16 %v5322
    %v5937 = vunpack.c.h.b16 %v5322
    %v5938 = vunpack.c.l.b16 %v5323
    %v5939 = vunpack.c.h.b16 %v5323
    %v5940 = vunpack.c.l.b16 %v5324
    %v5941 = vunpack.c.l.b16 %v5325
    %v5942 = vunpack.c.h.b16 %v5325
    %v5943 = vunpack.c.l.b16 %v5326
    %v5944 = vunpack.c.h.b16 %v5326
    %v5945 = vunpack.c.l.b16 %v5327
    %v5946 = vunpack.c.h.b16 %v5327
    %v5947 = vunpack.c.l.b16 %v5328
    %v5948 = vunpack.c.l.b16 %v5329
    %v5949 = vunpack.c.h.b16 %v5329
    %v5950 = vunpack.c.l.b16 %v5330
    %v5951 = vunpack.c.h.b16 %v5330
    %v5952 = vunpack.c.l.b16 %v5331
    %v5953 = vunpack.c.h.b16 %v5331
    %v5954 = vunpack.c.l.b16 %v5332
    %v5955 = vunpack.c.l.b16 %v5333
    %v5956 = vunpack.c.h.b16 %v5333
    %v5957 = vunpack.c.l.b16 %v5334
    %v5958 = vunpack.c.h.b16 %v5334
    %v5959 = vunpack.c.l.b16 %v5335
    %v5960 = vunpack.c.h.b16 %v5335
    %v5961 = vunpack.c.l.b16 %v5336
    %v5962 = vunpack.c.l.b16 %v5337
    %v5963 = vunpack.c.h.b16 %v5337
    %v5964 = vunpack.c.l.b16 %v5338
    %v5965 = vunpack.c.h.b16 %v5338
    %v5966 = vunpack.c.l.b16 %v5339
    %v5967 = vunpack.c.h.b16 %v5339
    %v5968 = vunpack.c.l.b16 %v5340
    %v5969 = vunpack.c.l.b16 %v5341
    %v5970 = vunpack.c.h.b16 %v5341
    %v5971 = vunpack.c.l.b16 %v5342
    %v5972 = vunpack.c.h.b16 %v5342
    %v5973 = vunpack.c.l.b16 %v5343
    %v5974 = vunpack.c.h.b16 %v5343
    %v5975 = vunpack.c.l.b16 %v5344
    %v5976 = vunpack.c.l.b16 %v5345
    %v5977 = vunpack.c.h.b16 %v5345
    %v5978 = vunpack.c.l.b16 %v5346
    %v5979 = vunpack.c.h.b16 %v5346
    %v5980 = vunpack.c.l.b16 %v5347
    %v5981 = vunpack.c.h.b16 %v5347
    %v5982 = vunpack.c.l.b16 %v5348
    %v5983 = vunpack.c.l.b16 %v5349
    %v5984 = vunpack.c.h.b16 %v5349
    %v5985 = vunpack.c.l.b16 %v5350
    %v5986 = vunpack.c.h.b16 %v5350
    %v5987 = vunpack.c.l.b16 %v5351
    %v5988 = vunpack.c.h.b16 %v5351
    %v5989 = vunpack.c.l.b16 %v5352
    %v5990 = vunpack.c.l.b16 %v5353
    %v5991 = vunpack.c.h.b16 %v5353
    %v5992 = vunpack.c.l.b16 %v5354
    %v5993 = vunpack.c.h.b16 %v5354
    %v5994 = vunpack.c.l.b16 %v5355
    %v5995 = vunpack.c.h.b16 %v5355
    %v5996 = vunpack.c.l.b16 %v5356
    %v5997 = vunpack.c.l.b16 %v5357
    %v5998 = vunpack.c.h.b16 %v5357
    %v5999 = vunpack.c.l.b16 %v5358
    %v6000 = vunpack.c.h.b16 %v5358
    %v6001 = vunpack.c.l.b16 %v5359
    %v6002 = vunpack.c.h.b16 %v5359
    %v6003 = vunpack.c.l.b16 %v5360
    %v6004 = vunpack.c.l.b16 %v5361
    %v6005 = vunpack.c.h.b16 %v5361
    %v6006 = vunpack.c.l.b16 %v5362
    %v6007 = vunpack.c.h.b16 %v5362
    %v6008 = vunpack.c.l.b16 %v5363
    %v6009 = vunpack.c.h.b16 %v5363
    %v6010 = vunpack.c.l.b16 %v5364
    %v6011 = vunpack.c.l.b16 %v5365
    %v6012 = vunpack.c.h.b16 %v5365
    %v6013 = vunpack.c.l.b16 %v5366
    %v6014 = vunpack.c.h.b16 %v5366
    %v6015 = vunpack.c.l.b16 %v5367
    %v6016 = vunpack.c.h.b16 %v5367
    %v6017 = vunpack.c.l.b16 %v5368
    %v6018 = vunpack.c.l.b16 %v5369
    %v6019 = vunpack.c.h.b16 %v5369
    %v6020 = vunpack.c.l.b16 %v5370
    %v6021 = vunpack.c.h.b16 %v5370
    %v6022 = vunpack.c.l.b16 %v5371
    %v6023 = vunpack.c.h.b16 %v5371
    %v6024 = vunpack.c.l.b16 %v5372
    %v6025 = vunpack.c.l.b16 %v5373
    %v6026 = vunpack.c.h.b16 %v5373
    %v6027 = vunpack.c.l.b16 %v5374
    %v6028 = vunpack.c.h.b16 %v5374
    %v6029 = vunpack.c.l.b16 %v5375
    %v6030 = vunpack.c.h.b16 %v5375
    %v6031 = vunpack.c.l.b16 %v5376
    %v6032 = vunpack.c.l.b16 %v5377
    %v6033 = vunpack.c.h.b16 %v5377
    %v6034 = vunpack.c.l.b16 %v5378
    %v6035 = vunpack.c.h.b16 %v5378
    %v6036 = vunpack.c.l.b16 %v5379
    %v6037 = vunpack.c.h.b16 %v5379
    %v6038 = vunpack.c.l.b16 %v5380
    %v6039 = vunpack.c.l.b16 %v5381
    %v6040 = vunpack.c.h.b16 %v5381
    %v6041 = vunpack.c.l.b16 %v5382
    %v6042 = vunpack.c.h.b16 %v5382
    %v6043 = vunpack.c.l.b16 %v5383
    %v6044 = vunpack.c.h.b16 %v5383
    %v6045 = vunpack.c.l.b16 %v5384
    %v6046 = vunpack.c.l.b16 %v5385
    %v6047 = vunpack.c.h.b16 %v5385
    %v6048 = vunpack.c.l.b16 %v5386
    %v6049 = vunpack.c.h.b16 %v5386
    %v6050 = vunpack.c.l.b16 %v5387
    %v6051 = vunpack.c.h.b16 %v5387
    %v6052 = vunpack.c.l.b16 %v5388
    %v6053 = vunpack.c.l.b16 %v5389
    %v6054 = vunpack.c.h.b16 %v5389
    %v6055 = vunpack.c.l.b16 %v5390
    %v6056 = vunpack.c.h.b16 %v5390
    %v6057 = vunpack.c.l.b16 %v5391
    %v6058 = vunpack.c.h.b16 %v5391
    %v6059 = vunpack.c.l.b16 %v5392
    %v6060 = vunpack.c.l.b16 %v5393
    %v6061 = vunpack.c.h.b16 %v5393
    %v6062 = vunpack.c.l.b16 %v5394
    %v6063 = vunpack.c.h.b16 %v5394
    %v6064 = vunpack.c.l.b16 %v5395
    %v6065 = vunpack.c.h.b16 %v5395
    %v6066 = vunpack.c.l.b16 %v5396
    %v6067 = vunpack.c.l.b16 %v5397
    %v6068 = vunpack.c.h.b16 %v5397
    %v6069 = vunpack.c.l.b16 %v5398
    %v6070 = vunpack.c.h.b16 %v5398
    %v6071 = vunpack.c.l.b16 %v5399
    %v6072 = vunpack.c.h.b16 %v5399
    %v6073 = vunpack.c.l.b16 %v5400
    %v6074 = vunpack.c.l.b16 %v5401
    %v6075 = vunpack.c.h.b16 %v5401
    %v6076 = vunpack.c.l.b16 %v5402
    %v6077 = vunpack.c.h.b16 %v5402
    %v6078 = vunpack.c.l.b16 %v5403
    %v6079 = vunpack.c.h.b16 %v5403
    %v6080 = vunpack.c.l.b16 %v5404
    %v6081 = vunpack.c.l.b16 %v5405
    %v6082 = vunpack.c.h.b16 %v5405
    %v6083 = vunpack.c.l.b16 %v5406
    %v6084 = vunpack.c.h.b16 %v5406
    %v6085 = vunpack.c.l.b16 %v5407
    %v6086 = vunpack.c.h.b16 %v5407
    %v6087 = vunpack.c.l.b16 %v5408
    %v6088 = vunpack.c.l.b16 %v5409
    %v6089 = vunpack.c.h.b16 %v5409
    %v6090 = vunpack.c.l.b16 %v5410
    %v6091 = vunpack.c.h.b16 %v5410
    %v6092 = vunpack.c.l.b16 %v5411
    %v6093 = vunpack.c.h.b16 %v5411
    %v6094 = vunpack.c.l.b16 %v5412
    %v6095 = vunpack.c.l.b16 %v5413
    %v6096 = vunpack.c.h.b16 %v5413
    %v6097 = vunpack.c.l.b16 %v5414
    %v6098 = vunpack.c.h.b16 %v5414
    %v6099 = vunpack.c.l.b16 %v5415
    %v6100 = vunpack.c.h.b16 %v5415
    %v6101 = vunpack.c.l.b16 %v5416
    %v6102 = vunpack.c.l.b16 %v5417
    %v6103 = vunpack.c.h.b16 %v5417
    %v6104 = vunpack.c.l.b16 %v5418
    %v6105 = vunpack.c.h.b16 %v5418
    %v6106 = vunpack.c.l.b16 %v5419
    %v6107 = vunpack.c.h.b16 %v5419
    %v6108 = vunpack.c.l.b16 %v5420
    %v6109 = vunpack.c.l.b16 %v5421
    %v6110 = vunpack.c.h.b16 %v5421
    %v6111 = vunpack.c.l.b16 %v5422
    %v6112 = vunpack.c.h.b16 %v5422
    %v6113 = vunpack.c.l.b16 %v5423
    %v6114 = vunpack.c.h.b16 %v5423
    %v6115 = vunpack.c.l.b16 %v5424
    %v6116 = vunpack.c.l.b16 %v5425
    %v6117 = vunpack.c.h.b16 %v5425
    %v6118 = vunpack.c.l.b16 %v5426
    %v6119 = vunpack.c.h.b16 %v5426
    %v6120 = vunpack.c.l.b16 %v5427
    %v6121 = vunpack.c.h.b16 %v5427
    %v6122 = vunpack.c.l.b16 %v5428
    %v6123 = vunpack.c.l.b16 %v5429
    %v6124 = vunpack.c.h.b16 %v5429
    %v6125 = vunpack.c.l.b16 %v5430
    %v6126 = vunpack.c.h.b16 %v5430
    %v6127 = vunpack.c.l.b16 %v5431
    %v6128 = vunpack.c.h.b16 %v5431
    %v6129 = vunpack.c.l.b16 %v5432
    %v6130 = vunpack.c.l.b16 %v5433
    %v6131 = vunpack.c.h.b16 %v5433
    %v6132 = vunpack.c.l.b16 %v5434
    %v6133 = vunpack.c.h.b16 %v5434
    %v6134 = vunpack.c.l.b16 %v5435
    %v6135 = vunpack.c.h.b16 %v5435
    %v6136 = vunpack.c.l.b16 %v5436
    %v6137 = vunpack.c.l.b16 %v5437
    %v6138 = vunpack.c.h.b16 %v5437
    %v6139 = vunpack.c.l.b16 %v5438
    %v6140 = vunpack.c.h.b16 %v5438
    %v6141 = vunpack.c.l.b16 %v5439
    %v6142 = vunpack.c.h.b16 %v5439
    %v6143 = vunpack.c.l.b16 %v5440
    %v6144 = vunpack.c.l.b16 %v5441
    %v6145 = vunpack.c.h.b16 %v5441
    %v6146 = vunpack.c.l.b16 %v5442
    %v6147 = vunpack.c.h.b16 %v5442
    %v6148 = vunpack.c.l.b16 %v5443
    %v6149 = vunpack.c.h.b16 %v5443
    %v6150 = vunpack.c.l.b16 %v5444
    %v6151 = vunpack.c.l.b16 %v5445
    %v6152 = vunpack.c.h.b16 %v5445
    %v6153 = vunpack.c.l.b16 %v5446
    %v6154 = vunpack.c.h.b16 %v5446
    %v6155 = vunpack.c.l.b16 %v5447
    %v6156 = vunpack.c.h.b16 %v5447
    %v6157 = vunpack.c.l.b16 %v5448
    %v6158 = vunpack.c.l.b16 %v5449
    %v6159 = vunpack.c.h.b16 %v5449
    %v6160 = vunpack.c.l.b16 %v5450
    %v6161 = vunpack.c.h.b16 %v5450
    %v6162 = vunpack.c.l.b16 %v5451
    %v6163 = vunpack.c.h.b16 %v5451
    %v6164 = vunpack.c.l.b16 %v5452
    %v6165 = vunpack.c.l.b16 %v5453
    %v6166 = vunpack.c.h.b16 %v5453
    %v6167 = vunpack.c.l.b16 %v5454
    %v6168 = vunpack.c.h.b16 %v5454
    %v6169 = vunpack.c.l.b16 %v5455
    %v6170 = vunpack.c.h.b16 %v5455
    %v6171 = vunpack.c.l.b16 %v5456
    %v6172 = vunpack.c.l.b16 %v5457
    %v6173 = vunpack.c.h.b16 %v5457
    %v6174 = vunpack.c.l.b16 %v5458
    %v6175 = vunpack.c.h.b16 %v5458
    %v6176 = vunpack.c.l.b16 %v5459
    %v6177 = vunpack.c.h.b16 %v5459
    %v6178 = vunpack.c.l.b16 %v5460
    %v6179 = vunpack.c.l.b16 %v5461
    %v6180 = vunpack.c.h.b16 %v5461
    %v6181 = vunpack.c.l.b16 %v5462
    %v6182 = vunpack.c.h.b16 %v5462
    %v6183 = vunpack.c.l.b16 %v5463
    %v6184 = vunpack.c.h.b16 %v5463
    %v6185 = vunpack.c.l.b16 %v5464
    %v6186 = vunpack.c.l.b16 %v5465
    %v6187 = vunpack.c.h.b16 %v5465
    %v6188 = vunpack.c.l.b16 %v5466
    %v6189 = vunpack.c.h.b16 %v5466
    %v6190 = vunpack.c.l.b16 %v5467
    %v6191 = vunpack.c.h.b16 %v5467
    %v6192 = vunpack.c.l.b16 %v5468
    %v6193 = vunpack.c.l.b16 %v5469
    %v6194 = vunpack.c.h.b16 %v5469
    %v6195 = vunpack.c.l.b16 %v5470
    %v6196 = vunpack.c.h.b16 %v5470
    %v6197 = vunpack.c.l.b16 %v5471
    %v6198 = vunpack.c.h.b16 %v5471
    %v6199 = vunpack.c.l.b16 %v5472
    %v6200 = vunpack.c.l.b16 %v5473
    %v6201 = vunpack.c.h.b16 %v5473
    %v6202 = vunpack.c.l.b16 %v5474
    %v6203 = vunpack.c.h.b16 %v5474
    %v6204 = vunpack.c.l.b16 %v5475
    %v6205 = vunpack.c.h.b16 %v5475
    %v6206 = vunpack.c.l.b16 %v5476
    %v6207 = vunpack.c.l.b16 %v5477
    %v6208 = vunpack.c.h.b16 %v5477
    %v6209 = vunpack.c.l.b16 %v5478
    %v6210 = vunpack.c.h.b16 %v5478
    %v6211 = vunpack.c.l.b16 %v5479
    %v6212 = vunpack.c.h.b16 %v5479
    %v6213 = vunpack.c.l.b16 %v5480
    %v6214 = vunpack.c.l.b16 %v5481
    %v6215 = vunpack.c.h.b16 %v5481
    %v6216 = vunpack.c.l.b16 %v5482
    %v6217 = vunpack.c.h.b16 %v5482
    %v6218 = vunpack.c.l.b16 %v5483
    %v6219 = vunpack.c.h.b16 %v5483
    %v6220 = vunpack.c.l.b16 %v5484
    %v6221 = vunpack.c.l.b16 %v5485
    %v6222 = vunpack.c.h.b16 %v5485
    %v6223 = vunpack.c.l.b16 %v5486
    %v6224 = vunpack.c.h.b16 %v5486
    %v6225 = vunpack.c.l.b16 %v5487
    %v6226 = vunpack.c.h.b16 %v5487
    %v6227 = vunpack.c.l.b16 %v5488
    %v6228 = vunpack.c.l.b16 %v5489
    %v6229 = vunpack.c.h.b16 %v5489
    %v6230 = vunpack.c.l.b16 %v5490
    %v6231 = vunpack.c.h.b16 %v5490
    %v6232 = vunpack.c.l.b16 %v5491
    %v6233 = vunpack.c.h.b16 %v5491
    %v6234 = vunpack.c.l.b16 %v5492
    %v6235 = vunpack.c.l.b16 %v5493
    %v6236 = vunpack.c.h.b16 %v5493
    %v6237 = vunpack.c.l.b16 %v5494
    %v6238 = vunpack.c.h.b16 %v5494
    %v6239 = vunpack.c.l.b16 %v5495
    %v6240 = vunpack.c.h.b16 %v5495
    %v6241 = vunpack.c.l.b16 %v5496
    %v6242 = vunpack.c.l.b16 %v5497
    %v6243 = vunpack.c.h.b16 %v5497
    %v6244 = vunpack.c.l.b16 %v5498
    %v6245 = vunpack.c.h.b16 %v5498
    %v6246 = vunpack.c.l.b16 %v5499
    %v6247 = vunpack.c.h.b16 %v5499
    %v6248 = vunpack.c.l.b16 %v5500
    %v6249 = vunpack.c.l.b16 %v5501
    %v6250 = vunpack.c.h.b16 %v5501
    %v6251 = vunpack.c.l.b16 %v5502
    %v6252 = vunpack.c.h.b16 %v5502
    %v6253 = vunpack.c.l.b16 %v5503
    %v6254 = vunpack.c.h.b16 %v5503
    %v6255 = vunpack.c.l.b16 %v5504
    %v6256 = vunpack.c.l.b16 %v5505
    %v6257 = vunpack.c.h.b16 %v5505
    %v6258 = vunpack.c.l.b16 %v5506
    %v6259 = vunpack.c.h.b16 %v5506
    %v6260 = vunpack.c.l.b16 %v5507
    %v6261 = vunpack.c.h.b16 %v5507
    %v6262 = vunpack.c.l.b16 %v5508
    %v6263 = vunpack.c.l.b16 %v5509
    %v6264 = vunpack.c.h.b16 %v5509
    %v6265 = vunpack.c.l.b16 %v5510
    %v6266 = vunpack.c.h.b16 %v5510
    %v6267 = vunpack.c.l.b16 %v5511
    %v6268 = vunpack.c.h.b16 %v5511
    %v6269 = vunpack.c.l.b16 %v5512
    %v6270 = vunpack.c.l.b16 %v5513
    %v6271 = vunpack.c.h.b16 %v5513
    %v6272 = vunpack.c.l.b16 %v5514
    %v6273 = vunpack.c.h.b16 %v5514
    %v6274 = vunpack.c.l.b16 %v5515
    %v6275 = vunpack.c.h.b16 %v5515
    %v6276 = vunpack.c.l.b16 %v5516
    %v6277 = vunpack.c.l.b16 %v5517
    %v6278 = vunpack.c.h.b16 %v5517
    %v6279 = vunpack.c.l.b16 %v5518
    %v6280 = vunpack.c.h.b16 %v5518
    %v6281 = vunpack.c.l.b16 %v5519
    %v6282 = vunpack.c.h.b16 %v5519
    %v6283 = vunpack.c.l.b16 %v5520
    %v6284 = vunpack.c.l.b16 %v5521
    %v6285 = vunpack.c.h.b16 %v5521
    %v6286 = vunpack.c.l.b16 %v5522
    %v6287 = vunpack.c.h.b16 %v5522
    %v6288 = vunpack.c.l.b16 %v5523
    %v6289 = vunpack.c.h.b16 %v5523
    %v6290 = vunpack.c.l.b16 %v5524
    %v6291 = vunpack.c.l.b16 %v5525
    %v6292 = vunpack.c.h.b16 %v5525
    %v6293 = vunpack.c.l.b16 %v5526
    %v6294 = vunpack.c.h.b16 %v5526
    %v6295 = vunpack.c.l.b16 %v5527
    %v6296 = vunpack.c.h.b16 %v5527
    %v6297 = vunpack.c.l.b16 %v5528
    %v6298 = vunpack.c.l.b16 %v5529
    %v6299 = vunpack.c.h.b16 %v5529
    %v6300 = vunpack.c.l.b16 %v5530
    %v6301 = vunpack.c.h.b16 %v5530
    %v6302 = vunpack.c.l.b16 %v5531
    %v6303 = vunpack.c.h.b16 %v5531
    %v6304 = vunpack.c.l.b16 %v5532
    %v6305 = vunpack.c.l.b16 %v5533
    %v6306 = vunpack.c.h.b16 %v5533
    %v6307 = vunpack.c.l.b16 %v5534
    %v6308 = vunpack.c.h.b16 %v5534
    %v6309 = vunpack.c.l.b16 %v5535
    %v6310 = vunpack.c.h.b16 %v5535
    %v6311 = vunpack.c.l.b16 %v5536
    %v6312 = vunpack.c.l.b16 %v5537
    %v6313 = vunpack.c.h.b16 %v5537
    %v6314 = vunpack.c.l.b16 %v5538
    %v6315 = vunpack.c.h.b16 %v5538
    %v6316 = vunpack.c.l.b16 %v5539
    %v6317 = vunpack.c.h.b16 %v5539
    %v6318 = vunpack.c.l.b16 %v5540
    %v6319 = vunpack.c.l.b16 %v5541
    %v6320 = vunpack.c.h.b16 %v5541
    %v6321 = vunpack.c.l.b16 %v5542
    %v6322 = vunpack.c.h.b16 %v5542
    %v6323 = vunpack.c.l.b16 %v5543
    %v6324 = vunpack.c.h.b16 %v5543
    %v6325 = vunpack.c.l.b16 %v5544
    %v6326 = vunpack.c.l.b16 %v5545
    %v6327 = vunpack.c.h.b16 %v5545
    %v6328 = vunpack.c.l.b16 %v5546
    %v6329 = vunpack.c.h.b16 %v5546
    %v6330 = vunpack.c.l.b16 %v5547
    %v6331 = vunpack.c.h.b16 %v5547
    %v6332 = vunpack.c.l.b16 %v5548
    %v6333 = vunpack.c.l.b16 %v5549
    %v6334 = vunpack.c.h.b16 %v5549
    %v6335 = vunpack.c.l.b16 %v5550
    %v6336 = vunpack.c.h.b16 %v5550
    %v6337 = vunpack.c.l.b16 %v5551
    %v6338 = vunpack.c.h.b16 %v5551
    %v6339 = vunpack.c.l.b16 %v5552
    %v6340 = vunpack.c.l.b16 %v5553
    %v6341 = vunpack.c.h.b16 %v5553
    %v6342 = vunpack.c.l.b16 %v5554
    %v6343 = vunpack.c.h.b16 %v5554
    %v6344 = vunpack.c.l.b16 %v5555
    %v6345 = vunpack.c.h.b16 %v5555
    %v6346 = vunpack.c.l.b16 %v5556
    %v6347 = vunpack.c.l.b16 %v5557
    %v6348 = vunpack.c.h.b16 %v5557
    %v6349 = vunpack.c.l.b16 %v5558
    %v6350 = vunpack.c.h.b16 %v5558
    %v6351 = vunpack.c.l.b16 %v5559
    %v6352 = vunpack.c.h.b16 %v5559
    %v6353 = vunpack.c.l.b16 %v5560
    %v6354 = vunpack.c.l.b16 %v5561
    %v6355 = vunpack.c.h.b16 %v5561
    %v6356 = vunpack.c.l.b16 %v5562
    %v6357 = vunpack.c.h.b16 %v5562
    %v6358 = vunpack.c.l.b16 %v5563
    %v6359 = vunpack.c.h.b16 %v5563
    %v6360 = vunpack.c.l.b16 %v5564
    %v6361 = vunpack.c.l.b16 %v5565
    %v6362 = vunpack.c.h.b16 %v5565
    %v6363 = vunpack.c.l.b16 %v5566
    %v6364 = vunpack.c.h.b16 %v5566
    %v6365 = vunpack.c.l.b16 %v5567
    %v6366 = vunpack.c.h.b16 %v5567
    %v6367 = vunpack.c.l.b16 %v5568
    %v6368 = vunpack.c.l.b16 %v5569
    %v6369 = vunpack.c.h.b16 %v5569
    %v6370 = vunpack.c.l.b16 %v5570
    %v6371 = vunpack.c.h.b16 %v5570
    %v6372 = vunpack.c.l.b16 %v5571
    %v6373 = vunpack.c.h.b16 %v5571
    %v6374 = vunpack.c.l.b16 %v5572
    %v6375 = vunpack.c.l.b16 %v5573
    %v6376 = vunpack.c.h.b16 %v5573
    %v6377 = vunpack.c.l.b16 %v5574
    %v6378 = vunpack.c.h.b16 %v5574
    %v6379 = vunpack.c.l.b16 %v5575
    %v6380 = vunpack.c.h.b16 %v5575
    %v6381 = vunpack.c.l.b16 %v5576
    %v6382 = vunpack.c.l.b16 %v5577
    %v6383 = vunpack.c.h.b16 %v5577
    %v6384 = vunpack.c.l.b16 %v5578
    %v6385 = vunpack.c.h.b16 %v5578
    %v6386 = vunpack.c.l.b16 %v5579
    %v6387 = vunpack.c.h.b16 %v5579
    %v6388 = vunpack.c.l.b16 %v5580
    %v6389 = vunpack.c.l.b16 %v5581
    %v6390 = vunpack.c.h.b16 %v5581
    %v6391 = vunpack.c.l.b16 %v5582
    %v6392 = vunpack.c.h.b16 %v5582
    %v6393 = vunpack.c.l.b16 %v5583
    %v6394 = vunpack.c.h.b16 %v5583
    %v6395 = vunpack.c.l.b16 %v5584
    %v6396 = vunpack.c.l.b16 %v5585
    %v6397 = vunpack.c.h.b16 %v5585
    %v6398 = vunpack.c.l.b16 %v5586
    %v6399 = vunpack.c.h.b16 %v5586
    %v6400 = vunpack.c.l.b16 %v5587
    %v6401 = vunpack.c.h.b16 %v5587
    %v6402 = vunpack.c.l.b16 %v5588
    %v6403 = vunpack.c.l.b16 %v5589
    %v6404 = vunpack.c.h.b16 %v5589
    %v6405 = vunpack.c.l.b16 %v5590
    %v6406 = vunpack.c.h.b16 %v5590
    %v6407 = vunpack.c.l.b16 %v5591
    %v6408 = vunpack.c.h.b16 %v5591
    %v6409 = vunpack.c.l.b16 %v5592
    %v6410 = vunpack.c.l.b16 %v5593
    %v6411 = vunpack.c.h.b16 %v5593
    %v6412 = vunpack.c.l.b16 %v5594
    %v6413 = vunpack.c.h.b16 %v5594
    %v6414 = vunpack.c.l.b16 %v5595
    %v6415 = vunpack.c.h.b16 %v5595
    %v6416 = vunpack.c.l.b16 %v5596
    %v6417 = vunpack.c.l.b16 %v5597
    %v6418 = vunpack.c.h.b16 %v5597
    %v6419 = vunpack.c.l.b16 %v5598
    %v6420 = vunpack.c.h.b16 %v5598
    %v6421 = vunpack.c.l.b16 %v5599
    %v6422 = vunpack.c.h.b16 %v5599
    %v6423 = vunpack.c.l.b16 %v5600
    %v6424 = vunpack.c.l.b16 %v5601
    %v6425 = vunpack.c.h.b16 %v5601
    %v6426 = vunpack.c.l.b16 %v5602
    %v6427 = vunpack.c.h.b16 %v5602
    %v6428 = vunpack.c.l.b16 %v5603
    %v6429 = vunpack.c.h.b16 %v5603
    %v6430 = vunpack.c.l.b16 %v5604
    %v6431 = vunpack.c.l.b16 %v5605
    %v6432 = vunpack.c.h.b16 %v5605
    %v6433 = vunpack.c.l.b16 %v5606
    %v6434 = vunpack.c.h.b16 %v5606
    %v6435 = vunpack.c.l.b16 %v5607
    %v6436 = vunpack.c.h.b16 %v5607
    %v6437 = vunpack.c.l.b16 %v5608
    %v6438 = vpack.c.b16 %v5941, %v5934
    %v6439 = vpack.c.b16 %v5942, %v5935
    %v6440 = vpack.c.b16 %v5943, %v5936
    %v6441 = vpack.c.b16 %v5944, %v5937
    %v6442 = vpack.c.b16 %v5945, %v5938
    %v6443 = vpack.c.b16 %v5946, %v5939
    %v6444 = vpack.c.b16 %v5947, %v5940
    %v6445 = vpack.c.b16 %v5955, %v5948
    %v6446 = vpack.c.b16 %v5956, %v5949
    %v6447 = vpack.c.b16 %v5957, %v5950
    %v6448 = vpack.c.b16 %v5958, %v5951
    %v6449 = vpack.c.b16 %v5959, %v5952
    %v6450 = vpack.c.b16 %v5960, %v5953
    %v6451 = vpack.c.b16 %v5961, %v5954
    %v6452 = vpack.c.b16 %v5969, %v5962
    %v6453 = vpack.c.b16 %v5970, %v5963
    %v6454 = vpack.c.b16 %v5971, %v5964
    %v6455 = vpack.c.b16 %v5972, %v5965
    %v6456 = vpack.c.b16 %v5973, %v5966
    %v6457 = vpack.c.b16 %v5974, %v5967
    %v6458 = vpack.c.b16 %v5975, %v5968
    %v6459 = vpack.c.b16 %v5983, %v5976
    %v6460 = vpack.c.b16 %v5984, %v5977
    %v6461 = vpack.c.b16 %v5985, %v5978
    %v6462 = vpack.c.b16 %v5986, %v5979
    %v6463 = vpack.c.b16 %v5987, %v5980
    %v6464 = vpack.c.b16 %v5988, %v5981
    %v6465 = vpack.c.b16 %v5989, %v5982
    %v6466 = vpack.c.b16 %v5997, %v5990
    %v6467 = vpack.c.b16 %v5998, %v5991
    %v6468 = vpack.c.b16 %v5999, %v5992
    %v6469 = vpack.c.b16 %v6000, %v5993
    %v6470 = vpack.c.b16 %v6001, %v5994
    %v6471 = vpack.c.b16 %v6002, %v5995
    %v6472 = vpack.c.b16 %v6003, %v5996
    %v6473 = vpack.c.b16 %v6011, %v6004
    %v6474 = vpack.c.b16 %v6012, %v6005
    %v6475 = vpack.c.b16 %v6013, %v6006
    %v6476 = vpack.c.b16 %v6014, %v6007
    %v6477 = vpack.c.b16 %v6015, %v6008
    %v6478 = vpack.c.b16 %v6016, %v6009
    %v6479 = vpack.c.b16 %v6017, %v6010
    %v6480 = vpack.c.b16 %v6025, %v6018
    %v6481 = vpack.c.b16 %v6026, %v6019
    %v6482 = vpack.c.b16 %v6027, %v6020
    %v6483 = vpack.c.b16 %v6028, %v6021
    %v6484 = vpack.c.b16 %v6029, %v6022
    %v6485 = vpack.c.b16 %v6030, %v6023
    %v6486 = vpack.c.b16 %v6031, %v6024
    %v6487 = vpack.c.b16 %v6039, %v6032
    %v6488 = vpack.c.b16 %v6040, %v6033
    %v6489 = vpack.c.b16 %v6041, %v6034
    %v6490 = vpack.c.b16 %v6042, %v6035
    %v6491 = vpack.c.b16 %v6043, %v6036
    %v6492 = vpack.c.b16 %v6044, %v6037
    %v6493 = vpack.c.b16 %v6045, %v6038
    %v6494 = vpack.c.b16 %v6053, %v6046
    %v6495 = vpack.c.b16 %v6054, %v6047
    %v6496 = vpack.c.b16 %v6055, %v6048
    %v6497 = vpack.c.b16 %v6056, %v6049
    %v6498 = vpack.c.b16 %v6057, %v6050
    %v6499 = vpack.c.b16 %v6058, %v6051
    %v6500 = vpack.c.b16 %v6059, %v6052
    %v6501 = vpack.c.b16 %v6067, %v6060
    %v6502 = vpack.c.b16 %v6068, %v6061
    %v6503 = vpack.c.b16 %v6069, %v6062
    %v6504 = vpack.c.b16 %v6070, %v6063
    %v6505 = vpack.c.b16 %v6071, %v6064
    %v6506 = vpack.c.b16 %v6072, %v6065
    %v6507 = vpack.c.b16 %v6073, %v6066
    %v6508 = vpack.c.b16 %v6081, %v6074
    %v6509 = vpack.c.b16 %v6082, %v6075
    %v6510 = vpack.c.b16 %v6083, %v6076
    %v6511 = vpack.c.b16 %v6084, %v6077
    %v6512 = vpack.c.b16 %v6085, %v6078
    %v6513 = vpack.c.b16 %v6086, %v6079
    %v6514 = vpack.c.b16 %v6087, %v6080
    %v6515 = vpack.c.b16 %v6095, %v6088
    %v6516 = vpack.c.b16 %v6096, %v6089
    %v6517 = vpack.c.b16 %v6097, %v6090
    %v6518 = vpack.c.b16 %v6098, %v6091
    %v6519 = vpack.c.b16 %v6099, %v6092
    %v6520 = vpack.c.b16 %v6100, %v6093
    %v6521 = vpack.c.b16 %v6101, %v6094
    %v6522 = vpack.c.b16 %v6109, %v6102
    %v6523 = vpack.c.b16 %v6110, %v6103
    %v6524 = vpack.c.b16 %v6111, %v6104
    %v6525 = vpack.c.b16 %v6112, %v6105
    %v6526 = vpack.c.b16 %v6113, %v6106
    %v6527 = vpack.c.b16 %v6114, %v6107
    %v6528 = vpack.c.b16 %v6115, %v6108
    %v6529 = vpack.c.b16 %v6123, %v6116
    %v6530 = vpack.c.b16 %v6124, %v6117
    %v6531 = vpack.c.b16 %v6125, %v6118
    %v6532 = vpack.c.b16 %v6126, %v6119
    %v6533 = vpack.c.b16 %v6127, %v6120
    %v6534 = vpack.c.b16 %v6128, %v6121
    %v6535 = vpack.c.b16 %v6129, %v6122
    %v6536 = vpack.c.b16 %v6137, %v6130
    %v6537 = vpack.c.b16 %v6138, %v6131
    %v6538 = vpack.c.b16 %v6139, %v6132
    %v6539 = vpack.c.b16 %v6140, %v6133
    %v6540 = vpack.c.b16 %v6141, %v6134
    %v6541 = vpack.c.b16 %v6142, %v6135
    %v6542 = vpack.c.b16 %v6143, %v6136
    %v6543 = vpack.c.b16 %v6151, %v6144
    %v6544 = vpack.c.b16 %v6152, %v6145
    %v6545 = vpack.c.b16 %v6153, %v6146
    %v6546 = vpack.c.b16 %v6154, %v6147
    %v6547 = vpack.c.b16 %v6155, %v6148
    %v6548 = vpack.c.b16 %v6156, %v6149
    %v6549 = vpack.c.b16 %v6157, %v6150
    %v6550 = vpack.c.b16 %v6165, %v6158
    %v6551 = vpack.c.b16 %v6166, %v6159
    %v6552 = vpack.c.b16 %v6167, %v6160
    %v6553 = vpack.c.b16 %v6168, %v6161
    %v6554 = vpack.c.b16 %v6169, %v6162
    %v6555 = vpack.c.b16 %v6170, %v6163
    %v6556 = vpack.c.b16 %v6171, %v6164
    %v6557 = vpack.c.b16 %v6179, %v6172
    %v6558 = vpack.c.b16 %v6180, %v6173
    %v6559 = vpack.c.b16 %v6181, %v6174
    %v6560 = vpack.c.b16 %v6182, %v6175
    %v6561 = vpack.c.b16 %v6183, %v6176
    %v6562 = vpack.c.b16 %v6184, %v6177
    %v6563 = vpack.c.b16 %v6185, %v6178
    %v6564 = vpack.c.b16 %v6193, %v6186
    %v6565 = vpack.c.b16 %v6194, %v6187
    %v6566 = vpack.c.b16 %v6195, %v6188
    %v6567 = vpack.c.b16 %v6196, %v6189
    %v6568 = vpack.c.b16 %v6197, %v6190
    %v6569 = vpack.c.b16 %v6198, %v6191
    %v6570 = vpack.c.b16 %v6199, %v6192
    %v6571 = vpack.c.b16 %v6207, %v6200
    %v6572 = vpack.c.b16 %v6208, %v6201
    %v6573 = vpack.c.b16 %v6209, %v6202
    %v6574 = vpack.c.b16 %v6210, %v6203
    %v6575 = vpack.c.b16 %v6211, %v6204
    %v6576 = vpack.c.b16 %v6212, %v6205
    %v6577 = vpack.c.b16 %v6213, %v6206
    %v6578 = vpack.c.b16 %v6221, %v6214
    %v6579 = vpack.c.b16 %v6222, %v6215
    %v6580 = vpack.c.b16 %v6223, %v6216
    %v6581 = vpack.c.b16 %v6224, %v6217
    %v6582 = vpack.c.b16 %v6225, %v6218
    %v6583 = vpack.c.b16 %v6226, %v6219
    %v6584 = vpack.c.b16 %v6227, %v6220
    %v6585 = vpack.c.b16 %v6235, %v6228
    %v6586 = vpack.c.b16 %v6236, %v6229
    %v6587 = vpack.c.b16 %v6237, %v6230
    %v6588 = vpack.c.b16 %v6238, %v6231
    %v6589 = vpack.c.b16 %v6239, %v6232
    %v6590 = vpack.c.b16 %v6240, %v6233
    %v6591 = vpack.c.b16 %v6241, %v6234
    %v6592 = vpack.c.b16 %v6249, %v6242
    %v6593 = vpack.c.b16 %v6250, %v6243
    %v6594 = vpack.c.b16 %v6251, %v6244
    %v6595 = vpack.c.b16 %v6252, %v6245
    %v6596 = vpack.c.b16 %v6253, %v6246
    %v6597 = vpack.c.b16 %v6254, %v6247
    %v6598 = vpack.c.b16 %v6255, %v6248
    %v6599 = vpack.c.b16 %v6263, %v6256
    %v6600 = vpack.c.b16 %v6264, %v6257
    %v6601 = vpack.c.b16 %v6265, %v6258
    %v6602 = vpack.c.b16 %v6266, %v6259
    %v6603 = vpack.c.b16 %v6267, %v6260
    %v6604 = vpack.c.b16 %v6268, %v6261
    %v6605 = vpack.c.b16 %v6269, %v6262
    %v6606 = vpack.c.b16 %v6277, %v6270
    %v6607 = vpack.c.b16 %v6278, %v6271
    %v6608 = vpack.c.b16 %v6279, %v6272
    %v6609 = vpack.c.b16 %v6280, %v6273
    %v6610 = vpack.c.b16 %v6281, %v6274
    %v6611 = vpack.c.b16 %v6282, %v6275
    %v6612 = vpack.c.b16 %v6283, %v6276
    %v6613 = vpack.c.b16 %v6291, %v6284
    %v6614 = vpack.c.b16 %v6292, %v6285
    %v6615 = vpack.c.b16 %v6293, %v6286
    %v6616 = vpack.c.b16 %v6294, %v6287
    %v6617 = vpack.c.b16 %v6295, %v6288
    %v6618 = vpack.c.b16 %v6296, %v6289
    %v6619 = vpack.c.b16 %v6297, %v6290
    %v6620 = vpack.c.b16 %v6305, %v6298
    %v6621 = vpack.c.b16 %v6306, %v6299
    %v6622 = vpack.c.b16 %v6307, %v6300
    %v6623 = vpack.c.b16 %v6308, %v6301
    %v6624 = vpack.c.b16 %v6309, %v6302
    %v6625 = vpack.c.b16 %v6310, %v6303
    %v6626 = vpack.c.b16 %v6311, %v6304
    %v6627 = vpack.c.b16 %v6319, %v6312
    %v6628 = vpack.c.b16 %v6320, %v6313
    %v6629 = vpack.c.b16 %v6321, %v6314
    %v6630 = vpack.c.b16 %v6322, %v6315
    %v6631 = vpack.c.b16 %v6323, %v6316
    %v6632 = vpack.c.b16 %v6324, %v6317
    %v6633 = vpack.c.b16 %v6325, %v6318
    %v6634 = vpack.c.b16 %v6333, %v6326
    %v6635 = vpack.c.b16 %v6334, %v6327
    %v6636 = vpack.c.b16 %v6335, %v6328
    %v6637 = vpack.c.b16 %v6336, %v6329
    %v6638 = vpack.c.b16 %v6337, %v6330
    %v6639 = vpack.c.b16 %v6338, %v6331
    %v6640 = vpack.c.b16 %v6339, %v6332
    %v6641 = vpack.c.b16 %v6347, %v6340
    %v6642 = vpack.c.b16 %v6348, %v6341
    %v6643 = vpack.c.b16 %v6349, %v6342
    %v6644 = vpack.c.b16 %v6350, %v6343
    %v6645 = vpack.c.b16 %v6351, %v6344
    %v6646 = vpack.c.b16 %v6352, %v6345
    %v6647 = vpack.c.b16 %v6353, %v6346
    %v6648 = vpack.c.b16 %v6361, %v6354
    %v6649 = vpack.c.b16 %v6362, %v6355
    %v6650 = vpack.c.b16 %v6363, %v6356
    %v6651 = vpack.c.b16 %v6364, %v6357
    %v6652 = vpack.c.b16 %v6365, %v6358
    %v6653 = vpack.c.b16 %v6366, %v6359
    %v6654 = vpack.c.b16 %v6367, %v6360
    %v6655 = vpack.c.b16 %v6375, %v6368
    %v6656 = vpack.c.b16 %v6376, %v6369
    %v6657 = vpack.c.b16 %v6377, %v6370
    %v6658 = vpack.c.b16 %v6378, %v6371
    %v6659 = vpack.c.b16 %v6379, %v6372
    %v6660 = vpack.c.b16 %v6380, %v6373
    %v6661 = vpack.c.b16 %v6381, %v6374
    %v6662 = vpack.c.b16 %v6389, %v6382
    %v6663 = vpack.c.b16 %v6390, %v6383
    %v6664 = vpack.c.b16 %v6391, %v6384
    %v6665 = vpack.c.b16 %v6392, %v6385
    %v6666 = vpack.c.b16 %v6393, %v6386
    %v6667 = vpack.c.b16 %v6394, %v6387
    %v6668 = vpack.c.b16 %v6395, %v6388
    %v6669 = vpack.c.b16 %v6403, %v6396
    %v6670 = vpack.c.b16 %v6404, %v6397
    %v6671 = vpack.c.b16 %v6405, %v6398
    %v6672 = vpack.c.b16 %v6406, %v6399
    %v6673 = vpack.c.b16 %v6407, %v6400
    %v6674 = vpack.c.b16 %v6408, %v6401
    %v6675 = vpack.c.b16 %v6409, %v6402
    %v6676 = vpack.c.b16 %v6417, %v6410
    %v6677 = vpack.c.b16 %v6418, %v6411
    %v6678 = vpack.c.b16 %v6419, %v6412
    %v6679 = vpack.c.b16 %v6420, %v6413
    %v6680 = vpack.c.b16 %v6421, %v6414
    %v6681 = vpack.c.b16 %v6422, %v6415
    %v6682 = vpack.c.b16 %v6423, %v6416
    %v6683 = vpack.c.b16 %v6431, %v6424
    %v6684 = vpack.c.b16 %v6432, %v6425
    %v6685 = vpack.c.b16 %v6433, %v6426
    %v6686 = vpack.c.b16 %v6434, %v6427
    %v6687 = vpack.c.b16 %v6435, %v6428
    %v6688 = vpack.c.b16 %v6436, %v6429
    %v6689 = vpack.c.b16 %v6437, %v6430
    %vm6942 = vcmask 523264
    %v6944 = vsel %vm6942, %v5320, 0
    %6946 = vmatprep.subr.bf16.mxu0 %v6439
    %6947 = vmatpush1.bf16.msra.mxu0 %v6438
    %6948 = vmatprep.subr.bf16.mxu0 %v6446
    %6949 = vmatpush1.bf16.msra.mxu0 %v6445
    %6950 = vmatprep.subr.bf16.mxu0 %v6453
    %6951 = vmatpush1.bf16.msra.mxu0 %v6452
    %6952 = vmatprep.subr.bf16.mxu0 %v6460
    %6953 = vmatpush1.bf16.msra.mxu0 %v6459
    %6954 = vmatprep.subr.bf16.mxu0 %v6467
    %6955 = vmatpush1.bf16.msra.mxu0 %v6466
    %6956 = vmatprep.subr.bf16.mxu0 %v6474
    %6957 = vmatpush1.bf16.msra.mxu0 %v6473
    %6958 = vmatprep.subr.bf16.mxu0 %v6481
    %6959 = vmatpush1.bf16.msra.mxu0 %v6480
    %6960 = vmatprep.subr.bf16.mxu0 %v6488
    %6961 = vmatpush1.bf16.msra.mxu0 %v6487
    %6962 = vmatprep.subr.bf16.mxu0 %v6495
    %6963 = vmatpush1.bf16.msra.mxu0 %v6494
    %6964 = vmatprep.subr.bf16.mxu0 %v6502
    %6965 = vmatpush1.bf16.msra.mxu0 %v6501
    %6966 = vmatprep.subr.bf16.mxu0 %v6509
    %6967 = vmatpush1.bf16.msra.mxu0 %v6508
    %6968 = vmatprep.subr.bf16.mxu0 %v6516
    %6969 = vmatpush1.bf16.msra.mxu0 %v6515
    %6970 = vmatprep.subr.bf16.mxu0 %v6523
    %6971 = vmatpush1.bf16.msra.mxu0 %v6522
    %6972 = vmatprep.subr.bf16.mxu0 %v6530
    %6973 = vmatpush1.bf16.msra.mxu0 %v6529
    %6974 = vmatprep.subr.bf16.mxu0 %v6537
    %6975 = vmatpush1.bf16.msra.mxu0 %v6536
    %6976 = vmatprep.subr.bf16.mxu0 %v6544
    %6977 = vmatpush1.bf16.msra.mxu0 %v6543
    %6978 = vmatprep.mubr.bf16.mxu0 %v5317
    %6979 = vmatmul.mubr.bf16.gmra.mrb[0].mxu0 %v5316
    %v6980 = vpop.f32.mrb[0].mxu0
    %v6981 = vadd.f32 %v5614, %v6980
    %v6982 = vpop.f32.mrb[0].mxu0
    %v6983 = vadd.f32 %v5618, %v6982
    %v6984 = vpop.f32.mrb[0].mxu0
    %v6985 = vpop.f32.mrb[0].mxu0
    %6986 = vdwg.mxu0
    %6987 = vmatprep.subr.bf16.mxu0 %v6551
    %6988 = vmatpush1.bf16.msra.mxu0 %v6550
    %6989 = vmatprep.subr.bf16.mxu0 %v6558
    %6990 = vmatpush1.bf16.msra.mxu0 %v6557
    %6991 = vmatprep.subr.bf16.mxu0 %v6565
    %6992 = vmatpush1.bf16.msra.mxu0 %v6564
    %6993 = vmatprep.subr.bf16.mxu0 %v6572
    %6994 = vmatpush1.bf16.msra.mxu0 %v6571
    %6995 = vmatprep.subr.bf16.mxu0 %v6579
    %6996 = vmatpush1.bf16.msra.mxu0 %v6578
    %6997 = vmatprep.subr.bf16.mxu0 %v6586
    %6998 = vmatpush1.bf16.msra.mxu0 %v6585
    %6999 = vmatprep.subr.bf16.mxu0 %v6593
    %7000 = vmatpush1.bf16.msra.mxu0 %v6592
    %7001 = vmatprep.subr.bf16.mxu0 %v6600
    %7002 = vmatpush1.bf16.msra.mxu0 %v6599
    %7003 = vmatprep.subr.bf16.mxu0 %v6607
    %7004 = vmatpush1.bf16.msra.mxu0 %v6606
    %7005 = vmatprep.subr.bf16.mxu0 %v6614
    %7006 = vmatpush1.bf16.msra.mxu0 %v6613
    %7007 = vmatprep.subr.bf16.mxu0 %v6621
    %7008 = vmatpush1.bf16.msra.mxu0 %v6620
    %7009 = vmatprep.subr.bf16.mxu0 %v6628
    %7010 = vmatpush1.bf16.msra.mxu0 %v6627
    %7011 = vmatprep.subr.bf16.mxu0 %v6635
    %7012 = vmatpush1.bf16.msra.mxu0 %v6634
    %7013 = vmatprep.subr.bf16.mxu0 %v6642
    %7014 = vmatpush1.bf16.msra.mxu0 %v6641
    %7015 = vmatprep.subr.bf16.mxu0 %v6649
    %7016 = vmatpush1.bf16.msra.mxu0 %v6648
    %7017 = vmatprep.subr.bf16.mxu0 %v6656
    %7018 = vmatpush1.bf16.msra.mxu0 %v6655
    %7019 = vmatprep.mubr.bf16.mxu0 %v5319
    %7020 = vmatmul.mubr.bf16.gmra.mrb[0].mxu0 %v5318
    %v7021 = vpop.f32.mrb[0].mxu0
    %v7022 = vadd.f32 %v6981, %v7021
    %v7023 = vpop.f32.mrb[0].mxu0
    %v7024 = vadd.f32 %v6983, %v7023
    %v7025 = vpop.f32.mrb[0].mxu0
    %v7026 = vpop.f32.mrb[0].mxu0
    %7027 = vdwg.mxu0
    %7028 = vmatprep.subr.bf16.mxu0 %v6663
    %7029 = vmatpush1.bf16.msra.mxu0 %v6662
    %7030 = vmatprep.subr.bf16.mxu0 %v6670
    %7031 = vmatpush1.bf16.msra.mxu0 %v6669
    %7032 = vmatprep.subr.bf16.mxu0 %v6677
    %7033 = vmatpush1.bf16.msra.mxu0 %v6676
    %7034 = vmatprep.subr.bf16.mxu0 %v6684
    %7035 = vmatpush1.bf16.msra.mxu0 %v6683
    %7036 = vmatprep.subr.bf16.mxu0 0
    %7037 = vmatpush1.bf16.msra.mxu0 0
    %7038 = vmatprep.subr.bf16.mxu0 0
    %7039 = vmatpush1.bf16.msra.mxu0 0
    %7040 = vmatprep.subr.bf16.mxu0 0
    %7041 = vmatpush1.bf16.msra.mxu0 0
    %7042 = vmatprep.subr.bf16.mxu0 0
    %7043 = vmatpush1.bf16.msra.mxu0 0
    %7044 = vmatprep.subr.bf16.mxu0 0
    %7045 = vmatpush1.bf16.msra.mxu0 0
    %7046 = vmatprep.subr.bf16.mxu0 0
    %7047 = vmatpush1.bf16.msra.mxu0 0
    %7048 = vmatprep.subr.bf16.mxu0 0
    %7049 = vmatpush1.bf16.msra.mxu0 0
    %7050 = vmatprep.subr.bf16.mxu0 0
    %7051 = vmatpush1.bf16.msra.mxu0 0
    %7052 = vmatprep.subr.bf16.mxu0 0
    %7053 = vmatpush1.bf16.msra.mxu0 0
    %7054 = vmatprep.subr.bf16.mxu0 0
    %7055 = vmatpush1.bf16.msra.mxu0 0
    %7056 = vmatprep.subr.bf16.mxu0 0
    %7057 = vmatpush1.bf16.msra.mxu0 0
    %7058 = vmatprep.subr.bf16.mxu0 0
    %7059 = vmatpush1.bf16.msra.mxu0 0
    %7060 = vmatprep.mubr.bf16.mxu0 0
    %7061 = vmatmul.mubr.bf16.gmra.mrb[0].mxu0 %v6944
    %v7062 = vpop.f32.mrb[0].mxu0
    %v7063 = vadd.f32 %v7022, %v7062
    %v7064 = vpop.f32.mrb[0].mxu0
    %v7065 = vadd.f32 %v7024, %v7064
    %v7066 = vpop.f32.mrb[0].mxu0
    %v7067 = vpop.f32.mrb[0].mxu0
    %7068 = vdwg.mxu0
    %7069 = vmatprep.subr.bf16.mxu0 %v6441
    %7070 = vmatpush1.bf16.msra.mxu0 %v6440
    %7071 = vmatprep.subr.bf16.mxu0 %v6448
    %7072 = vmatpush1.bf16.msra.mxu0 %v6447
    %7073 = vmatprep.subr.bf16.mxu0 %v6455
    %7074 = vmatpush1.bf16.msra.mxu0 %v6454
    %7075 = vmatprep.subr.bf16.mxu0 %v6462
    %7076 = vmatpush1.bf16.msra.mxu0 %v6461
    %7077 = vmatprep.subr.bf16.mxu0 %v6469
    %7078 = vmatpush1.bf16.msra.mxu0 %v6468
    %7079 = vmatprep.subr.bf16.mxu0 %v6476
    %7080 = vmatpush1.bf16.msra.mxu0 %v6475
    %7081 = vmatprep.subr.bf16.mxu0 %v6483
    %7082 = vmatpush1.bf16.msra.mxu0 %v6482
    %7083 = vmatprep.subr.bf16.mxu0 %v6490
    %7084 = vmatpush1.bf16.msra.mxu0 %v6489
    %7085 = vmatprep.subr.bf16.mxu0 %v6497
    %7086 = vmatpush1.bf16.msra.mxu0 %v6496
    %7087 = vmatprep.subr.bf16.mxu0 %v6504
    %7088 = vmatpush1.bf16.msra.mxu0 %v6503
    %7089 = vmatprep.subr.bf16.mxu0 %v6511
    %7090 = vmatpush1.bf16.msra.mxu0 %v6510
    %7091 = vmatprep.subr.bf16.mxu0 %v6518
    %7092 = vmatpush1.bf16.msra.mxu0 %v6517
    %7093 = vmatprep.subr.bf16.mxu0 %v6525
    %7094 = vmatpush1.bf16.msra.mxu0 %v6524
    %7095 = vmatprep.subr.bf16.mxu0 %v6532
    %7096 = vmatpush1.bf16.msra.mxu0 %v6531
    %7097 = vmatprep.subr.bf16.mxu0 %v6539
    %7098 = vmatpush1.bf16.msra.mxu0 %v6538
    %7099 = vmatprep.subr.bf16.mxu0 %v6546
    %7100 = vmatpush1.bf16.msra.mxu0 %v6545
    %7101 = vmatprep.mubr.bf16.mxu0 %v5317
    %7102 = vmatmul.mubr.bf16.gmra.mrb[0].mxu0 %v5316
    %v7103 = vpop.f32.mrb[0].mxu0
    %v7104 = vadd.f32 %v5622, %v7103
    %v7105 = vpop.f32.mrb[0].mxu0
    %v7106 = vadd.f32 %v5626, %v7105
    %v7107 = vpop.f32.mrb[0].mxu0
    %v7108 = vpop.f32.mrb[0].mxu0
    %7109 = vdwg.mxu0
    %7110 = vmatprep.subr.bf16.mxu0 %v6553
    %7111 = vmatpush1.bf16.msra.mxu0 %v6552
    %7112 = vmatprep.subr.bf16.mxu0 %v6560
    %7113 = vmatpush1.bf16.msra.mxu0 %v6559
    %7114 = vmatprep.subr.bf16.mxu0 %v6567
    %7115 = vmatpush1.bf16.msra.mxu0 %v6566
    %7116 = vmatprep.subr.bf16.mxu0 %v6574
    %7117 = vmatpush1.bf16.msra.mxu0 %v6573
    %7118 = vmatprep.subr.bf16.mxu0 %v6581
    %7119 = vmatpush1.bf16.msra.mxu0 %v6580
    %7120 = vmatprep.subr.bf16.mxu0 %v6588
    %7121 = vmatpush1.bf16.msra.mxu0 %v6587
    %7122 = vmatprep.subr.bf16.mxu0 %v6595
    %7123 = vmatpush1.bf16.msra.mxu0 %v6594
    %7124 = vmatprep.subr.bf16.mxu0 %v6602
    %7125 = vmatpush1.bf16.msra.mxu0 %v6601
    %7126 = vmatprep.subr.bf16.mxu0 %v6609
    %7127 = vmatpush1.bf16.msra.mxu0 %v6608
    %7128 = vmatprep.subr.bf16.mxu0 %v6616
    %7129 = vmatpush1.bf16.msra.mxu0 %v6615
    %7130 = vmatprep.subr.bf16.mxu0 %v6623
    %7131 = vmatpush1.bf16.msra.mxu0 %v6622
    %7132 = vmatprep.subr.bf16.mxu0 %v6630
    %7133 = vmatpush1.bf16.msra.mxu0 %v6629
    %7134 = vmatprep.subr.bf16.mxu0 %v6637
    %7135 = vmatpush1.bf16.msra.mxu0 %v6636
    %7136 = vmatprep.subr.bf16.mxu0 %v6644
    %7137 = vmatpush1.bf16.msra.mxu0 %v6643
    %7138 = vmatprep.subr.bf16.mxu0 %v6651
    %7139 = vmatpush1.bf16.msra.mxu0 %v6650
    %7140 = vmatprep.subr.bf16.mxu0 %v6658
    %7141 = vmatpush1.bf16.msra.mxu0 %v6657
    %7142 = vmatprep.mubr.bf16.mxu0 %v5319
    %7143 = vmatmul.mubr.bf16.gmra.mrb[0].mxu0 %v5318
    %v7144 = vpop.f32.mrb[0].mxu0
    %v7145 = vadd.f32 %v7104, %v7144
    %v7146 = vpop.f32.mrb[0].mxu0
    %v7147 = vadd.f32 %v7106, %v7146
    %v7148 = vpop.f32.mrb[0].mxu0
    %v7149 = vpop.f32.mrb[0].mxu0
    %7150 = vdwg.mxu0
    %7151 = vmatprep.subr.bf16.mxu0 %v6665
    %7152 = vmatpush1.bf16.msra.mxu0 %v6664
    %7153 = vmatprep.subr.bf16.mxu0 %v6672
    %7154 = vmatpush1.bf16.msra.mxu0 %v6671
    %7155 = vmatprep.subr.bf16.mxu0 %v6679
    %7156 = vmatpush1.bf16.msra.mxu0 %v6678
    %7157 = vmatprep.subr.bf16.mxu0 %v6686
    %7158 = vmatpush1.bf16.msra.mxu0 %v6685
    %7159 = vmatprep.subr.bf16.mxu0 0
    %7160 = vmatpush1.bf16.msra.mxu0 0
    %7161 = vmatprep.subr.bf16.mxu0 0
    %7162 = vmatpush1.bf16.msra.mxu0 0
    %7163 = vmatprep.subr.bf16.mxu0 0
    %7164 = vmatpush1.bf16.msra.mxu0 0
    %7165 = vmatprep.subr.bf16.mxu0 0
    %7166 = vmatpush1.bf16.msra.mxu0 0
    %7167 = vmatprep.subr.bf16.mxu0 0
    %7168 = vmatpush1.bf16.msra.mxu0 0
    %7169 = vmatprep.subr.bf16.mxu0 0
    %7170 = vmatpush1.bf16.msra.mxu0 0
    %7171 = vmatprep.subr.bf16.mxu0 0
    %7172 = vmatpush1.bf16.msra.mxu0 0
    %7173 = vmatprep.subr.bf16.mxu0 0
    %7174 = vmatpush1.bf16.msra.mxu0 0
    %7175 = vmatprep.subr.bf16.mxu0 0
    %7176 = vmatpush1.bf16.msra.mxu0 0
    %7177 = vmatprep.subr.bf16.mxu0 0
    %7178 = vmatpush1.bf16.msra.mxu0 0
    %7179 = vmatprep.subr.bf16.mxu0 0
    %7180 = vmatpush1.bf16.msra.mxu0 0
    %7181 = vmatprep.subr.bf16.mxu0 0
    %7182 = vmatpush1.bf16.msra.mxu0 0
    %7183 = vmatprep.mubr.bf16.mxu0 0
    %7184 = vmatmul.mubr.bf16.gmra.mrb[0].mxu0 %v6944
    %v7185 = vpop.f32.mrb[0].mxu0
    %v7186 = vadd.f32 %v7145, %v7185
    %v7187 = vpop.f32.mrb[0].mxu0
    %v7188 = vadd.f32 %v7147, %v7187
    %v7189 = vpop.f32.mrb[0].mxu0
    %v7190 = vpop.f32.mrb[0].mxu0
    %7191 = vdwg.mxu0
    %7192 = vmatprep.subr.bf16.mxu0 %v6443
    %7193 = vmatpush1.bf16.msra.mxu0 %v6442
    %7194 = vmatprep.subr.bf16.mxu0 %v6450
    %7195 = vmatpush1.bf16.msra.mxu0 %v6449
    %7196 = vmatprep.subr.bf16.mxu0 %v6457
    %7197 = vmatpush1.bf16.msra.mxu0 %v6456
    %7198 = vmatprep.subr.bf16.mxu0 %v6464
    %7199 = vmatpush1.bf16.msra.mxu0 %v6463
    %7200 = vmatprep.subr.bf16.mxu0 %v6471
    %7201 = vmatpush1.bf16.msra.mxu0 %v6470
    %7202 = vmatprep.subr.bf16.mxu0 %v6478
    %7203 = vmatpush1.bf16.msra.mxu0 %v6477
    %7204 = vmatprep.subr.bf16.mxu0 %v6485
    %7205 = vmatpush1.bf16.msra.mxu0 %v6484
    %7206 = vmatprep.subr.bf16.mxu0 %v6492
    %7207 = vmatpush1.bf16.msra.mxu0 %v6491
    %7208 = vmatprep.subr.bf16.mxu0 %v6499
    %7209 = vmatpush1.bf16.msra.mxu0 %v6498
    %7210 = vmatprep.subr.bf16.mxu0 %v6506
    %7211 = vmatpush1.bf16.msra.mxu0 %v6505
    %7212 = vmatprep.subr.bf16.mxu0 %v6513
    %7213 = vmatpush1.bf16.msra.mxu0 %v6512
    %7214 = vmatprep.subr.bf16.mxu0 %v6520
    %7215 = vmatpush1.bf16.msra.mxu0 %v6519
    %7216 = vmatprep.subr.bf16.mxu0 %v6527
    %7217 = vmatpush1.bf16.msra.mxu0 %v6526
    %7218 = vmatprep.subr.bf16.mxu0 %v6534
    %7219 = vmatpush1.bf16.msra.mxu0 %v6533
    %7220 = vmatprep.subr.bf16.mxu0 %v6541
    %7221 = vmatpush1.bf16.msra.mxu0 %v6540
    %7222 = vmatprep.subr.bf16.mxu0 %v6548
    %7223 = vmatpush1.bf16.msra.mxu0 %v6547
    %7224 = vmatprep.mubr.bf16.mxu0 %v5317
    %7225 = vmatmul.mubr.bf16.gmra.mrb[0].mxu0 %v5316
    %v7226 = vpop.f32.mrb[0].mxu0
    %v7227 = vadd.f32 %v5630, %v7226
    %v7228 = vpop.f32.mrb[0].mxu0
    %v7229 = vadd.f32 %v5634, %v7228
    %v7230 = vpop.f32.mrb[0].mxu0
    %v7231 = vpop.f32.mrb[0].mxu0
    %7232 = vdwg.mxu0
    %7233 = vmatprep.subr.bf16.mxu0 %v6555
    %7234 = vmatpush1.bf16.msra.mxu0 %v6554
    %7235 = vmatprep.subr.bf16.mxu0 %v6562
    %7236 = vmatpush1.bf16.msra.mxu0 %v6561
    %7237 = vmatprep.subr.bf16.mxu0 %v6569
    %7238 = vmatpush1.bf16.msra.mxu0 %v6568
    %7239 = vmatprep.subr.bf16.mxu0 %v6576
    %7240 = vmatpush1.bf16.msra.mxu0 %v6575
    %7241 = vmatprep.subr.bf16.mxu0 %v6583
    %7242 = vmatpush1.bf16.msra.mxu0 %v6582
    %7243 = vmatprep.subr.bf16.mxu0 %v6590
    %7244 = vmatpush1.bf16.msra.mxu0 %v6589
    %7245 = vmatprep.subr.bf16.mxu0 %v6597
    %7246 = vmatpush1.bf16.msra.mxu0 %v6596
    %7247 = vmatprep.subr.bf16.mxu0 %v6604
    %7248 = vmatpush1.bf16.msra.mxu0 %v6603
    %7249 = vmatprep.subr.bf16.mxu0 %v6611
    %7250 = vmatpush1.bf16.msra.mxu0 %v6610
    %7251 = vmatprep.subr.bf16.mxu0 %v6618
    %7252 = vmatpush1.bf16.msra.mxu0 %v6617
    %7253 = vmatprep.subr.bf16.mxu0 %v6625
    %7254 = vmatpush1.bf16.msra.mxu0 %v6624
    %7255 = vmatprep.subr.bf16.mxu0 %v6632
    %7256 = vmatpush1.bf16.msra.mxu0 %v6631
    %7257 = vmatprep.subr.bf16.mxu0 %v6639
    %7258 = vmatpush1.bf16.msra.mxu0 %v6638
    %7259 = vmatprep.subr.bf16.mxu0 %v6646
    %7260 = vmatpush1.bf16.msra.mxu0 %v6645
    %7261 = vmatprep.subr.bf16.mxu0 %v6653
    %7262 = vmatpush1.bf16.msra.mxu0 %v6652
    %7263 = vmatprep.subr.bf16.mxu0 %v6660
    %7264 = vmatpush1.bf16.msra.mxu0 %v6659
    %7265 = vmatprep.mubr.bf16.mxu0 %v5319
    %7266 = vmatmul.mubr.bf16.gmra.mrb[0].mxu0 %v5318
    %v7267 = vpop.f32.mrb[0].mxu0
    %v7268 = vadd.f32 %v7227, %v7267
    %v7269 = vpop.f32.mrb[0].mxu0
    %v7270 = vadd.f32 %v7229, %v7269
    %v7271 = vpop.f32.mrb[0].mxu0
    %v7272 = vpop.f32.mrb[0].mxu0
    %7273 = vdwg.mxu0
    %7274 = vmatprep.subr.bf16.mxu0 %v6667
    %7275 = vmatpush1.bf16.msra.mxu0 %v6666
    %7276 = vmatprep.subr.bf16.mxu0 %v6674
    %7277 = vmatpush1.bf16.msra.mxu0 %v6673
    %7278 = vmatprep.subr.bf16.mxu0 %v6681
    %7279 = vmatpush1.bf16.msra.mxu0 %v6680
    %7280 = vmatprep.subr.bf16.mxu0 %v6688
    %7281 = vmatpush1.bf16.msra.mxu0 %v6687
    %7282 = vmatprep.subr.bf16.mxu0 0
    %7283 = vmatpush1.bf16.msra.mxu0 0
    %7284 = vmatprep.subr.bf16.mxu0 0
    %7285 = vmatpush1.bf16.msra.mxu0 0
    %7286 = vmatprep.subr.bf16.mxu0 0
    %7287 = vmatpush1.bf16.msra.mxu0 0
    %7288 = vmatprep.subr.bf16.mxu0 0
    %7289 = vmatpush1.bf16.msra.mxu0 0
    %7290 = vmatprep.subr.bf16.mxu0 0
    %7291 = vmatpush1.bf16.msra.mxu0 0
    %7292 = vmatprep.subr.bf16.mxu0 0
    %7293 = vmatpush1.bf16.msra.mxu0 0
    %7294 = vmatprep.subr.bf16.mxu0 0
    %7295 = vmatpush1.bf16.msra.mxu0 0
    %7296 = vmatprep.subr.bf16.mxu0 0
    %7297 = vmatpush1.bf16.msra.mxu0 0
    %7298 = vmatprep.subr.bf16.mxu0 0
    %7299 = vmatpush1.bf16.msra.mxu0 0
    %7300 = vmatprep.subr.bf16.mxu0 0
    %7301 = vmatpush1.bf16.msra.mxu0 0
    %7302 = vmatprep.subr.bf16.mxu0 0
    %7303 = vmatpush1.bf16.msra.mxu0 0
    %7304 = vmatprep.subr.bf16.mxu0 0
    %7305 = vmatpush1.bf16.msra.mxu0 0
    %7306 = vmatprep.mubr.bf16.mxu0 0
    %7307 = vmatmul.mubr.bf16.gmra.mrb[0].mxu0 %v6944
    %v7308 = vpop.f32.mrb[0].mxu0
    %v7309 = vadd.f32 %v7268, %v7308
    %v7310 = vpop.f32.mrb[0].mxu0
    %v7311 = vadd.f32 %v7270, %v7310
    %v7312 = vpop.f32.mrb[0].mxu0
    %v7313 = vpop.f32.mrb[0].mxu0
    %7314 = vdwg.mxu0
    %7315 = vmatprep.subr.bf16.mxu0 0
    %7316 = vmatpush1.bf16.msra.mxu0 %v6444
    %7317 = vmatprep.subr.bf16.mxu0 0
    %7318 = vmatpush1.bf16.msra.mxu0 %v6451
    %7319 = vmatprep.subr.bf16.mxu0 0
    %7320 = vmatpush1.bf16.msra.mxu0 %v6458
    %7321 = vmatprep.subr.bf16.mxu0 0
    %7322 = vmatpush1.bf16.msra.mxu0 %v6465
    %7323 = vmatprep.subr.bf16.mxu0 0
    %7324 = vmatpush1.bf16.msra.mxu0 %v6472
    %7325 = vmatprep.subr.bf16.mxu0 0
    %7326 = vmatpush1.bf16.msra.mxu0 %v6479
    %7327 = vmatprep.subr.bf16.mxu0 0
    %7328 = vmatpush1.bf16.msra.mxu0 %v6486
    %7329 = vmatprep.subr.bf16.mxu0 0
    %7330 = vmatpush1.bf16.msra.mxu0 %v6493
    %7331 = vmatprep.subr.bf16.mxu0 0
    %7332 = vmatpush1.bf16.msra.mxu0 %v6500
    %7333 = vmatprep.subr.bf16.mxu0 0
    %7334 = vmatpush1.bf16.msra.mxu0 %v6507
    %7335 = vmatprep.subr.bf16.mxu0 0
    %7336 = vmatpush1.bf16.msra.mxu0 %v6514
    %7337 = vmatprep.subr.bf16.mxu0 0
    %7338 = vmatpush1.bf16.msra.mxu0 %v6521
    %7339 = vmatprep.subr.bf16.mxu0 0
    %7340 = vmatpush1.bf16.msra.mxu0 %v6528
    %7341 = vmatprep.subr.bf16.mxu0 0
    %7342 = vmatpush1.bf16.msra.mxu0 %v6535
    %7343 = vmatprep.subr.bf16.mxu0 0
    %7344 = vmatpush1.bf16.msra.mxu0 %v6542
    %7345 = vmatprep.subr.bf16.mxu0 0
    %7346 = vmatpush1.bf16.msra.mxu0 %v6549
    %7347 = vmatprep.mubr.bf16.mxu0 %v5317
    %7348 = vmatmul.mubr.bf16.gmra.mrb[0].mxu0 %v5316
    %v7349 = vpop.f32.mrb[0].mxu0
    %v7350 = vadd.f32 %v5638, %v7349
    %v7351 = vpop.f32.mrb[0].mxu0
    %v7352 = vpop.f32.mrb[0].mxu0
    %v7353 = vpop.f32.mrb[0].mxu0
    %7354 = vdwg.mxu0
    %7355 = vmatprep.subr.bf16.mxu0 0
    %7356 = vmatpush1.bf16.msra.mxu0 %v6556
    %7357 = vmatprep.subr.bf16.mxu0 0
    %7358 = vmatpush1.bf16.msra.mxu0 %v6563
    %7359 = vmatprep.subr.bf16.mxu0 0
    %7360 = vmatpush1.bf16.msra.mxu0 %v6570
    %7361 = vmatprep.subr.bf16.mxu0 0
    %7362 = vmatpush1.bf16.msra.mxu0 %v6577
    %7363 = vmatprep.subr.bf16.mxu0 0
    %7364 = vmatpush1.bf16.msra.mxu0 %v6584
    %7365 = vmatprep.subr.bf16.mxu0 0
    %7366 = vmatpush1.bf16.msra.mxu0 %v6591
    %7367 = vmatprep.subr.bf16.mxu0 0
    %7368 = vmatpush1.bf16.msra.mxu0 %v6598
    %7369 = vmatprep.subr.bf16.mxu0 0
    %7370 = vmatpush1.bf16.msra.mxu0 %v6605
    %7371 = vmatprep.subr.bf16.mxu0 0
    %7372 = vmatpush1.bf16.msra.mxu0 %v6612
    %7373 = vmatprep.subr.bf16.mxu0 0
    %7374 = vmatpush1.bf16.msra.mxu0 %v6619
    %7375 = vmatprep.subr.bf16.mxu0 0
    %7376 = vmatpush1.bf16.msra.mxu0 %v6626
    %7377 = vmatprep.subr.bf16.mxu0 0
    %7378 = vmatpush1.bf16.msra.mxu0 %v6633
    %7379 = vmatprep.subr.bf16.mxu0 0
    %7380 = vmatpush1.bf16.msra.mxu0 %v6640
    %7381 = vmatprep.subr.bf16.mxu0 0
    %7382 = vmatpush1.bf16.msra.mxu0 %v6647
    %7383 = vmatprep.subr.bf16.mxu0 0
    %7384 = vmatpush1.bf16.msra.mxu0 %v6654
    %7385 = vmatprep.subr.bf16.mxu0 0
    %7386 = vmatpush1.bf16.msra.mxu0 %v6661
    %7387 = vmatprep.mubr.bf16.mxu0 %v5319
    %7388 = vmatmul.mubr.bf16.gmra.mrb[0].mxu0 %v5318
    %v7389 = vpop.f32.mrb[0].mxu0
    %v7390 = vadd.f32 %v7350, %v7389
    %v7391 = vpop.f32.mrb[0].mxu0
    %v7392 = vpop.f32.mrb[0].mxu0
    %v7393 = vpop.f32.mrb[0].mxu0
    %7394 = vdwg.mxu0
    %7395 = vmatprep.subr.bf16.mxu0 0
    %7396 = vmatpush1.bf16.msra.mxu0 %v6668
    %7397 = vmatprep.subr.bf16.mxu0 0
    %7398 = vmatpush1.bf16.msra.mxu0 %v6675
    %7399 = vmatprep.subr.bf16.mxu0 0
    %7400 = vmatpush1.bf16.msra.mxu0 %v6682
    %7401 = vmatprep.subr.bf16.mxu0 0
    %7402 = vmatpush1.bf16.msra.mxu0 %v6689
    %7403 = vmatprep.subr.bf16.mxu0 0
    %7404 = vmatpush1.bf16.msra.mxu0 0
    %7405 = vmatprep.subr.bf16.mxu0 0
    %7406 = vmatpush1.bf16.msra.mxu0 0
    %7407 = vmatprep.subr.bf16.mxu0 0
    %7408 = vmatpush1.bf16.msra.mxu0 0
    %7409 = vmatprep.subr.bf16.mxu0 0
    %7410 = vmatpush1.bf16.msra.mxu0 0
    %7411 = vmatprep.subr.bf16.mxu0 0
    %7412 = vmatpush1.bf16.msra.mxu0 0
    %7413 = vmatprep.subr.bf16.mxu0 0
    %7414 = vmatpush1.bf16.msra.mxu0 0
    %7415 = vmatprep.subr.bf16.mxu0 0
    %7416 = vmatpush1.bf16.msra.mxu0 0
    %7417 = vmatprep.subr.bf16.mxu0 0
    %7418 = vmatpush1.bf16.msra.mxu0 0
    %7419 = vmatprep.subr.bf16.mxu0 0
    %7420 = vmatpush1.bf16.msra.mxu0 0
    %7421 = vmatprep.subr.bf16.mxu0 0
    %7422 = vmatpush1.bf16.msra.mxu0 0
    %7423 = vmatprep.subr.bf16.mxu0 0
    %7424 = vmatpush1.bf16.msra.mxu0 0
    %7425 = vmatprep.subr.bf16.mxu0 0
    %7426 = vmatpush1.bf16.msra.mxu0 0
    %7427 = vmatprep.mubr.bf16.mxu0 0
    %7428 = vmatmul.mubr.bf16.gmra.mrb[0].mxu0 %v6944
    %v7429 = vpop.f32.mrb[0].mxu0
    %v7430 = vadd.f32 %v7390, %v7429
    %v7431 = vpop.f32.mrb[0].mxu0
    %v7432 = vpop.f32.mrb[0].mxu0
    %v7433 = vpop.f32.mrb[0].mxu0
    %7434 = vdwg.mxu0
    %v7435 = vmax.f32 %v7063, 0.0
    %v7436 = vmax.f32 %v7065, 0.0
    %v7437 = vmax.f32 %v7186, 0.0
    %v7438 = vmax.f32 %v7188, 0.0
    %v7439 = vmax.f32 %v7309, 0.0
    %v7440 = vmax.f32 %v7311, 0.0
    %v7441 = vmax.f32 %v7430, 0.0
    %v7442 = vpack.c.bf16 %v7435, %v7435
    %v7443 = vpack.c.bf16 %v7436, %v7436
    %v7444 = vpack.c.bf16 %v7437, %v7437
    %v7445 = vpack.c.bf16 %v7438, %v7438
    %v7446 = vpack.c.bf16 %v7439, %v7439
    %v7447 = vpack.c.bf16 %v7440, %v7440
    %v7448 = vpack.c.bf16 %v7441, %v7441
    %v7449 = vld [vmem:[%s11] sm:$0xff]
    %v7450 = vld [vmem:[%s11 + $0x8] sm:$0xff]
    %v7451 = vld [vmem:[%s11 + $0x10] sm:$0xff]
    %v7452 = vld [vmem:[%s11 + $0x18] sm:$0xff]
    %v7453 = vld [vmem:[%s11 + $0x20] sm:$0xff]
    %v7454 = vld [vmem:[%s11 + $0x28] sm:$0xff]
    %v7455 = vld [vmem:[%s11 + $0x30] sm:$0xff]
    %v7456 = vld [vmem:[%s11 + $0x38] sm:$0xff]
    %v7457 = vld [vmem:[%s11 + $0x40] sm:$0xff]
    %v7458 = vld [vmem:[%s11 + $0x48] sm:$0xff]
    %v7459 = vld [vmem:[%s11 + $0x50] sm:$0xff]
    %v7460 = vld [vmem:[%s11 + $0x58] sm:$0xff]
    %v7461 = vld [vmem:[%s11 + $0x60] sm:$0xff]
    %v7462 = vld [vmem:[%s11 + $0x68] sm:$0xff]
    %v7463 = vld [vmem:[%s11 + $0x70] sm:$0xff]
    %v7464 = vld [vmem:[%s11 + $0x78] sm:$0xff]
    %v7465 = vld [vmem:[%s11 + $0x80] sm:$0xff]
    %v7466 = vld [vmem:[%s11 + $0x88] sm:$0xff]
    %v7467 = vld [vmem:[%s11 + $0x90] sm:$0xff]
    %v7468 = vld [vmem:[%s11 + $0x98] sm:$0xff]
    %v7469 = vld [vmem:[%s11 + $0xa0] sm:$0xff]
    %v7470 = vld [vmem:[%s11 + $0xa8] sm:$0xff]
    %v7471 = vld [vmem:[%s11 + $0xb0] sm:$0xff]
    %v7472 = vld [vmem:[%s11 + $0xb8] sm:$0xff]
    %v7473 = vld [vmem:[%s11 + $0xc0] sm:$0xff]
    %v7474 = vld [vmem:[%s11 + $0xc8] sm:$0xff]
    %v7475 = vld [vmem:[%s11 + $0xd0] sm:$0xff]
    %v7476 = vld [vmem:[%s11 + $0xd8] sm:$0xff]
    %v7477 = vld [vmem:[%s11 + $0xe0] sm:$0xff]
    %v7478 = vld [vmem:[%s11 + $0xe8] sm:$0xff]
    %v7479 = vld [vmem:[%s11 + $0xf0] sm:$0xff]
    %v7480 = vld [vmem:[%s11 + $0xf8] sm:$0xff]
    %v7481 = vld [vmem:[%s11 + $0x100] sm:$0xff]
    %v7482 = vld [vmem:[%s11 + $0x108] sm:$0xff]
    %v7483 = vld [vmem:[%s11 + $0x110] sm:$0xff]
    %v7484 = vld [vmem:[%s11 + $0x118] sm:$0xff]
    %v7485 = vld [vmem:[%s11 + $0x120] sm:$0xff]
    %v7486 = vld [vmem:[%s11 + $0x128] sm:$0xff]
    %v7487 = vld [vmem:[%s11 + $0x130] sm:$0xff]
    %v7488 = vld [vmem:[%s11 + $0x138] sm:$0xff]
    %v7489 = vld [vmem:[%s11 + $0x140] sm:$0xff]
    %v7490 = vld [vmem:[%s11 + $0x148] sm:$0xff]
    %v7491 = vld [vmem:[%s11 + $0x150] sm:$0xff]
    %v7492 = vld [vmem:[%s11 + $0x158] sm:$0xff]
    %v7493 = vld [vmem:[%s11 + $0x160] sm:$0xff]
    %v7494 = vld [vmem:[%s11 + $0x168] sm:$0xff]
    %v7495 = vld [vmem:[%s11 + $0x170] sm:$0xff]
    %v7496 = vld [vmem:[%s11 + $0x178] sm:$0xff]
    %v7497 = vld [vmem:[%s11 + $0x180] sm:$0xff]
    %v7498 = vld [vmem:[%s11 + $0x188] sm:$0xff]
    %v7499 = vld [vmem:[%s11 + $0x190] sm:$0xff]
    %v7500 = vld [vmem:[%s11 + $0x198] sm:$0xff]
    %v7501 = vld [vmem:[%s11 + $0x1a0] sm:$0xff]
    %v7502 = vld [vmem:[%s11 + $0x1a8] sm:$0xff]
    %v7503 = vld [vmem:[%s11 + $0x1b0] sm:$0xff]
    %v7504 = vld [vmem:[%s11 + $0x1b8] sm:$0xff]
    %v7505 = vld [vmem:[%s11 + $0x1c0] sm:$0xff]
    %v7506 = vld [vmem:[%s11 + $0x1c8] sm:$0xff]
    %v7507 = vld [vmem:[%s11 + $0x1d0] sm:$0xff]
    %v7508 = vld [vmem:[%s11 + $0x1d8] sm:$0xff]
    %v7509 = vld [vmem:[%s11 + $0x1e0] sm:$0xff]
    %v7510 = vld [vmem:[%s11 + $0x1e8] sm:$0xff]
    %v7511 = vld [vmem:[%s11 + $0x1f0] sm:$0xff]
    %v7512 = vld [vmem:[%s11 + $0x1f8] sm:$0xff]
    %v7513 = vld [vmem:[%s11 + $0x200] sm:$0xff]
    %v7514 = vld [vmem:[%s11 + $0x208] sm:$0xff]
    %v7515 = vld [vmem:[%s11 + $0x210] sm:$0xff]
    %v7516 = vld [vmem:[%s11 + $0x218] sm:$0xff]
    %v7517 = vld [vmem:[%s11 + $0x220] sm:$0xff]
    %v7518 = vld [vmem:[%s11 + $0x228] sm:$0xff]
    %v7519 = vld [vmem:[%s11 + $0x230] sm:$0xff]
    %v7520 = vld [vmem:[%s11 + $0x238] sm:$0xff]
    %v7521 = vld [vmem:[%s11 + $0x240] sm:$0xff]
    %v7522 = vld [vmem:[%s11 + $0x248] sm:$0xff]
    %v7523 = vld [vmem:[%s11 + $0x250] sm:$0xff]
    %v7524 = vld [vmem:[%s11 + $0x258] sm:$0xff]
    %v7525 = vld [vmem:[%s11 + $0x260] sm:$0xff]
    %v7526 = vld [vmem:[%s11 + $0x268] sm:$0xff]
    %v7527 = vld [vmem:[%s11 + $0x270] sm:$0xff]
    %v7528 = vld [vmem:[%s11 + $0x278] sm:$0xff]
    %v7529 = vld [vmem:[%s11 + $0x280] sm:$0xff]
    %v7530 = vld [vmem:[%s11 + $0x288] sm:$0xff]
    %v7531 = vld [vmem:[%s11 + $0x290] sm:$0xff]
    %v7532 = vld [vmem:[%s11 + $0x298] sm:$0xff]
    %v7533 = vld [vmem:[%s11 + $0x2a0] sm:$0xff]
    %v7534 = vld [vmem:[%s11 + $0x2a8] sm:$0xff]
    %v7535 = vld [vmem:[%s11 + $0x2b0] sm:$0xff]
    %v7536 = vld [vmem:[%s11 + $0x2b8] sm:$0xff]
    %v7537 = vld [vmem:[%s11 + $0x2c0] sm:$0xff]
    %v7538 = vld [vmem:[%s11 + $0x2c8] sm:$0xff]
    %v7539 = vld [vmem:[%s11 + $0x2d0] sm:$0xff]
    %v7540 = vld [vmem:[%s11 + $0x2d8] sm:$0xff]
    %v7541 = vld [vmem:[%s11 + $0x2e0] sm:$0xff]
    %v7542 = vld [vmem:[%s11 + $0x2e8] sm:$0xff]
    %v7543 = vld [vmem:[%s11 + $0x2f0] sm:$0xff]
    %v7544 = vld [vmem:[%s11 + $0x2f8] sm:$0xff]
    %v7545 = vld [vmem:[%s11 + $0x300] sm:$0xff]
    %v7546 = vld [vmem:[%s11 + $0x308] sm:$0xff]
    %v7547 = vld [vmem:[%s11 + $0x310] sm:$0xff]
    %v7548 = vld [vmem:[%s11 + $0x318] sm:$0xff]
    %v7549 = vld [vmem:[%s11 + $0x320] sm:$0xff]
    %v7550 = vld [vmem:[%s11 + $0x328] sm:$0xff]
    %v7551 = vld [vmem:[%s11 + $0x330] sm:$0xff]
    %v7552 = vld [vmem:[%s11 + $0x338] sm:$0xff]
    %v7553 = vld [vmem:[%s11 + $0x340] sm:$0xff]
    %v7554 = vld [vmem:[%s11 + $0x348] sm:$0xff]
    %v7555 = vld [vmem:[%s11 + $0x350] sm:$0xff]
    %v7556 = vld [vmem:[%s11 + $0x358] sm:$0xff]
    %v7557 = vld [vmem:[%s11 + $0x360] sm:$0xff]
    %v7558 = vld [vmem:[%s11 + $0x368] sm:$0xff]
    %v7559 = vld [vmem:[%s11 + $0x370] sm:$0xff]
    %v7560 = vld [vmem:[%s11 + $0x378] sm:$0xff]
    %v7561 = vld [vmem:[%s11 + $0x380] sm:$0xff]
    %v7562 = vld [vmem:[%s11 + $0x388] sm:$0xff]
    %v7563 = vld [vmem:[%s11 + $0x390] sm:$0xff]
    %v7564 = vld [vmem:[%s11 + $0x398] sm:$0xff]
    %v7565 = vld [vmem:[%s11 + $0x3a0] sm:$0xff]
    %v7566 = vld [vmem:[%s11 + $0x3a8] sm:$0xff]
    %v7567 = vld [vmem:[%s11 + $0x3b0] sm:$0xff]
    %v7568 = vld [vmem:[%s11 + $0x3b8] sm:$0xff]
    %v7569 = vld [vmem:[%s11 + $0x3c0] sm:$0xff]
    %v7570 = vld [vmem:[%s11 + $0x3c8] sm:$0xff]
    %v7571 = vld [vmem:[%s11 + $0x3d0] sm:$0xff]
    %v7572 = vld [vmem:[%s11 + $0x3d8] sm:$0xff]
    %v7573 = vld [vmem:[%s11 + $0x3e0] sm:$0xff]
    %v7574 = vld [vmem:[%s11 + $0x3e8] sm:$0xff]
    %v7575 = vld [vmem:[%s11 + $0x3f0] sm:$0xff]
    %v7576 = vld [vmem:[%s11 + $0x3f8] sm:$0xff]
    %v7577 = vld [vmem:[%s11 + $0x400] sm:$0xff]
    %v7578 = vld [vmem:[%s11 + $0x408] sm:$0xff]
    %v7579 = vld [vmem:[%s11 + $0x410] sm:$0xff]
    %v7580 = vld [vmem:[%s11 + $0x418] sm:$0xff]
    %v7581 = vld [vmem:[%s11 + $0x420] sm:$0xff]
    %v7582 = vld [vmem:[%s11 + $0x428] sm:$0xff]
    %v7583 = vld [vmem:[%s11 + $0x430] sm:$0xff]
    %v7584 = vld [vmem:[%s11 + $0x438] sm:$0xff]
    %v7585 = vld [vmem:[%s11 + $0x440] sm:$0xff]
    %v7586 = vld [vmem:[%s11 + $0x448] sm:$0xff]
    %v7587 = vld [vmem:[%s11 + $0x450] sm:$0xff]
    %v7588 = vld [vmem:[%s11 + $0x458] sm:$0xff]
    %v7589 = vld [vmem:[%s11 + $0x460] sm:$0xff]
    %v7590 = vld [vmem:[%s11 + $0x468] sm:$0xff]
    %v7591 = vld [vmem:[%s11 + $0x470] sm:$0xff]
    %v7592 = vld [vmem:[%s11 + $0x478] sm:$0xff]
    %v7593 = vld [vmem:[%s11 + $0x480] sm:$0xff]
    %v7594 = vld [vmem:[%s11 + $0x488] sm:$0xff]
    %v7595 = vld [vmem:[%s11 + $0x490] sm:$0xff]
    %v7596 = vld [vmem:[%s11 + $0x498] sm:$0xff]
    %v7597 = vld [vmem:[%s11 + $0x4a0] sm:$0xff]
    %v7598 = vld [vmem:[%s11 + $0x4a8] sm:$0xff]
    %v7599 = vld [vmem:[%s11 + $0x4b0] sm:$0xff]
    %v7600 = vld [vmem:[%s11 + $0x4b8] sm:$0xff]
    %v7601 = vld [vmem:[%s11 + $0x4c0] sm:$0xff]
    %v7602 = vld [vmem:[%s11 + $0x4c8] sm:$0xff]
    %v7603 = vld [vmem:[%s11 + $0x4d0] sm:$0xff]
    %v7604 = vld [vmem:[%s11 + $0x4d8] sm:$0xff]
    %v7605 = vld [vmem:[%s11 + $0x4e0] sm:$0xff]
    %v7606 = vld [vmem:[%s11 + $0x4e8] sm:$0xff]
    %v7607 = vld [vmem:[%s11 + $0x4f0] sm:$0xff]
    %v7608 = vld [vmem:[%s11 + $0x4f8] sm:$0xff]
    %v7609 = vld [vmem:[%s11 + $0x500] sm:$0xff]
    %v7610 = vld [vmem:[%s11 + $0x508] sm:$0xff]
    %v7611 = vld [vmem:[%s11 + $0x510] sm:$0xff]
    %v7612 = vld [vmem:[%s11 + $0x518] sm:$0xff]
    %v7613 = vld [vmem:[%s11 + $0x520] sm:$0xff]
    %v7614 = vld [vmem:[%s11 + $0x528] sm:$0xff]
    %v7615 = vld [vmem:[%s11 + $0x530] sm:$0xff]
    %v7616 = vld [vmem:[%s11 + $0x538] sm:$0xff]
    %v7617 = vld [vmem:[%s11 + $0x540] sm:$0xff]
    %v7618 = vld [vmem:[%s11 + $0x548] sm:$0xff]
    %v7619 = vld [vmem:[%s11 + $0x550] sm:$0xff]
    %v7620 = vld [vmem:[%s11 + $0x558] sm:$0xff]
    %v7621 = vld [vmem:[%s11 + $0x560] sm:$0xff]
    %v7622 = vld [vmem:[%s11 + $0x568] sm:$0xff]
    %v7623 = vld [vmem:[%s11 + $0x570] sm:$0xff]
    %v7624 = vld [vmem:[%s11 + $0x578] sm:$0xff]
    %v7625 = vld [vmem:[%s11 + $0x580] sm:$0xff]
    %v7626 = vld [vmem:[%s11 + $0x588] sm:$0xff]
    %v7627 = vld [vmem:[%s11 + $0x590] sm:$0xff]
    %v7628 = vld [vmem:[%s11 + $0x598] sm:$0xff]
    %v7629 = vld [vmem:[%s11 + $0x5a0] sm:$0xff]
    %v7630 = vld [vmem:[%s11 + $0x5a8] sm:$0xff]
    %v7631 = vld [vmem:[%s11 + $0x5b0] sm:$0xff]
    %v7632 = vld [vmem:[%s11 + $0x5b8] sm:$0xff]
    %v7633 = vld [vmem:[%s11 + $0x5c0] sm:$0xff]
    %v7634 = vld [vmem:[%s11 + $0x5c8] sm:$0xff]
    %v7635 = vld [vmem:[%s11 + $0x5d0] sm:$0xff]
    %v7636 = vld [vmem:[%s11 + $0x5d8] sm:$0xff]
    %v7637 = vld [vmem:[%s11 + $0x5e0] sm:$0xff]
    %v7638 = vld [vmem:[%s11 + $0x5e8] sm:$0xff]
    %v7639 = vld [vmem:[%s11 + $0x5f0] sm:$0xff]
    %v7640 = vld [vmem:[%s11 + $0x5f8] sm:$0xff]
    %v7641 = vld [vmem:[%s11 + $0x600] sm:$0xff]
    %v7642 = vld [vmem:[%s11 + $0x608] sm:$0xff]
    %v7643 = vld [vmem:[%s11 + $0x610] sm:$0xff]
    %v7644 = vld [vmem:[%s11 + $0x618] sm:$0xff]
    %v7645 = vld [vmem:[%s11 + $0x620] sm:$0xff]
    %v7646 = vld [vmem:[%s11 + $0x628] sm:$0xff]
    %v7647 = vld [vmem:[%s11 + $0x630] sm:$0xff]
    %v7648 = vld [vmem:[%s11 + $0x638] sm:$0xff]
    %v7649 = vld [vmem:[%s11 + $0x640] sm:$0xff]
    %v7650 = vld [vmem:[%s11 + $0x648] sm:$0xff]
    %v7651 = vld [vmem:[%s11 + $0x650] sm:$0xff]
    %v7652 = vld [vmem:[%s11 + $0x658] sm:$0xff]
    %v7653 = vld [vmem:[%s11 + $0x660] sm:$0xff]
    %v7654 = vld [vmem:[%s11 + $0x668] sm:$0xff]
    %v7655 = vld [vmem:[%s11 + $0x670] sm:$0xff]
    %v7656 = vld [vmem:[%s11 + $0x678] sm:$0xff]
    %v7657 = vld [vmem:[%s11 + $0x680] sm:$0xff]
    %v7658 = vld [vmem:[%s11 + $0x688] sm:$0xff]
    %v7659 = vld [vmem:[%s11 + $0x690] sm:$0xff]
    %v7660 = vld [vmem:[%s11 + $0x698] sm:$0xff]
    %v7661 = vld [vmem:[%s11 + $0x6a0] sm:$0xff]
    %v7662 = vld [vmem:[%s11 + $0x6a8] sm:$0xff]
    %v7663 = vld [vmem:[%s11 + $0x6b0] sm:$0xff]
    %v7664 = vld [vmem:[%s11 + $0x6b8] sm:$0xff]
    %v7665 = vld [vmem:[%s11 + $0x6c0] sm:$0xff]
    %v7666 = vld [vmem:[%s11 + $0x6c8] sm:$0xff]
    %v7667 = vld [vmem:[%s11 + $0x6d0] sm:$0xff]
    %v7668 = vld [vmem:[%s11 + $0x6d8] sm:$0xff]
    %v7669 = vld [vmem:[%s11 + $0x6e0] sm:$0xff]
    %v7670 = vld [vmem:[%s11 + $0x6e8] sm:$0xff]
    %v7671 = vld [vmem:[%s11 + $0x6f0] sm:$0xff]
    %v7672 = vld [vmem:[%s11 + $0x6f8] sm:$0xff]
    %v7673 = vld [vmem:[%s12] sm:$0xf]
    %v7675 = vlaneseq
    %v7676 = vshrl.u32 %v7675, 7
    %v7677 = vsub.s32 0, %v7676
    %v7678 = vrot.slane %v7673, %v7677
    %v7679 = vlaneseq
    %v7680 = vshrl.u32 %v7679, 7
    %v7681 = vsub.s32 1, %v7680
    %v7682 = vrot.slane %v7673, %v7681
    %v7683 = vlaneseq
    %v7684 = vshrl.u32 %v7683, 7
    %v7685 = vsub.s32 2, %v7684
    %v7686 = vrot.slane %v7673, %v7685
    %v7687 = vlaneseq
    %v7688 = vshrl.u32 %v7687, 7
    %v7689 = vsub.s32 3, %v7688
    %v7690 = vrot.slane %v7673, %v7689
    %v7919 = vunpack.c.l.b16 %v7449
    %v7920 = vunpack.c.h.b16 %v7449
    %v7921 = vunpack.c.l.b16 %v7450
    %v7922 = vunpack.c.h.b16 %v7450
    %v7923 = vunpack.c.l.b16 %v7451
    %v7924 = vunpack.c.h.b16 %v7451
    %v7925 = vunpack.c.l.b16 %v7452
    %v7926 = vunpack.c.h.b16 %v7452
    %v7927 = vunpack.c.l.b16 %v7453
    %v7928 = vunpack.c.h.b16 %v7453
    %v7929 = vunpack.c.l.b16 %v7454
    %v7930 = vunpack.c.h.b16 %v7454
    %v7931 = vunpack.c.l.b16 %v7455
    %v7932 = vunpack.c.h.b16 %v7455
    %v7933 = vunpack.c.l.b16 %v7456
    %v7934 = vunpack.c.h.b16 %v7456
    %v7935 = vunpack.c.l.b16 %v7457
    %v7936 = vunpack.c.h.b16 %v7457
    %v7937 = vunpack.c.l.b16 %v7458
    %v7938 = vunpack.c.h.b16 %v7458
    %v7939 = vunpack.c.l.b16 %v7459
    %v7940 = vunpack.c.h.b16 %v7459
    %v7941 = vunpack.c.l.b16 %v7460
    %v7942 = vunpack.c.h.b16 %v7460
    %v7943 = vunpack.c.l.b16 %v7461
    %v7944 = vunpack.c.h.b16 %v7461
    %v7945 = vunpack.c.l.b16 %v7462
    %v7946 = vunpack.c.h.b16 %v7462
    %v7947 = vunpack.c.l.b16 %v7463
    %v7948 = vunpack.c.h.b16 %v7463
    %v7949 = vunpack.c.l.b16 %v7464
    %v7950 = vunpack.c.h.b16 %v7464
    %v7951 = vunpack.c.l.b16 %v7465
    %v7952 = vunpack.c.h.b16 %v7465
    %v7953 = vunpack.c.l.b16 %v7466
    %v7954 = vunpack.c.h.b16 %v7466
    %v7955 = vunpack.c.l.b16 %v7467
    %v7956 = vunpack.c.h.b16 %v7467
    %v7957 = vunpack.c.l.b16 %v7468
    %v7958 = vunpack.c.h.b16 %v7468
    %v7959 = vunpack.c.l.b16 %v7469
    %v7960 = vunpack.c.h.b16 %v7469
    %v7961 = vunpack.c.l.b16 %v7470
    %v7962 = vunpack.c.h.b16 %v7470
    %v7963 = vunpack.c.l.b16 %v7471
    %v7964 = vunpack.c.h.b16 %v7471
    %v7965 = vunpack.c.l.b16 %v7472
    %v7966 = vunpack.c.h.b16 %v7472
    %v7967 = vunpack.c.l.b16 %v7473
    %v7968 = vunpack.c.h.b16 %v7473
    %v7969 = vunpack.c.l.b16 %v7474
    %v7970 = vunpack.c.h.b16 %v7474
    %v7971 = vunpack.c.l.b16 %v7475
    %v7972 = vunpack.c.h.b16 %v7475
    %v7973 = vunpack.c.l.b16 %v7476
    %v7974 = vunpack.c.h.b16 %v7476
    %v7975 = vunpack.c.l.b16 %v7477
    %v7976 = vunpack.c.h.b16 %v7477
    %v7977 = vunpack.c.l.b16 %v7478
    %v7978 = vunpack.c.h.b16 %v7478
    %v7979 = vunpack.c.l.b16 %v7479
    %v7980 = vunpack.c.h.b16 %v7479
    %v7981 = vunpack.c.l.b16 %v7480
    %v7982 = vunpack.c.h.b16 %v7480
    %v7983 = vunpack.c.l.b16 %v7481
    %v7984 = vunpack.c.h.b16 %v7481
    %v7985 = vunpack.c.l.b16 %v7482
    %v7986 = vunpack.c.h.b16 %v7482
    %v7987 = vunpack.c.l.b16 %v7483
    %v7988 = vunpack.c.h.b16 %v7483
    %v7989 = vunpack.c.l.b16 %v7484
    %v7990 = vunpack.c.h.b16 %v7484
    %v7991 = vunpack.c.l.b16 %v7485
    %v7992 = vunpack.c.h.b16 %v7485
    %v7993 = vunpack.c.l.b16 %v7486
    %v7994 = vunpack.c.h.b16 %v7486
    %v7995 = vunpack.c.l.b16 %v7487
    %v7996 = vunpack.c.h.b16 %v7487
    %v7997 = vunpack.c.l.b16 %v7488
    %v7998 = vunpack.c.h.b16 %v7488
    %v7999 = vunpack.c.l.b16 %v7489
    %v8000 = vunpack.c.h.b16 %v7489
    %v8001 = vunpack.c.l.b16 %v7490
    %v8002 = vunpack.c.h.b16 %v7490
    %v8003 = vunpack.c.l.b16 %v7491
    %v8004 = vunpack.c.h.b16 %v7491
    %v8005 = vunpack.c.l.b16 %v7492
    %v8006 = vunpack.c.h.b16 %v7492
    %v8007 = vunpack.c.l.b16 %v7493
    %v8008 = vunpack.c.h.b16 %v7493
    %v8009 = vunpack.c.l.b16 %v7494
    %v8010 = vunpack.c.h.b16 %v7494
    %v8011 = vunpack.c.l.b16 %v7495
    %v8012 = vunpack.c.h.b16 %v7495
    %v8013 = vunpack.c.l.b16 %v7496
    %v8014 = vunpack.c.h.b16 %v7496
    %v8015 = vunpack.c.l.b16 %v7497
    %v8016 = vunpack.c.h.b16 %v7497
    %v8017 = vunpack.c.l.b16 %v7498
    %v8018 = vunpack.c.h.b16 %v7498
    %v8019 = vunpack.c.l.b16 %v7499
    %v8020 = vunpack.c.h.b16 %v7499
    %v8021 = vunpack.c.l.b16 %v7500
    %v8022 = vunpack.c.h.b16 %v7500
    %v8023 = vunpack.c.l.b16 %v7501
    %v8024 = vunpack.c.h.b16 %v7501
    %v8025 = vunpack.c.l.b16 %v7502
    %v8026 = vunpack.c.h.b16 %v7502
    %v8027 = vunpack.c.l.b16 %v7503
    %v8028 = vunpack.c.h.b16 %v7503
    %v8029 = vunpack.c.l.b16 %v7504
    %v8030 = vunpack.c.h.b16 %v7504
    %v8031 = vunpack.c.l.b16 %v7505
    %v8032 = vunpack.c.h.b16 %v7505
    %v8033 = vunpack.c.l.b16 %v7506
    %v8034 = vunpack.c.h.b16 %v7506
    %v8035 = vunpack.c.l.b16 %v7507
    %v8036 = vunpack.c.h.b16 %v7507
    %v8037 = vunpack.c.l.b16 %v7508
    %v8038 = vunpack.c.h.b16 %v7508
    %v8039 = vunpack.c.l.b16 %v7509
    %v8040 = vunpack.c.h.b16 %v7509
    %v8041 = vunpack.c.l.b16 %v7510
    %v8042 = vunpack.c.h.b16 %v7510
    %v8043 = vunpack.c.l.b16 %v7511
    %v8044 = vunpack.c.h.b16 %v7511
    %v8045 = vunpack.c.l.b16 %v7512
    %v8046 = vunpack.c.h.b16 %v7512
    %v8047 = vunpack.c.l.b16 %v7513
    %v8048 = vunpack.c.h.b16 %v7513
    %v8049 = vunpack.c.l.b16 %v7514
    %v8050 = vunpack.c.h.b16 %v7514
    %v8051 = vunpack.c.l.b16 %v7515
    %v8052 = vunpack.c.h.b16 %v7515
    %v8053 = vunpack.c.l.b16 %v7516
    %v8054 = vunpack.c.h.b16 %v7516
    %v8055 = vunpack.c.l.b16 %v7517
    %v8056 = vunpack.c.h.b16 %v7517
    %v8057 = vunpack.c.l.b16 %v7518
    %v8058 = vunpack.c.h.b16 %v7518
    %v8059 = vunpack.c.l.b16 %v7519
    %v8060 = vunpack.c.h.b16 %v7519
    %v8061 = vunpack.c.l.b16 %v7520
    %v8062 = vunpack.c.h.b16 %v7520
    %v8063 = vunpack.c.l.b16 %v7521
    %v8064 = vunpack.c.h.b16 %v7521
    %v8065 = vunpack.c.l.b16 %v7522
    %v8066 = vunpack.c.h.b16 %v7522
    %v8067 = vunpack.c.l.b16 %v7523
    %v8068 = vunpack.c.h.b16 %v7523
    %v8069 = vunpack.c.l.b16 %v7524
    %v8070 = vunpack.c.h.b16 %v7524
    %v8071 = vunpack.c.l.b16 %v7525
    %v8072 = vunpack.c.h.b16 %v7525
    %v8073 = vunpack.c.l.b16 %v7526
    %v8074 = vunpack.c.h.b16 %v7526
    %v8075 = vunpack.c.l.b16 %v7527
    %v8076 = vunpack.c.h.b16 %v7527
    %v8077 = vunpack.c.l.b16 %v7528
    %v8078 = vunpack.c.h.b16 %v7528
    %v8079 = vunpack.c.l.b16 %v7529
    %v8080 = vunpack.c.h.b16 %v7529
    %v8081 = vunpack.c.l.b16 %v7530
    %v8082 = vunpack.c.h.b16 %v7530
    %v8083 = vunpack.c.l.b16 %v7531
    %v8084 = vunpack.c.h.b16 %v7531
    %v8085 = vunpack.c.l.b16 %v7532
    %v8086 = vunpack.c.h.b16 %v7532
    %v8087 = vunpack.c.l.b16 %v7533
    %v8088 = vunpack.c.h.b16 %v7533
    %v8089 = vunpack.c.l.b16 %v7534
    %v8090 = vunpack.c.h.b16 %v7534
    %v8091 = vunpack.c.l.b16 %v7535
    %v8092 = vunpack.c.h.b16 %v7535
    %v8093 = vunpack.c.l.b16 %v7536
    %v8094 = vunpack.c.h.b16 %v7536
    %v8095 = vunpack.c.l.b16 %v7537
    %v8096 = vunpack.c.h.b16 %v7537
    %v8097 = vunpack.c.l.b16 %v7538
    %v8098 = vunpack.c.h.b16 %v7538
    %v8099 = vunpack.c.l.b16 %v7539
    %v8100 = vunpack.c.h.b16 %v7539
    %v8101 = vunpack.c.l.b16 %v7540
    %v8102 = vunpack.c.h.b16 %v7540
    %v8103 = vunpack.c.l.b16 %v7541
    %v8104 = vunpack.c.h.b16 %v7541
    %v8105 = vunpack.c.l.b16 %v7542
    %v8106 = vunpack.c.h.b16 %v7542
    %v8107 = vunpack.c.l.b16 %v7543
    %v8108 = vunpack.c.h.b16 %v7543
    %v8109 = vunpack.c.l.b16 %v7544
    %v8110 = vunpack.c.h.b16 %v7544
    %v8111 = vunpack.c.l.b16 %v7545
    %v8112 = vunpack.c.h.b16 %v7545
    %v8113 = vunpack.c.l.b16 %v7546
    %v8114 = vunpack.c.h.b16 %v7546
    %v8115 = vunpack.c.l.b16 %v7547
    %v8116 = vunpack.c.h.b16 %v7547
    %v8117 = vunpack.c.l.b16 %v7548
    %v8118 = vunpack.c.h.b16 %v7548
    %v8119 = vunpack.c.l.b16 %v7549
    %v8120 = vunpack.c.h.b16 %v7549
    %v8121 = vunpack.c.l.b16 %v7550
    %v8122 = vunpack.c.h.b16 %v7550
    %v8123 = vunpack.c.l.b16 %v7551
    %v8124 = vunpack.c.h.b16 %v7551
    %v8125 = vunpack.c.l.b16 %v7552
    %v8126 = vunpack.c.h.b16 %v7552
    %v8127 = vunpack.c.l.b16 %v7553
    %v8128 = vunpack.c.h.b16 %v7553
    %v8129 = vunpack.c.l.b16 %v7554
    %v8130 = vunpack.c.h.b16 %v7554
    %v8131 = vunpack.c.l.b16 %v7555
    %v8132 = vunpack.c.h.b16 %v7555
    %v8133 = vunpack.c.l.b16 %v7556
    %v8134 = vunpack.c.h.b16 %v7556
    %v8135 = vunpack.c.l.b16 %v7557
    %v8136 = vunpack.c.h.b16 %v7557
    %v8137 = vunpack.c.l.b16 %v7558
    %v8138 = vunpack.c.h.b16 %v7558
    %v8139 = vunpack.c.l.b16 %v7559
    %v8140 = vunpack.c.h.b16 %v7559
    %v8141 = vunpack.c.l.b16 %v7560
    %v8142 = vunpack.c.h.b16 %v7560
    %v8143 = vunpack.c.l.b16 %v7561
    %v8144 = vunpack.c.h.b16 %v7561
    %v8145 = vunpack.c.l.b16 %v7562
    %v8146 = vunpack.c.h.b16 %v7562
    %v8147 = vunpack.c.l.b16 %v7563
    %v8148 = vunpack.c.h.b16 %v7563
    %v8149 = vunpack.c.l.b16 %v7564
    %v8150 = vunpack.c.h.b16 %v7564
    %v8151 = vunpack.c.l.b16 %v7565
    %v8152 = vunpack.c.h.b16 %v7565
    %v8153 = vunpack.c.l.b16 %v7566
    %v8154 = vunpack.c.h.b16 %v7566
    %v8155 = vunpack.c.l.b16 %v7567
    %v8156 = vunpack.c.h.b16 %v7567
    %v8157 = vunpack.c.l.b16 %v7568
    %v8158 = vunpack.c.h.b16 %v7568
    %v8159 = vunpack.c.l.b16 %v7569
    %v8160 = vunpack.c.h.b16 %v7569
    %v8161 = vunpack.c.l.b16 %v7570
    %v8162 = vunpack.c.h.b16 %v7570
    %v8163 = vunpack.c.l.b16 %v7571
    %v8164 = vunpack.c.h.b16 %v7571
    %v8165 = vunpack.c.l.b16 %v7572
    %v8166 = vunpack.c.h.b16 %v7572
    %v8167 = vunpack.c.l.b16 %v7573
    %v8168 = vunpack.c.h.b16 %v7573
    %v8169 = vunpack.c.l.b16 %v7574
    %v8170 = vunpack.c.h.b16 %v7574
    %v8171 = vunpack.c.l.b16 %v7575
    %v8172 = vunpack.c.h.b16 %v7575
    %v8173 = vunpack.c.l.b16 %v7576
    %v8174 = vunpack.c.h.b16 %v7576
    %v8175 = vunpack.c.l.b16 %v7577
    %v8176 = vunpack.c.h.b16 %v7577
    %v8177 = vunpack.c.l.b16 %v7578
    %v8178 = vunpack.c.h.b16 %v7578
    %v8179 = vunpack.c.l.b16 %v7579
    %v8180 = vunpack.c.h.b16 %v7579
    %v8181 = vunpack.c.l.b16 %v7580
    %v8182 = vunpack.c.h.b16 %v7580
    %v8183 = vunpack.c.l.b16 %v7581
    %v8184 = vunpack.c.h.b16 %v7581
    %v8185 = vunpack.c.l.b16 %v7582
    %v8186 = vunpack.c.h.b16 %v7582
    %v8187 = vunpack.c.l.b16 %v7583
    %v8188 = vunpack.c.h.b16 %v7583
    %v8189 = vunpack.c.l.b16 %v7584
    %v8190 = vunpack.c.h.b16 %v7584
    %v8191 = vunpack.c.l.b16 %v7585
    %v8192 = vunpack.c.h.b16 %v7585
    %v8193 = vunpack.c.l.b16 %v7586
    %v8194 = vunpack.c.h.b16 %v7586
    %v8195 = vunpack.c.l.b16 %v7587
    %v8196 = vunpack.c.h.b16 %v7587
    %v8197 = vunpack.c.l.b16 %v7588
    %v8198 = vunpack.c.h.b16 %v7588
    %v8199 = vunpack.c.l.b16 %v7589
    %v8200 = vunpack.c.h.b16 %v7589
    %v8201 = vunpack.c.l.b16 %v7590
    %v8202 = vunpack.c.h.b16 %v7590
    %v8203 = vunpack.c.l.b16 %v7591
    %v8204 = vunpack.c.h.b16 %v7591
    %v8205 = vunpack.c.l.b16 %v7592
    %v8206 = vunpack.c.h.b16 %v7592
    %v8207 = vunpack.c.l.b16 %v7593
    %v8208 = vunpack.c.h.b16 %v7593
    %v8209 = vunpack.c.l.b16 %v7594
    %v8210 = vunpack.c.h.b16 %v7594
    %v8211 = vunpack.c.l.b16 %v7595
    %v8212 = vunpack.c.h.b16 %v7595
    %v8213 = vunpack.c.l.b16 %v7596
    %v8214 = vunpack.c.h.b16 %v7596
    %v8215 = vunpack.c.l.b16 %v7597
    %v8216 = vunpack.c.h.b16 %v7597
    %v8217 = vunpack.c.l.b16 %v7598
    %v8218 = vunpack.c.h.b16 %v7598
    %v8219 = vunpack.c.l.b16 %v7599
    %v8220 = vunpack.c.h.b16 %v7599
    %v8221 = vunpack.c.l.b16 %v7600
    %v8222 = vunpack.c.h.b16 %v7600
    %v8223 = vunpack.c.l.b16 %v7601
    %v8224 = vunpack.c.h.b16 %v7601
    %v8225 = vunpack.c.l.b16 %v7602
    %v8226 = vunpack.c.h.b16 %v7602
    %v8227 = vunpack.c.l.b16 %v7603
    %v8228 = vunpack.c.h.b16 %v7603
    %v8229 = vunpack.c.l.b16 %v7604
    %v8230 = vunpack.c.h.b16 %v7604
    %v8231 = vunpack.c.l.b16 %v7605
    %v8232 = vunpack.c.h.b16 %v7605
    %v8233 = vunpack.c.l.b16 %v7606
    %v8234 = vunpack.c.h.b16 %v7606
    %v8235 = vunpack.c.l.b16 %v7607
    %v8236 = vunpack.c.h.b16 %v7607
    %v8237 = vunpack.c.l.b16 %v7608
    %v8238 = vunpack.c.h.b16 %v7608
    %v8239 = vunpack.c.l.b16 %v7609
    %v8240 = vunpack.c.h.b16 %v7609
    %v8241 = vunpack.c.l.b16 %v7610
    %v8242 = vunpack.c.h.b16 %v7610
    %v8243 = vunpack.c.l.b16 %v7611
    %v8244 = vunpack.c.h.b16 %v7611
    %v8245 = vunpack.c.l.b16 %v7612
    %v8246 = vunpack.c.h.b16 %v7612
    %v8247 = vunpack.c.l.b16 %v7613
    %v8248 = vunpack.c.h.b16 %v7613
    %v8249 = vunpack.c.l.b16 %v7614
    %v8250 = vunpack.c.h.b16 %v7614
    %v8251 = vunpack.c.l.b16 %v7615
    %v8252 = vunpack.c.h.b16 %v7615
    %v8253 = vunpack.c.l.b16 %v7616
    %v8254 = vunpack.c.h.b16 %v7616
    %v8255 = vunpack.c.l.b16 %v7617
    %v8256 = vunpack.c.h.b16 %v7617
    %v8257 = vunpack.c.l.b16 %v7618
    %v8258 = vunpack.c.h.b16 %v7618
    %v8259 = vunpack.c.l.b16 %v7619
    %v8260 = vunpack.c.h.b16 %v7619
    %v8261 = vunpack.c.l.b16 %v7620
    %v8262 = vunpack.c.h.b16 %v7620
    %v8263 = vunpack.c.l.b16 %v7621
    %v8264 = vunpack.c.h.b16 %v7621
    %v8265 = vunpack.c.l.b16 %v7622
    %v8266 = vunpack.c.h.b16 %v7622
    %v8267 = vunpack.c.l.b16 %v7623
    %v8268 = vunpack.c.h.b16 %v7623
    %v8269 = vunpack.c.l.b16 %v7624
    %v8270 = vunpack.c.h.b16 %v7624
    %v8271 = vunpack.c.l.b16 %v7625
    %v8272 = vunpack.c.h.b16 %v7625
    %v8273 = vunpack.c.l.b16 %v7626
    %v8274 = vunpack.c.h.b16 %v7626
    %v8275 = vunpack.c.l.b16 %v7627
    %v8276 = vunpack.c.h.b16 %v7627
    %v8277 = vunpack.c.l.b16 %v7628
    %v8278 = vunpack.c.h.b16 %v7628
    %v8279 = vunpack.c.l.b16 %v7629
    %v8280 = vunpack.c.h.b16 %v7629
    %v8281 = vunpack.c.l.b16 %v7630
    %v8282 = vunpack.c.h.b16 %v7630
    %v8283 = vunpack.c.l.b16 %v7631
    %v8284 = vunpack.c.h.b16 %v7631
    %v8285 = vunpack.c.l.b16 %v7632
    %v8286 = vunpack.c.h.b16 %v7632
    %v8287 = vunpack.c.l.b16 %v7633
    %v8288 = vunpack.c.h.b16 %v7633
    %v8289 = vunpack.c.l.b16 %v7634
    %v8290 = vunpack.c.h.b16 %v7634
    %v8291 = vunpack.c.l.b16 %v7635
    %v8292 = vunpack.c.h.b16 %v7635
    %v8293 = vunpack.c.l.b16 %v7636
    %v8294 = vunpack.c.h.b16 %v7636
    %v8295 = vunpack.c.l.b16 %v7637
    %v8296 = vunpack.c.h.b16 %v7637
    %v8297 = vunpack.c.l.b16 %v7638
    %v8298 = vunpack.c.h.b16 %v7638
    %v8299 = vunpack.c.l.b16 %v7639
    %v8300 = vunpack.c.h.b16 %v7639
    %v8301 = vunpack.c.l.b16 %v7640
    %v8302 = vunpack.c.h.b16 %v7640
    %v8303 = vunpack.c.l.b16 %v7641
    %v8304 = vunpack.c.h.b16 %v7641
    %v8305 = vunpack.c.l.b16 %v7642
    %v8306 = vunpack.c.h.b16 %v7642
    %v8307 = vunpack.c.l.b16 %v7643
    %v8308 = vunpack.c.h.b16 %v7643
    %v8309 = vunpack.c.l.b16 %v7644
    %v8310 = vunpack.c.h.b16 %v7644
    %v8311 = vunpack.c.l.b16 %v7645
    %v8312 = vunpack.c.h.b16 %v7645
    %v8313 = vunpack.c.l.b16 %v7646
    %v8314 = vunpack.c.h.b16 %v7646
    %v8315 = vunpack.c.l.b16 %v7647
    %v8316 = vunpack.c.h.b16 %v7647
    %v8317 = vunpack.c.l.b16 %v7648
    %v8318 = vunpack.c.h.b16 %v7648
    %v8319 = vunpack.c.l.b16 %v7649
    %v8320 = vunpack.c.h.b16 %v7649
    %v8321 = vunpack.c.l.b16 %v7650
    %v8322 = vunpack.c.h.b16 %v7650
    %v8323 = vunpack.c.l.b16 %v7651
    %v8324 = vunpack.c.h.b16 %v7651
    %v8325 = vunpack.c.l.b16 %v7652
    %v8326 = vunpack.c.h.b16 %v7652
    %v8327 = vunpack.c.l.b16 %v7653
    %v8328 = vunpack.c.h.b16 %v7653
    %v8329 = vunpack.c.l.b16 %v7654
    %v8330 = vunpack.c.h.b16 %v7654
    %v8331 = vunpack.c.l.b16 %v7655
    %v8332 = vunpack.c.h.b16 %v7655
    %v8333 = vunpack.c.l.b16 %v7656
    %v8334 = vunpack.c.h.b16 %v7656
    %v8335 = vunpack.c.l.b16 %v7657
    %v8336 = vunpack.c.h.b16 %v7657
    %v8337 = vunpack.c.l.b16 %v7658
    %v8338 = vunpack.c.h.b16 %v7658
    %v8339 = vunpack.c.l.b16 %v7659
    %v8340 = vunpack.c.h.b16 %v7659
    %v8341 = vunpack.c.l.b16 %v7660
    %v8342 = vunpack.c.h.b16 %v7660
    %v8343 = vunpack.c.l.b16 %v7661
    %v8344 = vunpack.c.h.b16 %v7661
    %v8345 = vunpack.c.l.b16 %v7662
    %v8346 = vunpack.c.h.b16 %v7662
    %v8347 = vunpack.c.l.b16 %v7663
    %v8348 = vunpack.c.h.b16 %v7663
    %v8349 = vunpack.c.l.b16 %v7664
    %v8350 = vunpack.c.h.b16 %v7664
    %v8351 = vunpack.c.l.b16 %v7665
    %v8352 = vunpack.c.h.b16 %v7665
    %v8353 = vunpack.c.l.b16 %v7666
    %v8354 = vunpack.c.h.b16 %v7666
    %v8355 = vunpack.c.l.b16 %v7667
    %v8356 = vunpack.c.h.b16 %v7667
    %v8357 = vunpack.c.l.b16 %v7668
    %v8358 = vunpack.c.h.b16 %v7668
    %v8359 = vunpack.c.l.b16 %v7669
    %v8360 = vunpack.c.h.b16 %v7669
    %v8361 = vunpack.c.l.b16 %v7670
    %v8362 = vunpack.c.h.b16 %v7670
    %v8363 = vunpack.c.l.b16 %v7671
    %v8364 = vunpack.c.h.b16 %v7671
    %v8365 = vunpack.c.l.b16 %v7672
    %v8366 = vunpack.c.h.b16 %v7672
    %v8367 = vpack.c.b16 %v7923, %v7919
    %v8368 = vpack.c.b16 %v7924, %v7920
    %v8369 = vpack.c.b16 %v7925, %v7921
    %v8370 = vpack.c.b16 %v7926, %v7922
    %v8371 = vpack.c.b16 %v7931, %v7927
    %v8372 = vpack.c.b16 %v7932, %v7928
    %v8373 = vpack.c.b16 %v7933, %v7929
    %v8374 = vpack.c.b16 %v7934, %v7930
    %v8375 = vpack.c.b16 %v7939, %v7935
    %v8376 = vpack.c.b16 %v7940, %v7936
    %v8377 = vpack.c.b16 %v7941, %v7937
    %v8378 = vpack.c.b16 %v7942, %v7938
    %v8379 = vpack.c.b16 %v7947, %v7943
    %v8380 = vpack.c.b16 %v7948, %v7944
    %v8381 = vpack.c.b16 %v7949, %v7945
    %v8382 = vpack.c.b16 %v7950, %v7946
    %v8383 = vpack.c.b16 %v7955, %v7951
    %v8384 = vpack.c.b16 %v7956, %v7952
    %v8385 = vpack.c.b16 %v7957, %v7953
    %v8386 = vpack.c.b16 %v7958, %v7954
    %v8387 = vpack.c.b16 %v7963, %v7959
    %v8388 = vpack.c.b16 %v7964, %v7960
    %v8389 = vpack.c.b16 %v7965, %v7961
    %v8390 = vpack.c.b16 %v7966, %v7962
    %v8391 = vpack.c.b16 %v7971, %v7967
    %v8392 = vpack.c.b16 %v7972, %v7968
    %v8393 = vpack.c.b16 %v7973, %v7969
    %v8394 = vpack.c.b16 %v7974, %v7970
    %v8395 = vpack.c.b16 %v7979, %v7975
    %v8396 = vpack.c.b16 %v7980, %v7976
    %v8397 = vpack.c.b16 %v7981, %v7977
    %v8398 = vpack.c.b16 %v7982, %v7978
    %v8399 = vpack.c.b16 %v7987, %v7983
    %v8400 = vpack.c.b16 %v7988, %v7984
    %v8401 = vpack.c.b16 %v7989, %v7985
    %v8402 = vpack.c.b16 %v7990, %v7986
    %v8403 = vpack.c.b16 %v7995, %v7991
    %v8404 = vpack.c.b16 %v7996, %v7992
    %v8405 = vpack.c.b16 %v7997, %v7993
    %v8406 = vpack.c.b16 %v7998, %v7994
    %v8407 = vpack.c.b16 %v8003, %v7999
    %v8408 = vpack.c.b16 %v8004, %v8000
    %v8409 = vpack.c.b16 %v8005, %v8001
    %v8410 = vpack.c.b16 %v8006, %v8002
    %v8411 = vpack.c.b16 %v8011, %v8007
    %v8412 = vpack.c.b16 %v8012, %v8008
    %v8413 = vpack.c.b16 %v8013, %v8009
    %v8414 = vpack.c.b16 %v8014, %v8010
    %v8415 = vpack.c.b16 %v8019, %v8015
    %v8416 = vpack.c.b16 %v8020, %v8016
    %v8417 = vpack.c.b16 %v8021, %v8017
    %v8418 = vpack.c.b16 %v8022, %v8018
    %v8419 = vpack.c.b16 %v8027, %v8023
    %v8420 = vpack.c.b16 %v8028, %v8024
    %v8421 = vpack.c.b16 %v8029, %v8025
    %v8422 = vpack.c.b16 %v8030, %v8026
    %v8423 = vpack.c.b16 %v8035, %v8031
    %v8424 = vpack.c.b16 %v8036, %v8032
    %v8425 = vpack.c.b16 %v8037, %v8033
    %v8426 = vpack.c.b16 %v8038, %v8034
    %v8427 = vpack.c.b16 %v8043, %v8039
    %v8428 = vpack.c.b16 %v8044, %v8040
    %v8429 = vpack.c.b16 %v8045, %v8041
    %v8430 = vpack.c.b16 %v8046, %v8042
    %v8431 = vpack.c.b16 %v8051, %v8047
    %v8432 = vpack.c.b16 %v8052, %v8048
    %v8433 = vpack.c.b16 %v8053, %v8049
    %v8434 = vpack.c.b16 %v8054, %v8050
    %v8435 = vpack.c.b16 %v8059, %v8055
    %v8436 = vpack.c.b16 %v8060, %v8056
    %v8437 = vpack.c.b16 %v8061, %v8057
    %v8438 = vpack.c.b16 %v8062, %v8058
    %v8439 = vpack.c.b16 %v8067, %v8063
    %v8440 = vpack.c.b16 %v8068, %v8064
    %v8441 = vpack.c.b16 %v8069, %v8065
    %v8442 = vpack.c.b16 %v8070, %v8066
    %v8443 = vpack.c.b16 %v8075, %v8071
    %v8444 = vpack.c.b16 %v8076, %v8072
    %v8445 = vpack.c.b16 %v8077, %v8073
    %v8446 = vpack.c.b16 %v8078, %v8074
    %v8447 = vpack.c.b16 %v8083, %v8079
    %v8448 = vpack.c.b16 %v8084, %v8080
    %v8449 = vpack.c.b16 %v8085, %v8081
    %v8450 = vpack.c.b16 %v8086, %v8082
    %v8451 = vpack.c.b16 %v8091, %v8087
    %v8452 = vpack.c.b16 %v8092, %v8088
    %v8453 = vpack.c.b16 %v8093, %v8089
    %v8454 = vpack.c.b16 %v8094, %v8090
    %v8455 = vpack.c.b16 %v8099, %v8095
    %v8456 = vpack.c.b16 %v8100, %v8096
    %v8457 = vpack.c.b16 %v8101, %v8097
    %v8458 = vpack.c.b16 %v8102, %v8098
    %v8459 = vpack.c.b16 %v8107, %v8103
    %v8460 = vpack.c.b16 %v8108, %v8104
    %v8461 = vpack.c.b16 %v8109, %v8105
    %v8462 = vpack.c.b16 %v8110, %v8106
    %v8463 = vpack.c.b16 %v8115, %v8111
    %v8464 = vpack.c.b16 %v8116, %v8112
    %v8465 = vpack.c.b16 %v8117, %v8113
    %v8466 = vpack.c.b16 %v8118, %v8114
    %v8467 = vpack.c.b16 %v8123, %v8119
    %v8468 = vpack.c.b16 %v8124, %v8120
    %v8469 = vpack.c.b16 %v8125, %v8121
    %v8470 = vpack.c.b16 %v8126, %v8122
    %v8471 = vpack.c.b16 %v8131, %v8127
    %v8472 = vpack.c.b16 %v8132, %v8128
    %v8473 = vpack.c.b16 %v8133, %v8129
    %v8474 = vpack.c.b16 %v8134, %v8130
    %v8475 = vpack.c.b16 %v8139, %v8135
    %v8476 = vpack.c.b16 %v8140, %v8136
    %v8477 = vpack.c.b16 %v8141, %v8137
    %v8478 = vpack.c.b16 %v8142, %v8138
    %v8479 = vpack.c.b16 %v8147, %v8143
    %v8480 = vpack.c.b16 %v8148, %v8144
    %v8481 = vpack.c.b16 %v8149, %v8145
    %v8482 = vpack.c.b16 %v8150, %v8146
    %v8483 = vpack.c.b16 %v8155, %v8151
    %v8484 = vpack.c.b16 %v8156, %v8152
    %v8485 = vpack.c.b16 %v8157, %v8153
    %v8486 = vpack.c.b16 %v8158, %v8154
    %v8487 = vpack.c.b16 %v8163, %v8159
    %v8488 = vpack.c.b16 %v8164, %v8160
    %v8489 = vpack.c.b16 %v8165, %v8161
    %v8490 = vpack.c.b16 %v8166, %v8162
    %v8491 = vpack.c.b16 %v8171, %v8167
    %v8492 = vpack.c.b16 %v8172, %v8168
    %v8493 = vpack.c.b16 %v8173, %v8169
    %v8494 = vpack.c.b16 %v8174, %v8170
    %v8495 = vpack.c.b16 %v8179, %v8175
    %v8496 = vpack.c.b16 %v8180, %v8176
    %v8497 = vpack.c.b16 %v8181, %v8177
    %v8498 = vpack.c.b16 %v8182, %v8178
    %v8499 = vpack.c.b16 %v8187, %v8183
    %v8500 = vpack.c.b16 %v8188, %v8184
    %v8501 = vpack.c.b16 %v8189, %v8185
    %v8502 = vpack.c.b16 %v8190, %v8186
    %v8503 = vpack.c.b16 %v8195, %v8191
    %v8504 = vpack.c.b16 %v8196, %v8192
    %v8505 = vpack.c.b16 %v8197, %v8193
    %v8506 = vpack.c.b16 %v8198, %v8194
    %v8507 = vpack.c.b16 %v8203, %v8199
    %v8508 = vpack.c.b16 %v8204, %v8200
    %v8509 = vpack.c.b16 %v8205, %v8201
    %v8510 = vpack.c.b16 %v8206, %v8202
    %v8511 = vpack.c.b16 %v8211, %v8207
    %v8512 = vpack.c.b16 %v8212, %v8208
    %v8513 = vpack.c.b16 %v8213, %v8209
    %v8514 = vpack.c.b16 %v8214, %v8210
    %v8515 = vpack.c.b16 %v8219, %v8215
    %v8516 = vpack.c.b16 %v8220, %v8216
    %v8517 = vpack.c.b16 %v8221, %v8217
    %v8518 = vpack.c.b16 %v8222, %v8218
    %v8519 = vpack.c.b16 %v8227, %v8223
    %v8520 = vpack.c.b16 %v8228, %v8224
    %v8521 = vpack.c.b16 %v8229, %v8225
    %v8522 = vpack.c.b16 %v8230, %v8226
    %v8523 = vpack.c.b16 %v8235, %v8231
    %v8524 = vpack.c.b16 %v8236, %v8232
    %v8525 = vpack.c.b16 %v8237, %v8233
    %v8526 = vpack.c.b16 %v8238, %v8234
    %v8527 = vpack.c.b16 %v8243, %v8239
    %v8528 = vpack.c.b16 %v8244, %v8240
    %v8529 = vpack.c.b16 %v8245, %v8241
    %v8530 = vpack.c.b16 %v8246, %v8242
    %v8531 = vpack.c.b16 %v8251, %v8247
    %v8532 = vpack.c.b16 %v8252, %v8248
    %v8533 = vpack.c.b16 %v8253, %v8249
    %v8534 = vpack.c.b16 %v8254, %v8250
    %v8535 = vpack.c.b16 %v8259, %v8255
    %v8536 = vpack.c.b16 %v8260, %v8256
    %v8537 = vpack.c.b16 %v8261, %v8257
    %v8538 = vpack.c.b16 %v8262, %v8258
    %v8539 = vpack.c.b16 %v8267, %v8263
    %v8540 = vpack.c.b16 %v8268, %v8264
    %v8541 = vpack.c.b16 %v8269, %v8265
    %v8542 = vpack.c.b16 %v8270, %v8266
    %v8543 = vpack.c.b16 %v8275, %v8271
    %v8544 = vpack.c.b16 %v8276, %v8272
    %v8545 = vpack.c.b16 %v8277, %v8273
    %v8546 = vpack.c.b16 %v8278, %v8274
    %v8547 = vpack.c.b16 %v8283, %v8279
    %v8548 = vpack.c.b16 %v8284, %v8280
    %v8549 = vpack.c.b16 %v8285, %v8281
    %v8550 = vpack.c.b16 %v8286, %v8282
    %v8551 = vpack.c.b16 %v8291, %v8287
    %v8552 = vpack.c.b16 %v8292, %v8288
    %v8553 = vpack.c.b16 %v8293, %v8289
    %v8554 = vpack.c.b16 %v8294, %v8290
    %v8555 = vpack.c.b16 %v8299, %v8295
    %v8556 = vpack.c.b16 %v8300, %v8296
    %v8557 = vpack.c.b16 %v8301, %v8297
    %v8558 = vpack.c.b16 %v8302, %v8298
    %v8559 = vpack.c.b16 %v8307, %v8303
    %v8560 = vpack.c.b16 %v8308, %v8304
    %v8561 = vpack.c.b16 %v8309, %v8305
    %v8562 = vpack.c.b16 %v8310, %v8306
    %v8563 = vpack.c.b16 %v8315, %v8311
    %v8564 = vpack.c.b16 %v8316, %v8312
    %v8565 = vpack.c.b16 %v8317, %v8313
    %v8566 = vpack.c.b16 %v8318, %v8314
    %v8567 = vpack.c.b16 %v8323, %v8319
    %v8568 = vpack.c.b16 %v8324, %v8320
    %v8569 = vpack.c.b16 %v8325, %v8321
    %v8570 = vpack.c.b16 %v8326, %v8322
    %v8571 = vpack.c.b16 %v8331, %v8327
    %v8572 = vpack.c.b16 %v8332, %v8328
    %v8573 = vpack.c.b16 %v8333, %v8329
    %v8574 = vpack.c.b16 %v8334, %v8330
    %v8575 = vpack.c.b16 %v8339, %v8335
    %v8576 = vpack.c.b16 %v8340, %v8336
    %v8577 = vpack.c.b16 %v8341, %v8337
    %v8578 = vpack.c.b16 %v8342, %v8338
    %v8579 = vpack.c.b16 %v8347, %v8343
    %v8580 = vpack.c.b16 %v8348, %v8344
    %v8581 = vpack.c.b16 %v8349, %v8345
    %v8582 = vpack.c.b16 %v8350, %v8346
    %v8583 = vpack.c.b16 %v8355, %v8351
    %v8584 = vpack.c.b16 %v8356, %v8352
    %v8585 = vpack.c.b16 %v8357, %v8353
    %v8586 = vpack.c.b16 %v8358, %v8354
    %v8587 = vpack.c.b16 %v8363, %v8359
    %v8588 = vpack.c.b16 %v8364, %v8360
    %v8589 = vpack.c.b16 %v8365, %v8361
    %v8590 = vpack.c.b16 %v8366, %v8362
    %8815 = vmatprep.subr.bf16.mxu0 %v8368
    %8816 = vmatpush1.bf16.msra.mxu0 %v8367
    %8817 = vmatprep.subr.bf16.mxu0 %v8372
    %8818 = vmatpush1.bf16.msra.mxu0 %v8371
    %8819 = vmatprep.subr.bf16.mxu0 %v8376
    %8820 = vmatpush1.bf16.msra.mxu0 %v8375
    %8821 = vmatprep.subr.bf16.mxu0 %v8380
    %8822 = vmatpush1.bf16.msra.mxu0 %v8379
    %8823 = vmatprep.subr.bf16.mxu0 %v8384
    %8824 = vmatpush1.bf16.msra.mxu0 %v8383
    %8825 = vmatprep.subr.bf16.mxu0 %v8388
    %8826 = vmatpush1.bf16.msra.mxu0 %v8387
    %8827 = vmatprep.subr.bf16.mxu0 %v8392
    %8828 = vmatpush1.bf16.msra.mxu0 %v8391
    %8829 = vmatprep.subr.bf16.mxu0 %v8396
    %8830 = vmatpush1.bf16.msra.mxu0 %v8395
    %8831 = vmatprep.subr.bf16.mxu0 %v8400
    %8832 = vmatpush1.bf16.msra.mxu0 %v8399
    %8833 = vmatprep.subr.bf16.mxu0 %v8404
    %8834 = vmatpush1.bf16.msra.mxu0 %v8403
    %8835 = vmatprep.subr.bf16.mxu0 %v8408
    %8836 = vmatpush1.bf16.msra.mxu0 %v8407
    %8837 = vmatprep.subr.bf16.mxu0 %v8412
    %8838 = vmatpush1.bf16.msra.mxu0 %v8411
    %8839 = vmatprep.subr.bf16.mxu0 %v8416
    %8840 = vmatpush1.bf16.msra.mxu0 %v8415
    %8841 = vmatprep.subr.bf16.mxu0 %v8420
    %8842 = vmatpush1.bf16.msra.mxu0 %v8419
    %8843 = vmatprep.subr.bf16.mxu0 %v8424
    %8844 = vmatpush1.bf16.msra.mxu0 %v8423
    %8845 = vmatprep.subr.bf16.mxu0 %v8428
    %8846 = vmatpush1.bf16.msra.mxu0 %v8427
    %8847 = vmatprep.mubr.bf16.mxu0 %v7443
    %8848 = vmatmul.mubr.bf16.gmra.mrb[0].mxu0 %v7442
    %v8849 = vpop.f32.mrb[0].mxu0
    %v8850 = vadd.f32 %v7678, %v8849
    %v8851 = vpop.f32.mrb[0].mxu0
    %v8852 = vadd.f32 %v7682, %v8851
    %v8853 = vpop.f32.mrb[0].mxu0
    %v8854 = vpop.f32.mrb[0].mxu0
    %8855 = vdwg.mxu0
    %8856 = vmatprep.subr.bf16.mxu0 %v8432
    %8857 = vmatpush1.bf16.msra.mxu0 %v8431
    %8858 = vmatprep.subr.bf16.mxu0 %v8436
    %8859 = vmatpush1.bf16.msra.mxu0 %v8435
    %8860 = vmatprep.subr.bf16.mxu0 %v8440
    %8861 = vmatpush1.bf16.msra.mxu0 %v8439
    %8862 = vmatprep.subr.bf16.mxu0 %v8444
    %8863 = vmatpush1.bf16.msra.mxu0 %v8443
    %8864 = vmatprep.subr.bf16.mxu0 %v8448
    %8865 = vmatpush1.bf16.msra.mxu0 %v8447
    %8866 = vmatprep.subr.bf16.mxu0 %v8452
    %8867 = vmatpush1.bf16.msra.mxu0 %v8451
    %8868 = vmatprep.subr.bf16.mxu0 %v8456
    %8869 = vmatpush1.bf16.msra.mxu0 %v8455
    %8870 = vmatprep.subr.bf16.mxu0 %v8460
    %8871 = vmatpush1.bf16.msra.mxu0 %v8459
    %8872 = vmatprep.subr.bf16.mxu0 %v8464
    %8873 = vmatpush1.bf16.msra.mxu0 %v8463
    %8874 = vmatprep.subr.bf16.mxu0 %v8468
    %8875 = vmatpush1.bf16.msra.mxu0 %v8467
    %8876 = vmatprep.subr.bf16.mxu0 %v8472
    %8877 = vmatpush1.bf16.msra.mxu0 %v8471
    %8878 = vmatprep.subr.bf16.mxu0 %v8476
    %8879 = vmatpush1.bf16.msra.mxu0 %v8475
    %8880 = vmatprep.subr.bf16.mxu0 %v8480
    %8881 = vmatpush1.bf16.msra.mxu0 %v8479
    %8882 = vmatprep.subr.bf16.mxu0 %v8484
    %8883 = vmatpush1.bf16.msra.mxu0 %v8483
    %8884 = vmatprep.subr.bf16.mxu0 %v8488
    %8885 = vmatpush1.bf16.msra.mxu0 %v8487
    %8886 = vmatprep.subr.bf16.mxu0 %v8492
    %8887 = vmatpush1.bf16.msra.mxu0 %v8491
    %8888 = vmatprep.mubr.bf16.mxu0 %v7445
    %8889 = vmatmul.mubr.bf16.gmra.mrb[0].mxu0 %v7444
    %v8890 = vpop.f32.mrb[0].mxu0
    %v8891 = vadd.f32 %v8850, %v8890
    %v8892 = vpop.f32.mrb[0].mxu0
    %v8893 = vadd.f32 %v8852, %v8892
    %v8894 = vpop.f32.mrb[0].mxu0
    %v8895 = vpop.f32.mrb[0].mxu0
    %8896 = vdwg.mxu0
    %8897 = vmatprep.subr.bf16.mxu0 %v8496
    %8898 = vmatpush1.bf16.msra.mxu0 %v8495
    %8899 = vmatprep.subr.bf16.mxu0 %v8500
    %8900 = vmatpush1.bf16.msra.mxu0 %v8499
    %8901 = vmatprep.subr.bf16.mxu0 %v8504
    %8902 = vmatpush1.bf16.msra.mxu0 %v8503
    %8903 = vmatprep.subr.bf16.mxu0 %v8508
    %8904 = vmatpush1.bf16.msra.mxu0 %v8507
    %8905 = vmatprep.subr.bf16.mxu0 %v8512
    %8906 = vmatpush1.bf16.msra.mxu0 %v8511
    %8907 = vmatprep.subr.bf16.mxu0 %v8516
    %8908 = vmatpush1.bf16.msra.mxu0 %v8515
    %8909 = vmatprep.subr.bf16.mxu0 %v8520
    %8910 = vmatpush1.bf16.msra.mxu0 %v8519
    %8911 = vmatprep.subr.bf16.mxu0 %v8524
    %8912 = vmatpush1.bf16.msra.mxu0 %v8523
    %8913 = vmatprep.subr.bf16.mxu0 %v8528
    %8914 = vmatpush1.bf16.msra.mxu0 %v8527
    %8915 = vmatprep.subr.bf16.mxu0 %v8532
    %8916 = vmatpush1.bf16.msra.mxu0 %v8531
    %8917 = vmatprep.subr.bf16.mxu0 %v8536
    %8918 = vmatpush1.bf16.msra.mxu0 %v8535
    %8919 = vmatprep.subr.bf16.mxu0 %v8540
    %8920 = vmatpush1.bf16.msra.mxu0 %v8539
    %8921 = vmatprep.subr.bf16.mxu0 %v8544
    %8922 = vmatpush1.bf16.msra.mxu0 %v8543
    %8923 = vmatprep.subr.bf16.mxu0 %v8548
    %8924 = vmatpush1.bf16.msra.mxu0 %v8547
    %8925 = vmatprep.subr.bf16.mxu0 %v8552
    %8926 = vmatpush1.bf16.msra.mxu0 %v8551
    %8927 = vmatprep.subr.bf16.mxu0 %v8556
    %8928 = vmatpush1.bf16.msra.mxu0 %v8555
    %8929 = vmatprep.mubr.bf16.mxu0 %v7447
    %8930 = vmatmul.mubr.bf16.gmra.mrb[0].mxu0 %v7446
    %v8931 = vpop.f32.mrb[0].mxu0
    %v8932 = vadd.f32 %v8891, %v8931
    %v8933 = vpop.f32.mrb[0].mxu0
    %v8934 = vadd.f32 %v8893, %v8933
    %v8935 = vpop.f32.mrb[0].mxu0
    %v8936 = vpop.f32.mrb[0].mxu0
    %8937 = vdwg.mxu0
    %8938 = vmatprep.subr.bf16.mxu0 %v8560
    %8939 = vmatpush1.bf16.msra.mxu0 %v8559
    %8940 = vmatprep.subr.bf16.mxu0 %v8564
    %8941 = vmatpush1.bf16.msra.mxu0 %v8563
    %8942 = vmatprep.subr.bf16.mxu0 %v8568
    %8943 = vmatpush1.bf16.msra.mxu0 %v8567
    %8944 = vmatprep.subr.bf16.mxu0 %v8572
    %8945 = vmatpush1.bf16.msra.mxu0 %v8571
    %8946 = vmatprep.subr.bf16.mxu0 %v8576
    %8947 = vmatpush1.bf16.msra.mxu0 %v8575
    %8948 = vmatprep.subr.bf16.mxu0 %v8580
    %8949 = vmatpush1.bf16.msra.mxu0 %v8579
    %8950 = vmatprep.subr.bf16.mxu0 %v8584
    %8951 = vmatpush1.bf16.msra.mxu0 %v8583
    %8952 = vmatprep.subr.bf16.mxu0 %v8588
    %8953 = vmatpush1.bf16.msra.mxu0 %v8587
    %8954 = vmatprep.subr.bf16.mxu0 0
    %8955 = vmatpush1.bf16.msra.mxu0 0
    %8956 = vmatprep.subr.bf16.mxu0 0
    %8957 = vmatpush1.bf16.msra.mxu0 0
    %8958 = vmatprep.subr.bf16.mxu0 0
    %8959 = vmatpush1.bf16.msra.mxu0 0
    %8960 = vmatprep.subr.bf16.mxu0 0
    %8961 = vmatpush1.bf16.msra.mxu0 0
    %8962 = vmatprep.subr.bf16.mxu0 0
    %8963 = vmatpush1.bf16.msra.mxu0 0
    %8964 = vmatprep.subr.bf16.mxu0 0
    %8965 = vmatpush1.bf16.msra.mxu0 0
    %8966 = vmatprep.subr.bf16.mxu0 0
    %8967 = vmatpush1.bf16.msra.mxu0 0
    %8968 = vmatprep.subr.bf16.mxu0 0
    %8969 = vmatpush1.bf16.msra.mxu0 0
    %8970 = vmatprep.mubr.bf16.mxu0 0
    %8971 = vmatmul.mubr.bf16.gmra.mrb[0].mxu0 %v7448
    %v8972 = vpop.f32.mrb[0].mxu0
    %v8973 = vadd.f32 %v8932, %v8972
    %v8974 = vpop.f32.mrb[0].mxu0
    %v8975 = vadd.f32 %v8934, %v8974
    %v8976 = vpop.f32.mrb[0].mxu0
    %v8977 = vpop.f32.mrb[0].mxu0
    %8978 = vdwg.mxu0
    %8979 = vmatprep.subr.bf16.mxu0 %v8370
    %8980 = vmatpush1.bf16.msra.mxu0 %v8369
    %8981 = vmatprep.subr.bf16.mxu0 %v8374
    %8982 = vmatpush1.bf16.msra.mxu0 %v8373
    %8983 = vmatprep.subr.bf16.mxu0 %v8378
    %8984 = vmatpush1.bf16.msra.mxu0 %v8377
    %8985 = vmatprep.subr.bf16.mxu0 %v8382
    %8986 = vmatpush1.bf16.msra.mxu0 %v8381
    %8987 = vmatprep.subr.bf16.mxu0 %v8386
    %8988 = vmatpush1.bf16.msra.mxu0 %v8385
    %8989 = vmatprep.subr.bf16.mxu0 %v8390
    %8990 = vmatpush1.bf16.msra.mxu0 %v8389
    %8991 = vmatprep.subr.bf16.mxu0 %v8394
    %8992 = vmatpush1.bf16.msra.mxu0 %v8393
    %8993 = vmatprep.subr.bf16.mxu0 %v8398
    %8994 = vmatpush1.bf16.msra.mxu0 %v8397
    %8995 = vmatprep.subr.bf16.mxu0 %v8402
    %8996 = vmatpush1.bf16.msra.mxu0 %v8401
    %8997 = vmatprep.subr.bf16.mxu0 %v8406
    %8998 = vmatpush1.bf16.msra.mxu0 %v8405
    %8999 = vmatprep.subr.bf16.mxu0 %v8410
    %9000 = vmatpush1.bf16.msra.mxu0 %v8409
    %9001 = vmatprep.subr.bf16.mxu0 %v8414
    %9002 = vmatpush1.bf16.msra.mxu0 %v8413
    %9003 = vmatprep.subr.bf16.mxu0 %v8418
    %9004 = vmatpush1.bf16.msra.mxu0 %v8417
    %9005 = vmatprep.subr.bf16.mxu0 %v8422
    %9006 = vmatpush1.bf16.msra.mxu0 %v8421
    %9007 = vmatprep.subr.bf16.mxu0 %v8426
    %9008 = vmatpush1.bf16.msra.mxu0 %v8425
    %9009 = vmatprep.subr.bf16.mxu0 %v8430
    %9010 = vmatpush1.bf16.msra.mxu0 %v8429
    %9011 = vmatprep.mubr.bf16.mxu0 %v7443
    %9012 = vmatmul.mubr.bf16.gmra.mrb[0].mxu0 %v7442
    %v9013 = vpop.f32.mrb[0].mxu0
    %v9014 = vadd.f32 %v7686, %v9013
    %v9015 = vpop.f32.mrb[0].mxu0
    %v9016 = vadd.f32 %v7690, %v9015
    %v9017 = vpop.f32.mrb[0].mxu0
    %v9018 = vpop.f32.mrb[0].mxu0
    %9019 = vdwg.mxu0
    %9020 = vmatprep.subr.bf16.mxu0 %v8434
    %9021 = vmatpush1.bf16.msra.mxu0 %v8433
    %9022 = vmatprep.subr.bf16.mxu0 %v8438
    %9023 = vmatpush1.bf16.msra.mxu0 %v8437
    %9024 = vmatprep.subr.bf16.mxu0 %v8442
    %9025 = vmatpush1.bf16.msra.mxu0 %v8441
    %9026 = vmatprep.subr.bf16.mxu0 %v8446
    %9027 = vmatpush1.bf16.msra.mxu0 %v8445
    %9028 = vmatprep.subr.bf16.mxu0 %v8450
    %9029 = vmatpush1.bf16.msra.mxu0 %v8449
    %9030 = vmatprep.subr.bf16.mxu0 %v8454
    %9031 = vmatpush1.bf16.msra.mxu0 %v8453
    %9032 = vmatprep.subr.bf16.mxu0 %v8458
    %9033 = vmatpush1.bf16.msra.mxu0 %v8457
    %9034 = vmatprep.subr.bf16.mxu0 %v8462
    %9035 = vmatpush1.bf16.msra.mxu0 %v8461
    %9036 = vmatprep.subr.bf16.mxu0 %v8466
    %9037 = vmatpush1.bf16.msra.mxu0 %v8465
    %9038 = vmatprep.subr.bf16.mxu0 %v8470
    %9039 = vmatpush1.bf16.msra.mxu0 %v8469
    %9040 = vmatprep.subr.bf16.mxu0 %v8474
    %9041 = vmatpush1.bf16.msra.mxu0 %v8473
    %9042 = vmatprep.subr.bf16.mxu0 %v8478
    %9043 = vmatpush1.bf16.msra.mxu0 %v8477
    %9044 = vmatprep.subr.bf16.mxu0 %v8482
    %9045 = vmatpush1.bf16.msra.mxu0 %v8481
    %9046 = vmatprep.subr.bf16.mxu0 %v8486
    %9047 = vmatpush1.bf16.msra.mxu0 %v8485
    %9048 = vmatprep.subr.bf16.mxu0 %v8490
    %9049 = vmatpush1.bf16.msra.mxu0 %v8489
    %9050 = vmatprep.subr.bf16.mxu0 %v8494
    %9051 = vmatpush1.bf16.msra.mxu0 %v8493
    %9052 = vmatprep.mubr.bf16.mxu0 %v7445
    %9053 = vmatmul.mubr.bf16.gmra.mrb[0].mxu0 %v7444
    %v9054 = vpop.f32.mrb[0].mxu0
    %v9055 = vadd.f32 %v9014, %v9054
    %v9056 = vpop.f32.mrb[0].mxu0
    %v9057 = vadd.f32 %v9016, %v9056
    %v9058 = vpop.f32.mrb[0].mxu0
    %v9059 = vpop.f32.mrb[0].mxu0
    %9060 = vdwg.mxu0
    %9061 = vmatprep.subr.bf16.mxu0 %v8498
    %9062 = vmatpush1.bf16.msra.mxu0 %v8497
    %9063 = vmatprep.subr.bf16.mxu0 %v8502
    %9064 = vmatpush1.bf16.msra.mxu0 %v8501
    %9065 = vmatprep.subr.bf16.mxu0 %v8506
    %9066 = vmatpush1.bf16.msra.mxu0 %v8505
    %9067 = vmatprep.subr.bf16.mxu0 %v8510
    %9068 = vmatpush1.bf16.msra.mxu0 %v8509
    %9069 = vmatprep.subr.bf16.mxu0 %v8514
    %9070 = vmatpush1.bf16.msra.mxu0 %v8513
    %9071 = vmatprep.subr.bf16.mxu0 %v8518
    %9072 = vmatpush1.bf16.msra.mxu0 %v8517
    %9073 = vmatprep.subr.bf16.mxu0 %v8522
    %9074 = vmatpush1.bf16.msra.mxu0 %v8521
    %9075 = vmatprep.subr.bf16.mxu0 %v8526
    %9076 = vmatpush1.bf16.msra.mxu0 %v8525
    %9077 = vmatprep.subr.bf16.mxu0 %v8530
    %9078 = vmatpush1.bf16.msra.mxu0 %v8529
    %9079 = vmatprep.subr.bf16.mxu0 %v8534
    %9080 = vmatpush1.bf16.msra.mxu0 %v8533
    %9081 = vmatprep.subr.bf16.mxu0 %v8538
    %9082 = vmatpush1.bf16.msra.mxu0 %v8537
    %9083 = vmatprep.subr.bf16.mxu0 %v8542
    %9084 = vmatpush1.bf16.msra.mxu0 %v8541
    %9085 = vmatprep.subr.bf16.mxu0 %v8546
    %9086 = vmatpush1.bf16.msra.mxu0 %v8545
    %9087 = vmatprep.subr.bf16.mxu0 %v8550
    %9088 = vmatpush1.bf16.msra.mxu0 %v8549
    %9089 = vmatprep.subr.bf16.mxu0 %v8554
    %9090 = vmatpush1.bf16.msra.mxu0 %v8553
    %9091 = vmatprep.subr.bf16.mxu0 %v8558
    %9092 = vmatpush1.bf16.msra.mxu0 %v8557
    %9093 = vmatprep.mubr.bf16.mxu0 %v7447
    %9094 = vmatmul.mubr.bf16.gmra.mrb[0].mxu0 %v7446
    %v9095 = vpop.f32.mrb[0].mxu0
    %v9096 = vadd.f32 %v9055, %v9095
    %v9097 = vpop.f32.mrb[0].mxu0
    %v9098 = vadd.f32 %v9057, %v9097
    %v9099 = vpop.f32.mrb[0].mxu0
    %v9100 = vpop.f32.mrb[0].mxu0
    %9101 = vdwg.mxu0
    %9102 = vmatprep.subr.bf16.mxu0 %v8562
    %9103 = vmatpush1.bf16.msra.mxu0 %v8561
    %9104 = vmatprep.subr.bf16.mxu0 %v8566
    %9105 = vmatpush1.bf16.msra.mxu0 %v8565
    %9106 = vmatprep.subr.bf16.mxu0 %v8570
    %9107 = vmatpush1.bf16.msra.mxu0 %v8569
    %9108 = vmatprep.subr.bf16.mxu0 %v8574
    %9109 = vmatpush1.bf16.msra.mxu0 %v8573
    %9110 = vmatprep.subr.bf16.mxu0 %v8578
    %9111 = vmatpush1.bf16.msra.mxu0 %v8577
    %9112 = vmatprep.subr.bf16.mxu0 %v8582
    %9113 = vmatpush1.bf16.msra.mxu0 %v8581
    %9114 = vmatprep.subr.bf16.mxu0 %v8586
    %9115 = vmatpush1.bf16.msra.mxu0 %v8585
    %9116 = vmatprep.subr.bf16.mxu0 %v8590
    %9117 = vmatpush1.bf16.msra.mxu0 %v8589
    %9118 = vmatprep.subr.bf16.mxu0 0
    %9119 = vmatpush1.bf16.msra.mxu0 0
    %9120 = vmatprep.subr.bf16.mxu0 0
    %9121 = vmatpush1.bf16.msra.mxu0 0
    %9122 = vmatprep.subr.bf16.mxu0 0
    %9123 = vmatpush1.bf16.msra.mxu0 0
    %9124 = vmatprep.subr.bf16.mxu0 0
    %9125 = vmatpush1.bf16.msra.mxu0 0
    %9126 = vmatprep.subr.bf16.mxu0 0
    %9127 = vmatpush1.bf16.msra.mxu0 0
    %9128 = vmatprep.subr.bf16.mxu0 0
    %9129 = vmatpush1.bf16.msra.mxu0 0
    %9130 = vmatprep.subr.bf16.mxu0 0
    %9131 = vmatpush1.bf16.msra.mxu0 0
    %9132 = vmatprep.subr.bf16.mxu0 0
    %9133 = vmatpush1.bf16.msra.mxu0 0
    %9134 = vmatprep.mubr.bf16.mxu0 0
    %9135 = vmatmul.mubr.bf16.gmra.mrb[0].mxu0 %v7448
    %v9136 = vpop.f32.mrb[0].mxu0
    %v9137 = vadd.f32 %v9096, %v9136
    %v9138 = vpop.f32.mrb[0].mxu0
    %v9139 = vadd.f32 %v9098, %v9138
    %v9140 = vpop.f32.mrb[0].mxu0
    %v9141 = vpop.f32.mrb[0].mxu0
    %9142 = vdwg.mxu0
    %v9143 = vmax.f32 %v8973, 0.0
    %v9144 = vmax.f32 %v8975, 0.0
    %v9145 = vmax.f32 %v9137, 0.0
    %v9146 = vmax.f32 %v9139, 0.0
    %v9147 = vpack.c.bf16 %v9143, %v9143
    %v9148 = vpack.c.bf16 %v9144, %v9144
    %v9149 = vpack.c.bf16 %v9145, %v9145
    %v9150 = vpack.c.bf16 %v9146, %v9146
    %v9151 = vld [vmem:[%s13] sm:$0xf]
    %v9152 = vld [vmem:[%s13 + $0x4] sm:$0xf]
    %v9153 = vld [vmem:[%s13 + $0x8] sm:$0xf]
    %v9154 = vld [vmem:[%s13 + $0xc] sm:$0xf]
    %v9155 = vld [vmem:[%s13 + $0x10] sm:$0xf]
    %v9156 = vld [vmem:[%s13 + $0x14] sm:$0xf]
    %v9157 = vld [vmem:[%s13 + $0x18] sm:$0xf]
    %v9158 = vld [vmem:[%s13 + $0x1c] sm:$0xf]
    %v9159 = vld [vmem:[%s13 + $0x20] sm:$0xf]
    %v9160 = vld [vmem:[%s13 + $0x24] sm:$0xf]
    %v9161 = vld [vmem:[%s13 + $0x28] sm:$0xf]
    %v9162 = vld [vmem:[%s13 + $0x2c] sm:$0xf]
    %v9163 = vld [vmem:[%s13 + $0x30] sm:$0xf]
    %v9164 = vld [vmem:[%s13 + $0x34] sm:$0xf]
    %v9165 = vld [vmem:[%s13 + $0x38] sm:$0xf]
    %v9166 = vld [vmem:[%s13 + $0x3c] sm:$0xf]
    %v9167 = vld [vmem:[%s13 + $0x40] sm:$0xf]
    %v9168 = vld [vmem:[%s13 + $0x44] sm:$0xf]
    %v9169 = vld [vmem:[%s13 + $0x48] sm:$0xf]
    %v9170 = vld [vmem:[%s13 + $0x4c] sm:$0xf]
    %v9171 = vld [vmem:[%s13 + $0x50] sm:$0xf]
    %v9172 = vld [vmem:[%s13 + $0x54] sm:$0xf]
    %v9173 = vld [vmem:[%s13 + $0x58] sm:$0xf]
    %v9174 = vld [vmem:[%s13 + $0x5c] sm:$0xf]
    %v9175 = vld [vmem:[%s13 + $0x60] sm:$0xf]
    %v9176 = vld [vmem:[%s13 + $0x64] sm:$0xf]
    %v9177 = vld [vmem:[%s13 + $0x68] sm:$0xf]
    %v9178 = vld [vmem:[%s13 + $0x6c] sm:$0xf]
    %v9179 = vld [vmem:[%s13 + $0x70] sm:$0xf]
    %v9180 = vld [vmem:[%s13 + $0x74] sm:$0xf]
    %v9181 = vld [vmem:[%s13 + $0x78] sm:$0xf]
    %v9182 = vld [vmem:[%s13 + $0x7c] sm:$0xf]
    %v9183 = vld [vmem:[%s13 + $0x80] sm:$0xf]
    %v9184 = vld [vmem:[%s13 + $0x84] sm:$0xf]
    %v9185 = vld [vmem:[%s13 + $0x88] sm:$0xf]
    %v9186 = vld [vmem:[%s13 + $0x8c] sm:$0xf]
    %v9187 = vld [vmem:[%s13 + $0x90] sm:$0xf]
    %v9188 = vld [vmem:[%s13 + $0x94] sm:$0xf]
    %v9189 = vld [vmem:[%s13 + $0x98] sm:$0xf]
    %v9190 = vld [vmem:[%s13 + $0x9c] sm:$0xf]
    %v9191 = vld [vmem:[%s13 + $0xa0] sm:$0xf]
    %v9192 = vld [vmem:[%s13 + $0xa4] sm:$0xf]
    %v9193 = vld [vmem:[%s13 + $0xa8] sm:$0xf]
    %v9194 = vld [vmem:[%s13 + $0xac] sm:$0xf]
    %v9195 = vld [vmem:[%s13 + $0xb0] sm:$0xf]
    %v9196 = vld [vmem:[%s13 + $0xb4] sm:$0xf]
    %v9197 = vld [vmem:[%s13 + $0xb8] sm:$0xf]
    %v9198 = vld [vmem:[%s13 + $0xbc] sm:$0xf]
    %v9199 = vld [vmem:[%s13 + $0xc0] sm:$0xf]
    %v9200 = vld [vmem:[%s13 + $0xc4] sm:$0xf]
    %v9201 = vld [vmem:[%s13 + $0xc8] sm:$0xf]
    %v9202 = vld [vmem:[%s13 + $0xcc] sm:$0xf]
    %v9203 = vld [vmem:[%s13 + $0xd0] sm:$0xf]
    %v9204 = vld [vmem:[%s13 + $0xd4] sm:$0xf]
    %v9205 = vld [vmem:[%s13 + $0xd8] sm:$0xf]
    %v9206 = vld [vmem:[%s13 + $0xdc] sm:$0xf]
    %v9207 = vld [vmem:[%s13 + $0xe0] sm:$0xf]
    %v9208 = vld [vmem:[%s13 + $0xe4] sm:$0xf]
    %v9209 = vld [vmem:[%s13 + $0xe8] sm:$0xf]
    %v9210 = vld [vmem:[%s13 + $0xec] sm:$0xf]
    %v9211 = vld [vmem:[%s13 + $0xf0] sm:$0xf]
    %v9212 = vld [vmem:[%s13 + $0xf4] sm:$0xf]
    %v9213 = vld [vmem:[%s13 + $0xf8] sm:$0xf]
    %v9214 = vld [vmem:[%s13 + $0xfc] sm:$0xf]
    %v9215 = vld [vmem:[%s14] sm:$0x1]
    %v9217 = vlaneseq
    %v9218 = vshrl.u32 %v9217, 7
    %v9219 = vsub.s32 0, %v9218
    %v9220 = vrot.slane %v9215, %v9219
    %v9286 = vunpack.c.l.b16 %v9151
    %v9287 = vunpack.c.l.b16 %v9152
    %v9288 = vunpack.c.l.b16 %v9153
    %v9289 = vunpack.c.l.b16 %v9154
    %v9290 = vunpack.c.l.b16 %v9155
    %v9291 = vunpack.c.l.b16 %v9156
    %v9292 = vunpack.c.l.b16 %v9157
    %v9293 = vunpack.c.l.b16 %v9158
    %v9294 = vunpack.c.l.b16 %v9159
    %v9295 = vunpack.c.l.b16 %v9160
    %v9296 = vunpack.c.l.b16 %v9161
    %v9297 = vunpack.c.l.b16 %v9162
    %v9298 = vunpack.c.l.b16 %v9163
    %v9299 = vunpack.c.l.b16 %v9164
    %v9300 = vunpack.c.l.b16 %v9165
    %v9301 = vunpack.c.l.b16 %v9166
    %v9302 = vunpack.c.l.b16 %v9167
    %v9303 = vunpack.c.l.b16 %v9168
    %v9304 = vunpack.c.l.b16 %v9169
    %v9305 = vunpack.c.l.b16 %v9170
    %v9306 = vunpack.c.l.b16 %v9171
    %v9307 = vunpack.c.l.b16 %v9172
    %v9308 = vunpack.c.l.b16 %v9173
    %v9309 = vunpack.c.l.b16 %v9174
    %v9310 = vunpack.c.l.b16 %v9175
    %v9311 = vunpack.c.l.b16 %v9176
    %v9312 = vunpack.c.l.b16 %v9177
    %v9313 = vunpack.c.l.b16 %v9178
    %v9314 = vunpack.c.l.b16 %v9179
    %v9315 = vunpack.c.l.b16 %v9180
    %v9316 = vunpack.c.l.b16 %v9181
    %v9317 = vunpack.c.l.b16 %v9182
    %v9318 = vunpack.c.l.b16 %v9183
    %v9319 = vunpack.c.l.b16 %v9184
    %v9320 = vunpack.c.l.b16 %v9185
    %v9321 = vunpack.c.l.b16 %v9186
    %v9322 = vunpack.c.l.b16 %v9187
    %v9323 = vunpack.c.l.b16 %v9188
    %v9324 = vunpack.c.l.b16 %v9189
    %v9325 = vunpack.c.l.b16 %v9190
    %v9326 = vunpack.c.l.b16 %v9191
    %v9327 = vunpack.c.l.b16 %v9192
    %v9328 = vunpack.c.l.b16 %v9193
    %v9329 = vunpack.c.l.b16 %v9194
    %v9330 = vunpack.c.l.b16 %v9195
    %v9331 = vunpack.c.l.b16 %v9196
    %v9332 = vunpack.c.l.b16 %v9197
    %v9333 = vunpack.c.l.b16 %v9198
    %v9334 = vunpack.c.l.b16 %v9199
    %v9335 = vunpack.c.l.b16 %v9200
    %v9336 = vunpack.c.l.b16 %v9201
    %v9337 = vunpack.c.l.b16 %v9202
    %v9338 = vunpack.c.l.b16 %v9203
    %v9339 = vunpack.c.l.b16 %v9204
    %v9340 = vunpack.c.l.b16 %v9205
    %v9341 = vunpack.c.l.b16 %v9206
    %v9342 = vunpack.c.l.b16 %v9207
    %v9343 = vunpack.c.l.b16 %v9208
    %v9344 = vunpack.c.l.b16 %v9209
    %v9345 = vunpack.c.l.b16 %v9210
    %v9346 = vunpack.c.l.b16 %v9211
    %v9347 = vunpack.c.l.b16 %v9212
    %v9348 = vunpack.c.l.b16 %v9213
    %v9349 = vunpack.c.l.b16 %v9214
    %v9350 = vpack.c.b16 %v9287, %v9286
    %v9351 = vpack.c.b16 %v9289, %v9288
    %v9352 = vpack.c.b16 %v9291, %v9290
    %v9353 = vpack.c.b16 %v9293, %v9292
    %v9354 = vpack.c.b16 %v9295, %v9294
    %v9355 = vpack.c.b16 %v9297, %v9296
    %v9356 = vpack.c.b16 %v9299, %v9298
    %v9357 = vpack.c.b16 %v9301, %v9300
    %v9358 = vpack.c.b16 %v9303, %v9302
    %v9359 = vpack.c.b16 %v9305, %v9304
    %v9360 = vpack.c.b16 %v9307, %v9306
    %v9361 = vpack.c.b16 %v9309, %v9308
    %v9362 = vpack.c.b16 %v9311, %v9310
    %v9363 = vpack.c.b16 %v9313, %v9312
    %v9364 = vpack.c.b16 %v9315, %v9314
    %v9365 = vpack.c.b16 %v9317, %v9316
    %v9366 = vpack.c.b16 %v9319, %v9318
    %v9367 = vpack.c.b16 %v9321, %v9320
    %v9368 = vpack.c.b16 %v9323, %v9322
    %v9369 = vpack.c.b16 %v9325, %v9324
    %v9370 = vpack.c.b16 %v9327, %v9326
    %v9371 = vpack.c.b16 %v9329, %v9328
    %v9372 = vpack.c.b16 %v9331, %v9330
    %v9373 = vpack.c.b16 %v9333, %v9332
    %v9374 = vpack.c.b16 %v9335, %v9334
    %v9375 = vpack.c.b16 %v9337, %v9336
    %v9376 = vpack.c.b16 %v9339, %v9338
    %v9377 = vpack.c.b16 %v9341, %v9340
    %v9378 = vpack.c.b16 %v9343, %v9342
    %v9379 = vpack.c.b16 %v9345, %v9344
    %v9380 = vpack.c.b16 %v9347, %v9346
    %v9381 = vpack.c.b16 %v9349, %v9348
    %9414 = vmatprep.subr.bf16.mxu0 0
    %9415 = vmatpush1.bf16.msra.mxu0 %v9350
    %9416 = vmatprep.subr.bf16.mxu0 0
    %9417 = vmatpush1.bf16.msra.mxu0 %v9351
    %9418 = vmatprep.subr.bf16.mxu0 0
    %9419 = vmatpush1.bf16.msra.mxu0 %v9352
    %9420 = vmatprep.subr.bf16.mxu0 0
    %9421 = vmatpush1.bf16.msra.mxu0 %v9353
    %9422 = vmatprep.subr.bf16.mxu0 0
    %9423 = vmatpush1.bf16.msra.mxu0 %v9354
    %9424 = vmatprep.subr.bf16.mxu0 0
    %9425 = vmatpush1.bf16.msra.mxu0 %v9355
    %9426 = vmatprep.subr.bf16.mxu0 0
    %9427 = vmatpush1.bf16.msra.mxu0 %v9356
    %9428 = vmatprep.subr.bf16.mxu0 0
    %9429 = vmatpush1.bf16.msra.mxu0 %v9357
    %9430 = vmatprep.subr.bf16.mxu0 0
    %9431 = vmatpush1.bf16.msra.mxu0 %v9358
    %9432 = vmatprep.subr.bf16.mxu0 0
    %9433 = vmatpush1.bf16.msra.mxu0 %v9359
    %9434 = vmatprep.subr.bf16.mxu0 0
    %9435 = vmatpush1.bf16.msra.mxu0 %v9360
    %9436 = vmatprep.subr.bf16.mxu0 0
    %9437 = vmatpush1.bf16.msra.mxu0 %v9361
    %9438 = vmatprep.subr.bf16.mxu0 0
    %9439 = vmatpush1.bf16.msra.mxu0 %v9362
    %9440 = vmatprep.subr.bf16.mxu0 0
    %9441 = vmatpush1.bf16.msra.mxu0 %v9363
    %9442 = vmatprep.subr.bf16.mxu0 0
    %9443 = vmatpush1.bf16.msra.mxu0 %v9364
    %9444 = vmatprep.subr.bf16.mxu0 0
    %9445 = vmatpush1.bf16.msra.mxu0 %v9365
    %9446 = vmatprep.mubr.bf16.mxu0 %v9148
    %9447 = vmatmul.mubr.bf16.gmra.mrb[0].mxu0 %v9147
    %v9448 = vpop.f32.mrb[0].mxu0
    %v9449 = vadd.f32 %v9220, %v9448
    %v9450 = vpop.f32.mrb[0].mxu0
    %v9451 = vpop.f32.mrb[0].mxu0
    %v9452 = vpop.f32.mrb[0].mxu0
    %9453 = vdwg.mxu0
    %9454 = vmatprep.subr.bf16.mxu0 0
    %9455 = vmatpush1.bf16.msra.mxu0 %v9366
    %9456 = vmatprep.subr.bf16.mxu0 0
    %9457 = vmatpush1.bf16.msra.mxu0 %v9367
    %9458 = vmatprep.subr.bf16.mxu0 0
    %9459 = vmatpush1.bf16.msra.mxu0 %v9368
    %9460 = vmatprep.subr.bf16.mxu0 0
    %9461 = vmatpush1.bf16.msra.mxu0 %v9369
    %9462 = vmatprep.subr.bf16.mxu0 0
    %9463 = vmatpush1.bf16.msra.mxu0 %v9370
    %9464 = vmatprep.subr.bf16.mxu0 0
    %9465 = vmatpush1.bf16.msra.mxu0 %v9371
    %9466 = vmatprep.subr.bf16.mxu0 0
    %9467 = vmatpush1.bf16.msra.mxu0 %v9372
    %9468 = vmatprep.subr.bf16.mxu0 0
    %9469 = vmatpush1.bf16.msra.mxu0 %v9373
    %9470 = vmatprep.subr.bf16.mxu0 0
    %9471 = vmatpush1.bf16.msra.mxu0 %v9374
    %9472 = vmatprep.subr.bf16.mxu0 0
    %9473 = vmatpush1.bf16.msra.mxu0 %v9375
    %9474 = vmatprep.subr.bf16.mxu0 0
    %9475 = vmatpush1.bf16.msra.mxu0 %v9376
    %9476 = vmatprep.subr.bf16.mxu0 0
    %9477 = vmatpush1.bf16.msra.mxu0 %v9377
    %9478 = vmatprep.subr.bf16.mxu0 0
    %9479 = vmatpush1.bf16.msra.mxu0 %v9378
    %9480 = vmatprep.subr.bf16.mxu0 0
    %9481 = vmatpush1.bf16.msra.mxu0 %v9379
    %9482 = vmatprep.subr.bf16.mxu0 0
    %9483 = vmatpush1.bf16.msra.mxu0 %v9380
    %9484 = vmatprep.subr.bf16.mxu0 0
    %9485 = vmatpush1.bf16.msra.mxu0 %v9381
    %9486 = vmatprep.mubr.bf16.mxu0 %v9150
    %9487 = vmatmul.mubr.bf16.gmra.mrb[0].mxu0 %v9149
    %v9488 = vpop.f32.mrb[0].mxu0
    %v9489 = vadd.f32 %v9449, %v9488
    %v9490 = vpop.f32.mrb[0].mxu0
    %v9491 = vpop.f32.mrb[0].mxu0
    %v9492 = vpop.f32.mrb[0].mxu0
    %9493 = vdwg.mxu0
    %v9494 = vtanh.pop %v9489
    %vm9495 = vcmask 25600
    %9496 = vst.msk [vmem:[#allocation5] sm:$0x3] %vm9495, %v9494
    // Predicated region
    $region62: #{actor_forward.1} parent=1 // pred_check
      _
    $region63: #{actor_forward.1} parent=1 // pred_check_branch
      %9498 = sbr.rel (0) target = $region65
    $region64: #{actor_forward.1} parent=1 // pred_region
      %s9500 = ssub.s32 32, 32
      %9501 = vsyncadd [#allocation6], %s9500
      %s9503 = sshll.u32 [#allocation5], 4
      %s9504 = int_to_ptr.vmem [resolvable:$true] %s9503
      %9506 = dma.vmem_to_hbm [thread:$0]  %s9504, 32, %s15, [#allocation6]
    $region65: #{actor_forward.1} parent=1 // pred_fallthru
      _
    // Predicated region
    $region66: #{actor_forward.1} parent=1 // pred_check
      _
    $region67: #{actor_forward.1} parent=1 // pred_check_branch
      %9508 = sbr.rel (0) target = $region69
    $region68: #{actor_forward.1} parent=1 // pred_region
      %9509 = dma.done [#allocation6], 32
    $region69: #{actor_forward.1} parent=1 // pred_fallthru
      _
    %9510 = vsyncpa [#allocation6], 1

</llo_original>
